<compile_context>
chip_gen: v5e
topology: v5e:2x2
jax: 0.10.0
libtpu: 0.0.40
codegen_flags: <defaults>
</compile_context>

<pallas_src>
import functools

import jax
import jax.numpy as jnp
from jax import lax
from jax.experimental import pallas as pl
from jax.experimental.pallas import tpu as pltpu


def _round_up(n, m):
    return ((n + m - 1) // m) * m


# ---------------------------------------------------------------------------
# Fused kernel: x_linear -> L-layer LSTM -> predict + tanh + masked MSE.
# Gate order matches PyTorch nn.LSTM: i, f, g, o (each padded to P lanes).
# ---------------------------------------------------------------------------
def dkt_fused_kernel(x_ref, wxl_ref, bxl_ref, wih_ref, whh_ref, bl_ref,
                     h0_ref, c0_ref, wpred_ref, bpred_ref, qt_ref, tgt_ref,
                     pred_ref, loss_ref, seq_ref, gates_ref, *, bp):
    M = x_ref.shape[0]           # S * Bp (time-major, batch-padded rows)
    S = M // bp
    P = seq_ref.shape[1]         # padded embed/hidden width (multiple of 128)
    L = wih_ref.shape[0]

    # ---- 1) x_linear over all timesteps: one well-shaped MXU call ----------
    seq_ref[...] = (
        jnp.dot(x_ref[...].astype(jnp.bfloat16), wxl_ref[...],
                preferred_element_type=jnp.float32)
        + bxl_ref[...]
    )

    # ---- 2) stacked LSTM ----------------------------------------------------
    for layer in range(L):       # static python loop, L is small
        # Hoisted input projection (+ combined bias) for ALL timesteps of this
        # layer: one (S*Bp, P) @ (P, 4P) matmul instead of S tiny ones.
        gates_ref[...] = (
            jnp.dot(seq_ref[...].astype(jnp.bfloat16), wih_ref[layer],
                    preferred_element_type=jnp.float32)
            + bl_ref[layer]
        )
        h_init = h0_ref[layer]   # (Bp, P) f32 — one vreg, hoisted
        c_init = c0_ref[layer]

        def step(t, carry, _layer=layer):
            h, c = carry
            row = pl.multiple_of(t * bp, 8)          # sublane-aligned window
            g = gates_ref[pl.ds(row, bp), :] + jnp.dot(
                h.astype(jnp.bfloat16), whh_ref[_layer],
                preferred_element_type=jnp.float32)
            # Each gate is a full 128-lane tile -> free static slicing.
            i_g = jax.nn.sigmoid(g[:, 0 * P:1 * P])
            f_g = jax.nn.sigmoid(g[:, 1 * P:2 * P])
            g_g = jnp.tanh(g[:, 2 * P:3 * P])
            o_g = jax.nn.sigmoid(g[:, 3 * P:4 * P])
            c_new = f_g * c + i_g * g_g
            h_new = o_g * jnp.tanh(c_new)
            seq_ref[pl.ds(row, bp), :] = h_new       # this layer's output seq
            return h_new, c_new

        lax.fori_loop(0, S, step, (h_init, c_init), unroll=True)

    # ---- 3) predict_linear + tanh + masked MSE loss -------------------------
    pred = jnp.tanh(
        jnp.dot(seq_ref[...].astype(jnp.bfloat16), wpred_ref[...],
                preferred_element_type=jnp.float32)
        + bpred_ref[...]
    )
    pred_ref[...] = pred                              # lane-dense (M, Qp) store
    mask = (qt_ref[...] > 0).astype(jnp.float32)      # zero in all padding
    diff = (pred - tgt_ref[...]) * mask
    sse = jnp.sum(diff * diff)
    cnt = jnp.sum(mask)
    # Divergence note: PyTorch MSELoss over an empty masked_select is NaN;
    # this returns 0 when the mask is empty.
    loss_ref[0, 0] = sse / jnp.maximum(cnt, 1.0)


# ---------------------------------------------------------------------------
# Wrapper: pad/layout the (tiny) operands, call the fused kernel, unpad.
# ---------------------------------------------------------------------------
def dkt_forward(kp, x_data, q_t_data, target, init_h, init_c):
    d = kp["dims"]
    P, Qp, Q1, H = d["P"], d["Qp"], d["Q1"], d["H"]
    B, S, F = x_data.shape
    L = init_h.shape[0]
    Bp = max(8, _round_up(B, 8))
    M = S * Bp

    # Time-major, batch/lane padded operands.  These are tiny layout ops on
    # the *inputs*; all large intermediates stay inside the kernel's VMEM.
    x_tm = jnp.pad(jnp.transpose(x_data.astype(jnp.float32), (1, 0, 2)),
                   ((0, 0), (0, Bp - B), (0, 0))).reshape(M, F)

    def to_tm_padded(a):
        a = a.reshape(B, S, Q1).transpose(1, 0, 2)          # (S, B, Q1)
        a = jnp.pad(a, ((0, 0), (0, Bp - B), (0, Qp - Q1)))
        return a.reshape(M, Qp)

    qt_p = to_tm_padded(q_t_data).astype(jnp.int32)
    tgt_p = to_tm_padded(target.astype(jnp.float32))

    h0_p = jnp.pad(init_h.astype(jnp.float32), ((0, 0), (0, Bp - B), (0, P - H)))
    c0_p = jnp.pad(init_c.astype(jnp.float32), ((0, 0), (0, Bp - B), (0, P - H)))

    operands = (x_tm, kp["wxl"], kp["bxl"], kp["wih"], kp["whh"], kp["blstm"],
                h0_p, c0_p, kp["wpred"], kp["bpred"], qt_p, tgt_p)

    flops = int(2 * M * F * P + L * 4 * M * P * 4 * P + 2 * M * P * Qp)
    transcend = int(L * M * 5 * P + M * Qp)
    bytes_acc = int(sum(int(a.size) * a.dtype.itemsize for a in operands)
                    + M * Qp * 4 + 4)

    vmem = pl.BlockSpec(memory_space=pltpu.MemorySpace.VMEM)
    smem = pl.BlockSpec(memory_space=pltpu.MemorySpace.SMEM)

    pred_p, loss = pl.pallas_call(
        functools.partial(dkt_fused_kernel, bp=Bp),
        out_shape=(jax.ShapeDtypeStruct((M, Qp), jnp.float32),
                   jax.ShapeDtypeStruct((1, 1), jnp.float32)),
        in_specs=[vmem] * len(operands),
        out_specs=(vmem, smem),
        scratch_shapes=[pltpu.VMEM((M, P), jnp.float32),       # layer sequence
                        pltpu.VMEM((M, 4 * P), jnp.float32)],  # hoisted gates
        cost_estimate=pl.CostEstimate(flops=flops,
                                      transcendentals=transcend,
                                      bytes_accessed=bytes_acc),
    )(*operands)

    pred_out = (pred_p.reshape(S, Bp, Qp)[:, :B, :Q1]
                .transpose(1, 0, 2).reshape(B * S, Q1))
    loss = loss[0, 0]

    # TODO(synk): torch.masked_select returns a dynamically shaped 1-D tensor,
    # which has no static-shape JAX equivalent; return mask-zeroed arrays.
    mask = q_t_data > 0
    filtered_pred = jnp.where(mask, pred_out, 0.0)
    filtered_target = jnp.where(mask, target, 0.0)
    return loss, filtered_pred, filtered_target, pred_out


# ---------------------------------------------------------------------------
# Parameter construction: natural (PyTorch-shaped, transposed) params, then a
# pack step that pads to 128-lane tiles / bf16 for the kernel.
# ---------------------------------------------------------------------------
def make_natural_params(key, F, n_question, E, H, L):
    Q1 = n_question + 1
    ks = iter(jax.random.split(key, 4 + 3 * L))

    def kaiming(k, shape, fan_in):
        return jax.random.normal(k, shape, jnp.float32) * jnp.sqrt(2.0 / fan_in)

    nat = {
        "w_xl": kaiming(next(ks), (F, E), F),                   # x_linear.weight^T
        "b_xl": 0.01 * jax.random.normal(next(ks), (E,), jnp.float32),
        "wih": [], "whh": [], "b_lstm": [],
    }
    for layer in range(L):
        in_dim = E if layer == 0 else H
        nat["wih"].append(kaiming(next(ks), (in_dim, 4 * H), in_dim))   # W_ih^T
        nat["whh"].append(kaiming(next(ks), (H, 4 * H), H))             # W_hh^T
        nat["b_lstm"].append(                                            # b_ih+b_hh
            0.01 * jax.random.normal(next(ks), (4 * H,), jnp.float32))
    nat["w_pred"] = kaiming(next(ks), (H, Q1), H)               # predict.weight^T
    nat["b_pred"] = jnp.zeros((Q1,), jnp.float32)
    return nat


def pack_params(nat, F, E, H, Q1, L):
    P = _round_up(max(E, H), 128)
    Qp = _round_up(Q1, 128)

    def pad_gates(w, rows_to):
        rows = w.shape[0]
        w4 = w.reshape(rows, 4, H)
        w4 = jnp.pad(w4, ((0, rows_to - rows), (0, 0), (0, P - H)))
        return w4.reshape(rows_to, 4 * P)

    wxl = jnp.pad(nat["w_xl"], ((0, 0), (0, P - E)))
    bxl = jnp.pad(nat["b_xl"], (0, P - E)).reshape(1, P)
    wih = jnp.stack([pad_gates(nat["wih"][l], P) for l in range(L)])
    whh = jnp.stack([pad_gates(nat["whh"][l], P) for l in range(L)])
    blstm = jnp.stack([pad_gates(nat["b_lstm"][l].reshape(1, 4 * H), 1)
                       for l in range(L)])
    wpred = jnp.pad(nat["w_pred"], ((0, P - H), (0, Qp - Q1)))
    bpred = jnp.pad(nat["b_pred"], (0, Qp - Q1)).reshape(1, Qp)

    return {
        "wxl": wxl.astype(jnp.bfloat16), "bxl": bxl.astype(jnp.float32),
        "wih": wih.astype(jnp.bfloat16), "whh": whh.astype(jnp.bfloat16),
        "blstm": blstm.astype(jnp.float32),
        "wpred": wpred.astype(jnp.bfloat16), "bpred": bpred.astype(jnp.float32),
        "dims": {"E": E, "H": H, "Q1": Q1, "P": P, "Qp": Qp},
    }


# ---------------------------------------------------------------------------
# Pure-JAX reference (same bf16 operand rounding) for correctness checking.
# ---------------------------------------------------------------------------
def _bdot(a, b):
    return jnp.dot(a.astype(jnp.bfloat16), b.astype(jnp.bfloat16),
                   preferred_element_type=jnp.float32)


def dkt_reference(nat, x_data, q_t_data, target, init_h, init_c):
    B, S, F = x_data.shape
    L, _, H = init_h.shape
    x = _bdot(x_data.reshape(B * S, F), nat["w_xl"]) + nat["b_xl"]
    seq = x.reshape(B, S, -1).transpose(1, 0, 2)               # (S, B, E)
    for l in range(L):
        wih, whh, b = nat["wih"][l], nat["whh"][l], nat["b_lstm"][l]

        def step(carry, x_t, wih=wih, whh=whh, b=b):
            h, c = carry
            g = _bdot(x_t, wih) + b + _bdot(h, whh)
            i = jax.nn.sigmoid(g[:, 0 * H:1 * H])
            f = jax.nn.sigmoid(g[:, 1 * H:2 * H])
            gg = jnp.tanh(g[:, 2 * H:3 * H])
            o = jax.nn.sigmoid(g[:, 3 * H:4 * H])
            c = f * c + i * gg
            h = o * jnp.tanh(c)
            return (h, c), h

        _, seq = lax.scan(step, (init_h[l], init_c[l]), seq)
    lstm_out = seq.transpose(1, 0, 2).reshape(B * S, H)
    pred = jnp.tanh(_bdot(lstm_out, nat["w_pred"]) + nat["b_pred"])
    mask = q_t_data > 0
    diff = jnp.where(mask, pred - target, 0.0)
    loss = jnp.sum(diff * diff) / jnp.maximum(
        jnp.sum(mask).astype(jnp.float32), 1.0)
    return loss, pred


if __name__ == "__main__":
    key = jax.random.PRNGKey(0)
    B, S = 2, 8
    feature_dim, x_embed_dim, hidden_dim, hidden_layers = 32, 32, 32, 2
    n_question = 15
    Q1 = n_question + 1

    k_x, k_qt, k_tgt, k_h, k_c, k_p = jax.random.split(key, 6)

    nat = make_natural_params(k_p, feature_dim, n_question, x_embed_dim,
                              hidden_dim, hidden_layers)
    kp = pack_params(nat, feature_dim, x_embed_dim, hidden_dim, Q1,
                     hidden_layers)

    x_data = jax.random.normal(k_x, (B, S, feature_dim), jnp.float32)
    q_t_data = jax.random.bernoulli(k_qt, 0.3, (B * S, Q1)).astype(jnp.int32)
    target = jax.random.uniform(k_tgt, (B * S, Q1), jnp.float32)
    # torch.randn initial hidden / cell states (deterministic here)
    init_h = jax.random.normal(k_h, (hidden_layers, B, hidden_dim), jnp.float32)
    init_c = jax.random.normal(k_c, (hidden_layers, B, hidden_dim), jnp.float32)

    outs = dkt_forward(kp, x_data, q_t_data, target, init_h, init_c)
    jax.block_until_ready(outs)
    loss, filtered_pred, filtered_target, pred_out = outs

    # Correctness check against pure-JAX reference.
    ref_loss, ref_pred = dkt_reference(nat, x_data, q_t_data, target,
                                       init_h, init_c)
    assert pred_out.shape == (B * S, Q1)
    assert bool(jnp.isfinite(loss))
    assert bool(jnp.allclose(pred_out, ref_pred, atol=5e-3, rtol=5e-3))
    assert bool(jnp.allclose(loss, ref_loss, atol=5e-3, rtol=5e-3))
    print("KERNEL_OK")
</pallas_src>

<mosaic_0001>
module attributes {stable_mosaic.version = 11 : i64} {
  func.func @dkt_fused_kernel(%arg0: memref<64x32xf32, #tpu.memory_space<vmem>>, %arg1: memref<32x128xbf16, #tpu.memory_space<vmem>>, %arg2: memref<1x128xf32, #tpu.memory_space<vmem>>, %arg3: memref<2x128x512xbf16, #tpu.memory_space<vmem>>, %arg4: memref<2x128x512xbf16, #tpu.memory_space<vmem>>, %arg5: memref<2x1x512xf32, #tpu.memory_space<vmem>>, %arg6: memref<2x8x128xf32, #tpu.memory_space<vmem>>, %arg7: memref<2x8x128xf32, #tpu.memory_space<vmem>>, %arg8: memref<128x128xbf16, #tpu.memory_space<vmem>>, %arg9: memref<1x128xf32, #tpu.memory_space<vmem>>, %arg10: memref<64x128xi32, #tpu.memory_space<vmem>>, %arg11: memref<64x128xf32, #tpu.memory_space<vmem>>, %arg12: memref<64x128xf32, #tpu.memory_space<vmem>>, %arg13: memref<1x1xf32, #tpu.memory_space<smem>>, %arg14: memref<64x128xf32, #tpu.memory_space<vmem>>, %arg15: memref<64x512xf32, #tpu.memory_space<vmem>>) attributes {dimension_semantics = [], scalar_prefetch = 0 : i64, scratch_operands = 2 : i64, tpu.core_type = #tpu.core_type<tc>} {
    %c0 = arith.constant 0 : index
    %c0_0 = arith.constant 0 : index
    %0 = vector.load %arg0[%c0, %c0_0] : memref<64x32xf32, #tpu.memory_space<vmem>>, vector<64x32xf32>
    %1 = arith.truncf %0 : vector<64x32xf32> to vector<64x32xbf16>
    %c0_1 = arith.constant 0 : index
    %c0_2 = arith.constant 0 : index
    %2 = vector.load %arg1[%c0_1, %c0_2] : memref<32x128xbf16, #tpu.memory_space<vmem>>, vector<32x128xbf16>
    %cst = arith.constant dense<0.000000e+00> : vector<64x128xf32>
    %3 = tpu.matmul %1, %2, %cst {dimension_numbers = #tpu.dot_dimension_numbers<[1], [0], [0], [1], [0, 0, 1, 1], [], []>} : vector<64x32xbf16>, vector<32x128xbf16>, vector<64x128xf32> -> vector<64x128xf32>
    %c0_3 = arith.constant 0 : index
    %c0_4 = arith.constant 0 : index
    %4 = vector.load %arg2[%c0_3, %c0_4] : memref<1x128xf32, #tpu.memory_space<vmem>>, vector<1x128xf32>
    %5 = vector.broadcast %4 : vector<1x128xf32> to vector<64x128xf32>
    %6 = arith.addf %3, %5 : vector<64x128xf32>
    %c0_5 = arith.constant 0 : index
    %c0_6 = arith.constant 0 : index
    %7 = vector.load %arg14[%c0_5, %c0_6] : memref<64x128xf32, #tpu.memory_space<vmem>>, vector<64x128xf32>
    tpu.vector_store %arg14[%c0_5, %c0_6], %6 {strides = array<i32>} : memref<64x128xf32, #tpu.memory_space<vmem>>, vector<64x128xf32>,
    %c0_7 = arith.constant 0 : index
    %c0_8 = arith.constant 0 : index
    %8 = vector.load %arg14[%c0_7, %c0_8] : memref<64x128xf32, #tpu.memory_space<vmem>>, vector<64x128xf32>
    %9 = arith.truncf %8 : vector<64x128xf32> to vector<64x128xbf16>
    %c0_9 = arith.constant 0 : index
    %c0_10 = arith.constant 0 : index
    %c0_11 = arith.constant 0 : index
    %10 = vector.load %arg3[%c0_9, %c0_10, %c0_11] : memref<2x128x512xbf16, #tpu.memory_space<vmem>>, vector<1x128x512xbf16>
    %11 = vector.shape_cast %10 : vector<1x128x512xbf16> to vector<128x512xbf16>
    %cst_12 = arith.constant dense<0.000000e+00> : vector<64x512xf32>
    %12 = tpu.matmul %9, %11, %cst_12 {dimension_numbers = #tpu.dot_dimension_numbers<[1], [0], [0], [1], [0, 0, 1, 1], [], []>} : vector<64x128xbf16>, vector<128x512xbf16>, vector<64x512xf32> -> vector<64x512xf32>
    %c0_13 = arith.constant 0 : index
    %c0_14 = arith.constant 0 : index
    %c0_15 = arith.constant 0 : index
    %13 = vector.load %arg5[%c0_13, %c0_14, %c0_15] : memref<2x1x512xf32, #tpu.memory_space<vmem>>, vector<1x1x512xf32>
    %14 = vector.shape_cast %13 : vector<1x1x512xf32> to vector<1x512xf32>
    %15 = vector.broadcast %14 : vector<1x512xf32> to vector<64x512xf32>
    %16 = arith.addf %12, %15 : vector<64x512xf32>
    %c0_16 = arith.constant 0 : index
    %c0_17 = arith.constant 0 : index
    %17 = vector.load %arg15[%c0_16, %c0_17] : memref<64x512xf32, #tpu.memory_space<vmem>>, vector<64x512xf32>
    tpu.vector_store %arg15[%c0_16, %c0_17], %16 {strides = array<i32>} : memref<64x512xf32, #tpu.memory_space<vmem>>, vector<64x512xf32>,
    %c0_18 = arith.constant 0 : index
    %c0_19 = arith.constant 0 : index
    %c0_20 = arith.constant 0 : index
    %18 = vector.load %arg6[%c0_18, %c0_19, %c0_20] : memref<2x8x128xf32, #tpu.memory_space<vmem>>, vector<1x8x128xf32>
    %19 = vector.shape_cast %18 : vector<1x8x128xf32> to vector<8x128xf32>
    %c0_21 = arith.constant 0 : index
    %c0_22 = arith.constant 0 : index
    %c0_23 = arith.constant 0 : index
    %20 = vector.load %arg7[%c0_21, %c0_22, %c0_23] : memref<2x8x128xf32, #tpu.memory_space<vmem>>, vector<1x8x128xf32>
    %21 = vector.shape_cast %20 : vector<1x8x128xf32> to vector<8x128xf32>
    %c0_i32 = arith.constant 0 : i32
    %c8_i32 = arith.constant 8 : i32
    %22 = arith.muli %c0_i32, %c8_i32 : i32
    %23 = tpu.assume_multiple %22, 8 : i32
    %24 = arith.index_cast %23 : i32 to index
    %c0_24 = arith.constant 0 : index
    %25 = vector.load %arg15[%24, %c0_24] : memref<64x512xf32, #tpu.memory_space<vmem>>, vector<8x512xf32>
    %26 = arith.truncf %19 : vector<8x128xf32> to vector<8x128xbf16>
    %c0_25 = arith.constant 0 : index
    %c0_26 = arith.constant 0 : index
    %c0_27 = arith.constant 0 : index
    %27 = vector.load %arg4[%c0_25, %c0_26, %c0_27] : memref<2x128x512xbf16, #tpu.memory_space<vmem>>, vector<1x128x512xbf16>
    %28 = vector.shape_cast %27 : vector<1x128x512xbf16> to vector<128x512xbf16>
    %cst_28 = arith.constant dense<0.000000e+00> : vector<8x512xf32>
    %29 = tpu.matmul %26, %28, %cst_28 {dimension_numbers = #tpu.dot_dimension_numbers<[1], [0], [0], [1], [0, 0, 1, 1], [], []>} : vector<8x128xbf16>, vector<128x512xbf16>, vector<8x512xf32> -> vector<8x512xf32>
    %30 = arith.addf %25, %29 : vector<8x512xf32>
    %31 = vector.extract_strided_slice %30 {offsets = [0, 0], sizes = [8, 128], strides = [1, 1]} : vector<8x512xf32> to vector<8x128xf32>
    %32 = arith.negf %31 : vector<8x128xf32>
    %33 = math.exp %32 : vector<8x128xf32>
    %cst_29 = arith.constant 1.000000e+00 : f32
    %34 = vector.broadcast %cst_29 : f32 to vector<8x128xf32>
    %35 = arith.addf %34, %33 : vector<8x128xf32>
    %36 = arith.divf %34, %35 : vector<8x128xf32>
    %37 = vector.extract_strided_slice %30 {offsets = [0, 128], sizes = [8, 128], strides = [1, 1]} : vector<8x512xf32> to vector<8x128xf32>
    %38 = arith.negf %37 : vector<8x128xf32>
    %39 = math.exp %38 : vector<8x128xf32>
    %cst_30 = arith.constant 1.000000e+00 : f32
    %40 = vector.broadcast %cst_30 : f32 to vector<8x128xf32>
    %41 = arith.addf %40, %39 : vector<8x128xf32>
    %42 = arith.divf %40, %41 : vector<8x128xf32>
    %43 = vector.extract_strided_slice %30 {offsets = [0, 256], sizes = [8, 128], strides = [1, 1]} : vector<8x512xf32> to vector<8x128xf32>
    %44 = math.tanh %43 : vector<8x128xf32>
    %45 = vector.extract_strided_slice %30 {offsets = [0, 384], sizes = [8, 128], strides = [1, 1]} : vector<8x512xf32> to vector<8x128xf32>
    %46 = arith.negf %45 : vector<8x128xf32>
    %47 = math.exp %46 : vector<8x128xf32>
    %cst_31 = arith.constant 1.000000e+00 : f32
    %48 = vector.broadcast %cst_31 : f32 to vector<8x128xf32>
    %49 = arith.addf %48, %47 : vector<8x128xf32>
    %50 = arith.divf %48, %49 : vector<8x128xf32>
    %51 = arith.mulf %42, %21 : vector<8x128xf32>
    %52 = arith.mulf %36, %44 : vector<8x128xf32>
    %53 = arith.addf %51, %52 : vector<8x128xf32>
    %54 = math.tanh %53 : vector<8x128xf32>
    %55 = arith.mulf %50, %54 : vector<8x128xf32>
    %56 = arith.index_cast %23 : i32 to index
    %c0_32 = arith.constant 0 : index
    %57 = vector.load %arg14[%56, %c0_32] : memref<64x128xf32, #tpu.memory_space<vmem>>, vector<8x128xf32>
    tpu.vector_store %arg14[%56, %c0_32], %55 {strides = array<i32>} : memref<64x128xf32, #tpu.memory_space<vmem>>, vector<8x128xf32>,
    %c1_i32 = arith.constant 1 : i32
    %c8_i32_33 = arith.constant 8 : i32
    %58 = arith.muli %c1_i32, %c8_i32_33 : i32
    %59 = tpu.assume_multiple %58, 8 : i32
    %60 = arith.index_cast %59 : i32 to index
    %c0_34 = arith.constant 0 : index
    %61 = vector.load %arg15[%60, %c0_34] : memref<64x512xf32, #tpu.memory_space<vmem>>, vector<8x512xf32>
    %62 = arith.truncf %55 : vector<8x128xf32> to vector<8x128xbf16>
    %c0_35 = arith.constant 0 : index
    %c0_36 = arith.constant 0 : index
    %c0_37 = arith.constant 0 : index
    %63 = vector.load %arg4[%c0_35, %c0_36, %c0_37] : memref<2x128x512xbf16, #tpu.memory_space<vmem>>, vector<1x128x512xbf16>
    %64 = vector.shape_cast %63 : vector<1x128x512xbf16> to vector<128x512xbf16>
    %cst_38 = arith.constant dense<0.000000e+00> : vector<8x512xf32>
    %65 = tpu.matmul %62, %64, %cst_38 {dimension_numbers = #tpu.dot_dimension_numbers<[1], [0], [0], [1], [0, 0, 1, 1], [], []>} : vector<8x128xbf16>, vector<128x512xbf16>, vector<8x512xf32> -> vector<8x512xf32>
    %66 = arith.addf %61, %65 : vector<8x512xf32>
    %67 = vector.extract_strided_slice %66 {offsets = [0, 0], sizes = [8, 128], strides = [1, 1]} : vector<8x512xf32> to vector<8x128xf32>
    %68 = arith.negf %67 : vector<8x128xf32>
    %69 = math.exp %68 : vector<8x128xf32>
    %cst_39 = arith.constant 1.000000e+00 : f32
    %70 = vector.broadcast %cst_39 : f32 to vector<8x128xf32>
    %71 = arith.addf %70, %69 : vector<8x128xf32>
    %72 = arith.divf %70, %71 : vector<8x128xf32>
    %73 = vector.extract_strided_slice %66 {offsets = [0, 128], sizes = [8, 128], strides = [1, 1]} : vector<8x512xf32> to vector<8x128xf32>
    %74 = arith.negf %73 : vector<8x128xf32>
    %75 = math.exp %74 : vector<8x128xf32>
    %cst_40 = arith.constant 1.000000e+00 : f32
    %76 = vector.broadcast %cst_40 : f32 to vector<8x128xf32>
    %77 = arith.addf %76, %75 : vector<8x128xf32>
    %78 = arith.divf %76, %77 : vector<8x128xf32>
    %79 = vector.extract_strided_slice %66 {offsets = [0, 256], sizes = [8, 128], strides = [1, 1]} : vector<8x512xf32> to vector<8x128xf32>
    %80 = math.tanh %79 : vector<8x128xf32>
    %81 = vector.extract_strided_slice %66 {offsets = [0, 384], sizes = [8, 128], strides = [1, 1]} : vector<8x512xf32> to vector<8x128xf32>
    %82 = arith.negf %81 : vector<8x128xf32>
    %83 = math.exp %82 : vector<8x128xf32>
    %cst_41 = arith.constant 1.000000e+00 : f32
    %84 = vector.broadcast %cst_41 : f32 to vector<8x128xf32>
    %85 = arith.addf %84, %83 : vector<8x128xf32>
    %86 = arith.divf %84, %85 : vector<8x128xf32>
    %87 = arith.mulf %78, %53 : vector<8x128xf32>
    %88 = arith.mulf %72, %80 : vector<8x128xf32>
    %89 = arith.addf %87, %88 : vector<8x128xf32>
    %90 = math.tanh %89 : vector<8x128xf32>
    %91 = arith.mulf %86, %90 : vector<8x128xf32>
    %92 = arith.index_cast %59 : i32 to index
    %c0_42 = arith.constant 0 : index
    %93 = vector.load %arg14[%92, %c0_42] : memref<64x128xf32, #tpu.memory_space<vmem>>, vector<8x128xf32>
    tpu.vector_store %arg14[%92, %c0_42], %91 {strides = array<i32>} : memref<64x128xf32, #tpu.memory_space<vmem>>, vector<8x128xf32>,
    %c2_i32 = arith.constant 2 : i32
    %c8_i32_43 = arith.constant 8 : i32
    %94 = arith.muli %c2_i32, %c8_i32_43 : i32
    %95 = tpu.assume_multiple %94, 8 : i32
    %96 = arith.index_cast %95 : i32 to index
    %c0_44 = arith.constant 0 : index
    %97 = vector.load %arg15[%96, %c0_44] : memref<64x512xf32, #tpu.memory_space<vmem>>, vector<8x512xf32>
    %98 = arith.truncf %91 : vector<8x128xf32> to vector<8x128xbf16>
    %c0_45 = arith.constant 0 : index
    %c0_46 = arith.constant 0 : index
    %c0_47 = arith.constant 0 : index
    %99 = vector.load %arg4[%c0_45, %c0_46, %c0_47] : memref<2x128x512xbf16, #tpu.memory_space<vmem>>, vector<1x128x512xbf16>
    %100 = vector.shape_cast %99 : vector<1x128x512xbf16> to vector<128x512xbf16>
    %cst_48 = arith.constant dense<0.000000e+00> : vector<8x512xf32>
    %101 = tpu.matmul %98, %100, %cst_48 {dimension_numbers = #tpu.dot_dimension_numbers<[1], [0], [0], [1], [0, 0, 1, 1], [], []>} : vector<8x128xbf16>, vector<128x512xbf16>, vector<8x512xf32> -> vector<8x512xf32>
    %102 = arith.addf %97, %101 : vector<8x512xf32>
    %103 = vector.extract_strided_slice %102 {offsets = [0, 0], sizes = [8, 128], strides = [1, 1]} : vector<8x512xf32> to vector<8x128xf32>
    %104 = arith.negf %103 : vector<8x128xf32>
    %105 = math.exp %104 : vector<8x128xf32>
    %cst_49 = arith.constant 1.000000e+00 : f32
    %106 = vector.broadcast %cst_49 : f32 to vector<8x128xf32>
    %107 = arith.addf %106, %105 : vector<8x128xf32>
    %108 = arith.divf %106, %107 : vector<8x128xf32>
    %109 = vector.extract_strided_slice %102 {offsets = [0, 128], sizes = [8, 128], strides = [1, 1]} : vector<8x512xf32> to vector<8x128xf32>
    %110 = arith.negf %109 : vector<8x128xf32>
    %111 = math.exp %110 : vector<8x128xf32>
    %cst_50 = arith.constant 1.000000e+00 : f32
    %112 = vector.broadcast %cst_50 : f32 to vector<8x128xf32>
    %113 = arith.addf %112, %111 : vector<8x128xf32>
    %114 = arith.divf %112, %113 : vector<8x128xf32>
    %115 = vector.extract_strided_slice %102 {offsets = [0, 256], sizes = [8, 128], strides = [1, 1]} : vector<8x512xf32> to vector<8x128xf32>
    %116 = math.tanh %115 : vector<8x128xf32>
    %117 = vector.extract_strided_slice %102 {offsets = [0, 384], sizes = [8, 128], strides = [1, 1]} : vector<8x512xf32> to vector<8x128xf32>
    %118 = arith.negf %117 : vector<8x128xf32>
    %119 = math.exp %118 : vector<8x128xf32>
    %cst_51 = arith.constant 1.000000e+00 : f32
    %120 = vector.broadcast %cst_51 : f32 to vector<8x128xf32>
    %121 = arith.addf %120, %119 : vector<8x128xf32>
    %122 = arith.divf %120, %121 : vector<8x128xf32>
    %123 = arith.mulf %114, %89 : vector<8x128xf32>
    %124 = arith.mulf %108, %116 : vector<8x128xf32>
    %125 = arith.addf %123, %124 : vector<8x128xf32>
    %126 = math.tanh %125 : vector<8x128xf32>
    %127 = arith.mulf %122, %126 : vector<8x128xf32>
    %128 = arith.index_cast %95 : i32 to index
    %c0_52 = arith.constant 0 : index
    %129 = vector.load %arg14[%128, %c0_52] : memref<64x128xf32, #tpu.memory_space<vmem>>, vector<8x128xf32>
    tpu.vector_store %arg14[%128, %c0_52], %127 {strides = array<i32>} : memref<64x128xf32, #tpu.memory_space<vmem>>, vector<8x128xf32>,
    %c3_i32 = arith.constant 3 : i32
    %c8_i32_53 = arith.constant 8 : i32
    %130 = arith.muli %c3_i32, %c8_i32_53 : i32
    %131 = tpu.assume_multiple %130, 8 : i32
    %132 = arith.index_cast %131 : i32 to index
    %c0_54 = arith.constant 0 : index
    %133 = vector.load %arg15[%132, %c0_54] : memref<64x512xf32, #tpu.memory_space<vmem>>, vector<8x512xf32>
    %134 = arith.truncf %127 : vector<8x128xf32> to vector<8x128xbf16>
    %c0_55 = arith.constant 0 : index
    %c0_56 = arith.constant 0 : index
    %c0_57 = arith.constant 0 : index
    %135 = vector.load %arg4[%c0_55, %c0_56, %c0_57] : memref<2x128x512xbf16, #tpu.memory_space<vmem>>, vector<1x128x512xbf16>
    %136 = vector.shape_cast %135 : vector<1x128x512xbf16> to vector<128x512xbf16>
    %cst_58 = arith.constant dense<0.000000e+00> : vector<8x512xf32>
    %137 = tpu.matmul %134, %136, %cst_58 {dimension_numbers = #tpu.dot_dimension_numbers<[1], [0], [0], [1], [0, 0, 1, 1], [], []>} : vector<8x128xbf16>, vector<128x512xbf16>, vector<8x512xf32> -> vector<8x512xf32>
    %138 = arith.addf %133, %137 : vector<8x512xf32>
    %139 = vector.extract_strided_slice %138 {offsets = [0, 0], sizes = [8, 128], strides = [1, 1]} : vector<8x512xf32> to vector<8x128xf32>
    %140 = arith.negf %139 : vector<8x128xf32>
    %141 = math.exp %140 : vector<8x128xf32>
    %cst_59 = arith.constant 1.000000e+00 : f32
    %142 = vector.broadcast %cst_59 : f32 to vector<8x128xf32>
    %143 = arith.addf %142, %141 : vector<8x128xf32>
    %144 = arith.divf %142, %143 : vector<8x128xf32>
    %145 = vector.extract_strided_slice %138 {offsets = [0, 128], sizes = [8, 128], strides = [1, 1]} : vector<8x512xf32> to vector<8x128xf32>
    %146 = arith.negf %145 : vector<8x128xf32>
    %147 = math.exp %146 : vector<8x128xf32>
    %cst_60 = arith.constant 1.000000e+00 : f32
    %148 = vector.broadcast %cst_60 : f32 to vector<8x128xf32>
    %149 = arith.addf %148, %147 : vector<8x128xf32>
    %150 = arith.divf %148, %149 : vector<8x128xf32>
    %151 = vector.extract_strided_slice %138 {offsets = [0, 256], sizes = [8, 128], strides = [1, 1]} : vector<8x512xf32> to vector<8x128xf32>
    %152 = math.tanh %151 : vector<8x128xf32>
    %153 = vector.extract_strided_slice %138 {offsets = [0, 384], sizes = [8, 128], strides = [1, 1]} : vector<8x512xf32> to vector<8x128xf32>
    %154 = arith.negf %153 : vector<8x128xf32>
    %155 = math.exp %154 : vector<8x128xf32>
    %cst_61 = arith.constant 1.000000e+00 : f32
    %156 = vector.broadcast %cst_61 : f32 to vector<8x128xf32>
    %157 = arith.addf %156, %155 : vector<8x128xf32>
    %158 = arith.divf %156, %157 : vector<8x128xf32>
    %159 = arith.mulf %150, %125 : vector<8x128xf32>
    %160 = arith.mulf %144, %152 : vector<8x128xf32>
    %161 = arith.addf %159, %160 : vector<8x128xf32>
    %162 = math.tanh %161 : vector<8x128xf32>
    %163 = arith.mulf %158, %162 : vector<8x128xf32>
    %164 = arith.index_cast %131 : i32 to index
    %c0_62 = arith.constant 0 : index
    %165 = vector.load %arg14[%164, %c0_62] : memref<64x128xf32, #tpu.memory_space<vmem>>, vector<8x128xf32>
    tpu.vector_store %arg14[%164, %c0_62], %163 {strides = array<i32>} : memref<64x128xf32, #tpu.memory_space<vmem>>, vector<8x128xf32>,
    %c4_i32 = arith.constant 4 : i32
    %c8_i32_63 = arith.constant 8 : i32
    %166 = arith.muli %c4_i32, %c8_i32_63 : i32
    %167 = tpu.assume_multiple %166, 8 : i32
    %168 = arith.index_cast %167 : i32 to index
    %c0_64 = arith.constant 0 : index
    %169 = vector.load %arg15[%168, %c0_64] : memref<64x512xf32, #tpu.memory_space<vmem>>, vector<8x512xf32>
    %170 = arith.truncf %163 : vector<8x128xf32> to vector<8x128xbf16>
    %c0_65 = arith.constant 0 : index
    %c0_66 = arith.constant 0 : index
    %c0_67 = arith.constant 0 : index
    %171 = vector.load %arg4[%c0_65, %c0_66, %c0_67] : memref<2x128x512xbf16, #tpu.memory_space<vmem>>, vector<1x128x512xbf16>
    %172 = vector.shape_cast %171 : vector<1x128x512xbf16> to vector<128x512xbf16>
    %cst_68 = arith.constant dense<0.000000e+00> : vector<8x512xf32>
    %173 = tpu.matmul %170, %172, %cst_68 {dimension_numbers = #tpu.dot_dimension_numbers<[1], [0], [0], [1], [0, 0, 1, 1], [], []>} : vector<8x128xbf16>, vector<128x512xbf16>, vector<8x512xf32> -> vector<8x512xf32>
    %174 = arith.addf %169, %173 : vector<8x512xf32>
    %175 = vector.extract_strided_slice %174 {offsets = [0, 0], sizes = [8, 128], strides = [1, 1]} : vector<8x512xf32> to vector<8x128xf32>
    %176 = arith.negf %175 : vector<8x128xf32>
    %177 = math.exp %176 : vector<8x128xf32>
    %cst_69 = arith.constant 1.000000e+00 : f32
    %178 = vector.broadcast %cst_69 : f32 to vector<8x128xf32>
    %179 = arith.addf %178, %177 : vector<8x128xf32>
    %180 = arith.divf %178, %179 : vector<8x128xf32>
    %181 = vector.extract_strided_slice %174 {offsets = [0, 128], sizes = [8, 128], strides = [1, 1]} : vector<8x512xf32> to vector<8x128xf32>
    %182 = arith.negf %181 : vector<8x128xf32>
    %183 = math.exp %182 : vector<8x128xf32>
    %cst_70 = arith.constant 1.000000e+00 : f32
    %184 = vector.broadcast %cst_70 : f32 to vector<8x128xf32>
    %185 = arith.addf %184, %183 : vector<8x128xf32>
    %186 = arith.divf %184, %185 : vector<8x128xf32>
    %187 = vector.extract_strided_slice %174 {offsets = [0, 256], sizes = [8, 128], strides = [1, 1]} : vector<8x512xf32> to vector<8x128xf32>
    %188 = math.tanh %187 : vector<8x128xf32>
    %189 = vector.extract_strided_slice %174 {offsets = [0, 384], sizes = [8, 128], strides = [1, 1]} : vector<8x512xf32> to vector<8x128xf32>
    %190 = arith.negf %189 : vector<8x128xf32>
    %191 = math.exp %190 : vector<8x128xf32>
    %cst_71 = arith.constant 1.000000e+00 : f32
    %192 = vector.broadcast %cst_71 : f32 to vector<8x128xf32>
    %193 = arith.addf %192, %191 : vector<8x128xf32>
    %194 = arith.divf %192, %193 : vector<8x128xf32>
    %195 = arith.mulf %186, %161 : vector<8x128xf32>
    %196 = arith.mulf %180, %188 : vector<8x128xf32>
    %197 = arith.addf %195, %196 : vector<8x128xf32>
    %198 = math.tanh %197 : vector<8x128xf32>
    %199 = arith.mulf %194, %198 : vector<8x128xf32>
    %200 = arith.index_cast %167 : i32 to index
    %c0_72 = arith.constant 0 : index
    %201 = vector.load %arg14[%200, %c0_72] : memref<64x128xf32, #tpu.memory_space<vmem>>, vector<8x128xf32>
    tpu.vector_store %arg14[%200, %c0_72], %199 {strides = array<i32>} : memref<64x128xf32, #tpu.memory_space<vmem>>, vector<8x128xf32>,
    %c5_i32 = arith.constant 5 : i32
    %c8_i32_73 = arith.constant 8 : i32
    %202 = arith.muli %c5_i32, %c8_i32_73 : i32
    %203 = tpu.assume_multiple %202, 8 : i32
    %204 = arith.index_cast %203 : i32 to index
    %c0_74 = arith.constant 0 : index
    %205 = vector.load %arg15[%204, %c0_74] : memref<64x512xf32, #tpu.memory_space<vmem>>, vector<8x512xf32>
    %206 = arith.truncf %199 : vector<8x128xf32> to vector<8x128xbf16>
    %c0_75 = arith.constant 0 : index
    %c0_76 = arith.constant 0 : index
    %c0_77 = arith.constant 0 : index
    %207 = vector.load %arg4[%c0_75, %c0_76, %c0_77] : memref<2x128x512xbf16, #tpu.memory_space<vmem>>, vector<1x128x512xbf16>
    %208 = vector.shape_cast %207 : vector<1x128x512xbf16> to vector<128x512xbf16>
    %cst_78 = arith.constant dense<0.000000e+00> : vector<8x512xf32>
    %209 = tpu.matmul %206, %208, %cst_78 {dimension_numbers = #tpu.dot_dimension_numbers<[1], [0], [0], [1], [0, 0, 1, 1], [], []>} : vector<8x128xbf16>, vector<128x512xbf16>, vector<8x512xf32> -> vector<8x512xf32>
    %210 = arith.addf %205, %209 : vector<8x512xf32>
    %211 = vector.extract_strided_slice %210 {offsets = [0, 0], sizes = [8, 128], strides = [1, 1]} : vector<8x512xf32> to vector<8x128xf32>
    %212 = arith.negf %211 : vector<8x128xf32>
    %213 = math.exp %212 : vector<8x128xf32>
    %cst_79 = arith.constant 1.000000e+00 : f32
    %214 = vector.broadcast %cst_79 : f32 to vector<8x128xf32>
    %215 = arith.addf %214, %213 : vector<8x128xf32>
    %216 = arith.divf %214, %215 : vector<8x128xf32>
    %217 = vector.extract_strided_slice %210 {offsets = [0, 128], sizes = [8, 128], strides = [1, 1]} : vector<8x512xf32> to vector<8x128xf32>
    %218 = arith.negf %217 : vector<8x128xf32>
    %219 = math.exp %218 : vector<8x128xf32>
    %cst_80 = arith.constant 1.000000e+00 : f32
    %220 = vector.broadcast %cst_80 : f32 to vector<8x128xf32>
    %221 = arith.addf %220, %219 : vector<8x128xf32>
    %222 = arith.divf %220, %221 : vector<8x128xf32>
    %223 = vector.extract_strided_slice %210 {offsets = [0, 256], sizes = [8, 128], strides = [1, 1]} : vector<8x512xf32> to vector<8x128xf32>
    %224 = math.tanh %223 : vector<8x128xf32>
    %225 = vector.extract_strided_slice %210 {offsets = [0, 384], sizes = [8, 128], strides = [1, 1]} : vector<8x512xf32> to vector<8x128xf32>
    %226 = arith.negf %225 : vector<8x128xf32>
    %227 = math.exp %226 : vector<8x128xf32>
    %cst_81 = arith.constant 1.000000e+00 : f32
    %228 = vector.broadcast %cst_81 : f32 to vector<8x128xf32>
    %229 = arith.addf %228, %227 : vector<8x128xf32>
    %230 = arith.divf %228, %229 : vector<8x128xf32>
    %231 = arith.mulf %222, %197 : vector<8x128xf32>
    %232 = arith.mulf %216, %224 : vector<8x128xf32>
    %233 = arith.addf %231, %232 : vector<8x128xf32>
    %234 = math.tanh %233 : vector<8x128xf32>
    %235 = arith.mulf %230, %234 : vector<8x128xf32>
    %236 = arith.index_cast %203 : i32 to index
    %c0_82 = arith.constant 0 : index
    %237 = vector.load %arg14[%236, %c0_82] : memref<64x128xf32, #tpu.memory_space<vmem>>, vector<8x128xf32>
    tpu.vector_store %arg14[%236, %c0_82], %235 {strides = array<i32>} : memref<64x128xf32, #tpu.memory_space<vmem>>, vector<8x128xf32>,
    %c6_i32 = arith.constant 6 : i32
    %c8_i32_83 = arith.constant 8 : i32
    %238 = arith.muli %c6_i32, %c8_i32_83 : i32
    %239 = tpu.assume_multiple %238, 8 : i32
    %240 = arith.index_cast %239 : i32 to index
    %c0_84 = arith.constant 0 : index
    %241 = vector.load %arg15[%240, %c0_84] : memref<64x512xf32, #tpu.memory_space<vmem>>, vector<8x512xf32>
    %242 = arith.truncf %235 : vector<8x128xf32> to vector<8x128xbf16>
    %c0_85 = arith.constant 0 : index
    %c0_86 = arith.constant 0 : index
    %c0_87 = arith.constant 0 : index
    %243 = vector.load %arg4[%c0_85, %c0_86, %c0_87] : memref<2x128x512xbf16, #tpu.memory_space<vmem>>, vector<1x128x512xbf16>
    %244 = vector.shape_cast %243 : vector<1x128x512xbf16> to vector<128x512xbf16>
    %cst_88 = arith.constant dense<0.000000e+00> : vector<8x512xf32>
    %245 = tpu.matmul %242, %244, %cst_88 {dimension_numbers = #tpu.dot_dimension_numbers<[1], [0], [0], [1], [0, 0, 1, 1], [], []>} : vector<8x128xbf16>, vector<128x512xbf16>, vector<8x512xf32> -> vector<8x512xf32>
    %246 = arith.addf %241, %245 : vector<8x512xf32>
    %247 = vector.extract_strided_slice %246 {offsets = [0, 0], sizes = [8, 128], strides = [1, 1]} : vector<8x512xf32> to vector<8x128xf32>
    %248 = arith.negf %247 : vector<8x128xf32>
    %249 = math.exp %248 : vector<8x128xf32>
    %cst_89 = arith.constant 1.000000e+00 : f32
    %250 = vector.broadcast %cst_89 : f32 to vector<8x128xf32>
    %251 = arith.addf %250, %249 : vector<8x128xf32>
    %252 = arith.divf %250, %251 : vector<8x128xf32>
    %253 = vector.extract_strided_slice %246 {offsets = [0, 128], sizes = [8, 128], strides = [1, 1]} : vector<8x512xf32> to vector<8x128xf32>
    %254 = arith.negf %253 : vector<8x128xf32>
    %255 = math.exp %254 : vector<8x128xf32>
    %cst_90 = arith.constant 1.000000e+00 : f32
    %256 = vector.broadcast %cst_90 : f32 to vector<8x128xf32>
    %257 = arith.addf %256, %255 : vector<8x128xf32>
    %258 = arith.divf %256, %257 : vector<8x128xf32>
    %259 = vector.extract_strided_slice %246 {offsets = [0, 256], sizes = [8, 128], strides = [1, 1]} : vector<8x512xf32> to vector<8x128xf32>
    %260 = math.tanh %259 : vector<8x128xf32>
    %261 = vector.extract_strided_slice %246 {offsets = [0, 384], sizes = [8, 128], strides = [1, 1]} : vector<8x512xf32> to vector<8x128xf32>
    %262 = arith.negf %261 : vector<8x128xf32>
    %263 = math.exp %262 : vector<8x128xf32>
    %cst_91 = arith.constant 1.000000e+00 : f32
    %264 = vector.broadcast %cst_91 : f32 to vector<8x128xf32>
    %265 = arith.addf %264, %263 : vector<8x128xf32>
    %266 = arith.divf %264, %265 : vector<8x128xf32>
    %267 = arith.mulf %258, %233 : vector<8x128xf32>
    %268 = arith.mulf %252, %260 : vector<8x128xf32>
    %269 = arith.addf %267, %268 : vector<8x128xf32>
    %270 = math.tanh %269 : vector<8x128xf32>
    %271 = arith.mulf %266, %270 : vector<8x128xf32>
    %272 = arith.index_cast %239 : i32 to index
    %c0_92 = arith.constant 0 : index
    %273 = vector.load %arg14[%272, %c0_92] : memref<64x128xf32, #tpu.memory_space<vmem>>, vector<8x128xf32>
    tpu.vector_store %arg14[%272, %c0_92], %271 {strides = array<i32>} : memref<64x128xf32, #tpu.memory_space<vmem>>, vector<8x128xf32>,
    %c7_i32 = arith.constant 7 : i32
    %c8_i32_93 = arith.constant 8 : i32
    %274 = arith.muli %c7_i32, %c8_i32_93 : i32
    %275 = tpu.assume_multiple %274, 8 : i32
    %276 = arith.index_cast %275 : i32 to index
    %c0_94 = arith.constant 0 : index
    %277 = vector.load %arg15[%276, %c0_94] : memref<64x512xf32, #tpu.memory_space<vmem>>, vector<8x512xf32>
    %278 = arith.truncf %271 : vector<8x128xf32> to vector<8x128xbf16>
    %c0_95 = arith.constant 0 : index
    %c0_96 = arith.constant 0 : index
    %c0_97 = arith.constant 0 : index
    %279 = vector.load %arg4[%c0_95, %c0_96, %c0_97] : memref<2x128x512xbf16, #tpu.memory_space<vmem>>, vector<1x128x512xbf16>
    %280 = vector.shape_cast %279 : vector<1x128x512xbf16> to vector<128x512xbf16>
    %cst_98 = arith.constant dense<0.000000e+00> : vector<8x512xf32>
    %281 = tpu.matmul %278, %280, %cst_98 {dimension_numbers = #tpu.dot_dimension_numbers<[1], [0], [0], [1], [0, 0, 1, 1], [], []>} : vector<8x128xbf16>, vector<128x512xbf16>, vector<8x512xf32> -> vector<8x512xf32>
    %282 = arith.addf %277, %281 : vector<8x512xf32>
    %283 = vector.extract_strided_slice %282 {offsets = [0, 0], sizes = [8, 128], strides = [1, 1]} : vector<8x512xf32> to vector<8x128xf32>
    %284 = arith.negf %283 : vector<8x128xf32>
    %285 = math.exp %284 : vector<8x128xf32>
    %cst_99 = arith.constant 1.000000e+00 : f32
    %286 = vector.broadcast %cst_99 : f32 to vector<8x128xf32>
    %287 = arith.addf %286, %285 : vector<8x128xf32>
    %288 = arith.divf %286, %287 : vector<8x128xf32>
    %289 = vector.extract_strided_slice %282 {offsets = [0, 128], sizes = [8, 128], strides = [1, 1]} : vector<8x512xf32> to vector<8x128xf32>
    %290 = arith.negf %289 : vector<8x128xf32>
    %291 = math.exp %290 : vector<8x128xf32>
    %cst_100 = arith.constant 1.000000e+00 : f32
    %292 = vector.broadcast %cst_100 : f32 to vector<8x128xf32>
    %293 = arith.addf %292, %291 : vector<8x128xf32>
    %294 = arith.divf %292, %293 : vector<8x128xf32>
    %295 = vector.extract_strided_slice %282 {offsets = [0, 256], sizes = [8, 128], strides = [1, 1]} : vector<8x512xf32> to vector<8x128xf32>
    %296 = math.tanh %295 : vector<8x128xf32>
    %297 = vector.extract_strided_slice %282 {offsets = [0, 384], sizes = [8, 128], strides = [1, 1]} : vector<8x512xf32> to vector<8x128xf32>
    %298 = arith.negf %297 : vector<8x128xf32>
    %299 = math.exp %298 : vector<8x128xf32>
    %cst_101 = arith.constant 1.000000e+00 : f32
    %300 = vector.broadcast %cst_101 : f32 to vector<8x128xf32>
    %301 = arith.addf %300, %299 : vector<8x128xf32>
    %302 = arith.divf %300, %301 : vector<8x128xf32>
    %303 = arith.mulf %294, %269 : vector<8x128xf32>
    %304 = arith.mulf %288, %296 : vector<8x128xf32>
    %305 = arith.addf %303, %304 : vector<8x128xf32>
    %306 = math.tanh %305 : vector<8x128xf32>
    %307 = arith.mulf %302, %306 : vector<8x128xf32>
    %308 = arith.index_cast %275 : i32 to index
    %c0_102 = arith.constant 0 : index
    %309 = vector.load %arg14[%308, %c0_102] : memref<64x128xf32, #tpu.memory_space<vmem>>, vector<8x128xf32>
    tpu.vector_store %arg14[%308, %c0_102], %307 {strides = array<i32>} : memref<64x128xf32, #tpu.memory_space<vmem>>, vector<8x128xf32>,
    %c8_i32_103 = arith.constant 8 : i32
    %c0_104 = arith.constant 0 : index
    %c0_105 = arith.constant 0 : index
    %310 = vector.load %arg14[%c0_104, %c0_105] : memref<64x128xf32, #tpu.memory_space<vmem>>, vector<64x128xf32>
    %311 = arith.truncf %310 : vector<64x128xf32> to vector<64x128xbf16>
    %c1 = arith.constant 1 : index
    %c0_106 = arith.constant 0 : index
    %c0_107 = arith.constant 0 : index
    %312 = vector.load %arg3[%c1, %c0_106, %c0_107] : memref<2x128x512xbf16, #tpu.memory_space<vmem>>, vector<1x128x512xbf16>
    %313 = vector.shape_cast %312 : vector<1x128x512xbf16> to vector<128x512xbf16>
    %cst_108 = arith.constant dense<0.000000e+00> : vector<64x512xf32>
    %314 = tpu.matmul %311, %313, %cst_108 {dimension_numbers = #tpu.dot_dimension_numbers<[1], [0], [0], [1], [0, 0, 1, 1], [], []>} : vector<64x128xbf16>, vector<128x512xbf16>, vector<64x512xf32> -> vector<64x512xf32>
    %c1_109 = arith.constant 1 : index
    %c0_110 = arith.constant 0 : index
    %c0_111 = arith.constant 0 : index
    %315 = vector.load %arg5[%c1_109, %c0_110, %c0_111] : memref<2x1x512xf32, #tpu.memory_space<vmem>>, vector<1x1x512xf32>
    %316 = vector.shape_cast %315 : vector<1x1x512xf32> to vector<1x512xf32>
    %317 = vector.broadcast %316 : vector<1x512xf32> to vector<64x512xf32>
    %318 = arith.addf %314, %317 : vector<64x512xf32>
    %c0_112 = arith.constant 0 : index
    %c0_113 = arith.constant 0 : index
    %319 = vector.load %arg15[%c0_112, %c0_113] : memref<64x512xf32, #tpu.memory_space<vmem>>, vector<64x512xf32>
    tpu.vector_store %arg15[%c0_112, %c0_113], %318 {strides = array<i32>} : memref<64x512xf32, #tpu.memory_space<vmem>>, vector<64x512xf32>,
    %c1_114 = arith.constant 1 : index
    %c0_115 = arith.constant 0 : index
    %c0_116 = arith.constant 0 : index
    %320 = vector.load %arg6[%c1_114, %c0_115, %c0_116] : memref<2x8x128xf32, #tpu.memory_space<vmem>>, vector<1x8x128xf32>
    %321 = vector.shape_cast %320 : vector<1x8x128xf32> to vector<8x128xf32>
    %c1_117 = arith.constant 1 : index
    %c0_118 = arith.constant 0 : index
    %c0_119 = arith.constant 0 : index
    %322 = vector.load %arg7[%c1_117, %c0_118, %c0_119] : memref<2x8x128xf32, #tpu.memory_space<vmem>>, vector<1x8x128xf32>
    %323 = vector.shape_cast %322 : vector<1x8x128xf32> to vector<8x128xf32>
    %c0_i32_120 = arith.constant 0 : i32
    %c8_i32_121 = arith.constant 8 : i32
    %324 = arith.muli %c0_i32_120, %c8_i32_121 : i32
    %325 = tpu.assume_multiple %324, 8 : i32
    %326 = arith.index_cast %325 : i32 to index
    %c0_122 = arith.constant 0 : index
    %327 = vector.load %arg15[%326, %c0_122] : memref<64x512xf32, #tpu.memory_space<vmem>>, vector<8x512xf32>
    %328 = arith.truncf %321 : vector<8x128xf32> to vector<8x128xbf16>
    %c1_123 = arith.constant 1 : index
    %c0_124 = arith.constant 0 : index
    %c0_125 = arith.constant 0 : index
    %329 = vector.load %arg4[%c1_123, %c0_124, %c0_125] : memref<2x128x512xbf16, #tpu.memory_space<vmem>>, vector<1x128x512xbf16>
    %330 = vector.shape_cast %329 : vector<1x128x512xbf16> to vector<128x512xbf16>
    %cst_126 = arith.constant dense<0.000000e+00> : vector<8x512xf32>
    %331 = tpu.matmul %328, %330, %cst_126 {dimension_numbers = #tpu.dot_dimension_numbers<[1], [0], [0], [1], [0, 0, 1, 1], [], []>} : vector<8x128xbf16>, vector<128x512xbf16>, vector<8x512xf32> -> vector<8x512xf32>
    %332 = arith.addf %327, %331 : vector<8x512xf32>
    %333 = vector.extract_strided_slice %332 {offsets = [0, 0], sizes = [8, 128], strides = [1, 1]} : vector<8x512xf32> to vector<8x128xf32>
    %334 = arith.negf %333 : vector<8x128xf32>
    %335 = math.exp %334 : vector<8x128xf32>
    %cst_127 = arith.constant 1.000000e+00 : f32
    %336 = vector.broadcast %cst_127 : f32 to vector<8x128xf32>
    %337 = arith.addf %336, %335 : vector<8x128xf32>
    %338 = arith.divf %336, %337 : vector<8x128xf32>
    %339 = vector.extract_strided_slice %332 {offsets = [0, 128], sizes = [8, 128], strides = [1, 1]} : vector<8x512xf32> to vector<8x128xf32>
    %340 = arith.negf %339 : vector<8x128xf32>
    %341 = math.exp %340 : vector<8x128xf32>
    %cst_128 = arith.constant 1.000000e+00 : f32
    %342 = vector.broadcast %cst_128 : f32 to vector<8x128xf32>
    %343 = arith.addf %342, %341 : vector<8x128xf32>
    %344 = arith.divf %342, %343 : vector<8x128xf32>
    %345 = vector.extract_strided_slice %332 {offsets = [0, 256], sizes = [8, 128], strides = [1, 1]} : vector<8x512xf32> to vector<8x128xf32>
    %346 = math.tanh %345 : vector<8x128xf32>
    %347 = vector.extract_strided_slice %332 {offsets = [0, 384], sizes = [8, 128], strides = [1, 1]} : vector<8x512xf32> to vector<8x128xf32>
    %348 = arith.negf %347 : vector<8x128xf32>
    %349 = math.exp %348 : vector<8x128xf32>
    %cst_129 = arith.constant 1.000000e+00 : f32
    %350 = vector.broadcast %cst_129 : f32 to vector<8x128xf32>
    %351 = arith.addf %350, %349 : vector<8x128xf32>
    %352 = arith.divf %350, %351 : vector<8x128xf32>
    %353 = arith.mulf %344, %323 : vector<8x128xf32>
    %354 = arith.mulf %338, %346 : vector<8x128xf32>
    %355 = arith.addf %353, %354 : vector<8x128xf32>
    %356 = math.tanh %355 : vector<8x128xf32>
    %357 = arith.mulf %352, %356 : vector<8x128xf32>
    %358 = arith.index_cast %325 : i32 to index
    %c0_130 = arith.constant 0 : index
    %359 = vector.load %arg14[%358, %c0_130] : memref<64x128xf32, #tpu.memory_space<vmem>>, vector<8x128xf32>
    tpu.vector_store %arg14[%358, %c0_130], %357 {strides = array<i32>} : memref<64x128xf32, #tpu.memory_space<vmem>>, vector<8x128xf32>,
    %c1_i32_131 = arith.constant 1 : i32
    %c8_i32_132 = arith.constant 8 : i32
    %360 = arith.muli %c1_i32_131, %c8_i32_132 : i32
    %361 = tpu.assume_multiple %360, 8 : i32
    %362 = arith.index_cast %361 : i32 to index
    %c0_133 = arith.constant 0 : index
    %363 = vector.load %arg15[%362, %c0_133] : memref<64x512xf32, #tpu.memory_space<vmem>>, vector<8x512xf32>
    %364 = arith.truncf %357 : vector<8x128xf32> to vector<8x128xbf16>
    %c1_134 = arith.constant 1 : index
    %c0_135 = arith.constant 0 : index
    %c0_136 = arith.constant 0 : index
    %365 = vector.load %arg4[%c1_134, %c0_135, %c0_136] : memref<2x128x512xbf16, #tpu.memory_space<vmem>>, vector<1x128x512xbf16>
    %366 = vector.shape_cast %365 : vector<1x128x512xbf16> to vector<128x512xbf16>
    %cst_137 = arith.constant dense<0.000000e+00> : vector<8x512xf32>
    %367 = tpu.matmul %364, %366, %cst_137 {dimension_numbers = #tpu.dot_dimension_numbers<[1], [0], [0], [1], [0, 0, 1, 1], [], []>} : vector<8x128xbf16>, vector<128x512xbf16>, vector<8x512xf32> -> vector<8x512xf32>
    %368 = arith.addf %363, %367 : vector<8x512xf32>
    %369 = vector.extract_strided_slice %368 {offsets = [0, 0], sizes = [8, 128], strides = [1, 1]} : vector<8x512xf32> to vector<8x128xf32>
    %370 = arith.negf %369 : vector<8x128xf32>
    %371 = math.exp %370 : vector<8x128xf32>
    %cst_138 = arith.constant 1.000000e+00 : f32
    %372 = vector.broadcast %cst_138 : f32 to vector<8x128xf32>
    %373 = arith.addf %372, %371 : vector<8x128xf32>
    %374 = arith.divf %372, %373 : vector<8x128xf32>
    %375 = vector.extract_strided_slice %368 {offsets = [0, 128], sizes = [8, 128], strides = [1, 1]} : vector<8x512xf32> to vector<8x128xf32>
    %376 = arith.negf %375 : vector<8x128xf32>
    %377 = math.exp %376 : vector<8x128xf32>
    %cst_139 = arith.constant 1.000000e+00 : f32
    %378 = vector.broadcast %cst_139 : f32 to vector<8x128xf32>
    %379 = arith.addf %378, %377 : vector<8x128xf32>
    %380 = arith.divf %378, %379 : vector<8x128xf32>
    %381 = vector.extract_strided_slice %368 {offsets = [0, 256], sizes = [8, 128], strides = [1, 1]} : vector<8x512xf32> to vector<8x128xf32>
    %382 = math.tanh %381 : vector<8x128xf32>
    %383 = vector.extract_strided_slice %368 {offsets = [0, 384], sizes = [8, 128], strides = [1, 1]} : vector<8x512xf32> to vector<8x128xf32>
    %384 = arith.negf %383 : vector<8x128xf32>
    %385 = math.exp %384 : vector<8x128xf32>
    %cst_140 = arith.constant 1.000000e+00 : f32
    %386 = vector.broadcast %cst_140 : f32 to vector<8x128xf32>
    %387 = arith.addf %386, %385 : vector<8x128xf32>
    %388 = arith.divf %386, %387 : vector<8x128xf32>
    %389 = arith.mulf %380, %355 : vector<8x128xf32>
    %390 = arith.mulf %374, %382 : vector<8x128xf32>
    %391 = arith.addf %389, %390 : vector<8x128xf32>
    %392 = math.tanh %391 : vector<8x128xf32>
    %393 = arith.mulf %388, %392 : vector<8x128xf32>
    %394 = arith.index_cast %361 : i32 to index
    %c0_141 = arith.constant 0 : index
    %395 = vector.load %arg14[%394, %c0_141] : memref<64x128xf32, #tpu.memory_space<vmem>>, vector<8x128xf32>
    tpu.vector_store %arg14[%394, %c0_141], %393 {strides = array<i32>} : memref<64x128xf32, #tpu.memory_space<vmem>>, vector<8x128xf32>,
    %c2_i32_142 = arith.constant 2 : i32
    %c8_i32_143 = arith.constant 8 : i32
    %396 = arith.muli %c2_i32_142, %c8_i32_143 : i32
    %397 = tpu.assume_multiple %396, 8 : i32
    %398 = arith.index_cast %397 : i32 to index
    %c0_144 = arith.constant 0 : index
    %399 = vector.load %arg15[%398, %c0_144] : memref<64x512xf32, #tpu.memory_space<vmem>>, vector<8x512xf32>
    %400 = arith.truncf %393 : vector<8x128xf32> to vector<8x128xbf16>
    %c1_145 = arith.constant 1 : index
    %c0_146 = arith.constant 0 : index
    %c0_147 = arith.constant 0 : index
    %401 = vector.load %arg4[%c1_145, %c0_146, %c0_147] : memref<2x128x512xbf16, #tpu.memory_space<vmem>>, vector<1x128x512xbf16>
    %402 = vector.shape_cast %401 : vector<1x128x512xbf16> to vector<128x512xbf16>
    %cst_148 = arith.constant dense<0.000000e+00> : vector<8x512xf32>
    %403 = tpu.matmul %400, %402, %cst_148 {dimension_numbers = #tpu.dot_dimension_numbers<[1], [0], [0], [1], [0, 0, 1, 1], [], []>} : vector<8x128xbf16>, vector<128x512xbf16>, vector<8x512xf32> -> vector<8x512xf32>
    %404 = arith.addf %399, %403 : vector<8x512xf32>
    %405 = vector.extract_strided_slice %404 {offsets = [0, 0], sizes = [8, 128], strides = [1, 1]} : vector<8x512xf32> to vector<8x128xf32>
    %406 = arith.negf %405 : vector<8x128xf32>
    %407 = math.exp %406 : vector<8x128xf32>
    %cst_149 = arith.constant 1.000000e+00 : f32
    %408 = vector.broadcast %cst_149 : f32 to vector<8x128xf32>
    %409 = arith.addf %408, %407 : vector<8x128xf32>
    %410 = arith.divf %408, %409 : vector<8x128xf32>
    %411 = vector.extract_strided_slice %404 {offsets = [0, 128], sizes = [8, 128], strides = [1, 1]} : vector<8x512xf32> to vector<8x128xf32>
    %412 = arith.negf %411 : vector<8x128xf32>
    %413 = math.exp %412 : vector<8x128xf32>
    %cst_150 = arith.constant 1.000000e+00 : f32
    %414 = vector.broadcast %cst_150 : f32 to vector<8x128xf32>
    %415 = arith.addf %414, %413 : vector<8x128xf32>
    %416 = arith.divf %414, %415 : vector<8x128xf32>
    %417 = vector.extract_strided_slice %404 {offsets = [0, 256], sizes = [8, 128], strides = [1, 1]} : vector<8x512xf32> to vector<8x128xf32>
    %418 = math.tanh %417 : vector<8x128xf32>
    %419 = vector.extract_strided_slice %404 {offsets = [0, 384], sizes = [8, 128], strides = [1, 1]} : vector<8x512xf32> to vector<8x128xf32>
    %420 = arith.negf %419 : vector<8x128xf32>
    %421 = math.exp %420 : vector<8x128xf32>
    %cst_151 = arith.constant 1.000000e+00 : f32
    %422 = vector.broadcast %cst_151 : f32 to vector<8x128xf32>
    %423 = arith.addf %422, %421 : vector<8x128xf32>
    %424 = arith.divf %422, %423 : vector<8x128xf32>
    %425 = arith.mulf %416, %391 : vector<8x128xf32>
    %426 = arith.mulf %410, %418 : vector<8x128xf32>
    %427 = arith.addf %425, %426 : vector<8x128xf32>
    %428 = math.tanh %427 : vector<8x128xf32>
    %429 = arith.mulf %424, %428 : vector<8x128xf32>
    %430 = arith.index_cast %397 : i32 to index
    %c0_152 = arith.constant 0 : index
    %431 = vector.load %arg14[%430, %c0_152] : memref<64x128xf32, #tpu.memory_space<vmem>>, vector<8x128xf32>
    tpu.vector_store %arg14[%430, %c0_152], %429 {strides = array<i32>} : memref<64x128xf32, #tpu.memory_space<vmem>>, vector<8x128xf32>,
    %c3_i32_153 = arith.constant 3 : i32
    %c8_i32_154 = arith.constant 8 : i32
    %432 = arith.muli %c3_i32_153, %c8_i32_154 : i32
    %433 = tpu.assume_multiple %432, 8 : i32
    %434 = arith.index_cast %433 : i32 to index
    %c0_155 = arith.constant 0 : index
    %435 = vector.load %arg15[%434, %c0_155] : memref<64x512xf32, #tpu.memory_space<vmem>>, vector<8x512xf32>
    %436 = arith.truncf %429 : vector<8x128xf32> to vector<8x128xbf16>
    %c1_156 = arith.constant 1 : index
    %c0_157 = arith.constant 0 : index
    %c0_158 = arith.constant 0 : index
    %437 = vector.load %arg4[%c1_156, %c0_157, %c0_158] : memref<2x128x512xbf16, #tpu.memory_space<vmem>>, vector<1x128x512xbf16>
    %438 = vector.shape_cast %437 : vector<1x128x512xbf16> to vector<128x512xbf16>
    %cst_159 = arith.constant dense<0.000000e+00> : vector<8x512xf32>
    %439 = tpu.matmul %436, %438, %cst_159 {dimension_numbers = #tpu.dot_dimension_numbers<[1], [0], [0], [1], [0, 0, 1, 1], [], []>} : vector<8x128xbf16>, vector<128x512xbf16>, vector<8x512xf32> -> vector<8x512xf32>
    %440 = arith.addf %435, %439 : vector<8x512xf32>
    %441 = vector.extract_strided_slice %440 {offsets = [0, 0], sizes = [8, 128], strides = [1, 1]} : vector<8x512xf32> to vector<8x128xf32>
    %442 = arith.negf %441 : vector<8x128xf32>
    %443 = math.exp %442 : vector<8x128xf32>
    %cst_160 = arith.constant 1.000000e+00 : f32
    %444 = vector.broadcast %cst_160 : f32 to vector<8x128xf32>
    %445 = arith.addf %444, %443 : vector<8x128xf32>
    %446 = arith.divf %444, %445 : vector<8x128xf32>
    %447 = vector.extract_strided_slice %440 {offsets = [0, 128], sizes = [8, 128], strides = [1, 1]} : vector<8x512xf32> to vector<8x128xf32>
    %448 = arith.negf %447 : vector<8x128xf32>
    %449 = math.exp %448 : vector<8x128xf32>
    %cst_161 = arith.constant 1.000000e+00 : f32
    %450 = vector.broadcast %cst_161 : f32 to vector<8x128xf32>
    %451 = arith.addf %450, %449 : vector<8x128xf32>
    %452 = arith.divf %450, %451 : vector<8x128xf32>
    %453 = vector.extract_strided_slice %440 {offsets = [0, 256], sizes = [8, 128], strides = [1, 1]} : vector<8x512xf32> to vector<8x128xf32>
    %454 = math.tanh %453 : vector<8x128xf32>
    %455 = vector.extract_strided_slice %440 {offsets = [0, 384], sizes = [8, 128], strides = [1, 1]} : vector<8x512xf32> to vector<8x128xf32>
    %456 = arith.negf %455 : vector<8x128xf32>
    %457 = math.exp %456 : vector<8x128xf32>
    %cst_162 = arith.constant 1.000000e+00 : f32
    %458 = vector.broadcast %cst_162 : f32 to vector<8x128xf32>
    %459 = arith.addf %458, %457 : vector<8x128xf32>
    %460 = arith.divf %458, %459 : vector<8x128xf32>
    %461 = arith.mulf %452, %427 : vector<8x128xf32>
    %462 = arith.mulf %446, %454 : vector<8x128xf32>
    %463 = arith.addf %461, %462 : vector<8x128xf32>
    %464 = math.tanh %463 : vector<8x128xf32>
    %465 = arith.mulf %460, %464 : vector<8x128xf32>
    %466 = arith.index_cast %433 : i32 to index
    %c0_163 = arith.constant 0 : index
    %467 = vector.load %arg14[%466, %c0_163] : memref<64x128xf32, #tpu.memory_space<vmem>>, vector<8x128xf32>
    tpu.vector_store %arg14[%466, %c0_163], %465 {strides = array<i32>} : memref<64x128xf32, #tpu.memory_space<vmem>>, vector<8x128xf32>,
    %c4_i32_164 = arith.constant 4 : i32
    %c8_i32_165 = arith.constant 8 : i32
    %468 = arith.muli %c4_i32_164, %c8_i32_165 : i32
    %469 = tpu.assume_multiple %468, 8 : i32
    %470 = arith.index_cast %469 : i32 to index
    %c0_166 = arith.constant 0 : index
    %471 = vector.load %arg15[%470, %c0_166] : memref<64x512xf32, #tpu.memory_space<vmem>>, vector<8x512xf32>
    %472 = arith.truncf %465 : vector<8x128xf32> to vector<8x128xbf16>
    %c1_167 = arith.constant 1 : index
    %c0_168 = arith.constant 0 : index
    %c0_169 = arith.constant 0 : index
    %473 = vector.load %arg4[%c1_167, %c0_168, %c0_169] : memref<2x128x512xbf16, #tpu.memory_space<vmem>>, vector<1x128x512xbf16>
    %474 = vector.shape_cast %473 : vector<1x128x512xbf16> to vector<128x512xbf16>
    %cst_170 = arith.constant dense<0.000000e+00> : vector<8x512xf32>
    %475 = tpu.matmul %472, %474, %cst_170 {dimension_numbers = #tpu.dot_dimension_numbers<[1], [0], [0], [1], [0, 0, 1, 1], [], []>} : vector<8x128xbf16>, vector<128x512xbf16>, vector<8x512xf32> -> vector<8x512xf32>
    %476 = arith.addf %471, %475 : vector<8x512xf32>
    %477 = vector.extract_strided_slice %476 {offsets = [0, 0], sizes = [8, 128], strides = [1, 1]} : vector<8x512xf32> to vector<8x128xf32>
    %478 = arith.negf %477 : vector<8x128xf32>
    %479 = math.exp %478 : vector<8x128xf32>
    %cst_171 = arith.constant 1.000000e+00 : f32
    %480 = vector.broadcast %cst_171 : f32 to vector<8x128xf32>
    %481 = arith.addf %480, %479 : vector<8x128xf32>
    %482 = arith.divf %480, %481 : vector<8x128xf32>
    %483 = vector.extract_strided_slice %476 {offsets = [0, 128], sizes = [8, 128], strides = [1, 1]} : vector<8x512xf32> to vector<8x128xf32>
    %484 = arith.negf %483 : vector<8x128xf32>
    %485 = math.exp %484 : vector<8x128xf32>
    %cst_172 = arith.constant 1.000000e+00 : f32
    %486 = vector.broadcast %cst_172 : f32 to vector<8x128xf32>
    %487 = arith.addf %486, %485 : vector<8x128xf32>
    %488 = arith.divf %486, %487 : vector<8x128xf32>
    %489 = vector.extract_strided_slice %476 {offsets = [0, 256], sizes = [8, 128], strides = [1, 1]} : vector<8x512xf32> to vector<8x128xf32>
    %490 = math.tanh %489 : vector<8x128xf32>
    %491 = vector.extract_strided_slice %476 {offsets = [0, 384], sizes = [8, 128], strides = [1, 1]} : vector<8x512xf32> to vector<8x128xf32>
    %492 = arith.negf %491 : vector<8x128xf32>
    %493 = math.exp %492 : vector<8x128xf32>
    %cst_173 = arith.constant 1.000000e+00 : f32
    %494 = vector.broadcast %cst_173 : f32 to vector<8x128xf32>
    %495 = arith.addf %494, %493 : vector<8x128xf32>
    %496 = arith.divf %494, %495 : vector<8x128xf32>
    %497 = arith.mulf %488, %463 : vector<8x128xf32>
    %498 = arith.mulf %482, %490 : vector<8x128xf32>
    %499 = arith.addf %497, %498 : vector<8x128xf32>
    %500 = math.tanh %499 : vector<8x128xf32>
    %501 = arith.mulf %496, %500 : vector<8x128xf32>
    %502 = arith.index_cast %469 : i32 to index
    %c0_174 = arith.constant 0 : index
    %503 = vector.load %arg14[%502, %c0_174] : memref<64x128xf32, #tpu.memory_space<vmem>>, vector<8x128xf32>
    tpu.vector_store %arg14[%502, %c0_174], %501 {strides = array<i32>} : memref<64x128xf32, #tpu.memory_space<vmem>>, vector<8x128xf32>,
    %c5_i32_175 = arith.constant 5 : i32
    %c8_i32_176 = arith.constant 8 : i32
    %504 = arith.muli %c5_i32_175, %c8_i32_176 : i32
    %505 = tpu.assume_multiple %504, 8 : i32
    %506 = arith.index_cast %505 : i32 to index
    %c0_177 = arith.constant 0 : index
    %507 = vector.load %arg15[%506, %c0_177] : memref<64x512xf32, #tpu.memory_space<vmem>>, vector<8x512xf32>
    %508 = arith.truncf %501 : vector<8x128xf32> to vector<8x128xbf16>
    %c1_178 = arith.constant 1 : index
    %c0_179 = arith.constant 0 : index
    %c0_180 = arith.constant 0 : index
    %509 = vector.load %arg4[%c1_178, %c0_179, %c0_180] : memref<2x128x512xbf16, #tpu.memory_space<vmem>>, vector<1x128x512xbf16>
    %510 = vector.shape_cast %509 : vector<1x128x512xbf16> to vector<128x512xbf16>
    %cst_181 = arith.constant dense<0.000000e+00> : vector<8x512xf32>
    %511 = tpu.matmul %508, %510, %cst_181 {dimension_numbers = #tpu.dot_dimension_numbers<[1], [0], [0], [1], [0, 0, 1, 1], [], []>} : vector<8x128xbf16>, vector<128x512xbf16>, vector<8x512xf32> -> vector<8x512xf32>
    %512 = arith.addf %507, %511 : vector<8x512xf32>
    %513 = vector.extract_strided_slice %512 {offsets = [0, 0], sizes = [8, 128], strides = [1, 1]} : vector<8x512xf32> to vector<8x128xf32>
    %514 = arith.negf %513 : vector<8x128xf32>
    %515 = math.exp %514 : vector<8x128xf32>
    %cst_182 = arith.constant 1.000000e+00 : f32
    %516 = vector.broadcast %cst_182 : f32 to vector<8x128xf32>
    %517 = arith.addf %516, %515 : vector<8x128xf32>
    %518 = arith.divf %516, %517 : vector<8x128xf32>
    %519 = vector.extract_strided_slice %512 {offsets = [0, 128], sizes = [8, 128], strides = [1, 1]} : vector<8x512xf32> to vector<8x128xf32>
    %520 = arith.negf %519 : vector<8x128xf32>
    %521 = math.exp %520 : vector<8x128xf32>
    %cst_183 = arith.constant 1.000000e+00 : f32
    %522 = vector.broadcast %cst_183 : f32 to vector<8x128xf32>
    %523 = arith.addf %522, %521 : vector<8x128xf32>
    %524 = arith.divf %522, %523 : vector<8x128xf32>
    %525 = vector.extract_strided_slice %512 {offsets = [0, 256], sizes = [8, 128], strides = [1, 1]} : vector<8x512xf32> to vector<8x128xf32>
    %526 = math.tanh %525 : vector<8x128xf32>
    %527 = vector.extract_strided_slice %512 {offsets = [0, 384], sizes = [8, 128], strides = [1, 1]} : vector<8x512xf32> to vector<8x128xf32>
    %528 = arith.negf %527 : vector<8x128xf32>
    %529 = math.exp %528 : vector<8x128xf32>
    %cst_184 = arith.constant 1.000000e+00 : f32
    %530 = vector.broadcast %cst_184 : f32 to vector<8x128xf32>
    %531 = arith.addf %530, %529 : vector<8x128xf32>
    %532 = arith.divf %530, %531 : vector<8x128xf32>
    %533 = arith.mulf %524, %499 : vector<8x128xf32>
    %534 = arith.mulf %518, %526 : vector<8x128xf32>
    %535 = arith.addf %533, %534 : vector<8x128xf32>
    %536 = math.tanh %535 : vector<8x128xf32>
    %537 = arith.mulf %532, %536 : vector<8x128xf32>
    %538 = arith.index_cast %505 : i32 to index
    %c0_185 = arith.constant 0 : index
    %539 = vector.load %arg14[%538, %c0_185] : memref<64x128xf32, #tpu.memory_space<vmem>>, vector<8x128xf32>
    tpu.vector_store %arg14[%538, %c0_185], %537 {strides = array<i32>} : memref<64x128xf32, #tpu.memory_space<vmem>>, vector<8x128xf32>,
    %c6_i32_186 = arith.constant 6 : i32
    %c8_i32_187 = arith.constant 8 : i32
    %540 = arith.muli %c6_i32_186, %c8_i32_187 : i32
    %541 = tpu.assume_multiple %540, 8 : i32
    %542 = arith.index_cast %541 : i32 to index
    %c0_188 = arith.constant 0 : index
    %543 = vector.load %arg15[%542, %c0_188] : memref<64x512xf32, #tpu.memory_space<vmem>>, vector<8x512xf32>
    %544 = arith.truncf %537 : vector<8x128xf32> to vector<8x128xbf16>
    %c1_189 = arith.constant 1 : index
    %c0_190 = arith.constant 0 : index
    %c0_191 = arith.constant 0 : index
    %545 = vector.load %arg4[%c1_189, %c0_190, %c0_191] : memref<2x128x512xbf16, #tpu.memory_space<vmem>>, vector<1x128x512xbf16>
    %546 = vector.shape_cast %545 : vector<1x128x512xbf16> to vector<128x512xbf16>
    %cst_192 = arith.constant dense<0.000000e+00> : vector<8x512xf32>
    %547 = tpu.matmul %544, %546, %cst_192 {dimension_numbers = #tpu.dot_dimension_numbers<[1], [0], [0], [1], [0, 0, 1, 1], [], []>} : vector<8x128xbf16>, vector<128x512xbf16>, vector<8x512xf32> -> vector<8x512xf32>
    %548 = arith.addf %543, %547 : vector<8x512xf32>
    %549 = vector.extract_strided_slice %548 {offsets = [0, 0], sizes = [8, 128], strides = [1, 1]} : vector<8x512xf32> to vector<8x128xf32>
    %550 = arith.negf %549 : vector<8x128xf32>
    %551 = math.exp %550 : vector<8x128xf32>
    %cst_193 = arith.constant 1.000000e+00 : f32
    %552 = vector.broadcast %cst_193 : f32 to vector<8x128xf32>
    %553 = arith.addf %552, %551 : vector<8x128xf32>
    %554 = arith.divf %552, %553 : vector<8x128xf32>
    %555 = vector.extract_strided_slice %548 {offsets = [0, 128], sizes = [8, 128], strides = [1, 1]} : vector<8x512xf32> to vector<8x128xf32>
    %556 = arith.negf %555 : vector<8x128xf32>
    %557 = math.exp %556 : vector<8x128xf32>
    %cst_194 = arith.constant 1.000000e+00 : f32
    %558 = vector.broadcast %cst_194 : f32 to vector<8x128xf32>
    %559 = arith.addf %558, %557 : vector<8x128xf32>
    %560 = arith.divf %558, %559 : vector<8x128xf32>
    %561 = vector.extract_strided_slice %548 {offsets = [0, 256], sizes = [8, 128], strides = [1, 1]} : vector<8x512xf32> to vector<8x128xf32>
    %562 = math.tanh %561 : vector<8x128xf32>
    %563 = vector.extract_strided_slice %548 {offsets = [0, 384], sizes = [8, 128], strides = [1, 1]} : vector<8x512xf32> to vector<8x128xf32>
    %564 = arith.negf %563 : vector<8x128xf32>
    %565 = math.exp %564 : vector<8x128xf32>
    %cst_195 = arith.constant 1.000000e+00 : f32
    %566 = vector.broadcast %cst_195 : f32 to vector<8x128xf32>
    %567 = arith.addf %566, %565 : vector<8x128xf32>
    %568 = arith.divf %566, %567 : vector<8x128xf32>
    %569 = arith.mulf %560, %535 : vector<8x128xf32>
    %570 = arith.mulf %554, %562 : vector<8x128xf32>
    %571 = arith.addf %569, %570 : vector<8x128xf32>
    %572 = math.tanh %571 : vector<8x128xf32>
    %573 = arith.mulf %568, %572 : vector<8x128xf32>
    %574 = arith.index_cast %541 : i32 to index
    %c0_196 = arith.constant 0 : index
    %575 = vector.load %arg14[%574, %c0_196] : memref<64x128xf32, #tpu.memory_space<vmem>>, vector<8x128xf32>
    tpu.vector_store %arg14[%574, %c0_196], %573 {strides = array<i32>} : memref<64x128xf32, #tpu.memory_space<vmem>>, vector<8x128xf32>,
    %c7_i32_197 = arith.constant 7 : i32
    %c8_i32_198 = arith.constant 8 : i32
    %576 = arith.muli %c7_i32_197, %c8_i32_198 : i32
    %577 = tpu.assume_multiple %576, 8 : i32
    %578 = arith.index_cast %577 : i32 to index
    %c0_199 = arith.constant 0 : index
    %579 = vector.load %arg15[%578, %c0_199] : memref<64x512xf32, #tpu.memory_space<vmem>>, vector<8x512xf32>
    %580 = arith.truncf %573 : vector<8x128xf32> to vector<8x128xbf16>
    %c1_200 = arith.constant 1 : index
    %c0_201 = arith.constant 0 : index
    %c0_202 = arith.constant 0 : index
    %581 = vector.load %arg4[%c1_200, %c0_201, %c0_202] : memref<2x128x512xbf16, #tpu.memory_space<vmem>>, vector<1x128x512xbf16>
    %582 = vector.shape_cast %581 : vector<1x128x512xbf16> to vector<128x512xbf16>
    %cst_203 = arith.constant dense<0.000000e+00> : vector<8x512xf32>
    %583 = tpu.matmul %580, %582, %cst_203 {dimension_numbers = #tpu.dot_dimension_numbers<[1], [0], [0], [1], [0, 0, 1, 1], [], []>} : vector<8x128xbf16>, vector<128x512xbf16>, vector<8x512xf32> -> vector<8x512xf32>
    %584 = arith.addf %579, %583 : vector<8x512xf32>
    %585 = vector.extract_strided_slice %584 {offsets = [0, 0], sizes = [8, 128], strides = [1, 1]} : vector<8x512xf32> to vector<8x128xf32>
    %586 = arith.negf %585 : vector<8x128xf32>
    %587 = math.exp %586 : vector<8x128xf32>
    %cst_204 = arith.constant 1.000000e+00 : f32
    %588 = vector.broadcast %cst_204 : f32 to vector<8x128xf32>
    %589 = arith.addf %588, %587 : vector<8x128xf32>
    %590 = arith.divf %588, %589 : vector<8x128xf32>
    %591 = vector.extract_strided_slice %584 {offsets = [0, 128], sizes = [8, 128], strides = [1, 1]} : vector<8x512xf32> to vector<8x128xf32>
    %592 = arith.negf %591 : vector<8x128xf32>
    %593 = math.exp %592 : vector<8x128xf32>
    %cst_205 = arith.constant 1.000000e+00 : f32
    %594 = vector.broadcast %cst_205 : f32 to vector<8x128xf32>
    %595 = arith.addf %594, %593 : vector<8x128xf32>
    %596 = arith.divf %594, %595 : vector<8x128xf32>
    %597 = vector.extract_strided_slice %584 {offsets = [0, 256], sizes = [8, 128], strides = [1, 1]} : vector<8x512xf32> to vector<8x128xf32>
    %598 = math.tanh %597 : vector<8x128xf32>
    %599 = vector.extract_strided_slice %584 {offsets = [0, 384], sizes = [8, 128], strides = [1, 1]} : vector<8x512xf32> to vector<8x128xf32>
    %600 = arith.negf %599 : vector<8x128xf32>
    %601 = math.exp %600 : vector<8x128xf32>
    %cst_206 = arith.constant 1.000000e+00 : f32
    %602 = vector.broadcast %cst_206 : f32 to vector<8x128xf32>
    %603 = arith.addf %602, %601 : vector<8x128xf32>
    %604 = arith.divf %602, %603 : vector<8x128xf32>
    %605 = arith.mulf %596, %571 : vector<8x128xf32>
    %606 = arith.mulf %590, %598 : vector<8x128xf32>
    %607 = arith.addf %605, %606 : vector<8x128xf32>
    %608 = math.tanh %607 : vector<8x128xf32>
    %609 = arith.mulf %604, %608 : vector<8x128xf32>
    %610 = arith.index_cast %577 : i32 to index
    %c0_207 = arith.constant 0 : index
    %611 = vector.load %arg14[%610, %c0_207] : memref<64x128xf32, #tpu.memory_space<vmem>>, vector<8x128xf32>
    tpu.vector_store %arg14[%610, %c0_207], %609 {strides = array<i32>} : memref<64x128xf32, #tpu.memory_space<vmem>>, vector<8x128xf32>,
    %c8_i32_208 = arith.constant 8 : i32
    %c0_209 = arith.constant 0 : index
    %c0_210 = arith.constant 0 : index
    %612 = vector.load %arg14[%c0_209, %c0_210] : memref<64x128xf32, #tpu.memory_space<vmem>>, vector<64x128xf32>
    %613 = arith.truncf %612 : vector<64x128xf32> to vector<64x128xbf16>
    %c0_211 = arith.constant 0 : index
    %c0_212 = arith.constant 0 : index
    %614 = vector.load %arg8[%c0_211, %c0_212] : memref<128x128xbf16, #tpu.memory_space<vmem>>, vector<128x128xbf16>
    %cst_213 = arith.constant dense<0.000000e+00> : vector<64x128xf32>
    %615 = tpu.matmul %613, %614, %cst_213 {dimension_numbers = #tpu.dot_dimension_numbers<[1], [0], [0], [1], [0, 0, 1, 1], [], []>} : vector<64x128xbf16>, vector<128x128xbf16>, vector<64x128xf32> -> vector<64x128xf32>
    %c0_214 = arith.constant 0 : index
    %c0_215 = arith.constant 0 : index
    %616 = vector.load %arg9[%c0_214, %c0_215] : memref<1x128xf32, #tpu.memory_space<vmem>>, vector<1x128xf32>
    %617 = vector.broadcast %616 : vector<1x128xf32> to vector<64x128xf32>
    %618 = arith.addf %615, %617 : vector<64x128xf32>
    %619 = math.tanh %618 : vector<64x128xf32>
    %c0_216 = arith.constant 0 : index
    %c0_217 = arith.constant 0 : index
    %620 = vector.load %arg12[%c0_216, %c0_217] : memref<64x128xf32, #tpu.memory_space<vmem>>, vector<64x128xf32>
    tpu.vector_store %arg12[%c0_216, %c0_217], %619 {strides = array<i32>} : memref<64x128xf32, #tpu.memory_space<vmem>>, vector<64x128xf32>,
    %c0_218 = arith.constant 0 : index
    %c0_219 = arith.constant 0 : index
    %621 = vector.load %arg10[%c0_218, %c0_219] : memref<64x128xi32, #tpu.memory_space<vmem>>, vector<64x128xi32>
    %c0_i32_220 = arith.constant 0 : i32
    %622 = vector.broadcast %c0_i32_220 : i32 to vector<64x128xi32>
    %623 = arith.cmpi sgt, %621, %622 : vector<64x128xi32>
    %624 = arith.extui %623 : vector<64x128xi1> to vector<64x128xi32>
    %625 = arith.sitofp %624 : vector<64x128xi32> to vector<64x128xf32>
    %c0_221 = arith.constant 0 : index
    %c0_222 = arith.constant 0 : index
    %626 = vector.load %arg11[%c0_221, %c0_222] : memref<64x128xf32, #tpu.memory_space<vmem>>, vector<64x128xf32>
    %627 = arith.subf %619, %626 : vector<64x128xf32>
    %628 = arith.mulf %627, %625 : vector<64x128xf32>
    %629 = arith.mulf %628, %628 : vector<64x128xf32>
    %630 = vector.shape_cast %629 : vector<64x128xf32> to vector<1x64x128xf32>
    %cst_223 = arith.constant dense<0.000000e+00> : vector<1xf32>
    %631 = vector.multi_reduction <add>, %630, %cst_223 [1, 2] : vector<1x64x128xf32> to vector<1xf32>
    %632 = vector.shape_cast %631 : vector<1xf32> to vector<1x1x1xf32>
    %633 = vector.extract %632[0, 0, 0] : f32 from vector<1x1x1xf32>
    %634 = vector.shape_cast %625 : vector<64x128xf32> to vector<1x64x128xf32>
    %cst_224 = arith.constant dense<0.000000e+00> : vector<1xf32>
    %635 = vector.multi_reduction <add>, %634, %cst_224 [1, 2] : vector<1x64x128xf32> to vector<1xf32>
    %636 = vector.shape_cast %635 : vector<1xf32> to vector<1x1x1xf32>
    %637 = vector.extract %636[0, 0, 0] : f32 from vector<1x1x1xf32>
    %cst_225 = arith.constant 1.000000e+00 : f32
    %638 = arith.maximumf %637, %cst_225 : f32
    %639 = arith.divf %633, %638 : f32
    %c0_226 = arith.constant 0 : index
    %c0_227 = arith.constant 0 : index
    %640 = memref.load %arg13[%c0_226, %c0_227] : memref<1x1xf32, #tpu.memory_space<smem>>
    memref.store %639, %arg13[%c0_226, %c0_227] : memref<1x1xf32, #tpu.memory_space<smem>>
    return
  }
}

</mosaic_0001>

<llo_original>
// kernel: tpu_custom_call.1
$region0: #{tpu_custom_call.1}
  #allocation0 [shape = 'u32[]', space=smem, size = 0x4, offset = 0x4, fixed_abs, tag = 'smem constant byte address 0x4 - core index']
  #allocation1 [shape = 'u32[72,128]{1,0:T(1,128)}', space=vmem, size = 0x9000, scoped, tag = 'internal scratch']
  #allocation2 [shape = 'f32[64,128]{1,0:T(8,128)}', space=vmem, size = 0x8000, scoped, tag = 'scratch operand']
  #allocation3 [shape = 'f32[64,512]{1,0:T(8,128)}', space=vmem, size = 0x20000, scoped, tag = 'scratch operand']
  %s0 = inlined_call_operand.vmem [shape: f32[64,32], index: 0, kind: input, shape index: {}]
  %s1 = inlined_call_operand.vmem [shape: bf16[32,128], index: 1, kind: input, shape index: {}]
  %s2 = inlined_call_operand.vmem [shape: f32[1,128], index: 2, kind: input, shape index: {}]
  %s3 = inlined_call_operand.hbm [shape: bf16[2,128,512], index: 3, kind: input, shape index: {}]
  %s4 = inlined_call_operand.hbm [shape: bf16[2,128,512], index: 4, kind: input, shape index: {}]
  %s5 = inlined_call_operand.hbm [shape: f32[2,1,512], index: 5, kind: input, shape index: {}]
  %s6 = inlined_call_operand.vmem [shape: f32[2,8,128], index: 6, kind: input, shape index: {}]
  %s7 = inlined_call_operand.hbm [shape: f32[2,8,128], index: 7, kind: input, shape index: {}]
  %s8 = inlined_call_operand.vmem [shape: bf16[128,128], index: 8, kind: input, shape index: {}]
  %s9 = inlined_call_operand.vmem [shape: f32[1,128], index: 9, kind: input, shape index: {}]
  %s10 = inlined_call_operand.hbm [shape: s32[64,128], index: 10, kind: input, shape index: {}]
  %s11 = inlined_call_operand.hbm [shape: f32[64,128], index: 11, kind: input, shape index: {}]
  %s12 = inlined_call_operand.hbm [shape: f32[64,128], index: 12, kind: output, shape index: {0}]
  %s13 = inlined_call_operand.hbm [shape: f32[1,1], index: 13, kind: output, shape index: {1}]
  %14 = xla_tuple %s12, %s13
  %s15 = sld [smem:[#allocation0]]
  $region90: #{tpu_custom_call.1} parent=0
    _
  %s17 = ssub.s32 1, %s15
  %s18 = scalar_select 0, %s17, %s15
  $region1: #{tpu_custom_call.1} parent=0
    #allocation4 [shape = 'u8[262144]{0}', space=vmem, size = 0x40000, scoped, tag = 'input window, operand 3, single buffered']
    #allocation5 [shape = 's32[1]{0}', space=sflag, size = 0x4, scoped, tag = 'scoped memory for tpu_custom_call.1']
    #allocation6 [shape = 's32[1]{0}', space=sflag, size = 0x4, scoped, tag = 'scoped memory for tpu_custom_call.1']
    #allocation7 [shape = 's32[1]{0}', space=sflag, size = 0x4, scoped, tag = 'scoped memory for tpu_custom_call.1']
    #allocation8 [shape = 'u8[262144]{0}', space=vmem, size = 0x40000, scoped, tag = 'input window, operand 4, single buffered']
    #allocation9 [shape = 's32[1]{0}', space=sflag, size = 0x4, scoped, tag = 'scoped memory for tpu_custom_call.1']
    #allocation10 [shape = 'u8[4096]{0}', space=vmem, size = 0x1000, scoped, tag = 'input window, operand 5, single buffered']
    #allocation11 [shape = 'u8[8192]{0}', space=vmem, size = 0x2000, scoped, tag = 'input window, operand 7, single buffered']
    #allocation12 [shape = 's32[1]{0}', space=sflag, size = 0x4, scoped, tag = 'scoped memory for tpu_custom_call.1']
    #allocation13 [shape = 'u8[32768]{0}', space=vmem, size = 0x8000, scoped, tag = 'input window, operand 10, single buffered']
    #allocation14 [shape = 'u8[32768]{0}', space=vmem, size = 0x8000, scoped, tag = 'input window, operand 11, single buffered']
    #allocation15 [shape = 's32[1]{0}', space=sflag, size = 0x4, scoped, tag = 'scoped memory for tpu_custom_call.1']
    #allocation16 [shape = 'u8[32768]{0}', space=vmem, size = 0x8000, scoped, tag = 'output window, operand 0, single buffered']
    #allocation17 [shape = 'u8[512]{0}', space=smem, size = 0x200, scoped, tag = 'output window, operand 1, single buffered']
    %19 = vsyncpa [#allocation5], 0
    %20 = vsyncpa [#allocation9], 0
    %21 = vsyncpa [#allocation12], 0
    %22 = vsyncpa [#allocation15], 0
    %23 = vsyncpa [#allocation6], 0
    %24 = vsyncpa [#allocation7], 0
    // Predicated region
    $region2: #{tpu_custom_call.1} parent=1 // pred_check
      _
    $region3: #{tpu_custom_call.1} parent=1 // pred_check_branch
      %26 = sbr.rel (0) target = $region5
    $region4: #{tpu_custom_call.1} parent=1 // pred_region
      _
    $region5: #{tpu_custom_call.1} parent=1 // pred_fallthru
      _
    // Predicated region
    $region6: #{tpu_custom_call.1} parent=1 // pred_check
      _
    $region7: #{tpu_custom_call.1} parent=1 // pred_check_branch
      %28 = sbr.rel (0) target = $region9
    $region8: #{tpu_custom_call.1} parent=1 // pred_region
      _
    $region9: #{tpu_custom_call.1} parent=1 // pred_fallthru
      _
    // Predicated region
    $region10: #{tpu_custom_call.1} parent=1 // pred_check
      _
    $region11: #{tpu_custom_call.1} parent=1 // pred_check_branch
      %30 = sbr.rel (0) target = $region13
    $region12: #{tpu_custom_call.1} parent=1 // pred_region
      _
    $region13: #{tpu_custom_call.1} parent=1 // pred_fallthru
      _
    // Predicated region
    $region14: #{tpu_custom_call.1} parent=1 // pred_check
      _
    $region15: #{tpu_custom_call.1} parent=1 // pred_check_branch
      %32 = sbr.rel (0) target = $region17
    $region16: #{tpu_custom_call.1} parent=1 // pred_region
      %34 = vsyncadd [#allocation5], 0
      %s35 = sshll.u32 %s3, 4
      %s36 = int_to_ptr.hbm [resolvable:$true] %s35
      %s37 = sshll.u32 [#allocation4], 4
      %s38 = int_to_ptr.vmem [resolvable:$true] %s37
      %43 = dma.hbm_to_vmem [thread:$0]  %s36, 8192, %s38, [#allocation5], 256, 256, 16
    $region17: #{tpu_custom_call.1} parent=1 // pred_fallthru
      _
    // Predicated region
    $region18: #{tpu_custom_call.1} parent=1 // pred_check
      _
    $region19: #{tpu_custom_call.1} parent=1 // pred_check_branch
      %45 = sbr.rel (0) target = $region21
    $region20: #{tpu_custom_call.1} parent=1 // pred_region
      %47 = vsyncadd [#allocation9], 0
      %s48 = sshll.u32 %s4, 4
      %s49 = int_to_ptr.hbm [resolvable:$true] %s48
      %s50 = sshll.u32 [#allocation8], 4
      %s51 = int_to_ptr.vmem [resolvable:$true] %s50
      %56 = dma.hbm_to_vmem [thread:$0]  %s49, 8192, %s51, [#allocation9], 256, 256, 16
    $region21: #{tpu_custom_call.1} parent=1 // pred_fallthru
      _
    // Predicated region
    $region22: #{tpu_custom_call.1} parent=1 // pred_check
      _
    $region23: #{tpu_custom_call.1} parent=1 // pred_check_branch
      %58 = sbr.rel (0) target = $region25
    $region24: #{tpu_custom_call.1} parent=1 // pred_region
      %60 = vsyncadd [#allocation9], 0
      %s61 = sshll.u32 %s5, 4
      %s62 = int_to_ptr.hbm [resolvable:$true] %s61
      %s63 = sshll.u32 [#allocation10], 4
      %s64 = int_to_ptr.vmem [resolvable:$true] %s63
      %69 = dma.hbm_to_vmem [thread:$0]  %s62, 128, %s64, [#allocation9], 64, 64, 4
    $region25: #{tpu_custom_call.1} parent=1 // pred_fallthru
      _
    // Predicated region
    $region26: #{tpu_custom_call.1} parent=1 // pred_check
      _
    $region27: #{tpu_custom_call.1} parent=1 // pred_check_branch
      %71 = sbr.rel (0) target = $region29
    $region28: #{tpu_custom_call.1} parent=1 // pred_region
      _
    $region29: #{tpu_custom_call.1} parent=1 // pred_fallthru
      _
    // Predicated region
    $region30: #{tpu_custom_call.1} parent=1 // pred_check
      _
    $region31: #{tpu_custom_call.1} parent=1 // pred_check_branch
      %73 = sbr.rel (0) target = $region33
    $region32: #{tpu_custom_call.1} parent=1 // pred_region
      %75 = vsyncadd [#allocation12], 0
      %s76 = sshll.u32 %s7, 4
      %s77 = int_to_ptr.hbm [resolvable:$true] %s76
      %s78 = sshll.u32 [#allocation11], 4
      %s79 = int_to_ptr.vmem [resolvable:$true] %s78
      %84 = dma.hbm_to_vmem [thread:$0]  %s77, 256, %s79, [#allocation12], 128, 128, 8
    $region33: #{tpu_custom_call.1} parent=1 // pred_fallthru
      _
    // Predicated region
    $region34: #{tpu_custom_call.1} parent=1 // pred_check
      _
    $region35: #{tpu_custom_call.1} parent=1 // pred_check_branch
      %86 = sbr.rel (0) target = $region37
    $region36: #{tpu_custom_call.1} parent=1 // pred_region
      _
    $region37: #{tpu_custom_call.1} parent=1 // pred_fallthru
      _
    // Predicated region
    $region38: #{tpu_custom_call.1} parent=1 // pred_check
      _
    $region39: #{tpu_custom_call.1} parent=1 // pred_check_branch
      %88 = sbr.rel (0) target = $region41
    $region40: #{tpu_custom_call.1} parent=1 // pred_region
      _
    $region41: #{tpu_custom_call.1} parent=1 // pred_fallthru
      _
    // Predicated region
    $region42: #{tpu_custom_call.1} parent=1 // pred_check
      _
    $region43: #{tpu_custom_call.1} parent=1 // pred_check_branch
      %90 = sbr.rel (0) target = $region45
    $region44: #{tpu_custom_call.1} parent=1 // pred_region
      %92 = vsyncadd [#allocation12], 0
      %s93 = sshll.u32 %s10, 4
      %s94 = int_to_ptr.hbm [resolvable:$true] %s93
      %s95 = sshll.u32 [#allocation13], 4
      %s96 = int_to_ptr.vmem [resolvable:$true] %s95
      %101 = dma.hbm_to_vmem [thread:$0]  %s94, 1024, %s96, [#allocation12], 128, 128, 8
    $region45: #{tpu_custom_call.1} parent=1 // pred_fallthru
      _
    // Predicated region
    $region46: #{tpu_custom_call.1} parent=1 // pred_check
      _
    $region47: #{tpu_custom_call.1} parent=1 // pred_check_branch
      %103 = sbr.rel (0) target = $region49
    $region48: #{tpu_custom_call.1} parent=1 // pred_region
      %105 = vsyncadd [#allocation15], 0
      %s106 = sshll.u32 %s11, 4
      %s107 = int_to_ptr.hbm [resolvable:$true] %s106
      %s108 = sshll.u32 [#allocation14], 4
      %s109 = int_to_ptr.vmem [resolvable:$true] %s108
      %114 = dma.hbm_to_vmem [thread:$0]  %s107, 1024, %s109, [#allocation15], 128, 128, 8
    $region49: #{tpu_custom_call.1} parent=1 // pred_fallthru
      _
    // Predicated region
    $region50: #{tpu_custom_call.1} parent=1 // pred_check
      _
    $region51: #{tpu_custom_call.1} parent=1 // pred_check_branch
      %116 = sbr.rel (0) target = $region53
    $region52: #{tpu_custom_call.1} parent=1 // pred_region
      %118 = dma.done [#allocation5], 8192
    $region53: #{tpu_custom_call.1} parent=1 // pred_fallthru
      _
    // Predicated region
    $region54: #{tpu_custom_call.1} parent=1 // pred_check
      _
    $region55: #{tpu_custom_call.1} parent=1 // pred_check_branch
      %120 = sbr.rel (0) target = $region57
    $region56: #{tpu_custom_call.1} parent=1 // pred_region
      %122 = dma.done [#allocation9], 8192
    $region57: #{tpu_custom_call.1} parent=1 // pred_fallthru
      _
    // Predicated region
    $region58: #{tpu_custom_call.1} parent=1 // pred_check
      _
    $region59: #{tpu_custom_call.1} parent=1 // pred_check_branch
      %124 = sbr.rel (0) target = $region61
    $region60: #{tpu_custom_call.1} parent=1 // pred_region
      %126 = dma.done [#allocation9], 128
    $region61: #{tpu_custom_call.1} parent=1 // pred_fallthru
      _
    // Predicated region
    $region62: #{tpu_custom_call.1} parent=1 // pred_check
      _
    $region63: #{tpu_custom_call.1} parent=1 // pred_check_branch
      %128 = sbr.rel (0) target = $region65
    $region64: #{tpu_custom_call.1} parent=1 // pred_region
      %130 = dma.done [#allocation12], 256
    $region65: #{tpu_custom_call.1} parent=1 // pred_fallthru
      _
    // Predicated region
    $region66: #{tpu_custom_call.1} parent=1 // pred_check
      _
    $region67: #{tpu_custom_call.1} parent=1 // pred_check_branch
      %132 = sbr.rel (0) target = $region69
    $region68: #{tpu_custom_call.1} parent=1 // pred_region
      %134 = dma.done [#allocation12], 1024
    $region69: #{tpu_custom_call.1} parent=1 // pred_fallthru
      _
    // Predicated region
    $region70: #{tpu_custom_call.1} parent=1 // pred_check
      _
    $region71: #{tpu_custom_call.1} parent=1 // pred_check_branch
      %136 = sbr.rel (0) target = $region73
    $region72: #{tpu_custom_call.1} parent=1 // pred_region
      %138 = dma.done [#allocation15], 1024
    $region73: #{tpu_custom_call.1} parent=1 // pred_fallthru
      _
    %v140 = vld [vmem:[%s0] sm:$0xff]
    %v141 = vld [vmem:[%s0 + $0x8] sm:$0xff]
    %v142 = vld [vmem:[%s0 + $0x10] sm:$0xff]
    %v143 = vld [vmem:[%s0 + $0x18] sm:$0xff]
    %v144 = vld [vmem:[%s0 + $0x20] sm:$0xff]
    %v145 = vld [vmem:[%s0 + $0x28] sm:$0xff]
    %v146 = vld [vmem:[%s0 + $0x30] sm:$0xff]
    %v147 = vld [vmem:[%s0 + $0x38] sm:$0xff]
    %v148 = vpack.c.bf16 %v141, %v140
    %v149 = vpack.c.bf16 %v143, %v142
    %v150 = vpack.c.bf16 %v145, %v144
    %v151 = vpack.c.bf16 %v147, %v146
    %v152 = vld [vmem:[%s1] sm:$0xf]
    %v153 = vld [vmem:[%s1 + $0x4] sm:$0xf]
    %v154 = vld [vmem:[%s1 + $0x8] sm:$0xf]
    %v155 = vld [vmem:[%s1 + $0xc] sm:$0xf]
    %v156 = vld [vmem:[%s2] sm:$0x1]
    %v158 = vperm.slane %v156, 0
    %v164 = vunpack.c.l.b16 %v152
    %v165 = vunpack.c.l.b16 %v153
    %v166 = vunpack.c.l.b16 %v154
    %v167 = vunpack.c.l.b16 %v155
    %v168 = vpack.c.b16 %v165, %v164
    %v169 = vpack.c.b16 %v167, %v166
    %vm172 = vcmask 261120
    %v174 = vsel %vm172, %v148, 0
    %v177 = vsel %vm172, %v149, 0
    %v180 = vsel %vm172, %v150, 0
    %v183 = vsel %vm172, %v151, 0
    %185 = vmatpush.bf16.msra.mxu0 0
    %186 = vmatpush.bf16.msra.mxu0 0
    %187 = vmatpush.bf16.msra.mxu0 0
    %188 = vmatpush.bf16.msra.mxu0 0
    %189 = vmatpush.bf16.msra.mxu0 0
    %190 = vmatpush.bf16.msra.mxu0 0
    %191 = vmatpush.bf16.msra.mxu0 %v169
    %192 = vmatpush.bf16.msra.mxu0 %v168
    %193 = vmatmul.bf16.gmra.mxu0 %v174
    %v194 = vpop.f32.mrf.mxu0
    %v195 = vadd.f32 %v158, %v194
    %v196 = vpop.f32.mrf.mxu0
    %v197 = vadd.f32 %v158, %v196
    %198 = vmatmul.bf16.gmra.mxu0 %v177
    %v199 = vpop.f32.mrf.mxu0
    %v200 = vadd.f32 %v158, %v199
    %v201 = vpop.f32.mrf.mxu0
    %v202 = vadd.f32 %v158, %v201
    %203 = vmatmul.bf16.gmra.mxu0 %v180
    %v204 = vpop.f32.mrf.mxu0
    %v205 = vadd.f32 %v158, %v204
    %v206 = vpop.f32.mrf.mxu0
    %v207 = vadd.f32 %v158, %v206
    %208 = vmatmul.bf16.gmra.mxu0 %v183
    %v209 = vpop.f32.mrf.mxu0
    %v210 = vadd.f32 %v158, %v209
    %v211 = vpop.f32.mrf.mxu0
    %v212 = vadd.f32 %v158, %v211
    %213 = vdwg.mxu0
    %214 = vst [vmem:[#allocation2] sm:$0xff] %v195
    %215 = vst [vmem:[#allocation2 + $0x8] sm:$0xff] %v197
    %216 = vst [vmem:[#allocation2 + $0x10] sm:$0xff] %v200
    %217 = vst [vmem:[#allocation2 + $0x18] sm:$0xff] %v202
    %218 = vst [vmem:[#allocation2 + $0x20] sm:$0xff] %v205
    %219 = vst [vmem:[#allocation2 + $0x28] sm:$0xff] %v207
    %220 = vst [vmem:[#allocation2 + $0x30] sm:$0xff] %v210
    %221 = vst [vmem:[#allocation2 + $0x38] sm:$0xff] %v212
    %v222 = vld [vmem:[#allocation2] sm:$0xff]
    %v223 = vld [vmem:[#allocation2 + $0x8] sm:$0xff]
    %v224 = vld [vmem:[#allocation2 + $0x10] sm:$0xff]
    %v225 = vld [vmem:[#allocation2 + $0x18] sm:$0xff]
    %v226 = vld [vmem:[#allocation2 + $0x20] sm:$0xff]
    %v227 = vld [vmem:[#allocation2 + $0x28] sm:$0xff]
    %v228 = vld [vmem:[#allocation2 + $0x30] sm:$0xff]
    %v229 = vld [vmem:[#allocation2 + $0x38] sm:$0xff]
    %v230 = vpack.c.bf16 %v223, %v222
    %v231 = vpack.c.bf16 %v225, %v224
    %v232 = vpack.c.bf16 %v227, %v226
    %v233 = vpack.c.bf16 %v229, %v228
    %v234 = vld [vmem:[#allocation4] sm:$0xff]
    %v235 = vld [vmem:[#allocation4 + $0x8] sm:$0xff]
    %v236 = vld [vmem:[#allocation4 + $0x10] sm:$0xff]
    %v237 = vld [vmem:[#allocation4 + $0x18] sm:$0xff]
    %v238 = vld [vmem:[#allocation4 + $0x20] sm:$0xff]
    %v239 = vld [vmem:[#allocation4 + $0x28] sm:$0xff]
    %v240 = vld [vmem:[#allocation4 + $0x30] sm:$0xff]
    %v241 = vld [vmem:[#allocation4 + $0x38] sm:$0xff]
    %v242 = vld [vmem:[#allocation4 + $0x40] sm:$0xff]
    %v243 = vld [vmem:[#allocation4 + $0x48] sm:$0xff]
    %v244 = vld [vmem:[#allocation4 + $0x50] sm:$0xff]
    %v245 = vld [vmem:[#allocation4 + $0x58] sm:$0xff]
    %v246 = vld [vmem:[#allocation4 + $0x60] sm:$0xff]
    %v247 = vld [vmem:[#allocation4 + $0x68] sm:$0xff]
    %v248 = vld [vmem:[#allocation4 + $0x70] sm:$0xff]
    %v249 = vld [vmem:[#allocation4 + $0x78] sm:$0xff]
    %v250 = vld [vmem:[#allocation4 + $0x80] sm:$0xff]
    %v251 = vld [vmem:[#allocation4 + $0x88] sm:$0xff]
    %v252 = vld [vmem:[#allocation4 + $0x90] sm:$0xff]
    %v253 = vld [vmem:[#allocation4 + $0x98] sm:$0xff]
    %v254 = vld [vmem:[#allocation4 + $0xa0] sm:$0xff]
    %v255 = vld [vmem:[#allocation4 + $0xa8] sm:$0xff]
    %v256 = vld [vmem:[#allocation4 + $0xb0] sm:$0xff]
    %v257 = vld [vmem:[#allocation4 + $0xb8] sm:$0xff]
    %v258 = vld [vmem:[#allocation4 + $0xc0] sm:$0xff]
    %v259 = vld [vmem:[#allocation4 + $0xc8] sm:$0xff]
    %v260 = vld [vmem:[#allocation4 + $0xd0] sm:$0xff]
    %v261 = vld [vmem:[#allocation4 + $0xd8] sm:$0xff]
    %v262 = vld [vmem:[#allocation4 + $0xe0] sm:$0xff]
    %v263 = vld [vmem:[#allocation4 + $0xe8] sm:$0xff]
    %v264 = vld [vmem:[#allocation4 + $0xf0] sm:$0xff]
    %v265 = vld [vmem:[#allocation4 + $0xf8] sm:$0xff]
    %v266 = vld [vmem:[#allocation10] sm:$0xf]
    %v268 = vperm.slane %v266, 0
    %v269 = vperm.slane %v266, 1
    %v270 = vperm.slane %v266, 2
    %v271 = vperm.slane %v266, 3
    %v308 = vunpack.c.l.b16 %v234
    %v309 = vunpack.c.h.b16 %v234
    %v310 = vunpack.c.l.b16 %v235
    %v311 = vunpack.c.h.b16 %v235
    %v312 = vunpack.c.l.b16 %v236
    %v313 = vunpack.c.h.b16 %v236
    %v314 = vunpack.c.l.b16 %v237
    %v315 = vunpack.c.h.b16 %v237
    %v316 = vunpack.c.l.b16 %v238
    %v317 = vunpack.c.h.b16 %v238
    %v318 = vunpack.c.l.b16 %v239
    %v319 = vunpack.c.h.b16 %v239
    %v320 = vunpack.c.l.b16 %v240
    %v321 = vunpack.c.h.b16 %v240
    %v322 = vunpack.c.l.b16 %v241
    %v323 = vunpack.c.h.b16 %v241
    %v324 = vunpack.c.l.b16 %v242
    %v325 = vunpack.c.h.b16 %v242
    %v326 = vunpack.c.l.b16 %v243
    %v327 = vunpack.c.h.b16 %v243
    %v328 = vunpack.c.l.b16 %v244
    %v329 = vunpack.c.h.b16 %v244
    %v330 = vunpack.c.l.b16 %v245
    %v331 = vunpack.c.h.b16 %v245
    %v332 = vunpack.c.l.b16 %v246
    %v333 = vunpack.c.h.b16 %v246
    %v334 = vunpack.c.l.b16 %v247
    %v335 = vunpack.c.h.b16 %v247
    %v336 = vunpack.c.l.b16 %v248
    %v337 = vunpack.c.h.b16 %v248
    %v338 = vunpack.c.l.b16 %v249
    %v339 = vunpack.c.h.b16 %v249
    %v340 = vunpack.c.l.b16 %v250
    %v341 = vunpack.c.h.b16 %v250
    %v342 = vunpack.c.l.b16 %v251
    %v343 = vunpack.c.h.b16 %v251
    %v344 = vunpack.c.l.b16 %v252
    %v345 = vunpack.c.h.b16 %v252
    %v346 = vunpack.c.l.b16 %v253
    %v347 = vunpack.c.h.b16 %v253
    %v348 = vunpack.c.l.b16 %v254
    %v349 = vunpack.c.h.b16 %v254
    %v350 = vunpack.c.l.b16 %v255
    %v351 = vunpack.c.h.b16 %v255
    %v352 = vunpack.c.l.b16 %v256
    %v353 = vunpack.c.h.b16 %v256
    %v354 = vunpack.c.l.b16 %v257
    %v355 = vunpack.c.h.b16 %v257
    %v356 = vunpack.c.l.b16 %v258
    %v357 = vunpack.c.h.b16 %v258
    %v358 = vunpack.c.l.b16 %v259
    %v359 = vunpack.c.h.b16 %v259
    %v360 = vunpack.c.l.b16 %v260
    %v361 = vunpack.c.h.b16 %v260
    %v362 = vunpack.c.l.b16 %v261
    %v363 = vunpack.c.h.b16 %v261
    %v364 = vunpack.c.l.b16 %v262
    %v365 = vunpack.c.h.b16 %v262
    %v366 = vunpack.c.l.b16 %v263
    %v367 = vunpack.c.h.b16 %v263
    %v368 = vunpack.c.l.b16 %v264
    %v369 = vunpack.c.h.b16 %v264
    %v370 = vunpack.c.l.b16 %v265
    %v371 = vunpack.c.h.b16 %v265
    %v372 = vpack.c.b16 %v312, %v308
    %v373 = vpack.c.b16 %v313, %v309
    %v374 = vpack.c.b16 %v314, %v310
    %v375 = vpack.c.b16 %v315, %v311
    %v376 = vpack.c.b16 %v320, %v316
    %v377 = vpack.c.b16 %v321, %v317
    %v378 = vpack.c.b16 %v322, %v318
    %v379 = vpack.c.b16 %v323, %v319
    %v380 = vpack.c.b16 %v328, %v324
    %v381 = vpack.c.b16 %v329, %v325
    %v382 = vpack.c.b16 %v330, %v326
    %v383 = vpack.c.b16 %v331, %v327
    %v384 = vpack.c.b16 %v336, %v332
    %v385 = vpack.c.b16 %v337, %v333
    %v386 = vpack.c.b16 %v338, %v334
    %v387 = vpack.c.b16 %v339, %v335
    %v388 = vpack.c.b16 %v344, %v340
    %v389 = vpack.c.b16 %v345, %v341
    %v390 = vpack.c.b16 %v346, %v342
    %v391 = vpack.c.b16 %v347, %v343
    %v392 = vpack.c.b16 %v352, %v348
    %v393 = vpack.c.b16 %v353, %v349
    %v394 = vpack.c.b16 %v354, %v350
    %v395 = vpack.c.b16 %v355, %v351
    %v396 = vpack.c.b16 %v360, %v356
    %v397 = vpack.c.b16 %v361, %v357
    %v398 = vpack.c.b16 %v362, %v358
    %v399 = vpack.c.b16 %v363, %v359
    %v400 = vpack.c.b16 %v368, %v364
    %v401 = vpack.c.b16 %v369, %v365
    %v402 = vpack.c.b16 %v370, %v366
    %v403 = vpack.c.b16 %v371, %v367
    %436 = vmatpush.bf16.msra.mxu0 %v400
    %437 = vmatpush.bf16.msra.mxu0 %v396
    %438 = vmatpush.bf16.msra.mxu0 %v392
    %439 = vmatpush.bf16.msra.mxu0 %v388
    %440 = vmatpush.bf16.msra.mxu0 %v384
    %441 = vmatpush.bf16.msra.mxu0 %v380
    %442 = vmatpush.bf16.msra.mxu0 %v376
    %443 = vmatpush.bf16.msra.mxu0 %v372
    %444 = vmatmul.bf16.gmra.mxu0 %v230
    %v445 = vpop.f32.mrf.mxu0
    %v446 = vadd.f32 %v268, %v445
    %v447 = vpop.f32.mrf.mxu0
    %v448 = vadd.f32 %v268, %v447
    %449 = vmatmul.bf16.gmra.mxu0 %v231
    %v450 = vpop.f32.mrf.mxu0
    %v451 = vadd.f32 %v268, %v450
    %v452 = vpop.f32.mrf.mxu0
    %v453 = vadd.f32 %v268, %v452
    %454 = vmatmul.bf16.gmra.mxu0 %v232
    %v455 = vpop.f32.mrf.mxu0
    %v456 = vadd.f32 %v268, %v455
    %v457 = vpop.f32.mrf.mxu0
    %v458 = vadd.f32 %v268, %v457
    %459 = vmatmul.bf16.gmra.mxu0 %v233
    %v460 = vpop.f32.mrf.mxu0
    %v461 = vadd.f32 %v268, %v460
    %v462 = vpop.f32.mrf.mxu0
    %v463 = vadd.f32 %v268, %v462
    %464 = vdwg.mxu0
    %465 = vmatpush.bf16.msra.mxu0 %v401
    %466 = vmatpush.bf16.msra.mxu0 %v397
    %467 = vmatpush.bf16.msra.mxu0 %v393
    %468 = vmatpush.bf16.msra.mxu0 %v389
    %469 = vmatpush.bf16.msra.mxu0 %v385
    %470 = vmatpush.bf16.msra.mxu0 %v381
    %471 = vmatpush.bf16.msra.mxu0 %v377
    %472 = vmatpush.bf16.msra.mxu0 %v373
    %473 = vmatmul.bf16.gmra.mxu0 %v230
    %v474 = vpop.f32.mrf.mxu0
    %v475 = vadd.f32 %v269, %v474
    %v476 = vpop.f32.mrf.mxu0
    %v477 = vadd.f32 %v269, %v476
    %478 = vmatmul.bf16.gmra.mxu0 %v231
    %v479 = vpop.f32.mrf.mxu0
    %v480 = vadd.f32 %v269, %v479
    %v481 = vpop.f32.mrf.mxu0
    %v482 = vadd.f32 %v269, %v481
    %483 = vmatmul.bf16.gmra.mxu0 %v232
    %v484 = vpop.f32.mrf.mxu0
    %v485 = vadd.f32 %v269, %v484
    %v486 = vpop.f32.mrf.mxu0
    %v487 = vadd.f32 %v269, %v486
    %488 = vmatmul.bf16.gmra.mxu0 %v233
    %v489 = vpop.f32.mrf.mxu0
    %v490 = vadd.f32 %v269, %v489
    %v491 = vpop.f32.mrf.mxu0
    %v492 = vadd.f32 %v269, %v491
    %493 = vdwg.mxu0
    %494 = vmatpush.bf16.msra.mxu0 %v402
    %495 = vmatpush.bf16.msra.mxu0 %v398
    %496 = vmatpush.bf16.msra.mxu0 %v394
    %497 = vmatpush.bf16.msra.mxu0 %v390
    %498 = vmatpush.bf16.msra.mxu0 %v386
    %499 = vmatpush.bf16.msra.mxu0 %v382
    %500 = vmatpush.bf16.msra.mxu0 %v378
    %501 = vmatpush.bf16.msra.mxu0 %v374
    %502 = vmatmul.bf16.gmra.mxu0 %v230
    %v503 = vpop.f32.mrf.mxu0
    %v504 = vadd.f32 %v270, %v503
    %v505 = vpop.f32.mrf.mxu0
    %v506 = vadd.f32 %v270, %v505
    %507 = vmatmul.bf16.gmra.mxu0 %v231
    %v508 = vpop.f32.mrf.mxu0
    %v509 = vadd.f32 %v270, %v508
    %v510 = vpop.f32.mrf.mxu0
    %v511 = vadd.f32 %v270, %v510
    %512 = vmatmul.bf16.gmra.mxu0 %v232
    %v513 = vpop.f32.mrf.mxu0
    %v514 = vadd.f32 %v270, %v513
    %v515 = vpop.f32.mrf.mxu0
    %v516 = vadd.f32 %v270, %v515
    %517 = vmatmul.bf16.gmra.mxu0 %v233
    %v518 = vpop.f32.mrf.mxu0
    %v519 = vadd.f32 %v270, %v518
    %v520 = vpop.f32.mrf.mxu0
    %v521 = vadd.f32 %v270, %v520
    %522 = vdwg.mxu0
    %523 = vmatpush.bf16.msra.mxu0 %v403
    %524 = vmatpush.bf16.msra.mxu0 %v399
    %525 = vmatpush.bf16.msra.mxu0 %v395
    %526 = vmatpush.bf16.msra.mxu0 %v391
    %527 = vmatpush.bf16.msra.mxu0 %v387
    %528 = vmatpush.bf16.msra.mxu0 %v383
    %529 = vmatpush.bf16.msra.mxu0 %v379
    %530 = vmatpush.bf16.msra.mxu0 %v375
    %531 = vmatmul.bf16.gmra.mxu0 %v230
    %v532 = vpop.f32.mrf.mxu0
    %v533 = vadd.f32 %v271, %v532
    %v534 = vpop.f32.mrf.mxu0
    %v535 = vadd.f32 %v271, %v534
    %536 = vmatmul.bf16.gmra.mxu0 %v231
    %v537 = vpop.f32.mrf.mxu0
    %v538 = vadd.f32 %v271, %v537
    %v539 = vpop.f32.mrf.mxu0
    %v540 = vadd.f32 %v271, %v539
    %541 = vmatmul.bf16.gmra.mxu0 %v232
    %v542 = vpop.f32.mrf.mxu0
    %v543 = vadd.f32 %v271, %v542
    %v544 = vpop.f32.mrf.mxu0
    %v545 = vadd.f32 %v271, %v544
    %546 = vmatmul.bf16.gmra.mxu0 %v233
    %v547 = vpop.f32.mrf.mxu0
    %v548 = vadd.f32 %v271, %v547
    %v549 = vpop.f32.mrf.mxu0
    %v550 = vadd.f32 %v271, %v549
    %551 = vdwg.mxu0
    %552 = vst [vmem:[#allocation3] sm:$0xff] %v446
    %553 = vst [vmem:[#allocation3 + $0x8] sm:$0xff] %v475
    %554 = vst [vmem:[#allocation3 + $0x10] sm:$0xff] %v504
    %555 = vst [vmem:[#allocation3 + $0x18] sm:$0xff] %v533
    %556 = vst [vmem:[#allocation3 + $0x20] sm:$0xff] %v448
    %557 = vst [vmem:[#allocation3 + $0x28] sm:$0xff] %v477
    %558 = vst [vmem:[#allocation3 + $0x30] sm:$0xff] %v506
    %559 = vst [vmem:[#allocation3 + $0x38] sm:$0xff] %v535
    %560 = vst [vmem:[#allocation3 + $0x40] sm:$0xff] %v451
    %561 = vst [vmem:[#allocation3 + $0x48] sm:$0xff] %v480
    %562 = vst [vmem:[#allocation3 + $0x50] sm:$0xff] %v509
    %563 = vst [vmem:[#allocation3 + $0x58] sm:$0xff] %v538
    %564 = vst [vmem:[#allocation3 + $0x60] sm:$0xff] %v453
    %565 = vst [vmem:[#allocation3 + $0x68] sm:$0xff] %v482
    %566 = vst [vmem:[#allocation3 + $0x70] sm:$0xff] %v511
    %567 = vst [vmem:[#allocation3 + $0x78] sm:$0xff] %v540
    %568 = vst [vmem:[#allocation3 + $0x80] sm:$0xff] %v456
    %569 = vst [vmem:[#allocation3 + $0x88] sm:$0xff] %v485
    %570 = vst [vmem:[#allocation3 + $0x90] sm:$0xff] %v514
    %571 = vst [vmem:[#allocation3 + $0x98] sm:$0xff] %v543
    %572 = vst [vmem:[#allocation3 + $0xa0] sm:$0xff] %v458
    %573 = vst [vmem:[#allocation3 + $0xa8] sm:$0xff] %v487
    %574 = vst [vmem:[#allocation3 + $0xb0] sm:$0xff] %v516
    %575 = vst [vmem:[#allocation3 + $0xb8] sm:$0xff] %v545
    %576 = vst [vmem:[#allocation3 + $0xc0] sm:$0xff] %v461
    %577 = vst [vmem:[#allocation3 + $0xc8] sm:$0xff] %v490
    %578 = vst [vmem:[#allocation3 + $0xd0] sm:$0xff] %v519
    %579 = vst [vmem:[#allocation3 + $0xd8] sm:$0xff] %v548
    %580 = vst [vmem:[#allocation3 + $0xe0] sm:$0xff] %v463
    %581 = vst [vmem:[#allocation3 + $0xe8] sm:$0xff] %v492
    %582 = vst [vmem:[#allocation3 + $0xf0] sm:$0xff] %v521
    %583 = vst [vmem:[#allocation3 + $0xf8] sm:$0xff] %v550
    %v584 = vld [vmem:[%s6] sm:$0xff]
    %v585 = vld [vmem:[#allocation11] sm:$0xff]
    %s586 = smul.u32 0, 4
    %s587 = smul.addr %s586, 8
    %s588 = scalar_lea.vmem [#allocation3], %s587
    %v589 = vld [vmem:[%s588] sm:$0xff]
    %v590 = vld [vmem:[%s588 + $0x8] sm:$0xff]
    %v591 = vld [vmem:[%s588 + $0x10] sm:$0xff]
    %v592 = vld [vmem:[%s588 + $0x18] sm:$0xff]
    %v593 = vpack.c.bf16 %v584, %v584
    %v594 = vld [vmem:[#allocation8] sm:$0xff]
    %v595 = vld [vmem:[#allocation8 + $0x8] sm:$0xff]
    %v596 = vld [vmem:[#allocation8 + $0x10] sm:$0xff]
    %v597 = vld [vmem:[#allocation8 + $0x18] sm:$0xff]
    %v598 = vld [vmem:[#allocation8 + $0x20] sm:$0xff]
    %v599 = vld [vmem:[#allocation8 + $0x28] sm:$0xff]
    %v600 = vld [vmem:[#allocation8 + $0x30] sm:$0xff]
    %v601 = vld [vmem:[#allocation8 + $0x38] sm:$0xff]
    %v602 = vld [vmem:[#allocation8 + $0x40] sm:$0xff]
    %v603 = vld [vmem:[#allocation8 + $0x48] sm:$0xff]
    %v604 = vld [vmem:[#allocation8 + $0x50] sm:$0xff]
    %v605 = vld [vmem:[#allocation8 + $0x58] sm:$0xff]
    %v606 = vld [vmem:[#allocation8 + $0x60] sm:$0xff]
    %v607 = vld [vmem:[#allocation8 + $0x68] sm:$0xff]
    %v608 = vld [vmem:[#allocation8 + $0x70] sm:$0xff]
    %v609 = vld [vmem:[#allocation8 + $0x78] sm:$0xff]
    %v610 = vld [vmem:[#allocation8 + $0x80] sm:$0xff]
    %v611 = vld [vmem:[#allocation8 + $0x88] sm:$0xff]
    %v612 = vld [vmem:[#allocation8 + $0x90] sm:$0xff]
    %v613 = vld [vmem:[#allocation8 + $0x98] sm:$0xff]
    %v614 = vld [vmem:[#allocation8 + $0xa0] sm:$0xff]
    %v615 = vld [vmem:[#allocation8 + $0xa8] sm:$0xff]
    %v616 = vld [vmem:[#allocation8 + $0xb0] sm:$0xff]
    %v617 = vld [vmem:[#allocation8 + $0xb8] sm:$0xff]
    %v618 = vld [vmem:[#allocation8 + $0xc0] sm:$0xff]
    %v619 = vld [vmem:[#allocation8 + $0xc8] sm:$0xff]
    %v620 = vld [vmem:[#allocation8 + $0xd0] sm:$0xff]
    %v621 = vld [vmem:[#allocation8 + $0xd8] sm:$0xff]
    %v622 = vld [vmem:[#allocation8 + $0xe0] sm:$0xff]
    %v623 = vld [vmem:[#allocation8 + $0xe8] sm:$0xff]
    %v624 = vld [vmem:[#allocation8 + $0xf0] sm:$0xff]
    %v625 = vld [vmem:[#allocation8 + $0xf8] sm:$0xff]
    %v658 = vunpack.c.l.b16 %v594
    %v659 = vunpack.c.h.b16 %v594
    %v660 = vunpack.c.l.b16 %v595
    %v661 = vunpack.c.h.b16 %v595
    %v662 = vunpack.c.l.b16 %v596
    %v663 = vunpack.c.h.b16 %v596
    %v664 = vunpack.c.l.b16 %v597
    %v665 = vunpack.c.h.b16 %v597
    %v666 = vunpack.c.l.b16 %v598
    %v667 = vunpack.c.h.b16 %v598
    %v668 = vunpack.c.l.b16 %v599
    %v669 = vunpack.c.h.b16 %v599
    %v670 = vunpack.c.l.b16 %v600
    %v671 = vunpack.c.h.b16 %v600
    %v672 = vunpack.c.l.b16 %v601
    %v673 = vunpack.c.h.b16 %v601
    %v674 = vunpack.c.l.b16 %v602
    %v675 = vunpack.c.h.b16 %v602
    %v676 = vunpack.c.l.b16 %v603
    %v677 = vunpack.c.h.b16 %v603
    %v678 = vunpack.c.l.b16 %v604
    %v679 = vunpack.c.h.b16 %v604
    %v680 = vunpack.c.l.b16 %v605
    %v681 = vunpack.c.h.b16 %v605
    %v682 = vunpack.c.l.b16 %v606
    %v683 = vunpack.c.h.b16 %v606
    %v684 = vunpack.c.l.b16 %v607
    %v685 = vunpack.c.h.b16 %v607
    %v686 = vunpack.c.l.b16 %v608
    %v687 = vunpack.c.h.b16 %v608
    %v688 = vunpack.c.l.b16 %v609
    %v689 = vunpack.c.h.b16 %v609
    %v690 = vunpack.c.l.b16 %v610
    %v691 = vunpack.c.h.b16 %v610
    %v692 = vunpack.c.l.b16 %v611
    %v693 = vunpack.c.h.b16 %v611
    %v694 = vunpack.c.l.b16 %v612
    %v695 = vunpack.c.h.b16 %v612
    %v696 = vunpack.c.l.b16 %v613
    %v697 = vunpack.c.h.b16 %v613
    %v698 = vunpack.c.l.b16 %v614
    %v699 = vunpack.c.h.b16 %v614
    %v700 = vunpack.c.l.b16 %v615
    %v701 = vunpack.c.h.b16 %v615
    %v702 = vunpack.c.l.b16 %v616
    %v703 = vunpack.c.h.b16 %v616
    %v704 = vunpack.c.l.b16 %v617
    %v705 = vunpack.c.h.b16 %v617
    %v706 = vunpack.c.l.b16 %v618
    %v707 = vunpack.c.h.b16 %v618
    %v708 = vunpack.c.l.b16 %v619
    %v709 = vunpack.c.h.b16 %v619
    %v710 = vunpack.c.l.b16 %v620
    %v711 = vunpack.c.h.b16 %v620
    %v712 = vunpack.c.l.b16 %v621
    %v713 = vunpack.c.h.b16 %v621
    %v714 = vunpack.c.l.b16 %v622
    %v715 = vunpack.c.h.b16 %v622
    %v716 = vunpack.c.l.b16 %v623
    %v717 = vunpack.c.h.b16 %v623
    %v718 = vunpack.c.l.b16 %v624
    %v719 = vunpack.c.h.b16 %v624
    %v720 = vunpack.c.l.b16 %v625
    %v721 = vunpack.c.h.b16 %v625
    %v722 = vpack.c.b16 %v662, %v658
    %v723 = vpack.c.b16 %v663, %v659
    %v724 = vpack.c.b16 %v664, %v660
    %v725 = vpack.c.b16 %v665, %v661
    %v726 = vpack.c.b16 %v670, %v666
    %v727 = vpack.c.b16 %v671, %v667
    %v728 = vpack.c.b16 %v672, %v668
    %v729 = vpack.c.b16 %v673, %v669
    %v730 = vpack.c.b16 %v678, %v674
    %v731 = vpack.c.b16 %v679, %v675
    %v732 = vpack.c.b16 %v680, %v676
    %v733 = vpack.c.b16 %v681, %v677
    %v734 = vpack.c.b16 %v686, %v682
    %v735 = vpack.c.b16 %v687, %v683
    %v736 = vpack.c.b16 %v688, %v684
    %v737 = vpack.c.b16 %v689, %v685
    %v738 = vpack.c.b16 %v694, %v690
    %v739 = vpack.c.b16 %v695, %v691
    %v740 = vpack.c.b16 %v696, %v692
    %v741 = vpack.c.b16 %v697, %v693
    %v742 = vpack.c.b16 %v702, %v698
    %v743 = vpack.c.b16 %v703, %v699
    %v744 = vpack.c.b16 %v704, %v700
    %v745 = vpack.c.b16 %v705, %v701
    %v746 = vpack.c.b16 %v710, %v706
    %v747 = vpack.c.b16 %v711, %v707
    %v748 = vpack.c.b16 %v712, %v708
    %v749 = vpack.c.b16 %v713, %v709
    %v750 = vpack.c.b16 %v718, %v714
    %v751 = vpack.c.b16 %v719, %v715
    %v752 = vpack.c.b16 %v720, %v716
    %v753 = vpack.c.b16 %v721, %v717
    %786 = vmatpush.bf16.msra.mxu0 %v750
    %787 = vmatpush.bf16.msra.mxu0 %v746
    %788 = vmatpush.bf16.msra.mxu0 %v742
    %789 = vmatpush.bf16.msra.mxu0 %v738
    %790 = vmatpush.bf16.msra.mxu0 %v734
    %791 = vmatpush.bf16.msra.mxu0 %v730
    %792 = vmatpush.bf16.msra.mxu0 %v726
    %793 = vmatpush.bf16.msra.mxu0 %v722
    %794 = vmatmul.bf16.gmra.mxu0 %v593
    %v795 = vpop.f32.mrf.mxu0
    %v796 = vadd.f32 0.0, %v795
    %v797 = vpop.f32.mrf.mxu0
    %798 = vdwg.mxu0
    %799 = vmatpush.bf16.msra.mxu0 %v751
    %800 = vmatpush.bf16.msra.mxu0 %v747
    %801 = vmatpush.bf16.msra.mxu0 %v743
    %802 = vmatpush.bf16.msra.mxu0 %v739
    %803 = vmatpush.bf16.msra.mxu0 %v735
    %804 = vmatpush.bf16.msra.mxu0 %v731
    %805 = vmatpush.bf16.msra.mxu0 %v727
    %806 = vmatpush.bf16.msra.mxu0 %v723
    %807 = vmatmul.bf16.gmra.mxu0 %v593
    %v808 = vpop.f32.mrf.mxu0
    %v809 = vadd.f32 0.0, %v808
    %v810 = vpop.f32.mrf.mxu0
    %811 = vdwg.mxu0
    %812 = vmatpush.bf16.msra.mxu0 %v752
    %813 = vmatpush.bf16.msra.mxu0 %v748
    %814 = vmatpush.bf16.msra.mxu0 %v744
    %815 = vmatpush.bf16.msra.mxu0 %v740
    %816 = vmatpush.bf16.msra.mxu0 %v736
    %817 = vmatpush.bf16.msra.mxu0 %v732
    %818 = vmatpush.bf16.msra.mxu0 %v728
    %819 = vmatpush.bf16.msra.mxu0 %v724
    %820 = vmatmul.bf16.gmra.mxu0 %v593
    %v821 = vpop.f32.mrf.mxu0
    %v822 = vadd.f32 0.0, %v821
    %v823 = vpop.f32.mrf.mxu0
    %824 = vdwg.mxu0
    %825 = vmatpush.bf16.msra.mxu0 %v753
    %826 = vmatpush.bf16.msra.mxu0 %v749
    %827 = vmatpush.bf16.msra.mxu0 %v745
    %828 = vmatpush.bf16.msra.mxu0 %v741
    %829 = vmatpush.bf16.msra.mxu0 %v737
    %830 = vmatpush.bf16.msra.mxu0 %v733
    %831 = vmatpush.bf16.msra.mxu0 %v729
    %832 = vmatpush.bf16.msra.mxu0 %v725
    %833 = vmatmul.bf16.gmra.mxu0 %v593
    %v834 = vpop.f32.mrf.mxu0
    %v835 = vadd.f32 0.0, %v834
    %v836 = vpop.f32.mrf.mxu0
    %837 = vdwg.mxu0
    %v838 = vadd.f32 %v589, %v796
    %v839 = vadd.f32 %v590, %v809
    %v840 = vadd.f32 %v591, %v822
    %v841 = vadd.f32 %v592, %v835
    %v842 = vxor.u32 %v838, 2147483648
    %v843 = vmul.f32 %v842, 1.442695
    %v844 = vpow.pop %v843
    %v845 = vadd.f32 %v844, 1.0
    %v846 = vrcp.pop %v845
    %v847 = vmul.f32 %v845, %v846
    %v848 = vsub.f32 1.0, %v847
    %v849 = vmul.f32 %v846, %v848
    %v850 = vadd.f32 %v846, %v849
    %vm851 = vweird.f32 %v845
    %vm852 = vweird.f32 %v846
    %vm853 = vmor %vm851, %vm852
    %v854 = vsel %vm853, %v846, %v850
    %v855 = vand.u32 2147483647, %v845
    %vm856 = vcmp.eq.f32.partialorder %v855, 8.507059e+37
    %v857 = vand.u32 %v845, 2147483648
    %v858 = vor.u32 1.1754944e-38, %v857
    %v859 = vsel %vm856, %v858, %v854
    %v860 = vmul.f32 1.0, %v859
    %v861 = vxor.u32 %v839, 2147483648
    %v862 = vmul.f32 %v861, 1.442695
    %v863 = vpow.pop %v862
    %v864 = vadd.f32 %v863, 1.0
    %v865 = vrcp.pop %v864
    %v866 = vmul.f32 %v864, %v865
    %v867 = vsub.f32 1.0, %v866
    %v868 = vmul.f32 %v865, %v867
    %v869 = vadd.f32 %v865, %v868
    %vm870 = vweird.f32 %v864
    %vm871 = vweird.f32 %v865
    %vm872 = vmor %vm870, %vm871
    %v873 = vsel %vm872, %v865, %v869
    %v874 = vand.u32 2147483647, %v864
    %vm875 = vcmp.eq.f32.partialorder %v874, 8.507059e+37
    %v876 = vand.u32 %v864, 2147483648
    %v877 = vor.u32 1.1754944e-38, %v876
    %v878 = vsel %vm875, %v877, %v873
    %v879 = vmul.f32 1.0, %v878
    %v880 = vtanh.pop %v840
    %v881 = vxor.u32 %v841, 2147483648
    %v882 = vmul.f32 %v881, 1.442695
    %v883 = vpow.pop %v882
    %v884 = vadd.f32 %v883, 1.0
    %v885 = vrcp.pop %v884
    %v886 = vmul.f32 %v884, %v885
    %v887 = vsub.f32 1.0, %v886
    %v888 = vmul.f32 %v885, %v887
    %v889 = vadd.f32 %v885, %v888
    %vm890 = vweird.f32 %v884
    %vm891 = vweird.f32 %v885
    %vm892 = vmor %vm890, %vm891
    %v893 = vsel %vm892, %v885, %v889
    %v894 = vand.u32 2147483647, %v884
    %vm895 = vcmp.eq.f32.partialorder %v894, 8.507059e+37
    %v896 = vand.u32 %v884, 2147483648
    %v897 = vor.u32 1.1754944e-38, %v896
    %v898 = vsel %vm895, %v897, %v893
    %v899 = vmul.f32 1.0, %v898
    %v900 = vmul.f32 %v879, %v585
    %v901 = vmul.f32 %v860, %v880
    %v902 = vadd.f32 %v900, %v901
    %v903 = vtanh.pop %v902
    %v904 = vmul.f32 %v899, %v903
    %905 = vst [vmem:[#allocation2] sm:$0xff] %v904
    %s906 = smul.u32 1, 4
    %s907 = smul.addr %s906, 8
    %s908 = scalar_lea.vmem [#allocation3], %s907
    %v909 = vld [vmem:[%s908] sm:$0xff]
    %v910 = vld [vmem:[%s908 + $0x8] sm:$0xff]
    %v911 = vld [vmem:[%s908 + $0x10] sm:$0xff]
    %v912 = vld [vmem:[%s908 + $0x18] sm:$0xff]
    %v913 = vpack.c.bf16 %v904, %v904
    %v914 = vld [vmem:[#allocation8] sm:$0xff]
    %v915 = vld [vmem:[#allocation8 + $0x8] sm:$0xff]
    %v916 = vld [vmem:[#allocation8 + $0x10] sm:$0xff]
    %v917 = vld [vmem:[#allocation8 + $0x18] sm:$0xff]
    %v918 = vld [vmem:[#allocation8 + $0x20] sm:$0xff]
    %v919 = vld [vmem:[#allocation8 + $0x28] sm:$0xff]
    %v920 = vld [vmem:[#allocation8 + $0x30] sm:$0xff]
    %v921 = vld [vmem:[#allocation8 + $0x38] sm:$0xff]
    %v922 = vld [vmem:[#allocation8 + $0x40] sm:$0xff]
    %v923 = vld [vmem:[#allocation8 + $0x48] sm:$0xff]
    %v924 = vld [vmem:[#allocation8 + $0x50] sm:$0xff]
    %v925 = vld [vmem:[#allocation8 + $0x58] sm:$0xff]
    %v926 = vld [vmem:[#allocation8 + $0x60] sm:$0xff]
    %v927 = vld [vmem:[#allocation8 + $0x68] sm:$0xff]
    %v928 = vld [vmem:[#allocation8 + $0x70] sm:$0xff]
    %v929 = vld [vmem:[#allocation8 + $0x78] sm:$0xff]
    %v930 = vld [vmem:[#allocation8 + $0x80] sm:$0xff]
    %v931 = vld [vmem:[#allocation8 + $0x88] sm:$0xff]
    %v932 = vld [vmem:[#allocation8 + $0x90] sm:$0xff]
    %v933 = vld [vmem:[#allocation8 + $0x98] sm:$0xff]
    %v934 = vld [vmem:[#allocation8 + $0xa0] sm:$0xff]
    %v935 = vld [vmem:[#allocation8 + $0xa8] sm:$0xff]
    %v936 = vld [vmem:[#allocation8 + $0xb0] sm:$0xff]
    %v937 = vld [vmem:[#allocation8 + $0xb8] sm:$0xff]
    %v938 = vld [vmem:[#allocation8 + $0xc0] sm:$0xff]
    %v939 = vld [vmem:[#allocation8 + $0xc8] sm:$0xff]
    %v940 = vld [vmem:[#allocation8 + $0xd0] sm:$0xff]
    %v941 = vld [vmem:[#allocation8 + $0xd8] sm:$0xff]
    %v942 = vld [vmem:[#allocation8 + $0xe0] sm:$0xff]
    %v943 = vld [vmem:[#allocation8 + $0xe8] sm:$0xff]
    %v944 = vld [vmem:[#allocation8 + $0xf0] sm:$0xff]
    %v945 = vld [vmem:[#allocation8 + $0xf8] sm:$0xff]
    %v978 = vunpack.c.l.b16 %v914
    %v979 = vunpack.c.h.b16 %v914
    %v980 = vunpack.c.l.b16 %v915
    %v981 = vunpack.c.h.b16 %v915
    %v982 = vunpack.c.l.b16 %v916
    %v983 = vunpack.c.h.b16 %v916
    %v984 = vunpack.c.l.b16 %v917
    %v985 = vunpack.c.h.b16 %v917
    %v986 = vunpack.c.l.b16 %v918
    %v987 = vunpack.c.h.b16 %v918
    %v988 = vunpack.c.l.b16 %v919
    %v989 = vunpack.c.h.b16 %v919
    %v990 = vunpack.c.l.b16 %v920
    %v991 = vunpack.c.h.b16 %v920
    %v992 = vunpack.c.l.b16 %v921
    %v993 = vunpack.c.h.b16 %v921
    %v994 = vunpack.c.l.b16 %v922
    %v995 = vunpack.c.h.b16 %v922
    %v996 = vunpack.c.l.b16 %v923
    %v997 = vunpack.c.h.b16 %v923
    %v998 = vunpack.c.l.b16 %v924
    %v999 = vunpack.c.h.b16 %v924
    %v1000 = vunpack.c.l.b16 %v925
    %v1001 = vunpack.c.h.b16 %v925
    %v1002 = vunpack.c.l.b16 %v926
    %v1003 = vunpack.c.h.b16 %v926
    %v1004 = vunpack.c.l.b16 %v927
    %v1005 = vunpack.c.h.b16 %v927
    %v1006 = vunpack.c.l.b16 %v928
    %v1007 = vunpack.c.h.b16 %v928
    %v1008 = vunpack.c.l.b16 %v929
    %v1009 = vunpack.c.h.b16 %v929
    %v1010 = vunpack.c.l.b16 %v930
    %v1011 = vunpack.c.h.b16 %v930
    %v1012 = vunpack.c.l.b16 %v931
    %v1013 = vunpack.c.h.b16 %v931
    %v1014 = vunpack.c.l.b16 %v932
    %v1015 = vunpack.c.h.b16 %v932
    %v1016 = vunpack.c.l.b16 %v933
    %v1017 = vunpack.c.h.b16 %v933
    %v1018 = vunpack.c.l.b16 %v934
    %v1019 = vunpack.c.h.b16 %v934
    %v1020 = vunpack.c.l.b16 %v935
    %v1021 = vunpack.c.h.b16 %v935
    %v1022 = vunpack.c.l.b16 %v936
    %v1023 = vunpack.c.h.b16 %v936
    %v1024 = vunpack.c.l.b16 %v937
    %v1025 = vunpack.c.h.b16 %v937
    %v1026 = vunpack.c.l.b16 %v938
    %v1027 = vunpack.c.h.b16 %v938
    %v1028 = vunpack.c.l.b16 %v939
    %v1029 = vunpack.c.h.b16 %v939
    %v1030 = vunpack.c.l.b16 %v940
    %v1031 = vunpack.c.h.b16 %v940
    %v1032 = vunpack.c.l.b16 %v941
    %v1033 = vunpack.c.h.b16 %v941
    %v1034 = vunpack.c.l.b16 %v942
    %v1035 = vunpack.c.h.b16 %v942
    %v1036 = vunpack.c.l.b16 %v943
    %v1037 = vunpack.c.h.b16 %v943
    %v1038 = vunpack.c.l.b16 %v944
    %v1039 = vunpack.c.h.b16 %v944
    %v1040 = vunpack.c.l.b16 %v945
    %v1041 = vunpack.c.h.b16 %v945
    %v1042 = vpack.c.b16 %v982, %v978
    %v1043 = vpack.c.b16 %v983, %v979
    %v1044 = vpack.c.b16 %v984, %v980
    %v1045 = vpack.c.b16 %v985, %v981
    %v1046 = vpack.c.b16 %v990, %v986
    %v1047 = vpack.c.b16 %v991, %v987
    %v1048 = vpack.c.b16 %v992, %v988
    %v1049 = vpack.c.b16 %v993, %v989
    %v1050 = vpack.c.b16 %v998, %v994
    %v1051 = vpack.c.b16 %v999, %v995
    %v1052 = vpack.c.b16 %v1000, %v996
    %v1053 = vpack.c.b16 %v1001, %v997
    %v1054 = vpack.c.b16 %v1006, %v1002
    %v1055 = vpack.c.b16 %v1007, %v1003
    %v1056 = vpack.c.b16 %v1008, %v1004
    %v1057 = vpack.c.b16 %v1009, %v1005
    %v1058 = vpack.c.b16 %v1014, %v1010
    %v1059 = vpack.c.b16 %v1015, %v1011
    %v1060 = vpack.c.b16 %v1016, %v1012
    %v1061 = vpack.c.b16 %v1017, %v1013
    %v1062 = vpack.c.b16 %v1022, %v1018
    %v1063 = vpack.c.b16 %v1023, %v1019
    %v1064 = vpack.c.b16 %v1024, %v1020
    %v1065 = vpack.c.b16 %v1025, %v1021
    %v1066 = vpack.c.b16 %v1030, %v1026
    %v1067 = vpack.c.b16 %v1031, %v1027
    %v1068 = vpack.c.b16 %v1032, %v1028
    %v1069 = vpack.c.b16 %v1033, %v1029
    %v1070 = vpack.c.b16 %v1038, %v1034
    %v1071 = vpack.c.b16 %v1039, %v1035
    %v1072 = vpack.c.b16 %v1040, %v1036
    %v1073 = vpack.c.b16 %v1041, %v1037
    %1106 = vmatpush.bf16.msra.mxu0 %v1070
    %1107 = vmatpush.bf16.msra.mxu0 %v1066
    %1108 = vmatpush.bf16.msra.mxu0 %v1062
    %1109 = vmatpush.bf16.msra.mxu0 %v1058
    %1110 = vmatpush.bf16.msra.mxu0 %v1054
    %1111 = vmatpush.bf16.msra.mxu0 %v1050
    %1112 = vmatpush.bf16.msra.mxu0 %v1046
    %1113 = vmatpush.bf16.msra.mxu0 %v1042
    %1114 = vmatmul.bf16.gmra.mxu0 %v913
    %v1115 = vpop.f32.mrf.mxu0
    %v1116 = vadd.f32 0.0, %v1115
    %v1117 = vpop.f32.mrf.mxu0
    %1118 = vdwg.mxu0
    %1119 = vmatpush.bf16.msra.mxu0 %v1071
    %1120 = vmatpush.bf16.msra.mxu0 %v1067
    %1121 = vmatpush.bf16.msra.mxu0 %v1063
    %1122 = vmatpush.bf16.msra.mxu0 %v1059
    %1123 = vmatpush.bf16.msra.mxu0 %v1055
    %1124 = vmatpush.bf16.msra.mxu0 %v1051
    %1125 = vmatpush.bf16.msra.mxu0 %v1047
    %1126 = vmatpush.bf16.msra.mxu0 %v1043
    %1127 = vmatmul.bf16.gmra.mxu0 %v913
    %v1128 = vpop.f32.mrf.mxu0
    %v1129 = vadd.f32 0.0, %v1128
    %v1130 = vpop.f32.mrf.mxu0
    %1131 = vdwg.mxu0
    %1132 = vmatpush.bf16.msra.mxu0 %v1072
    %1133 = vmatpush.bf16.msra.mxu0 %v1068
    %1134 = vmatpush.bf16.msra.mxu0 %v1064
    %1135 = vmatpush.bf16.msra.mxu0 %v1060
    %1136 = vmatpush.bf16.msra.mxu0 %v1056
    %1137 = vmatpush.bf16.msra.mxu0 %v1052
    %1138 = vmatpush.bf16.msra.mxu0 %v1048
    %1139 = vmatpush.bf16.msra.mxu0 %v1044
    %1140 = vmatmul.bf16.gmra.mxu0 %v913
    %v1141 = vpop.f32.mrf.mxu0
    %v1142 = vadd.f32 0.0, %v1141
    %v1143 = vpop.f32.mrf.mxu0
    %1144 = vdwg.mxu0
    %1145 = vmatpush.bf16.msra.mxu0 %v1073
    %1146 = vmatpush.bf16.msra.mxu0 %v1069
    %1147 = vmatpush.bf16.msra.mxu0 %v1065
    %1148 = vmatpush.bf16.msra.mxu0 %v1061
    %1149 = vmatpush.bf16.msra.mxu0 %v1057
    %1150 = vmatpush.bf16.msra.mxu0 %v1053
    %1151 = vmatpush.bf16.msra.mxu0 %v1049
    %1152 = vmatpush.bf16.msra.mxu0 %v1045
    %1153 = vmatmul.bf16.gmra.mxu0 %v913
    %v1154 = vpop.f32.mrf.mxu0
    %v1155 = vadd.f32 0.0, %v1154
    %v1156 = vpop.f32.mrf.mxu0
    %1157 = vdwg.mxu0
    %v1158 = vadd.f32 %v909, %v1116
    %v1159 = vadd.f32 %v910, %v1129
    %v1160 = vadd.f32 %v911, %v1142
    %v1161 = vadd.f32 %v912, %v1155
    %v1162 = vxor.u32 %v1158, 2147483648
    %v1163 = vmul.f32 %v1162, 1.442695
    %v1164 = vpow.pop %v1163
    %v1165 = vadd.f32 %v1164, 1.0
    %v1166 = vrcp.pop %v1165
    %v1167 = vmul.f32 %v1165, %v1166
    %v1168 = vsub.f32 1.0, %v1167
    %v1169 = vmul.f32 %v1166, %v1168
    %v1170 = vadd.f32 %v1166, %v1169
    %vm1171 = vweird.f32 %v1165
    %vm1172 = vweird.f32 %v1166
    %vm1173 = vmor %vm1171, %vm1172
    %v1174 = vsel %vm1173, %v1166, %v1170
    %v1175 = vand.u32 2147483647, %v1165
    %vm1176 = vcmp.eq.f32.partialorder %v1175, 8.507059e+37
    %v1177 = vand.u32 %v1165, 2147483648
    %v1178 = vor.u32 1.1754944e-38, %v1177
    %v1179 = vsel %vm1176, %v1178, %v1174
    %v1180 = vmul.f32 1.0, %v1179
    %v1181 = vxor.u32 %v1159, 2147483648
    %v1182 = vmul.f32 %v1181, 1.442695
    %v1183 = vpow.pop %v1182
    %v1184 = vadd.f32 %v1183, 1.0
    %v1185 = vrcp.pop %v1184
    %v1186 = vmul.f32 %v1184, %v1185
    %v1187 = vsub.f32 1.0, %v1186
    %v1188 = vmul.f32 %v1185, %v1187
    %v1189 = vadd.f32 %v1185, %v1188
    %vm1190 = vweird.f32 %v1184
    %vm1191 = vweird.f32 %v1185
    %vm1192 = vmor %vm1190, %vm1191
    %v1193 = vsel %vm1192, %v1185, %v1189
    %v1194 = vand.u32 2147483647, %v1184
    %vm1195 = vcmp.eq.f32.partialorder %v1194, 8.507059e+37
    %v1196 = vand.u32 %v1184, 2147483648
    %v1197 = vor.u32 1.1754944e-38, %v1196
    %v1198 = vsel %vm1195, %v1197, %v1193
    %v1199 = vmul.f32 1.0, %v1198
    %v1200 = vtanh.pop %v1160
    %v1201 = vxor.u32 %v1161, 2147483648
    %v1202 = vmul.f32 %v1201, 1.442695
    %v1203 = vpow.pop %v1202
    %v1204 = vadd.f32 %v1203, 1.0
    %v1205 = vrcp.pop %v1204
    %v1206 = vmul.f32 %v1204, %v1205
    %v1207 = vsub.f32 1.0, %v1206
    %v1208 = vmul.f32 %v1205, %v1207
    %v1209 = vadd.f32 %v1205, %v1208
    %vm1210 = vweird.f32 %v1204
    %vm1211 = vweird.f32 %v1205
    %vm1212 = vmor %vm1210, %vm1211
    %v1213 = vsel %vm1212, %v1205, %v1209
    %v1214 = vand.u32 2147483647, %v1204
    %vm1215 = vcmp.eq.f32.partialorder %v1214, 8.507059e+37
    %v1216 = vand.u32 %v1204, 2147483648
    %v1217 = vor.u32 1.1754944e-38, %v1216
    %v1218 = vsel %vm1215, %v1217, %v1213
    %v1219 = vmul.f32 1.0, %v1218
    %v1220 = vmul.f32 %v1199, %v902
    %v1221 = vmul.f32 %v1180, %v1200
    %v1222 = vadd.f32 %v1220, %v1221
    %v1223 = vtanh.pop %v1222
    %v1224 = vmul.f32 %v1219, %v1223
    %s1225 = scalar_lea.vmem [#allocation2], 8
    %1226 = vst [vmem:[%s1225] sm:$0xff] %v1224
    %s1227 = smul.u32 2, 4
    %s1228 = smul.addr %s1227, 8
    %s1229 = scalar_lea.vmem [#allocation3], %s1228
    %v1230 = vld [vmem:[%s1229] sm:$0xff]
    %v1231 = vld [vmem:[%s1229 + $0x8] sm:$0xff]
    %v1232 = vld [vmem:[%s1229 + $0x10] sm:$0xff]
    %v1233 = vld [vmem:[%s1229 + $0x18] sm:$0xff]
    %v1234 = vpack.c.bf16 %v1224, %v1224
    %v1235 = vld [vmem:[#allocation8] sm:$0xff]
    %v1236 = vld [vmem:[#allocation8 + $0x8] sm:$0xff]
    %v1237 = vld [vmem:[#allocation8 + $0x10] sm:$0xff]
    %v1238 = vld [vmem:[#allocation8 + $0x18] sm:$0xff]
    %v1239 = vld [vmem:[#allocation8 + $0x20] sm:$0xff]
    %v1240 = vld [vmem:[#allocation8 + $0x28] sm:$0xff]
    %v1241 = vld [vmem:[#allocation8 + $0x30] sm:$0xff]
    %v1242 = vld [vmem:[#allocation8 + $0x38] sm:$0xff]
    %v1243 = vld [vmem:[#allocation8 + $0x40] sm:$0xff]
    %v1244 = vld [vmem:[#allocation8 + $0x48] sm:$0xff]
    %v1245 = vld [vmem:[#allocation8 + $0x50] sm:$0xff]
    %v1246 = vld [vmem:[#allocation8 + $0x58] sm:$0xff]
    %v1247 = vld [vmem:[#allocation8 + $0x60] sm:$0xff]
    %v1248 = vld [vmem:[#allocation8 + $0x68] sm:$0xff]
    %v1249 = vld [vmem:[#allocation8 + $0x70] sm:$0xff]
    %v1250 = vld [vmem:[#allocation8 + $0x78] sm:$0xff]
    %v1251 = vld [vmem:[#allocation8 + $0x80] sm:$0xff]
    %v1252 = vld [vmem:[#allocation8 + $0x88] sm:$0xff]
    %v1253 = vld [vmem:[#allocation8 + $0x90] sm:$0xff]
    %v1254 = vld [vmem:[#allocation8 + $0x98] sm:$0xff]
    %v1255 = vld [vmem:[#allocation8 + $0xa0] sm:$0xff]
    %v1256 = vld [vmem:[#allocation8 + $0xa8] sm:$0xff]
    %v1257 = vld [vmem:[#allocation8 + $0xb0] sm:$0xff]
    %v1258 = vld [vmem:[#allocation8 + $0xb8] sm:$0xff]
    %v1259 = vld [vmem:[#allocation8 + $0xc0] sm:$0xff]
    %v1260 = vld [vmem:[#allocation8 + $0xc8] sm:$0xff]
    %v1261 = vld [vmem:[#allocation8 + $0xd0] sm:$0xff]
    %v1262 = vld [vmem:[#allocation8 + $0xd8] sm:$0xff]
    %v1263 = vld [vmem:[#allocation8 + $0xe0] sm:$0xff]
    %v1264 = vld [vmem:[#allocation8 + $0xe8] sm:$0xff]
    %v1265 = vld [vmem:[#allocation8 + $0xf0] sm:$0xff]
    %v1266 = vld [vmem:[#allocation8 + $0xf8] sm:$0xff]
    %v1299 = vunpack.c.l.b16 %v1235
    %v1300 = vunpack.c.h.b16 %v1235
    %v1301 = vunpack.c.l.b16 %v1236
    %v1302 = vunpack.c.h.b16 %v1236
    %v1303 = vunpack.c.l.b16 %v1237
    %v1304 = vunpack.c.h.b16 %v1237
    %v1305 = vunpack.c.l.b16 %v1238
    %v1306 = vunpack.c.h.b16 %v1238
    %v1307 = vunpack.c.l.b16 %v1239
    %v1308 = vunpack.c.h.b16 %v1239
    %v1309 = vunpack.c.l.b16 %v1240
    %v1310 = vunpack.c.h.b16 %v1240
    %v1311 = vunpack.c.l.b16 %v1241
    %v1312 = vunpack.c.h.b16 %v1241
    %v1313 = vunpack.c.l.b16 %v1242
    %v1314 = vunpack.c.h.b16 %v1242
    %v1315 = vunpack.c.l.b16 %v1243
    %v1316 = vunpack.c.h.b16 %v1243
    %v1317 = vunpack.c.l.b16 %v1244
    %v1318 = vunpack.c.h.b16 %v1244
    %v1319 = vunpack.c.l.b16 %v1245
    %v1320 = vunpack.c.h.b16 %v1245
    %v1321 = vunpack.c.l.b16 %v1246
    %v1322 = vunpack.c.h.b16 %v1246
    %v1323 = vunpack.c.l.b16 %v1247
    %v1324 = vunpack.c.h.b16 %v1247
    %v1325 = vunpack.c.l.b16 %v1248
    %v1326 = vunpack.c.h.b16 %v1248
    %v1327 = vunpack.c.l.b16 %v1249
    %v1328 = vunpack.c.h.b16 %v1249
    %v1329 = vunpack.c.l.b16 %v1250
    %v1330 = vunpack.c.h.b16 %v1250
    %v1331 = vunpack.c.l.b16 %v1251
    %v1332 = vunpack.c.h.b16 %v1251
    %v1333 = vunpack.c.l.b16 %v1252
    %v1334 = vunpack.c.h.b16 %v1252
    %v1335 = vunpack.c.l.b16 %v1253
    %v1336 = vunpack.c.h.b16 %v1253
    %v1337 = vunpack.c.l.b16 %v1254
    %v1338 = vunpack.c.h.b16 %v1254
    %v1339 = vunpack.c.l.b16 %v1255
    %v1340 = vunpack.c.h.b16 %v1255
    %v1341 = vunpack.c.l.b16 %v1256
    %v1342 = vunpack.c.h.b16 %v1256
    %v1343 = vunpack.c.l.b16 %v1257
    %v1344 = vunpack.c.h.b16 %v1257
    %v1345 = vunpack.c.l.b16 %v1258
    %v1346 = vunpack.c.h.b16 %v1258
    %v1347 = vunpack.c.l.b16 %v1259
    %v1348 = vunpack.c.h.b16 %v1259
    %v1349 = vunpack.c.l.b16 %v1260
    %v1350 = vunpack.c.h.b16 %v1260
    %v1351 = vunpack.c.l.b16 %v1261
    %v1352 = vunpack.c.h.b16 %v1261
    %v1353 = vunpack.c.l.b16 %v1262
    %v1354 = vunpack.c.h.b16 %v1262
    %v1355 = vunpack.c.l.b16 %v1263
    %v1356 = vunpack.c.h.b16 %v1263
    %v1357 = vunpack.c.l.b16 %v1264
    %v1358 = vunpack.c.h.b16 %v1264
    %v1359 = vunpack.c.l.b16 %v1265
    %v1360 = vunpack.c.h.b16 %v1265
    %v1361 = vunpack.c.l.b16 %v1266
    %v1362 = vunpack.c.h.b16 %v1266
    %v1363 = vpack.c.b16 %v1303, %v1299
    %v1364 = vpack.c.b16 %v1304, %v1300
    %v1365 = vpack.c.b16 %v1305, %v1301
    %v1366 = vpack.c.b16 %v1306, %v1302
    %v1367 = vpack.c.b16 %v1311, %v1307
    %v1368 = vpack.c.b16 %v1312, %v1308
    %v1369 = vpack.c.b16 %v1313, %v1309
    %v1370 = vpack.c.b16 %v1314, %v1310
    %v1371 = vpack.c.b16 %v1319, %v1315
    %v1372 = vpack.c.b16 %v1320, %v1316
    %v1373 = vpack.c.b16 %v1321, %v1317
    %v1374 = vpack.c.b16 %v1322, %v1318
    %v1375 = vpack.c.b16 %v1327, %v1323
    %v1376 = vpack.c.b16 %v1328, %v1324
    %v1377 = vpack.c.b16 %v1329, %v1325
    %v1378 = vpack.c.b16 %v1330, %v1326
    %v1379 = vpack.c.b16 %v1335, %v1331
    %v1380 = vpack.c.b16 %v1336, %v1332
    %v1381 = vpack.c.b16 %v1337, %v1333
    %v1382 = vpack.c.b16 %v1338, %v1334
    %v1383 = vpack.c.b16 %v1343, %v1339
    %v1384 = vpack.c.b16 %v1344, %v1340
    %v1385 = vpack.c.b16 %v1345, %v1341
    %v1386 = vpack.c.b16 %v1346, %v1342
    %v1387 = vpack.c.b16 %v1351, %v1347
    %v1388 = vpack.c.b16 %v1352, %v1348
    %v1389 = vpack.c.b16 %v1353, %v1349
    %v1390 = vpack.c.b16 %v1354, %v1350
    %v1391 = vpack.c.b16 %v1359, %v1355
    %v1392 = vpack.c.b16 %v1360, %v1356
    %v1393 = vpack.c.b16 %v1361, %v1357
    %v1394 = vpack.c.b16 %v1362, %v1358
    %1427 = vmatpush.bf16.msra.mxu0 %v1391
    %1428 = vmatpush.bf16.msra.mxu0 %v1387
    %1429 = vmatpush.bf16.msra.mxu0 %v1383
    %1430 = vmatpush.bf16.msra.mxu0 %v1379
    %1431 = vmatpush.bf16.msra.mxu0 %v1375
    %1432 = vmatpush.bf16.msra.mxu0 %v1371
    %1433 = vmatpush.bf16.msra.mxu0 %v1367
    %1434 = vmatpush.bf16.msra.mxu0 %v1363
    %1435 = vmatmul.bf16.gmra.mxu0 %v1234
    %v1436 = vpop.f32.mrf.mxu0
    %v1437 = vadd.f32 0.0, %v1436
    %v1438 = vpop.f32.mrf.mxu0
    %1439 = vdwg.mxu0
    %1440 = vmatpush.bf16.msra.mxu0 %v1392
    %1441 = vmatpush.bf16.msra.mxu0 %v1388
    %1442 = vmatpush.bf16.msra.mxu0 %v1384
    %1443 = vmatpush.bf16.msra.mxu0 %v1380
    %1444 = vmatpush.bf16.msra.mxu0 %v1376
    %1445 = vmatpush.bf16.msra.mxu0 %v1372
    %1446 = vmatpush.bf16.msra.mxu0 %v1368
    %1447 = vmatpush.bf16.msra.mxu0 %v1364
    %1448 = vmatmul.bf16.gmra.mxu0 %v1234
    %v1449 = vpop.f32.mrf.mxu0
    %v1450 = vadd.f32 0.0, %v1449
    %v1451 = vpop.f32.mrf.mxu0
    %1452 = vdwg.mxu0
    %1453 = vmatpush.bf16.msra.mxu0 %v1393
    %1454 = vmatpush.bf16.msra.mxu0 %v1389
    %1455 = vmatpush.bf16.msra.mxu0 %v1385
    %1456 = vmatpush.bf16.msra.mxu0 %v1381
    %1457 = vmatpush.bf16.msra.mxu0 %v1377
    %1458 = vmatpush.bf16.msra.mxu0 %v1373
    %1459 = vmatpush.bf16.msra.mxu0 %v1369
    %1460 = vmatpush.bf16.msra.mxu0 %v1365
    %1461 = vmatmul.bf16.gmra.mxu0 %v1234
    %v1462 = vpop.f32.mrf.mxu0
    %v1463 = vadd.f32 0.0, %v1462
    %v1464 = vpop.f32.mrf.mxu0
    %1465 = vdwg.mxu0
    %1466 = vmatpush.bf16.msra.mxu0 %v1394
    %1467 = vmatpush.bf16.msra.mxu0 %v1390
    %1468 = vmatpush.bf16.msra.mxu0 %v1386
    %1469 = vmatpush.bf16.msra.mxu0 %v1382
    %1470 = vmatpush.bf16.msra.mxu0 %v1378
    %1471 = vmatpush.bf16.msra.mxu0 %v1374
    %1472 = vmatpush.bf16.msra.mxu0 %v1370
    %1473 = vmatpush.bf16.msra.mxu0 %v1366
    %1474 = vmatmul.bf16.gmra.mxu0 %v1234
    %v1475 = vpop.f32.mrf.mxu0
    %v1476 = vadd.f32 0.0, %v1475
    %v1477 = vpop.f32.mrf.mxu0
    %1478 = vdwg.mxu0
    %v1479 = vadd.f32 %v1230, %v1437
    %v1480 = vadd.f32 %v1231, %v1450
    %v1481 = vadd.f32 %v1232, %v1463
    %v1482 = vadd.f32 %v1233, %v1476
    %v1483 = vxor.u32 %v1479, 2147483648
    %v1484 = vmul.f32 %v1483, 1.442695
    %v1485 = vpow.pop %v1484
    %v1486 = vadd.f32 %v1485, 1.0
    %v1487 = vrcp.pop %v1486
    %v1488 = vmul.f32 %v1486, %v1487
    %v1489 = vsub.f32 1.0, %v1488
    %v1490 = vmul.f32 %v1487, %v1489
    %v1491 = vadd.f32 %v1487, %v1490
    %vm1492 = vweird.f32 %v1486
    %vm1493 = vweird.f32 %v1487
    %vm1494 = vmor %vm1492, %vm1493
    %v1495 = vsel %vm1494, %v1487, %v1491
    %v1496 = vand.u32 2147483647, %v1486
    %vm1497 = vcmp.eq.f32.partialorder %v1496, 8.507059e+37
    %v1498 = vand.u32 %v1486, 2147483648
    %v1499 = vor.u32 1.1754944e-38, %v1498
    %v1500 = vsel %vm1497, %v1499, %v1495
    %v1501 = vmul.f32 1.0, %v1500
    %v1502 = vxor.u32 %v1480, 2147483648
    %v1503 = vmul.f32 %v1502, 1.442695
    %v1504 = vpow.pop %v1503
    %v1505 = vadd.f32 %v1504, 1.0
    %v1506 = vrcp.pop %v1505
    %v1507 = vmul.f32 %v1505, %v1506
    %v1508 = vsub.f32 1.0, %v1507
    %v1509 = vmul.f32 %v1506, %v1508
    %v1510 = vadd.f32 %v1506, %v1509
    %vm1511 = vweird.f32 %v1505
    %vm1512 = vweird.f32 %v1506
    %vm1513 = vmor %vm1511, %vm1512
    %v1514 = vsel %vm1513, %v1506, %v1510
    %v1515 = vand.u32 2147483647, %v1505
    %vm1516 = vcmp.eq.f32.partialorder %v1515, 8.507059e+37
    %v1517 = vand.u32 %v1505, 2147483648
    %v1518 = vor.u32 1.1754944e-38, %v1517
    %v1519 = vsel %vm1516, %v1518, %v1514
    %v1520 = vmul.f32 1.0, %v1519
    %v1521 = vtanh.pop %v1481
    %v1522 = vxor.u32 %v1482, 2147483648
    %v1523 = vmul.f32 %v1522, 1.442695
    %v1524 = vpow.pop %v1523
    %v1525 = vadd.f32 %v1524, 1.0
    %v1526 = vrcp.pop %v1525
    %v1527 = vmul.f32 %v1525, %v1526
    %v1528 = vsub.f32 1.0, %v1527
    %v1529 = vmul.f32 %v1526, %v1528
    %v1530 = vadd.f32 %v1526, %v1529
    %vm1531 = vweird.f32 %v1525
    %vm1532 = vweird.f32 %v1526
    %vm1533 = vmor %vm1531, %vm1532
    %v1534 = vsel %vm1533, %v1526, %v1530
    %v1535 = vand.u32 2147483647, %v1525
    %vm1536 = vcmp.eq.f32.partialorder %v1535, 8.507059e+37
    %v1537 = vand.u32 %v1525, 2147483648
    %v1538 = vor.u32 1.1754944e-38, %v1537
    %v1539 = vsel %vm1536, %v1538, %v1534
    %v1540 = vmul.f32 1.0, %v1539
    %v1541 = vmul.f32 %v1520, %v1222
    %v1542 = vmul.f32 %v1501, %v1521
    %v1543 = vadd.f32 %v1541, %v1542
    %v1544 = vtanh.pop %v1543
    %v1545 = vmul.f32 %v1540, %v1544
    %s1546 = scalar_lea.vmem [#allocation2], 16
    %1547 = vst [vmem:[%s1546] sm:$0xff] %v1545
    %s1548 = smul.u32 3, 4
    %s1549 = smul.addr %s1548, 8
    %s1550 = scalar_lea.vmem [#allocation3], %s1549
    %v1551 = vld [vmem:[%s1550] sm:$0xff]
    %v1552 = vld [vmem:[%s1550 + $0x8] sm:$0xff]
    %v1553 = vld [vmem:[%s1550 + $0x10] sm:$0xff]
    %v1554 = vld [vmem:[%s1550 + $0x18] sm:$0xff]
    %v1555 = vpack.c.bf16 %v1545, %v1545
    %v1556 = vld [vmem:[#allocation8] sm:$0xff]
    %v1557 = vld [vmem:[#allocation8 + $0x8] sm:$0xff]
    %v1558 = vld [vmem:[#allocation8 + $0x10] sm:$0xff]
    %v1559 = vld [vmem:[#allocation8 + $0x18] sm:$0xff]
    %v1560 = vld [vmem:[#allocation8 + $0x20] sm:$0xff]
    %v1561 = vld [vmem:[#allocation8 + $0x28] sm:$0xff]
    %v1562 = vld [vmem:[#allocation8 + $0x30] sm:$0xff]
    %v1563 = vld [vmem:[#allocation8 + $0x38] sm:$0xff]
    %v1564 = vld [vmem:[#allocation8 + $0x40] sm:$0xff]
    %v1565 = vld [vmem:[#allocation8 + $0x48] sm:$0xff]
    %v1566 = vld [vmem:[#allocation8 + $0x50] sm:$0xff]
    %v1567 = vld [vmem:[#allocation8 + $0x58] sm:$0xff]
    %v1568 = vld [vmem:[#allocation8 + $0x60] sm:$0xff]
    %v1569 = vld [vmem:[#allocation8 + $0x68] sm:$0xff]
    %v1570 = vld [vmem:[#allocation8 + $0x70] sm:$0xff]
    %v1571 = vld [vmem:[#allocation8 + $0x78] sm:$0xff]
    %v1572 = vld [vmem:[#allocation8 + $0x80] sm:$0xff]
    %v1573 = vld [vmem:[#allocation8 + $0x88] sm:$0xff]
    %v1574 = vld [vmem:[#allocation8 + $0x90] sm:$0xff]
    %v1575 = vld [vmem:[#allocation8 + $0x98] sm:$0xff]
    %v1576 = vld [vmem:[#allocation8 + $0xa0] sm:$0xff]
    %v1577 = vld [vmem:[#allocation8 + $0xa8] sm:$0xff]
    %v1578 = vld [vmem:[#allocation8 + $0xb0] sm:$0xff]
    %v1579 = vld [vmem:[#allocation8 + $0xb8] sm:$0xff]
    %v1580 = vld [vmem:[#allocation8 + $0xc0] sm:$0xff]
    %v1581 = vld [vmem:[#allocation8 + $0xc8] sm:$0xff]
    %v1582 = vld [vmem:[#allocation8 + $0xd0] sm:$0xff]
    %v1583 = vld [vmem:[#allocation8 + $0xd8] sm:$0xff]
    %v1584 = vld [vmem:[#allocation8 + $0xe0] sm:$0xff]
    %v1585 = vld [vmem:[#allocation8 + $0xe8] sm:$0xff]
    %v1586 = vld [vmem:[#allocation8 + $0xf0] sm:$0xff]
    %v1587 = vld [vmem:[#allocation8 + $0xf8] sm:$0xff]
    %v1620 = vunpack.c.l.b16 %v1556
    %v1621 = vunpack.c.h.b16 %v1556
    %v1622 = vunpack.c.l.b16 %v1557
    %v1623 = vunpack.c.h.b16 %v1557
    %v1624 = vunpack.c.l.b16 %v1558
    %v1625 = vunpack.c.h.b16 %v1558
    %v1626 = vunpack.c.l.b16 %v1559
    %v1627 = vunpack.c.h.b16 %v1559
    %v1628 = vunpack.c.l.b16 %v1560
    %v1629 = vunpack.c.h.b16 %v1560
    %v1630 = vunpack.c.l.b16 %v1561
    %v1631 = vunpack.c.h.b16 %v1561
    %v1632 = vunpack.c.l.b16 %v1562
    %v1633 = vunpack.c.h.b16 %v1562
    %v1634 = vunpack.c.l.b16 %v1563
    %v1635 = vunpack.c.h.b16 %v1563
    %v1636 = vunpack.c.l.b16 %v1564
    %v1637 = vunpack.c.h.b16 %v1564
    %v1638 = vunpack.c.l.b16 %v1565
    %v1639 = vunpack.c.h.b16 %v1565
    %v1640 = vunpack.c.l.b16 %v1566
    %v1641 = vunpack.c.h.b16 %v1566
    %v1642 = vunpack.c.l.b16 %v1567
    %v1643 = vunpack.c.h.b16 %v1567
    %v1644 = vunpack.c.l.b16 %v1568
    %v1645 = vunpack.c.h.b16 %v1568
    %v1646 = vunpack.c.l.b16 %v1569
    %v1647 = vunpack.c.h.b16 %v1569
    %v1648 = vunpack.c.l.b16 %v1570
    %v1649 = vunpack.c.h.b16 %v1570
    %v1650 = vunpack.c.l.b16 %v1571
    %v1651 = vunpack.c.h.b16 %v1571
    %v1652 = vunpack.c.l.b16 %v1572
    %v1653 = vunpack.c.h.b16 %v1572
    %v1654 = vunpack.c.l.b16 %v1573
    %v1655 = vunpack.c.h.b16 %v1573
    %v1656 = vunpack.c.l.b16 %v1574
    %v1657 = vunpack.c.h.b16 %v1574
    %v1658 = vunpack.c.l.b16 %v1575
    %v1659 = vunpack.c.h.b16 %v1575
    %v1660 = vunpack.c.l.b16 %v1576
    %v1661 = vunpack.c.h.b16 %v1576
    %v1662 = vunpack.c.l.b16 %v1577
    %v1663 = vunpack.c.h.b16 %v1577
    %v1664 = vunpack.c.l.b16 %v1578
    %v1665 = vunpack.c.h.b16 %v1578
    %v1666 = vunpack.c.l.b16 %v1579
    %v1667 = vunpack.c.h.b16 %v1579
    %v1668 = vunpack.c.l.b16 %v1580
    %v1669 = vunpack.c.h.b16 %v1580
    %v1670 = vunpack.c.l.b16 %v1581
    %v1671 = vunpack.c.h.b16 %v1581
    %v1672 = vunpack.c.l.b16 %v1582
    %v1673 = vunpack.c.h.b16 %v1582
    %v1674 = vunpack.c.l.b16 %v1583
    %v1675 = vunpack.c.h.b16 %v1583
    %v1676 = vunpack.c.l.b16 %v1584
    %v1677 = vunpack.c.h.b16 %v1584
    %v1678 = vunpack.c.l.b16 %v1585
    %v1679 = vunpack.c.h.b16 %v1585
    %v1680 = vunpack.c.l.b16 %v1586
    %v1681 = vunpack.c.h.b16 %v1586
    %v1682 = vunpack.c.l.b16 %v1587
    %v1683 = vunpack.c.h.b16 %v1587
    %v1684 = vpack.c.b16 %v1624, %v1620
    %v1685 = vpack.c.b16 %v1625, %v1621
    %v1686 = vpack.c.b16 %v1626, %v1622
    %v1687 = vpack.c.b16 %v1627, %v1623
    %v1688 = vpack.c.b16 %v1632, %v1628
    %v1689 = vpack.c.b16 %v1633, %v1629
    %v1690 = vpack.c.b16 %v1634, %v1630
    %v1691 = vpack.c.b16 %v1635, %v1631
    %v1692 = vpack.c.b16 %v1640, %v1636
    %v1693 = vpack.c.b16 %v1641, %v1637
    %v1694 = vpack.c.b16 %v1642, %v1638
    %v1695 = vpack.c.b16 %v1643, %v1639
    %v1696 = vpack.c.b16 %v1648, %v1644
    %v1697 = vpack.c.b16 %v1649, %v1645
    %v1698 = vpack.c.b16 %v1650, %v1646
    %v1699 = vpack.c.b16 %v1651, %v1647
    %v1700 = vpack.c.b16 %v1656, %v1652
    %v1701 = vpack.c.b16 %v1657, %v1653
    %v1702 = vpack.c.b16 %v1658, %v1654
    %v1703 = vpack.c.b16 %v1659, %v1655
    %v1704 = vpack.c.b16 %v1664, %v1660
    %v1705 = vpack.c.b16 %v1665, %v1661
    %v1706 = vpack.c.b16 %v1666, %v1662
    %v1707 = vpack.c.b16 %v1667, %v1663
    %v1708 = vpack.c.b16 %v1672, %v1668
    %v1709 = vpack.c.b16 %v1673, %v1669
    %v1710 = vpack.c.b16 %v1674, %v1670
    %v1711 = vpack.c.b16 %v1675, %v1671
    %v1712 = vpack.c.b16 %v1680, %v1676
    %v1713 = vpack.c.b16 %v1681, %v1677
    %v1714 = vpack.c.b16 %v1682, %v1678
    %v1715 = vpack.c.b16 %v1683, %v1679
    %1748 = vmatpush.bf16.msra.mxu0 %v1712
    %1749 = vmatpush.bf16.msra.mxu0 %v1708
    %1750 = vmatpush.bf16.msra.mxu0 %v1704
    %1751 = vmatpush.bf16.msra.mxu0 %v1700
    %1752 = vmatpush.bf16.msra.mxu0 %v1696
    %1753 = vmatpush.bf16.msra.mxu0 %v1692
    %1754 = vmatpush.bf16.msra.mxu0 %v1688
    %1755 = vmatpush.bf16.msra.mxu0 %v1684
    %1756 = vmatmul.bf16.gmra.mxu0 %v1555
    %v1757 = vpop.f32.mrf.mxu0
    %v1758 = vadd.f32 0.0, %v1757
    %v1759 = vpop.f32.mrf.mxu0
    %1760 = vdwg.mxu0
    %1761 = vmatpush.bf16.msra.mxu0 %v1713
    %1762 = vmatpush.bf16.msra.mxu0 %v1709
    %1763 = vmatpush.bf16.msra.mxu0 %v1705
    %1764 = vmatpush.bf16.msra.mxu0 %v1701
    %1765 = vmatpush.bf16.msra.mxu0 %v1697
    %1766 = vmatpush.bf16.msra.mxu0 %v1693
    %1767 = vmatpush.bf16.msra.mxu0 %v1689
    %1768 = vmatpush.bf16.msra.mxu0 %v1685
    %1769 = vmatmul.bf16.gmra.mxu0 %v1555
    %v1770 = vpop.f32.mrf.mxu0
    %v1771 = vadd.f32 0.0, %v1770
    %v1772 = vpop.f32.mrf.mxu0
    %1773 = vdwg.mxu0
    %1774 = vmatpush.bf16.msra.mxu0 %v1714
    %1775 = vmatpush.bf16.msra.mxu0 %v1710
    %1776 = vmatpush.bf16.msra.mxu0 %v1706
    %1777 = vmatpush.bf16.msra.mxu0 %v1702
    %1778 = vmatpush.bf16.msra.mxu0 %v1698
    %1779 = vmatpush.bf16.msra.mxu0 %v1694
    %1780 = vmatpush.bf16.msra.mxu0 %v1690
    %1781 = vmatpush.bf16.msra.mxu0 %v1686
    %1782 = vmatmul.bf16.gmra.mxu0 %v1555
    %v1783 = vpop.f32.mrf.mxu0
    %v1784 = vadd.f32 0.0, %v1783
    %v1785 = vpop.f32.mrf.mxu0
    %1786 = vdwg.mxu0
    %1787 = vmatpush.bf16.msra.mxu0 %v1715
    %1788 = vmatpush.bf16.msra.mxu0 %v1711
    %1789 = vmatpush.bf16.msra.mxu0 %v1707
    %1790 = vmatpush.bf16.msra.mxu0 %v1703
    %1791 = vmatpush.bf16.msra.mxu0 %v1699
    %1792 = vmatpush.bf16.msra.mxu0 %v1695
    %1793 = vmatpush.bf16.msra.mxu0 %v1691
    %1794 = vmatpush.bf16.msra.mxu0 %v1687
    %1795 = vmatmul.bf16.gmra.mxu0 %v1555
    %v1796 = vpop.f32.mrf.mxu0
    %v1797 = vadd.f32 0.0, %v1796
    %v1798 = vpop.f32.mrf.mxu0
    %1799 = vdwg.mxu0
    %v1800 = vadd.f32 %v1551, %v1758
    %v1801 = vadd.f32 %v1552, %v1771
    %v1802 = vadd.f32 %v1553, %v1784
    %v1803 = vadd.f32 %v1554, %v1797
    %v1804 = vxor.u32 %v1800, 2147483648
    %v1805 = vmul.f32 %v1804, 1.442695
    %v1806 = vpow.pop %v1805
    %v1807 = vadd.f32 %v1806, 1.0
    %v1808 = vrcp.pop %v1807
    %v1809 = vmul.f32 %v1807, %v1808
    %v1810 = vsub.f32 1.0, %v1809
    %v1811 = vmul.f32 %v1808, %v1810
    %v1812 = vadd.f32 %v1808, %v1811
    %vm1813 = vweird.f32 %v1807
    %vm1814 = vweird.f32 %v1808
    %vm1815 = vmor %vm1813, %vm1814
    %v1816 = vsel %vm1815, %v1808, %v1812
    %v1817 = vand.u32 2147483647, %v1807
    %vm1818 = vcmp.eq.f32.partialorder %v1817, 8.507059e+37
    %v1819 = vand.u32 %v1807, 2147483648
    %v1820 = vor.u32 1.1754944e-38, %v1819
    %v1821 = vsel %vm1818, %v1820, %v1816
    %v1822 = vmul.f32 1.0, %v1821
    %v1823 = vxor.u32 %v1801, 2147483648
    %v1824 = vmul.f32 %v1823, 1.442695
    %v1825 = vpow.pop %v1824
    %v1826 = vadd.f32 %v1825, 1.0
    %v1827 = vrcp.pop %v1826
    %v1828 = vmul.f32 %v1826, %v1827
    %v1829 = vsub.f32 1.0, %v1828
    %v1830 = vmul.f32 %v1827, %v1829
    %v1831 = vadd.f32 %v1827, %v1830
    %vm1832 = vweird.f32 %v1826
    %vm1833 = vweird.f32 %v1827
    %vm1834 = vmor %vm1832, %vm1833
    %v1835 = vsel %vm1834, %v1827, %v1831
    %v1836 = vand.u32 2147483647, %v1826
    %vm1837 = vcmp.eq.f32.partialorder %v1836, 8.507059e+37
    %v1838 = vand.u32 %v1826, 2147483648
    %v1839 = vor.u32 1.1754944e-38, %v1838
    %v1840 = vsel %vm1837, %v1839, %v1835
    %v1841 = vmul.f32 1.0, %v1840
    %v1842 = vtanh.pop %v1802
    %v1843 = vxor.u32 %v1803, 2147483648
    %v1844 = vmul.f32 %v1843, 1.442695
    %v1845 = vpow.pop %v1844
    %v1846 = vadd.f32 %v1845, 1.0
    %v1847 = vrcp.pop %v1846
    %v1848 = vmul.f32 %v1846, %v1847
    %v1849 = vsub.f32 1.0, %v1848
    %v1850 = vmul.f32 %v1847, %v1849
    %v1851 = vadd.f32 %v1847, %v1850
    %vm1852 = vweird.f32 %v1846
    %vm1853 = vweird.f32 %v1847
    %vm1854 = vmor %vm1852, %vm1853
    %v1855 = vsel %vm1854, %v1847, %v1851
    %v1856 = vand.u32 2147483647, %v1846
    %vm1857 = vcmp.eq.f32.partialorder %v1856, 8.507059e+37
    %v1858 = vand.u32 %v1846, 2147483648
    %v1859 = vor.u32 1.1754944e-38, %v1858
    %v1860 = vsel %vm1857, %v1859, %v1855
    %v1861 = vmul.f32 1.0, %v1860
    %v1862 = vmul.f32 %v1841, %v1543
    %v1863 = vmul.f32 %v1822, %v1842
    %v1864 = vadd.f32 %v1862, %v1863
    %v1865 = vtanh.pop %v1864
    %v1866 = vmul.f32 %v1861, %v1865
    %s1867 = scalar_lea.vmem [#allocation2], 24
    %1868 = vst [vmem:[%s1867] sm:$0xff] %v1866
    %s1869 = smul.u32 4, 4
    %s1870 = smul.addr %s1869, 8
    %s1871 = scalar_lea.vmem [#allocation3], %s1870
    %v1872 = vld [vmem:[%s1871] sm:$0xff]
    %v1873 = vld [vmem:[%s1871 + $0x8] sm:$0xff]
    %v1874 = vld [vmem:[%s1871 + $0x10] sm:$0xff]
    %v1875 = vld [vmem:[%s1871 + $0x18] sm:$0xff]
    %v1876 = vpack.c.bf16 %v1866, %v1866
    %v1877 = vld [vmem:[#allocation8] sm:$0xff]
    %v1878 = vld [vmem:[#allocation8 + $0x8] sm:$0xff]
    %v1879 = vld [vmem:[#allocation8 + $0x10] sm:$0xff]
    %v1880 = vld [vmem:[#allocation8 + $0x18] sm:$0xff]
    %v1881 = vld [vmem:[#allocation8 + $0x20] sm:$0xff]
    %v1882 = vld [vmem:[#allocation8 + $0x28] sm:$0xff]
    %v1883 = vld [vmem:[#allocation8 + $0x30] sm:$0xff]
    %v1884 = vld [vmem:[#allocation8 + $0x38] sm:$0xff]
    %v1885 = vld [vmem:[#allocation8 + $0x40] sm:$0xff]
    %v1886 = vld [vmem:[#allocation8 + $0x48] sm:$0xff]
    %v1887 = vld [vmem:[#allocation8 + $0x50] sm:$0xff]
    %v1888 = vld [vmem:[#allocation8 + $0x58] sm:$0xff]
    %v1889 = vld [vmem:[#allocation8 + $0x60] sm:$0xff]
    %v1890 = vld [vmem:[#allocation8 + $0x68] sm:$0xff]
    %v1891 = vld [vmem:[#allocation8 + $0x70] sm:$0xff]
    %v1892 = vld [vmem:[#allocation8 + $0x78] sm:$0xff]
    %v1893 = vld [vmem:[#allocation8 + $0x80] sm:$0xff]
    %v1894 = vld [vmem:[#allocation8 + $0x88] sm:$0xff]
    %v1895 = vld [vmem:[#allocation8 + $0x90] sm:$0xff]
    %v1896 = vld [vmem:[#allocation8 + $0x98] sm:$0xff]
    %v1897 = vld [vmem:[#allocation8 + $0xa0] sm:$0xff]
    %v1898 = vld [vmem:[#allocation8 + $0xa8] sm:$0xff]
    %v1899 = vld [vmem:[#allocation8 + $0xb0] sm:$0xff]
    %v1900 = vld [vmem:[#allocation8 + $0xb8] sm:$0xff]
    %v1901 = vld [vmem:[#allocation8 + $0xc0] sm:$0xff]
    %v1902 = vld [vmem:[#allocation8 + $0xc8] sm:$0xff]
    %v1903 = vld [vmem:[#allocation8 + $0xd0] sm:$0xff]
    %v1904 = vld [vmem:[#allocation8 + $0xd8] sm:$0xff]
    %v1905 = vld [vmem:[#allocation8 + $0xe0] sm:$0xff]
    %v1906 = vld [vmem:[#allocation8 + $0xe8] sm:$0xff]
    %v1907 = vld [vmem:[#allocation8 + $0xf0] sm:$0xff]
    %v1908 = vld [vmem:[#allocation8 + $0xf8] sm:$0xff]
    %v1941 = vunpack.c.l.b16 %v1877
    %v1942 = vunpack.c.h.b16 %v1877
    %v1943 = vunpack.c.l.b16 %v1878
    %v1944 = vunpack.c.h.b16 %v1878
    %v1945 = vunpack.c.l.b16 %v1879
    %v1946 = vunpack.c.h.b16 %v1879
    %v1947 = vunpack.c.l.b16 %v1880
    %v1948 = vunpack.c.h.b16 %v1880
    %v1949 = vunpack.c.l.b16 %v1881
    %v1950 = vunpack.c.h.b16 %v1881
    %v1951 = vunpack.c.l.b16 %v1882
    %v1952 = vunpack.c.h.b16 %v1882
    %v1953 = vunpack.c.l.b16 %v1883
    %v1954 = vunpack.c.h.b16 %v1883
    %v1955 = vunpack.c.l.b16 %v1884
    %v1956 = vunpack.c.h.b16 %v1884
    %v1957 = vunpack.c.l.b16 %v1885
    %v1958 = vunpack.c.h.b16 %v1885
    %v1959 = vunpack.c.l.b16 %v1886
    %v1960 = vunpack.c.h.b16 %v1886
    %v1961 = vunpack.c.l.b16 %v1887
    %v1962 = vunpack.c.h.b16 %v1887
    %v1963 = vunpack.c.l.b16 %v1888
    %v1964 = vunpack.c.h.b16 %v1888
    %v1965 = vunpack.c.l.b16 %v1889
    %v1966 = vunpack.c.h.b16 %v1889
    %v1967 = vunpack.c.l.b16 %v1890
    %v1968 = vunpack.c.h.b16 %v1890
    %v1969 = vunpack.c.l.b16 %v1891
    %v1970 = vunpack.c.h.b16 %v1891
    %v1971 = vunpack.c.l.b16 %v1892
    %v1972 = vunpack.c.h.b16 %v1892
    %v1973 = vunpack.c.l.b16 %v1893
    %v1974 = vunpack.c.h.b16 %v1893
    %v1975 = vunpack.c.l.b16 %v1894
    %v1976 = vunpack.c.h.b16 %v1894
    %v1977 = vunpack.c.l.b16 %v1895
    %v1978 = vunpack.c.h.b16 %v1895
    %v1979 = vunpack.c.l.b16 %v1896
    %v1980 = vunpack.c.h.b16 %v1896
    %v1981 = vunpack.c.l.b16 %v1897
    %v1982 = vunpack.c.h.b16 %v1897
    %v1983 = vunpack.c.l.b16 %v1898
    %v1984 = vunpack.c.h.b16 %v1898
    %v1985 = vunpack.c.l.b16 %v1899
    %v1986 = vunpack.c.h.b16 %v1899
    %v1987 = vunpack.c.l.b16 %v1900
    %v1988 = vunpack.c.h.b16 %v1900
    %v1989 = vunpack.c.l.b16 %v1901
    %v1990 = vunpack.c.h.b16 %v1901
    %v1991 = vunpack.c.l.b16 %v1902
    %v1992 = vunpack.c.h.b16 %v1902
    %v1993 = vunpack.c.l.b16 %v1903
    %v1994 = vunpack.c.h.b16 %v1903
    %v1995 = vunpack.c.l.b16 %v1904
    %v1996 = vunpack.c.h.b16 %v1904
    %v1997 = vunpack.c.l.b16 %v1905
    %v1998 = vunpack.c.h.b16 %v1905
    %v1999 = vunpack.c.l.b16 %v1906
    %v2000 = vunpack.c.h.b16 %v1906
    %v2001 = vunpack.c.l.b16 %v1907
    %v2002 = vunpack.c.h.b16 %v1907
    %v2003 = vunpack.c.l.b16 %v1908
    %v2004 = vunpack.c.h.b16 %v1908
    %v2005 = vpack.c.b16 %v1945, %v1941
    %v2006 = vpack.c.b16 %v1946, %v1942
    %v2007 = vpack.c.b16 %v1947, %v1943
    %v2008 = vpack.c.b16 %v1948, %v1944
    %v2009 = vpack.c.b16 %v1953, %v1949
    %v2010 = vpack.c.b16 %v1954, %v1950
    %v2011 = vpack.c.b16 %v1955, %v1951
    %v2012 = vpack.c.b16 %v1956, %v1952
    %v2013 = vpack.c.b16 %v1961, %v1957
    %v2014 = vpack.c.b16 %v1962, %v1958
    %v2015 = vpack.c.b16 %v1963, %v1959
    %v2016 = vpack.c.b16 %v1964, %v1960
    %v2017 = vpack.c.b16 %v1969, %v1965
    %v2018 = vpack.c.b16 %v1970, %v1966
    %v2019 = vpack.c.b16 %v1971, %v1967
    %v2020 = vpack.c.b16 %v1972, %v1968
    %v2021 = vpack.c.b16 %v1977, %v1973
    %v2022 = vpack.c.b16 %v1978, %v1974
    %v2023 = vpack.c.b16 %v1979, %v1975
    %v2024 = vpack.c.b16 %v1980, %v1976
    %v2025 = vpack.c.b16 %v1985, %v1981
    %v2026 = vpack.c.b16 %v1986, %v1982
    %v2027 = vpack.c.b16 %v1987, %v1983
    %v2028 = vpack.c.b16 %v1988, %v1984
    %v2029 = vpack.c.b16 %v1993, %v1989
    %v2030 = vpack.c.b16 %v1994, %v1990
    %v2031 = vpack.c.b16 %v1995, %v1991
    %v2032 = vpack.c.b16 %v1996, %v1992
    %v2033 = vpack.c.b16 %v2001, %v1997
    %v2034 = vpack.c.b16 %v2002, %v1998
    %v2035 = vpack.c.b16 %v2003, %v1999
    %v2036 = vpack.c.b16 %v2004, %v2000
    %2069 = vmatpush.bf16.msra.mxu0 %v2033
    %2070 = vmatpush.bf16.msra.mxu0 %v2029
    %2071 = vmatpush.bf16.msra.mxu0 %v2025
    %2072 = vmatpush.bf16.msra.mxu0 %v2021
    %2073 = vmatpush.bf16.msra.mxu0 %v2017
    %2074 = vmatpush.bf16.msra.mxu0 %v2013
    %2075 = vmatpush.bf16.msra.mxu0 %v2009
    %2076 = vmatpush.bf16.msra.mxu0 %v2005
    %2077 = vmatmul.bf16.gmra.mxu0 %v1876
    %v2078 = vpop.f32.mrf.mxu0
    %v2079 = vadd.f32 0.0, %v2078
    %v2080 = vpop.f32.mrf.mxu0
    %2081 = vdwg.mxu0
    %2082 = vmatpush.bf16.msra.mxu0 %v2034
    %2083 = vmatpush.bf16.msra.mxu0 %v2030
    %2084 = vmatpush.bf16.msra.mxu0 %v2026
    %2085 = vmatpush.bf16.msra.mxu0 %v2022
    %2086 = vmatpush.bf16.msra.mxu0 %v2018
    %2087 = vmatpush.bf16.msra.mxu0 %v2014
    %2088 = vmatpush.bf16.msra.mxu0 %v2010
    %2089 = vmatpush.bf16.msra.mxu0 %v2006
    %2090 = vmatmul.bf16.gmra.mxu0 %v1876
    %v2091 = vpop.f32.mrf.mxu0
    %v2092 = vadd.f32 0.0, %v2091
    %v2093 = vpop.f32.mrf.mxu0
    %2094 = vdwg.mxu0
    %2095 = vmatpush.bf16.msra.mxu0 %v2035
    %2096 = vmatpush.bf16.msra.mxu0 %v2031
    %2097 = vmatpush.bf16.msra.mxu0 %v2027
    %2098 = vmatpush.bf16.msra.mxu0 %v2023
    %2099 = vmatpush.bf16.msra.mxu0 %v2019
    %2100 = vmatpush.bf16.msra.mxu0 %v2015
    %2101 = vmatpush.bf16.msra.mxu0 %v2011
    %2102 = vmatpush.bf16.msra.mxu0 %v2007
    %2103 = vmatmul.bf16.gmra.mxu0 %v1876
    %v2104 = vpop.f32.mrf.mxu0
    %v2105 = vadd.f32 0.0, %v2104
    %v2106 = vpop.f32.mrf.mxu0
    %2107 = vdwg.mxu0
    %2108 = vmatpush.bf16.msra.mxu0 %v2036
    %2109 = vmatpush.bf16.msra.mxu0 %v2032
    %2110 = vmatpush.bf16.msra.mxu0 %v2028
    %2111 = vmatpush.bf16.msra.mxu0 %v2024
    %2112 = vmatpush.bf16.msra.mxu0 %v2020
    %2113 = vmatpush.bf16.msra.mxu0 %v2016
    %2114 = vmatpush.bf16.msra.mxu0 %v2012
    %2115 = vmatpush.bf16.msra.mxu0 %v2008
    %2116 = vmatmul.bf16.gmra.mxu0 %v1876
    %v2117 = vpop.f32.mrf.mxu0
    %v2118 = vadd.f32 0.0, %v2117
    %v2119 = vpop.f32.mrf.mxu0
    %2120 = vdwg.mxu0
    %v2121 = vadd.f32 %v1872, %v2079
    %v2122 = vadd.f32 %v1873, %v2092
    %v2123 = vadd.f32 %v1874, %v2105
    %v2124 = vadd.f32 %v1875, %v2118
    %v2125 = vxor.u32 %v2121, 2147483648
    %v2126 = vmul.f32 %v2125, 1.442695
    %v2127 = vpow.pop %v2126
    %v2128 = vadd.f32 %v2127, 1.0
    %v2129 = vrcp.pop %v2128
    %v2130 = vmul.f32 %v2128, %v2129
    %v2131 = vsub.f32 1.0, %v2130
    %v2132 = vmul.f32 %v2129, %v2131
    %v2133 = vadd.f32 %v2129, %v2132
    %vm2134 = vweird.f32 %v2128
    %vm2135 = vweird.f32 %v2129
    %vm2136 = vmor %vm2134, %vm2135
    %v2137 = vsel %vm2136, %v2129, %v2133
    %v2138 = vand.u32 2147483647, %v2128
    %vm2139 = vcmp.eq.f32.partialorder %v2138, 8.507059e+37
    %v2140 = vand.u32 %v2128, 2147483648
    %v2141 = vor.u32 1.1754944e-38, %v2140
    %v2142 = vsel %vm2139, %v2141, %v2137
    %v2143 = vmul.f32 1.0, %v2142
    %v2144 = vxor.u32 %v2122, 2147483648
    %v2145 = vmul.f32 %v2144, 1.442695
    %v2146 = vpow.pop %v2145
    %v2147 = vadd.f32 %v2146, 1.0
    %v2148 = vrcp.pop %v2147
    %v2149 = vmul.f32 %v2147, %v2148
    %v2150 = vsub.f32 1.0, %v2149
    %v2151 = vmul.f32 %v2148, %v2150
    %v2152 = vadd.f32 %v2148, %v2151
    %vm2153 = vweird.f32 %v2147
    %vm2154 = vweird.f32 %v2148
    %vm2155 = vmor %vm2153, %vm2154
    %v2156 = vsel %vm2155, %v2148, %v2152
    %v2157 = vand.u32 2147483647, %v2147
    %vm2158 = vcmp.eq.f32.partialorder %v2157, 8.507059e+37
    %v2159 = vand.u32 %v2147, 2147483648
    %v2160 = vor.u32 1.1754944e-38, %v2159
    %v2161 = vsel %vm2158, %v2160, %v2156
    %v2162 = vmul.f32 1.0, %v2161
    %v2163 = vtanh.pop %v2123
    %v2164 = vxor.u32 %v2124, 2147483648
    %v2165 = vmul.f32 %v2164, 1.442695
    %v2166 = vpow.pop %v2165
    %v2167 = vadd.f32 %v2166, 1.0
    %v2168 = vrcp.pop %v2167
    %v2169 = vmul.f32 %v2167, %v2168
    %v2170 = vsub.f32 1.0, %v2169
    %v2171 = vmul.f32 %v2168, %v2170
    %v2172 = vadd.f32 %v2168, %v2171
    %vm2173 = vweird.f32 %v2167
    %vm2174 = vweird.f32 %v2168
    %vm2175 = vmor %vm2173, %vm2174
    %v2176 = vsel %vm2175, %v2168, %v2172
    %v2177 = vand.u32 2147483647, %v2167
    %vm2178 = vcmp.eq.f32.partialorder %v2177, 8.507059e+37
    %v2179 = vand.u32 %v2167, 2147483648
    %v2180 = vor.u32 1.1754944e-38, %v2179
    %v2181 = vsel %vm2178, %v2180, %v2176
    %v2182 = vmul.f32 1.0, %v2181
    %v2183 = vmul.f32 %v2162, %v1864
    %v2184 = vmul.f32 %v2143, %v2163
    %v2185 = vadd.f32 %v2183, %v2184
    %v2186 = vtanh.pop %v2185
    %v2187 = vmul.f32 %v2182, %v2186
    %s2188 = scalar_lea.vmem [#allocation2], 32
    %2189 = vst [vmem:[%s2188] sm:$0xff] %v2187
    %s2190 = smul.u32 5, 4
    %s2191 = smul.addr %s2190, 8
    %s2192 = scalar_lea.vmem [#allocation3], %s2191
    %v2193 = vld [vmem:[%s2192] sm:$0xff]
    %v2194 = vld [vmem:[%s2192 + $0x8] sm:$0xff]
    %v2195 = vld [vmem:[%s2192 + $0x10] sm:$0xff]
    %v2196 = vld [vmem:[%s2192 + $0x18] sm:$0xff]
    %v2197 = vpack.c.bf16 %v2187, %v2187
    %v2198 = vld [vmem:[#allocation8] sm:$0xff]
    %v2199 = vld [vmem:[#allocation8 + $0x8] sm:$0xff]
    %v2200 = vld [vmem:[#allocation8 + $0x10] sm:$0xff]
    %v2201 = vld [vmem:[#allocation8 + $0x18] sm:$0xff]
    %v2202 = vld [vmem:[#allocation8 + $0x20] sm:$0xff]
    %v2203 = vld [vmem:[#allocation8 + $0x28] sm:$0xff]
    %v2204 = vld [vmem:[#allocation8 + $0x30] sm:$0xff]
    %v2205 = vld [vmem:[#allocation8 + $0x38] sm:$0xff]
    %v2206 = vld [vmem:[#allocation8 + $0x40] sm:$0xff]
    %v2207 = vld [vmem:[#allocation8 + $0x48] sm:$0xff]
    %v2208 = vld [vmem:[#allocation8 + $0x50] sm:$0xff]
    %v2209 = vld [vmem:[#allocation8 + $0x58] sm:$0xff]
    %v2210 = vld [vmem:[#allocation8 + $0x60] sm:$0xff]
    %v2211 = vld [vmem:[#allocation8 + $0x68] sm:$0xff]
    %v2212 = vld [vmem:[#allocation8 + $0x70] sm:$0xff]
    %v2213 = vld [vmem:[#allocation8 + $0x78] sm:$0xff]
    %v2214 = vld [vmem:[#allocation8 + $0x80] sm:$0xff]
    %v2215 = vld [vmem:[#allocation8 + $0x88] sm:$0xff]
    %v2216 = vld [vmem:[#allocation8 + $0x90] sm:$0xff]
    %v2217 = vld [vmem:[#allocation8 + $0x98] sm:$0xff]
    %v2218 = vld [vmem:[#allocation8 + $0xa0] sm:$0xff]
    %v2219 = vld [vmem:[#allocation8 + $0xa8] sm:$0xff]
    %v2220 = vld [vmem:[#allocation8 + $0xb0] sm:$0xff]
    %v2221 = vld [vmem:[#allocation8 + $0xb8] sm:$0xff]
    %v2222 = vld [vmem:[#allocation8 + $0xc0] sm:$0xff]
    %v2223 = vld [vmem:[#allocation8 + $0xc8] sm:$0xff]
    %v2224 = vld [vmem:[#allocation8 + $0xd0] sm:$0xff]
    %v2225 = vld [vmem:[#allocation8 + $0xd8] sm:$0xff]
    %v2226 = vld [vmem:[#allocation8 + $0xe0] sm:$0xff]
    %v2227 = vld [vmem:[#allocation8 + $0xe8] sm:$0xff]
    %v2228 = vld [vmem:[#allocation8 + $0xf0] sm:$0xff]
    %v2229 = vld [vmem:[#allocation8 + $0xf8] sm:$0xff]
    %v2262 = vunpack.c.l.b16 %v2198
    %v2263 = vunpack.c.h.b16 %v2198
    %v2264 = vunpack.c.l.b16 %v2199
    %v2265 = vunpack.c.h.b16 %v2199
    %v2266 = vunpack.c.l.b16 %v2200
    %v2267 = vunpack.c.h.b16 %v2200
    %v2268 = vunpack.c.l.b16 %v2201
    %v2269 = vunpack.c.h.b16 %v2201
    %v2270 = vunpack.c.l.b16 %v2202
    %v2271 = vunpack.c.h.b16 %v2202
    %v2272 = vunpack.c.l.b16 %v2203
    %v2273 = vunpack.c.h.b16 %v2203
    %v2274 = vunpack.c.l.b16 %v2204
    %v2275 = vunpack.c.h.b16 %v2204
    %v2276 = vunpack.c.l.b16 %v2205
    %v2277 = vunpack.c.h.b16 %v2205
    %v2278 = vunpack.c.l.b16 %v2206
    %v2279 = vunpack.c.h.b16 %v2206
    %v2280 = vunpack.c.l.b16 %v2207
    %v2281 = vunpack.c.h.b16 %v2207
    %v2282 = vunpack.c.l.b16 %v2208
    %v2283 = vunpack.c.h.b16 %v2208
    %v2284 = vunpack.c.l.b16 %v2209
    %v2285 = vunpack.c.h.b16 %v2209
    %v2286 = vunpack.c.l.b16 %v2210
    %v2287 = vunpack.c.h.b16 %v2210
    %v2288 = vunpack.c.l.b16 %v2211
    %v2289 = vunpack.c.h.b16 %v2211
    %v2290 = vunpack.c.l.b16 %v2212
    %v2291 = vunpack.c.h.b16 %v2212
    %v2292 = vunpack.c.l.b16 %v2213
    %v2293 = vunpack.c.h.b16 %v2213
    %v2294 = vunpack.c.l.b16 %v2214
    %v2295 = vunpack.c.h.b16 %v2214
    %v2296 = vunpack.c.l.b16 %v2215
    %v2297 = vunpack.c.h.b16 %v2215
    %v2298 = vunpack.c.l.b16 %v2216
    %v2299 = vunpack.c.h.b16 %v2216
    %v2300 = vunpack.c.l.b16 %v2217
    %v2301 = vunpack.c.h.b16 %v2217
    %v2302 = vunpack.c.l.b16 %v2218
    %v2303 = vunpack.c.h.b16 %v2218
    %v2304 = vunpack.c.l.b16 %v2219
    %v2305 = vunpack.c.h.b16 %v2219
    %v2306 = vunpack.c.l.b16 %v2220
    %v2307 = vunpack.c.h.b16 %v2220
    %v2308 = vunpack.c.l.b16 %v2221
    %v2309 = vunpack.c.h.b16 %v2221
    %v2310 = vunpack.c.l.b16 %v2222
    %v2311 = vunpack.c.h.b16 %v2222
    %v2312 = vunpack.c.l.b16 %v2223
    %v2313 = vunpack.c.h.b16 %v2223
    %v2314 = vunpack.c.l.b16 %v2224
    %v2315 = vunpack.c.h.b16 %v2224
    %v2316 = vunpack.c.l.b16 %v2225
    %v2317 = vunpack.c.h.b16 %v2225
    %v2318 = vunpack.c.l.b16 %v2226
    %v2319 = vunpack.c.h.b16 %v2226
    %v2320 = vunpack.c.l.b16 %v2227
    %v2321 = vunpack.c.h.b16 %v2227
    %v2322 = vunpack.c.l.b16 %v2228
    %v2323 = vunpack.c.h.b16 %v2228
    %v2324 = vunpack.c.l.b16 %v2229
    %v2325 = vunpack.c.h.b16 %v2229
    %v2326 = vpack.c.b16 %v2266, %v2262
    %v2327 = vpack.c.b16 %v2267, %v2263
    %v2328 = vpack.c.b16 %v2268, %v2264
    %v2329 = vpack.c.b16 %v2269, %v2265
    %v2330 = vpack.c.b16 %v2274, %v2270
    %v2331 = vpack.c.b16 %v2275, %v2271
    %v2332 = vpack.c.b16 %v2276, %v2272
    %v2333 = vpack.c.b16 %v2277, %v2273
    %v2334 = vpack.c.b16 %v2282, %v2278
    %v2335 = vpack.c.b16 %v2283, %v2279
    %v2336 = vpack.c.b16 %v2284, %v2280
    %v2337 = vpack.c.b16 %v2285, %v2281
    %v2338 = vpack.c.b16 %v2290, %v2286
    %v2339 = vpack.c.b16 %v2291, %v2287
    %v2340 = vpack.c.b16 %v2292, %v2288
    %v2341 = vpack.c.b16 %v2293, %v2289
    %v2342 = vpack.c.b16 %v2298, %v2294
    %v2343 = vpack.c.b16 %v2299, %v2295
    %v2344 = vpack.c.b16 %v2300, %v2296
    %v2345 = vpack.c.b16 %v2301, %v2297
    %v2346 = vpack.c.b16 %v2306, %v2302
    %v2347 = vpack.c.b16 %v2307, %v2303
    %v2348 = vpack.c.b16 %v2308, %v2304
    %v2349 = vpack.c.b16 %v2309, %v2305
    %v2350 = vpack.c.b16 %v2314, %v2310
    %v2351 = vpack.c.b16 %v2315, %v2311
    %v2352 = vpack.c.b16 %v2316, %v2312
    %v2353 = vpack.c.b16 %v2317, %v2313
    %v2354 = vpack.c.b16 %v2322, %v2318
    %v2355 = vpack.c.b16 %v2323, %v2319
    %v2356 = vpack.c.b16 %v2324, %v2320
    %v2357 = vpack.c.b16 %v2325, %v2321
    %2390 = vmatpush.bf16.msra.mxu0 %v2354
    %2391 = vmatpush.bf16.msra.mxu0 %v2350
    %2392 = vmatpush.bf16.msra.mxu0 %v2346
    %2393 = vmatpush.bf16.msra.mxu0 %v2342
    %2394 = vmatpush.bf16.msra.mxu0 %v2338
    %2395 = vmatpush.bf16.msra.mxu0 %v2334
    %2396 = vmatpush.bf16.msra.mxu0 %v2330
    %2397 = vmatpush.bf16.msra.mxu0 %v2326
    %2398 = vmatmul.bf16.gmra.mxu0 %v2197
    %v2399 = vpop.f32.mrf.mxu0
    %v2400 = vadd.f32 0.0, %v2399
    %v2401 = vpop.f32.mrf.mxu0
    %2402 = vdwg.mxu0
    %2403 = vmatpush.bf16.msra.mxu0 %v2355
    %2404 = vmatpush.bf16.msra.mxu0 %v2351
    %2405 = vmatpush.bf16.msra.mxu0 %v2347
    %2406 = vmatpush.bf16.msra.mxu0 %v2343
    %2407 = vmatpush.bf16.msra.mxu0 %v2339
    %2408 = vmatpush.bf16.msra.mxu0 %v2335
    %2409 = vmatpush.bf16.msra.mxu0 %v2331
    %2410 = vmatpush.bf16.msra.mxu0 %v2327
    %2411 = vmatmul.bf16.gmra.mxu0 %v2197
    %v2412 = vpop.f32.mrf.mxu0
    %v2413 = vadd.f32 0.0, %v2412
    %v2414 = vpop.f32.mrf.mxu0
    %2415 = vdwg.mxu0
    %2416 = vmatpush.bf16.msra.mxu0 %v2356
    %2417 = vmatpush.bf16.msra.mxu0 %v2352
    %2418 = vmatpush.bf16.msra.mxu0 %v2348
    %2419 = vmatpush.bf16.msra.mxu0 %v2344
    %2420 = vmatpush.bf16.msra.mxu0 %v2340
    %2421 = vmatpush.bf16.msra.mxu0 %v2336
    %2422 = vmatpush.bf16.msra.mxu0 %v2332
    %2423 = vmatpush.bf16.msra.mxu0 %v2328
    %2424 = vmatmul.bf16.gmra.mxu0 %v2197
    %v2425 = vpop.f32.mrf.mxu0
    %v2426 = vadd.f32 0.0, %v2425
    %v2427 = vpop.f32.mrf.mxu0
    %2428 = vdwg.mxu0
    %2429 = vmatpush.bf16.msra.mxu0 %v2357
    %2430 = vmatpush.bf16.msra.mxu0 %v2353
    %2431 = vmatpush.bf16.msra.mxu0 %v2349
    %2432 = vmatpush.bf16.msra.mxu0 %v2345
    %2433 = vmatpush.bf16.msra.mxu0 %v2341
    %2434 = vmatpush.bf16.msra.mxu0 %v2337
    %2435 = vmatpush.bf16.msra.mxu0 %v2333
    %2436 = vmatpush.bf16.msra.mxu0 %v2329
    %2437 = vmatmul.bf16.gmra.mxu0 %v2197
    %v2438 = vpop.f32.mrf.mxu0
    %v2439 = vadd.f32 0.0, %v2438
    %v2440 = vpop.f32.mrf.mxu0
    %2441 = vdwg.mxu0
    %v2442 = vadd.f32 %v2193, %v2400
    %v2443 = vadd.f32 %v2194, %v2413
    %v2444 = vadd.f32 %v2195, %v2426
    %v2445 = vadd.f32 %v2196, %v2439
    %v2446 = vxor.u32 %v2442, 2147483648
    %v2447 = vmul.f32 %v2446, 1.442695
    %v2448 = vpow.pop %v2447
    %v2449 = vadd.f32 %v2448, 1.0
    %v2450 = vrcp.pop %v2449
    %v2451 = vmul.f32 %v2449, %v2450
    %v2452 = vsub.f32 1.0, %v2451
    %v2453 = vmul.f32 %v2450, %v2452
    %v2454 = vadd.f32 %v2450, %v2453
    %vm2455 = vweird.f32 %v2449
    %vm2456 = vweird.f32 %v2450
    %vm2457 = vmor %vm2455, %vm2456
    %v2458 = vsel %vm2457, %v2450, %v2454
    %v2459 = vand.u32 2147483647, %v2449
    %vm2460 = vcmp.eq.f32.partialorder %v2459, 8.507059e+37
    %v2461 = vand.u32 %v2449, 2147483648
    %v2462 = vor.u32 1.1754944e-38, %v2461
    %v2463 = vsel %vm2460, %v2462, %v2458
    %v2464 = vmul.f32 1.0, %v2463
    %v2465 = vxor.u32 %v2443, 2147483648
    %v2466 = vmul.f32 %v2465, 1.442695
    %v2467 = vpow.pop %v2466
    %v2468 = vadd.f32 %v2467, 1.0
    %v2469 = vrcp.pop %v2468
    %v2470 = vmul.f32 %v2468, %v2469
    %v2471 = vsub.f32 1.0, %v2470
    %v2472 = vmul.f32 %v2469, %v2471
    %v2473 = vadd.f32 %v2469, %v2472
    %vm2474 = vweird.f32 %v2468
    %vm2475 = vweird.f32 %v2469
    %vm2476 = vmor %vm2474, %vm2475
    %v2477 = vsel %vm2476, %v2469, %v2473
    %v2478 = vand.u32 2147483647, %v2468
    %vm2479 = vcmp.eq.f32.partialorder %v2478, 8.507059e+37
    %v2480 = vand.u32 %v2468, 2147483648
    %v2481 = vor.u32 1.1754944e-38, %v2480
    %v2482 = vsel %vm2479, %v2481, %v2477
    %v2483 = vmul.f32 1.0, %v2482
    %v2484 = vtanh.pop %v2444
    %v2485 = vxor.u32 %v2445, 2147483648
    %v2486 = vmul.f32 %v2485, 1.442695
    %v2487 = vpow.pop %v2486
    %v2488 = vadd.f32 %v2487, 1.0
    %v2489 = vrcp.pop %v2488
    %v2490 = vmul.f32 %v2488, %v2489
    %v2491 = vsub.f32 1.0, %v2490
    %v2492 = vmul.f32 %v2489, %v2491
    %v2493 = vadd.f32 %v2489, %v2492
    %vm2494 = vweird.f32 %v2488
    %vm2495 = vweird.f32 %v2489
    %vm2496 = vmor %vm2494, %vm2495
    %v2497 = vsel %vm2496, %v2489, %v2493
    %v2498 = vand.u32 2147483647, %v2488
    %vm2499 = vcmp.eq.f32.partialorder %v2498, 8.507059e+37
    %v2500 = vand.u32 %v2488, 2147483648
    %v2501 = vor.u32 1.1754944e-38, %v2500
    %v2502 = vsel %vm2499, %v2501, %v2497
    %v2503 = vmul.f32 1.0, %v2502
    %v2504 = vmul.f32 %v2483, %v2185
    %v2505 = vmul.f32 %v2464, %v2484
    %v2506 = vadd.f32 %v2504, %v2505
    %v2507 = vtanh.pop %v2506
    %v2508 = vmul.f32 %v2503, %v2507
    %s2509 = scalar_lea.vmem [#allocation2], 40
    %2510 = vst [vmem:[%s2509] sm:$0xff] %v2508
    %s2511 = smul.u32 6, 4
    %s2512 = smul.addr %s2511, 8
    %s2513 = scalar_lea.vmem [#allocation3], %s2512
    %v2514 = vld [vmem:[%s2513] sm:$0xff]
    %v2515 = vld [vmem:[%s2513 + $0x8] sm:$0xff]
    %v2516 = vld [vmem:[%s2513 + $0x10] sm:$0xff]
    %v2517 = vld [vmem:[%s2513 + $0x18] sm:$0xff]
    %v2518 = vpack.c.bf16 %v2508, %v2508
    %v2519 = vld [vmem:[#allocation8] sm:$0xff]
    %v2520 = vld [vmem:[#allocation8 + $0x8] sm:$0xff]
    %v2521 = vld [vmem:[#allocation8 + $0x10] sm:$0xff]
    %v2522 = vld [vmem:[#allocation8 + $0x18] sm:$0xff]
    %v2523 = vld [vmem:[#allocation8 + $0x20] sm:$0xff]
    %v2524 = vld [vmem:[#allocation8 + $0x28] sm:$0xff]
    %v2525 = vld [vmem:[#allocation8 + $0x30] sm:$0xff]
    %v2526 = vld [vmem:[#allocation8 + $0x38] sm:$0xff]
    %v2527 = vld [vmem:[#allocation8 + $0x40] sm:$0xff]
    %v2528 = vld [vmem:[#allocation8 + $0x48] sm:$0xff]
    %v2529 = vld [vmem:[#allocation8 + $0x50] sm:$0xff]
    %v2530 = vld [vmem:[#allocation8 + $0x58] sm:$0xff]
    %v2531 = vld [vmem:[#allocation8 + $0x60] sm:$0xff]
    %v2532 = vld [vmem:[#allocation8 + $0x68] sm:$0xff]
    %v2533 = vld [vmem:[#allocation8 + $0x70] sm:$0xff]
    %v2534 = vld [vmem:[#allocation8 + $0x78] sm:$0xff]
    %v2535 = vld [vmem:[#allocation8 + $0x80] sm:$0xff]
    %v2536 = vld [vmem:[#allocation8 + $0x88] sm:$0xff]
    %v2537 = vld [vmem:[#allocation8 + $0x90] sm:$0xff]
    %v2538 = vld [vmem:[#allocation8 + $0x98] sm:$0xff]
    %v2539 = vld [vmem:[#allocation8 + $0xa0] sm:$0xff]
    %v2540 = vld [vmem:[#allocation8 + $0xa8] sm:$0xff]
    %v2541 = vld [vmem:[#allocation8 + $0xb0] sm:$0xff]
    %v2542 = vld [vmem:[#allocation8 + $0xb8] sm:$0xff]
    %v2543 = vld [vmem:[#allocation8 + $0xc0] sm:$0xff]
    %v2544 = vld [vmem:[#allocation8 + $0xc8] sm:$0xff]
    %v2545 = vld [vmem:[#allocation8 + $0xd0] sm:$0xff]
    %v2546 = vld [vmem:[#allocation8 + $0xd8] sm:$0xff]
    %v2547 = vld [vmem:[#allocation8 + $0xe0] sm:$0xff]
    %v2548 = vld [vmem:[#allocation8 + $0xe8] sm:$0xff]
    %v2549 = vld [vmem:[#allocation8 + $0xf0] sm:$0xff]
    %v2550 = vld [vmem:[#allocation8 + $0xf8] sm:$0xff]
    %v2583 = vunpack.c.l.b16 %v2519
    %v2584 = vunpack.c.h.b16 %v2519
    %v2585 = vunpack.c.l.b16 %v2520
    %v2586 = vunpack.c.h.b16 %v2520
    %v2587 = vunpack.c.l.b16 %v2521
    %v2588 = vunpack.c.h.b16 %v2521
    %v2589 = vunpack.c.l.b16 %v2522
    %v2590 = vunpack.c.h.b16 %v2522
    %v2591 = vunpack.c.l.b16 %v2523
    %v2592 = vunpack.c.h.b16 %v2523
    %v2593 = vunpack.c.l.b16 %v2524
    %v2594 = vunpack.c.h.b16 %v2524
    %v2595 = vunpack.c.l.b16 %v2525
    %v2596 = vunpack.c.h.b16 %v2525
    %v2597 = vunpack.c.l.b16 %v2526
    %v2598 = vunpack.c.h.b16 %v2526
    %v2599 = vunpack.c.l.b16 %v2527
    %v2600 = vunpack.c.h.b16 %v2527
    %v2601 = vunpack.c.l.b16 %v2528
    %v2602 = vunpack.c.h.b16 %v2528
    %v2603 = vunpack.c.l.b16 %v2529
    %v2604 = vunpack.c.h.b16 %v2529
    %v2605 = vunpack.c.l.b16 %v2530
    %v2606 = vunpack.c.h.b16 %v2530
    %v2607 = vunpack.c.l.b16 %v2531
    %v2608 = vunpack.c.h.b16 %v2531
    %v2609 = vunpack.c.l.b16 %v2532
    %v2610 = vunpack.c.h.b16 %v2532
    %v2611 = vunpack.c.l.b16 %v2533
    %v2612 = vunpack.c.h.b16 %v2533
    %v2613 = vunpack.c.l.b16 %v2534
    %v2614 = vunpack.c.h.b16 %v2534
    %v2615 = vunpack.c.l.b16 %v2535
    %v2616 = vunpack.c.h.b16 %v2535
    %v2617 = vunpack.c.l.b16 %v2536
    %v2618 = vunpack.c.h.b16 %v2536
    %v2619 = vunpack.c.l.b16 %v2537
    %v2620 = vunpack.c.h.b16 %v2537
    %v2621 = vunpack.c.l.b16 %v2538
    %v2622 = vunpack.c.h.b16 %v2538
    %v2623 = vunpack.c.l.b16 %v2539
    %v2624 = vunpack.c.h.b16 %v2539
    %v2625 = vunpack.c.l.b16 %v2540
    %v2626 = vunpack.c.h.b16 %v2540
    %v2627 = vunpack.c.l.b16 %v2541
    %v2628 = vunpack.c.h.b16 %v2541
    %v2629 = vunpack.c.l.b16 %v2542
    %v2630 = vunpack.c.h.b16 %v2542
    %v2631 = vunpack.c.l.b16 %v2543
    %v2632 = vunpack.c.h.b16 %v2543
    %v2633 = vunpack.c.l.b16 %v2544
    %v2634 = vunpack.c.h.b16 %v2544
    %v2635 = vunpack.c.l.b16 %v2545
    %v2636 = vunpack.c.h.b16 %v2545
    %v2637 = vunpack.c.l.b16 %v2546
    %v2638 = vunpack.c.h.b16 %v2546
    %v2639 = vunpack.c.l.b16 %v2547
    %v2640 = vunpack.c.h.b16 %v2547
    %v2641 = vunpack.c.l.b16 %v2548
    %v2642 = vunpack.c.h.b16 %v2548
    %v2643 = vunpack.c.l.b16 %v2549
    %v2644 = vunpack.c.h.b16 %v2549
    %v2645 = vunpack.c.l.b16 %v2550
    %v2646 = vunpack.c.h.b16 %v2550
    %v2647 = vpack.c.b16 %v2587, %v2583
    %v2648 = vpack.c.b16 %v2588, %v2584
    %v2649 = vpack.c.b16 %v2589, %v2585
    %v2650 = vpack.c.b16 %v2590, %v2586
    %v2651 = vpack.c.b16 %v2595, %v2591
    %v2652 = vpack.c.b16 %v2596, %v2592
    %v2653 = vpack.c.b16 %v2597, %v2593
    %v2654 = vpack.c.b16 %v2598, %v2594
    %v2655 = vpack.c.b16 %v2603, %v2599
    %v2656 = vpack.c.b16 %v2604, %v2600
    %v2657 = vpack.c.b16 %v2605, %v2601
    %v2658 = vpack.c.b16 %v2606, %v2602
    %v2659 = vpack.c.b16 %v2611, %v2607
    %v2660 = vpack.c.b16 %v2612, %v2608
    %v2661 = vpack.c.b16 %v2613, %v2609
    %v2662 = vpack.c.b16 %v2614, %v2610
    %v2663 = vpack.c.b16 %v2619, %v2615
    %v2664 = vpack.c.b16 %v2620, %v2616
    %v2665 = vpack.c.b16 %v2621, %v2617
    %v2666 = vpack.c.b16 %v2622, %v2618
    %v2667 = vpack.c.b16 %v2627, %v2623
    %v2668 = vpack.c.b16 %v2628, %v2624
    %v2669 = vpack.c.b16 %v2629, %v2625
    %v2670 = vpack.c.b16 %v2630, %v2626
    %v2671 = vpack.c.b16 %v2635, %v2631
    %v2672 = vpack.c.b16 %v2636, %v2632
    %v2673 = vpack.c.b16 %v2637, %v2633
    %v2674 = vpack.c.b16 %v2638, %v2634
    %v2675 = vpack.c.b16 %v2643, %v2639
    %v2676 = vpack.c.b16 %v2644, %v2640
    %v2677 = vpack.c.b16 %v2645, %v2641
    %v2678 = vpack.c.b16 %v2646, %v2642
    %2711 = vmatpush.bf16.msra.mxu0 %v2675
    %2712 = vmatpush.bf16.msra.mxu0 %v2671
    %2713 = vmatpush.bf16.msra.mxu0 %v2667
    %2714 = vmatpush.bf16.msra.mxu0 %v2663
    %2715 = vmatpush.bf16.msra.mxu0 %v2659
    %2716 = vmatpush.bf16.msra.mxu0 %v2655
    %2717 = vmatpush.bf16.msra.mxu0 %v2651
    %2718 = vmatpush.bf16.msra.mxu0 %v2647
    %2719 = vmatmul.bf16.gmra.mxu0 %v2518
    %v2720 = vpop.f32.mrf.mxu0
    %v2721 = vadd.f32 0.0, %v2720
    %v2722 = vpop.f32.mrf.mxu0
    %2723 = vdwg.mxu0
    %2724 = vmatpush.bf16.msra.mxu0 %v2676
    %2725 = vmatpush.bf16.msra.mxu0 %v2672
    %2726 = vmatpush.bf16.msra.mxu0 %v2668
    %2727 = vmatpush.bf16.msra.mxu0 %v2664
    %2728 = vmatpush.bf16.msra.mxu0 %v2660
    %2729 = vmatpush.bf16.msra.mxu0 %v2656
    %2730 = vmatpush.bf16.msra.mxu0 %v2652
    %2731 = vmatpush.bf16.msra.mxu0 %v2648
    %2732 = vmatmul.bf16.gmra.mxu0 %v2518
    %v2733 = vpop.f32.mrf.mxu0
    %v2734 = vadd.f32 0.0, %v2733
    %v2735 = vpop.f32.mrf.mxu0
    %2736 = vdwg.mxu0
    %2737 = vmatpush.bf16.msra.mxu0 %v2677
    %2738 = vmatpush.bf16.msra.mxu0 %v2673
    %2739 = vmatpush.bf16.msra.mxu0 %v2669
    %2740 = vmatpush.bf16.msra.mxu0 %v2665
    %2741 = vmatpush.bf16.msra.mxu0 %v2661
    %2742 = vmatpush.bf16.msra.mxu0 %v2657
    %2743 = vmatpush.bf16.msra.mxu0 %v2653
    %2744 = vmatpush.bf16.msra.mxu0 %v2649
    %2745 = vmatmul.bf16.gmra.mxu0 %v2518
    %v2746 = vpop.f32.mrf.mxu0
    %v2747 = vadd.f32 0.0, %v2746
    %v2748 = vpop.f32.mrf.mxu0
    %2749 = vdwg.mxu0
    %2750 = vmatpush.bf16.msra.mxu0 %v2678
    %2751 = vmatpush.bf16.msra.mxu0 %v2674
    %2752 = vmatpush.bf16.msra.mxu0 %v2670
    %2753 = vmatpush.bf16.msra.mxu0 %v2666
    %2754 = vmatpush.bf16.msra.mxu0 %v2662
    %2755 = vmatpush.bf16.msra.mxu0 %v2658
    %2756 = vmatpush.bf16.msra.mxu0 %v2654
    %2757 = vmatpush.bf16.msra.mxu0 %v2650
    %2758 = vmatmul.bf16.gmra.mxu0 %v2518
    %v2759 = vpop.f32.mrf.mxu0
    %v2760 = vadd.f32 0.0, %v2759
    %v2761 = vpop.f32.mrf.mxu0
    %2762 = vdwg.mxu0
    %v2763 = vadd.f32 %v2514, %v2721
    %v2764 = vadd.f32 %v2515, %v2734
    %v2765 = vadd.f32 %v2516, %v2747
    %v2766 = vadd.f32 %v2517, %v2760
    %v2767 = vxor.u32 %v2763, 2147483648
    %v2768 = vmul.f32 %v2767, 1.442695
    %v2769 = vpow.pop %v2768
    %v2770 = vadd.f32 %v2769, 1.0
    %v2771 = vrcp.pop %v2770
    %v2772 = vmul.f32 %v2770, %v2771
    %v2773 = vsub.f32 1.0, %v2772
    %v2774 = vmul.f32 %v2771, %v2773
    %v2775 = vadd.f32 %v2771, %v2774
    %vm2776 = vweird.f32 %v2770
    %vm2777 = vweird.f32 %v2771
    %vm2778 = vmor %vm2776, %vm2777
    %v2779 = vsel %vm2778, %v2771, %v2775
    %v2780 = vand.u32 2147483647, %v2770
    %vm2781 = vcmp.eq.f32.partialorder %v2780, 8.507059e+37
    %v2782 = vand.u32 %v2770, 2147483648
    %v2783 = vor.u32 1.1754944e-38, %v2782
    %v2784 = vsel %vm2781, %v2783, %v2779
    %v2785 = vmul.f32 1.0, %v2784
    %v2786 = vxor.u32 %v2764, 2147483648
    %v2787 = vmul.f32 %v2786, 1.442695
    %v2788 = vpow.pop %v2787
    %v2789 = vadd.f32 %v2788, 1.0
    %v2790 = vrcp.pop %v2789
    %v2791 = vmul.f32 %v2789, %v2790
    %v2792 = vsub.f32 1.0, %v2791
    %v2793 = vmul.f32 %v2790, %v2792
    %v2794 = vadd.f32 %v2790, %v2793
    %vm2795 = vweird.f32 %v2789
    %vm2796 = vweird.f32 %v2790
    %vm2797 = vmor %vm2795, %vm2796
    %v2798 = vsel %vm2797, %v2790, %v2794
    %v2799 = vand.u32 2147483647, %v2789
    %vm2800 = vcmp.eq.f32.partialorder %v2799, 8.507059e+37
    %v2801 = vand.u32 %v2789, 2147483648
    %v2802 = vor.u32 1.1754944e-38, %v2801
    %v2803 = vsel %vm2800, %v2802, %v2798
    %v2804 = vmul.f32 1.0, %v2803
    %v2805 = vtanh.pop %v2765
    %v2806 = vxor.u32 %v2766, 2147483648
    %v2807 = vmul.f32 %v2806, 1.442695
    %v2808 = vpow.pop %v2807
    %v2809 = vadd.f32 %v2808, 1.0
    %v2810 = vrcp.pop %v2809
    %v2811 = vmul.f32 %v2809, %v2810
    %v2812 = vsub.f32 1.0, %v2811
    %v2813 = vmul.f32 %v2810, %v2812
    %v2814 = vadd.f32 %v2810, %v2813
    %vm2815 = vweird.f32 %v2809
    %vm2816 = vweird.f32 %v2810
    %vm2817 = vmor %vm2815, %vm2816
    %v2818 = vsel %vm2817, %v2810, %v2814
    %v2819 = vand.u32 2147483647, %v2809
    %vm2820 = vcmp.eq.f32.partialorder %v2819, 8.507059e+37
    %v2821 = vand.u32 %v2809, 2147483648
    %v2822 = vor.u32 1.1754944e-38, %v2821
    %v2823 = vsel %vm2820, %v2822, %v2818
    %v2824 = vmul.f32 1.0, %v2823
    %v2825 = vmul.f32 %v2804, %v2506
    %v2826 = vmul.f32 %v2785, %v2805
    %v2827 = vadd.f32 %v2825, %v2826
    %v2828 = vtanh.pop %v2827
    %v2829 = vmul.f32 %v2824, %v2828
    %s2830 = scalar_lea.vmem [#allocation2], 48
    %2831 = vst [vmem:[%s2830] sm:$0xff] %v2829
    %s2832 = smul.u32 7, 4
    %s2833 = smul.addr %s2832, 8
    %s2834 = scalar_lea.vmem [#allocation3], %s2833
    %v2835 = vld [vmem:[%s2834] sm:$0xff]
    %v2836 = vld [vmem:[%s2834 + $0x8] sm:$0xff]
    %v2837 = vld [vmem:[%s2834 + $0x10] sm:$0xff]
    %v2838 = vld [vmem:[%s2834 + $0x18] sm:$0xff]
    %v2839 = vpack.c.bf16 %v2829, %v2829
    %v2840 = vld [vmem:[#allocation8] sm:$0xff]
    %v2841 = vld [vmem:[#allocation8 + $0x8] sm:$0xff]
    %v2842 = vld [vmem:[#allocation8 + $0x10] sm:$0xff]
    %v2843 = vld [vmem:[#allocation8 + $0x18] sm:$0xff]
    %v2844 = vld [vmem:[#allocation8 + $0x20] sm:$0xff]
    %v2845 = vld [vmem:[#allocation8 + $0x28] sm:$0xff]
    %v2846 = vld [vmem:[#allocation8 + $0x30] sm:$0xff]
    %v2847 = vld [vmem:[#allocation8 + $0x38] sm:$0xff]
    %v2848 = vld [vmem:[#allocation8 + $0x40] sm:$0xff]
    %v2849 = vld [vmem:[#allocation8 + $0x48] sm:$0xff]
    %v2850 = vld [vmem:[#allocation8 + $0x50] sm:$0xff]
    %v2851 = vld [vmem:[#allocation8 + $0x58] sm:$0xff]
    %v2852 = vld [vmem:[#allocation8 + $0x60] sm:$0xff]
    %v2853 = vld [vmem:[#allocation8 + $0x68] sm:$0xff]
    %v2854 = vld [vmem:[#allocation8 + $0x70] sm:$0xff]
    %v2855 = vld [vmem:[#allocation8 + $0x78] sm:$0xff]
    %v2856 = vld [vmem:[#allocation8 + $0x80] sm:$0xff]
    %v2857 = vld [vmem:[#allocation8 + $0x88] sm:$0xff]
    %v2858 = vld [vmem:[#allocation8 + $0x90] sm:$0xff]
    %v2859 = vld [vmem:[#allocation8 + $0x98] sm:$0xff]
    %v2860 = vld [vmem:[#allocation8 + $0xa0] sm:$0xff]
    %v2861 = vld [vmem:[#allocation8 + $0xa8] sm:$0xff]
    %v2862 = vld [vmem:[#allocation8 + $0xb0] sm:$0xff]
    %v2863 = vld [vmem:[#allocation8 + $0xb8] sm:$0xff]
    %v2864 = vld [vmem:[#allocation8 + $0xc0] sm:$0xff]
    %v2865 = vld [vmem:[#allocation8 + $0xc8] sm:$0xff]
    %v2866 = vld [vmem:[#allocation8 + $0xd0] sm:$0xff]
    %v2867 = vld [vmem:[#allocation8 + $0xd8] sm:$0xff]
    %v2868 = vld [vmem:[#allocation8 + $0xe0] sm:$0xff]
    %v2869 = vld [vmem:[#allocation8 + $0xe8] sm:$0xff]
    %v2870 = vld [vmem:[#allocation8 + $0xf0] sm:$0xff]
    %v2871 = vld [vmem:[#allocation8 + $0xf8] sm:$0xff]
    %v2904 = vunpack.c.l.b16 %v2840
    %v2905 = vunpack.c.h.b16 %v2840
    %v2906 = vunpack.c.l.b16 %v2841
    %v2907 = vunpack.c.h.b16 %v2841
    %v2908 = vunpack.c.l.b16 %v2842
    %v2909 = vunpack.c.h.b16 %v2842
    %v2910 = vunpack.c.l.b16 %v2843
    %v2911 = vunpack.c.h.b16 %v2843
    %v2912 = vunpack.c.l.b16 %v2844
    %v2913 = vunpack.c.h.b16 %v2844
    %v2914 = vunpack.c.l.b16 %v2845
    %v2915 = vunpack.c.h.b16 %v2845
    %v2916 = vunpack.c.l.b16 %v2846
    %v2917 = vunpack.c.h.b16 %v2846
    %v2918 = vunpack.c.l.b16 %v2847
    %v2919 = vunpack.c.h.b16 %v2847
    %v2920 = vunpack.c.l.b16 %v2848
    %v2921 = vunpack.c.h.b16 %v2848
    %v2922 = vunpack.c.l.b16 %v2849
    %v2923 = vunpack.c.h.b16 %v2849
    %v2924 = vunpack.c.l.b16 %v2850
    %v2925 = vunpack.c.h.b16 %v2850
    %v2926 = vunpack.c.l.b16 %v2851
    %v2927 = vunpack.c.h.b16 %v2851
    %v2928 = vunpack.c.l.b16 %v2852
    %v2929 = vunpack.c.h.b16 %v2852
    %v2930 = vunpack.c.l.b16 %v2853
    %v2931 = vunpack.c.h.b16 %v2853
    %v2932 = vunpack.c.l.b16 %v2854
    %v2933 = vunpack.c.h.b16 %v2854
    %v2934 = vunpack.c.l.b16 %v2855
    %v2935 = vunpack.c.h.b16 %v2855
    %v2936 = vunpack.c.l.b16 %v2856
    %v2937 = vunpack.c.h.b16 %v2856
    %v2938 = vunpack.c.l.b16 %v2857
    %v2939 = vunpack.c.h.b16 %v2857
    %v2940 = vunpack.c.l.b16 %v2858
    %v2941 = vunpack.c.h.b16 %v2858
    %v2942 = vunpack.c.l.b16 %v2859
    %v2943 = vunpack.c.h.b16 %v2859
    %v2944 = vunpack.c.l.b16 %v2860
    %v2945 = vunpack.c.h.b16 %v2860
    %v2946 = vunpack.c.l.b16 %v2861
    %v2947 = vunpack.c.h.b16 %v2861
    %v2948 = vunpack.c.l.b16 %v2862
    %v2949 = vunpack.c.h.b16 %v2862
    %v2950 = vunpack.c.l.b16 %v2863
    %v2951 = vunpack.c.h.b16 %v2863
    %v2952 = vunpack.c.l.b16 %v2864
    %v2953 = vunpack.c.h.b16 %v2864
    %v2954 = vunpack.c.l.b16 %v2865
    %v2955 = vunpack.c.h.b16 %v2865
    %v2956 = vunpack.c.l.b16 %v2866
    %v2957 = vunpack.c.h.b16 %v2866
    %v2958 = vunpack.c.l.b16 %v2867
    %v2959 = vunpack.c.h.b16 %v2867
    %v2960 = vunpack.c.l.b16 %v2868
    %v2961 = vunpack.c.h.b16 %v2868
    %v2962 = vunpack.c.l.b16 %v2869
    %v2963 = vunpack.c.h.b16 %v2869
    %v2964 = vunpack.c.l.b16 %v2870
    %v2965 = vunpack.c.h.b16 %v2870
    %v2966 = vunpack.c.l.b16 %v2871
    %v2967 = vunpack.c.h.b16 %v2871
    %v2968 = vpack.c.b16 %v2908, %v2904
    %v2969 = vpack.c.b16 %v2909, %v2905
    %v2970 = vpack.c.b16 %v2910, %v2906
    %v2971 = vpack.c.b16 %v2911, %v2907
    %v2972 = vpack.c.b16 %v2916, %v2912
    %v2973 = vpack.c.b16 %v2917, %v2913
    %v2974 = vpack.c.b16 %v2918, %v2914
    %v2975 = vpack.c.b16 %v2919, %v2915
    %v2976 = vpack.c.b16 %v2924, %v2920
    %v2977 = vpack.c.b16 %v2925, %v2921
    %v2978 = vpack.c.b16 %v2926, %v2922
    %v2979 = vpack.c.b16 %v2927, %v2923
    %v2980 = vpack.c.b16 %v2932, %v2928
    %v2981 = vpack.c.b16 %v2933, %v2929
    %v2982 = vpack.c.b16 %v2934, %v2930
    %v2983 = vpack.c.b16 %v2935, %v2931
    %v2984 = vpack.c.b16 %v2940, %v2936
    %v2985 = vpack.c.b16 %v2941, %v2937
    %v2986 = vpack.c.b16 %v2942, %v2938
    %v2987 = vpack.c.b16 %v2943, %v2939
    %v2988 = vpack.c.b16 %v2948, %v2944
    %v2989 = vpack.c.b16 %v2949, %v2945
    %v2990 = vpack.c.b16 %v2950, %v2946
    %v2991 = vpack.c.b16 %v2951, %v2947
    %v2992 = vpack.c.b16 %v2956, %v2952
    %v2993 = vpack.c.b16 %v2957, %v2953
    %v2994 = vpack.c.b16 %v2958, %v2954
    %v2995 = vpack.c.b16 %v2959, %v2955
    %v2996 = vpack.c.b16 %v2964, %v2960
    %v2997 = vpack.c.b16 %v2965, %v2961
    %v2998 = vpack.c.b16 %v2966, %v2962
    %v2999 = vpack.c.b16 %v2967, %v2963
    %3032 = vmatpush.bf16.msra.mxu0 %v2996
    %3033 = vmatpush.bf16.msra.mxu0 %v2992
    %3034 = vmatpush.bf16.msra.mxu0 %v2988
    %3035 = vmatpush.bf16.msra.mxu0 %v2984
    %3036 = vmatpush.bf16.msra.mxu0 %v2980
    %3037 = vmatpush.bf16.msra.mxu0 %v2976
    %3038 = vmatpush.bf16.msra.mxu0 %v2972
    %3039 = vmatpush.bf16.msra.mxu0 %v2968
    %3040 = vmatmul.bf16.gmra.mxu0 %v2839
    %v3041 = vpop.f32.mrf.mxu0
    %v3042 = vadd.f32 0.0, %v3041
    %v3043 = vpop.f32.mrf.mxu0
    %3044 = vdwg.mxu0
    %3045 = vmatpush.bf16.msra.mxu0 %v2997
    %3046 = vmatpush.bf16.msra.mxu0 %v2993
    %3047 = vmatpush.bf16.msra.mxu0 %v2989
    %3048 = vmatpush.bf16.msra.mxu0 %v2985
    %3049 = vmatpush.bf16.msra.mxu0 %v2981
    %3050 = vmatpush.bf16.msra.mxu0 %v2977
    %3051 = vmatpush.bf16.msra.mxu0 %v2973
    %3052 = vmatpush.bf16.msra.mxu0 %v2969
    %3053 = vmatmul.bf16.gmra.mxu0 %v2839
    %v3054 = vpop.f32.mrf.mxu0
    %v3055 = vadd.f32 0.0, %v3054
    %v3056 = vpop.f32.mrf.mxu0
    %3057 = vdwg.mxu0
    %3058 = vmatpush.bf16.msra.mxu0 %v2998
    %3059 = vmatpush.bf16.msra.mxu0 %v2994
    %3060 = vmatpush.bf16.msra.mxu0 %v2990
    %3061 = vmatpush.bf16.msra.mxu0 %v2986
    %3062 = vmatpush.bf16.msra.mxu0 %v2982
    %3063 = vmatpush.bf16.msra.mxu0 %v2978
    %3064 = vmatpush.bf16.msra.mxu0 %v2974
    %3065 = vmatpush.bf16.msra.mxu0 %v2970
    %3066 = vmatmul.bf16.gmra.mxu0 %v2839
    %v3067 = vpop.f32.mrf.mxu0
    %v3068 = vadd.f32 0.0, %v3067
    %v3069 = vpop.f32.mrf.mxu0
    %3070 = vdwg.mxu0
    %3071 = vmatpush.bf16.msra.mxu0 %v2999
    %3072 = vmatpush.bf16.msra.mxu0 %v2995
    %3073 = vmatpush.bf16.msra.mxu0 %v2991
    %3074 = vmatpush.bf16.msra.mxu0 %v2987
    %3075 = vmatpush.bf16.msra.mxu0 %v2983
    %3076 = vmatpush.bf16.msra.mxu0 %v2979
    %3077 = vmatpush.bf16.msra.mxu0 %v2975
    %3078 = vmatpush.bf16.msra.mxu0 %v2971
    %3079 = vmatmul.bf16.gmra.mxu0 %v2839
    %v3080 = vpop.f32.mrf.mxu0
    %v3081 = vadd.f32 0.0, %v3080
    %v3082 = vpop.f32.mrf.mxu0
    %3083 = vdwg.mxu0
    %v3084 = vadd.f32 %v2835, %v3042
    %v3085 = vadd.f32 %v2836, %v3055
    %v3086 = vadd.f32 %v2837, %v3068
    %v3087 = vadd.f32 %v2838, %v3081
    %v3088 = vxor.u32 %v3084, 2147483648
    %v3089 = vmul.f32 %v3088, 1.442695
    %v3090 = vpow.pop %v3089
    %v3091 = vadd.f32 %v3090, 1.0
    %v3092 = vrcp.pop %v3091
    %v3093 = vmul.f32 %v3091, %v3092
    %v3094 = vsub.f32 1.0, %v3093
    %v3095 = vmul.f32 %v3092, %v3094
    %v3096 = vadd.f32 %v3092, %v3095
    %vm3097 = vweird.f32 %v3091
    %vm3098 = vweird.f32 %v3092
    %vm3099 = vmor %vm3097, %vm3098
    %v3100 = vsel %vm3099, %v3092, %v3096
    %v3101 = vand.u32 2147483647, %v3091
    %vm3102 = vcmp.eq.f32.partialorder %v3101, 8.507059e+37
    %v3103 = vand.u32 %v3091, 2147483648
    %v3104 = vor.u32 1.1754944e-38, %v3103
    %v3105 = vsel %vm3102, %v3104, %v3100
    %v3106 = vmul.f32 1.0, %v3105
    %v3107 = vxor.u32 %v3085, 2147483648
    %v3108 = vmul.f32 %v3107, 1.442695
    %v3109 = vpow.pop %v3108
    %v3110 = vadd.f32 %v3109, 1.0
    %v3111 = vrcp.pop %v3110
    %v3112 = vmul.f32 %v3110, %v3111
    %v3113 = vsub.f32 1.0, %v3112
    %v3114 = vmul.f32 %v3111, %v3113
    %v3115 = vadd.f32 %v3111, %v3114
    %vm3116 = vweird.f32 %v3110
    %vm3117 = vweird.f32 %v3111
    %vm3118 = vmor %vm3116, %vm3117
    %v3119 = vsel %vm3118, %v3111, %v3115
    %v3120 = vand.u32 2147483647, %v3110
    %vm3121 = vcmp.eq.f32.partialorder %v3120, 8.507059e+37
    %v3122 = vand.u32 %v3110, 2147483648
    %v3123 = vor.u32 1.1754944e-38, %v3122
    %v3124 = vsel %vm3121, %v3123, %v3119
    %v3125 = vmul.f32 1.0, %v3124
    %v3126 = vtanh.pop %v3086
    %v3127 = vxor.u32 %v3087, 2147483648
    %v3128 = vmul.f32 %v3127, 1.442695
    %v3129 = vpow.pop %v3128
    %v3130 = vadd.f32 %v3129, 1.0
    %v3131 = vrcp.pop %v3130
    %v3132 = vmul.f32 %v3130, %v3131
    %v3133 = vsub.f32 1.0, %v3132
    %v3134 = vmul.f32 %v3131, %v3133
    %v3135 = vadd.f32 %v3131, %v3134
    %vm3136 = vweird.f32 %v3130
    %vm3137 = vweird.f32 %v3131
    %vm3138 = vmor %vm3136, %vm3137
    %v3139 = vsel %vm3138, %v3131, %v3135
    %v3140 = vand.u32 2147483647, %v3130
    %vm3141 = vcmp.eq.f32.partialorder %v3140, 8.507059e+37
    %v3142 = vand.u32 %v3130, 2147483648
    %v3143 = vor.u32 1.1754944e-38, %v3142
    %v3144 = vsel %vm3141, %v3143, %v3139
    %v3145 = vmul.f32 1.0, %v3144
    %v3146 = vmul.f32 %v3125, %v2827
    %v3147 = vmul.f32 %v3106, %v3126
    %v3148 = vadd.f32 %v3146, %v3147
    %v3149 = vtanh.pop %v3148
    %v3150 = vmul.f32 %v3145, %v3149
    %s3151 = scalar_lea.vmem [#allocation2], 56
    %3152 = vst [vmem:[%s3151] sm:$0xff] %v3150
    %v3153 = vld [vmem:[#allocation2] sm:$0xff]
    %v3154 = vld [vmem:[#allocation2 + $0x8] sm:$0xff]
    %v3155 = vld [vmem:[#allocation2 + $0x10] sm:$0xff]
    %v3156 = vld [vmem:[#allocation2 + $0x18] sm:$0xff]
    %v3157 = vld [vmem:[#allocation2 + $0x20] sm:$0xff]
    %v3158 = vld [vmem:[#allocation2 + $0x28] sm:$0xff]
    %v3159 = vld [vmem:[#allocation2 + $0x30] sm:$0xff]
    %v3160 = vld [vmem:[#allocation2 + $0x38] sm:$0xff]
    %v3161 = vpack.c.bf16 %v3154, %v3153
    %v3162 = vpack.c.bf16 %v3156, %v3155
    %v3163 = vpack.c.bf16 %v3158, %v3157
    %v3164 = vpack.c.bf16 %v3160, %v3159
    %s3165 = scalar_lea.vmem [#allocation4], 256
    %v3166 = vld [vmem:[%s3165] sm:$0xff]
    %v3167 = vld [vmem:[%s3165 + $0x8] sm:$0xff]
    %v3168 = vld [vmem:[%s3165 + $0x10] sm:$0xff]
    %v3169 = vld [vmem:[%s3165 + $0x18] sm:$0xff]
    %v3170 = vld [vmem:[%s3165 + $0x20] sm:$0xff]
    %v3171 = vld [vmem:[%s3165 + $0x28] sm:$0xff]
    %v3172 = vld [vmem:[%s3165 + $0x30] sm:$0xff]
    %v3173 = vld [vmem:[%s3165 + $0x38] sm:$0xff]
    %v3174 = vld [vmem:[%s3165 + $0x40] sm:$0xff]
    %v3175 = vld [vmem:[%s3165 + $0x48] sm:$0xff]
    %v3176 = vld [vmem:[%s3165 + $0x50] sm:$0xff]
    %v3177 = vld [vmem:[%s3165 + $0x58] sm:$0xff]
    %v3178 = vld [vmem:[%s3165 + $0x60] sm:$0xff]
    %v3179 = vld [vmem:[%s3165 + $0x68] sm:$0xff]
    %v3180 = vld [vmem:[%s3165 + $0x70] sm:$0xff]
    %v3181 = vld [vmem:[%s3165 + $0x78] sm:$0xff]
    %v3182 = vld [vmem:[%s3165 + $0x80] sm:$0xff]
    %v3183 = vld [vmem:[%s3165 + $0x88] sm:$0xff]
    %v3184 = vld [vmem:[%s3165 + $0x90] sm:$0xff]
    %v3185 = vld [vmem:[%s3165 + $0x98] sm:$0xff]
    %v3186 = vld [vmem:[%s3165 + $0xa0] sm:$0xff]
    %v3187 = vld [vmem:[%s3165 + $0xa8] sm:$0xff]
    %v3188 = vld [vmem:[%s3165 + $0xb0] sm:$0xff]
    %v3189 = vld [vmem:[%s3165 + $0xb8] sm:$0xff]
    %v3190 = vld [vmem:[%s3165 + $0xc0] sm:$0xff]
    %v3191 = vld [vmem:[%s3165 + $0xc8] sm:$0xff]
    %v3192 = vld [vmem:[%s3165 + $0xd0] sm:$0xff]
    %v3193 = vld [vmem:[%s3165 + $0xd8] sm:$0xff]
    %v3194 = vld [vmem:[%s3165 + $0xe0] sm:$0xff]
    %v3195 = vld [vmem:[%s3165 + $0xe8] sm:$0xff]
    %v3196 = vld [vmem:[%s3165 + $0xf0] sm:$0xff]
    %v3197 = vld [vmem:[%s3165 + $0xf8] sm:$0xff]
    %s3198 = scalar_lea.vmem [#allocation10], 4
    %v3199 = vld [vmem:[%s3198] sm:$0xf]
    %v3201 = vperm.slane %v3199, 0
    %v3202 = vperm.slane %v3199, 1
    %v3203 = vperm.slane %v3199, 2
    %v3204 = vperm.slane %v3199, 3
    %v3241 = vunpack.c.l.b16 %v3166
    %v3242 = vunpack.c.h.b16 %v3166
    %v3243 = vunpack.c.l.b16 %v3167
    %v3244 = vunpack.c.h.b16 %v3167
    %v3245 = vunpack.c.l.b16 %v3168
    %v3246 = vunpack.c.h.b16 %v3168
    %v3247 = vunpack.c.l.b16 %v3169
    %v3248 = vunpack.c.h.b16 %v3169
    %v3249 = vunpack.c.l.b16 %v3170
    %v3250 = vunpack.c.h.b16 %v3170
    %v3251 = vunpack.c.l.b16 %v3171
    %v3252 = vunpack.c.h.b16 %v3171
    %v3253 = vunpack.c.l.b16 %v3172
    %v3254 = vunpack.c.h.b16 %v3172
    %v3255 = vunpack.c.l.b16 %v3173
    %v3256 = vunpack.c.h.b16 %v3173
    %v3257 = vunpack.c.l.b16 %v3174
    %v3258 = vunpack.c.h.b16 %v3174
    %v3259 = vunpack.c.l.b16 %v3175
    %v3260 = vunpack.c.h.b16 %v3175
    %v3261 = vunpack.c.l.b16 %v3176
    %v3262 = vunpack.c.h.b16 %v3176
    %v3263 = vunpack.c.l.b16 %v3177
    %v3264 = vunpack.c.h.b16 %v3177
    %v3265 = vunpack.c.l.b16 %v3178
    %v3266 = vunpack.c.h.b16 %v3178
    %v3267 = vunpack.c.l.b16 %v3179
    %v3268 = vunpack.c.h.b16 %v3179
    %v3269 = vunpack.c.l.b16 %v3180
    %v3270 = vunpack.c.h.b16 %v3180
    %v3271 = vunpack.c.l.b16 %v3181
    %v3272 = vunpack.c.h.b16 %v3181
    %v3273 = vunpack.c.l.b16 %v3182
    %v3274 = vunpack.c.h.b16 %v3182
    %v3275 = vunpack.c.l.b16 %v3183
    %v3276 = vunpack.c.h.b16 %v3183
    %v3277 = vunpack.c.l.b16 %v3184
    %v3278 = vunpack.c.h.b16 %v3184
    %v3279 = vunpack.c.l.b16 %v3185
    %v3280 = vunpack.c.h.b16 %v3185
    %v3281 = vunpack.c.l.b16 %v3186
    %v3282 = vunpack.c.h.b16 %v3186
    %v3283 = vunpack.c.l.b16 %v3187
    %v3284 = vunpack.c.h.b16 %v3187
    %v3285 = vunpack.c.l.b16 %v3188
    %v3286 = vunpack.c.h.b16 %v3188
    %v3287 = vunpack.c.l.b16 %v3189
    %v3288 = vunpack.c.h.b16 %v3189
    %v3289 = vunpack.c.l.b16 %v3190
    %v3290 = vunpack.c.h.b16 %v3190
    %v3291 = vunpack.c.l.b16 %v3191
    %v3292 = vunpack.c.h.b16 %v3191
    %v3293 = vunpack.c.l.b16 %v3192
    %v3294 = vunpack.c.h.b16 %v3192
    %v3295 = vunpack.c.l.b16 %v3193
    %v3296 = vunpack.c.h.b16 %v3193
    %v3297 = vunpack.c.l.b16 %v3194
    %v3298 = vunpack.c.h.b16 %v3194
    %v3299 = vunpack.c.l.b16 %v3195
    %v3300 = vunpack.c.h.b16 %v3195
    %v3301 = vunpack.c.l.b16 %v3196
    %v3302 = vunpack.c.h.b16 %v3196
    %v3303 = vunpack.c.l.b16 %v3197
    %v3304 = vunpack.c.h.b16 %v3197
    %v3305 = vpack.c.b16 %v3245, %v3241
    %v3306 = vpack.c.b16 %v3246, %v3242
    %v3307 = vpack.c.b16 %v3247, %v3243
    %v3308 = vpack.c.b16 %v3248, %v3244
    %v3309 = vpack.c.b16 %v3253, %v3249
    %v3310 = vpack.c.b16 %v3254, %v3250
    %v3311 = vpack.c.b16 %v3255, %v3251
    %v3312 = vpack.c.b16 %v3256, %v3252
    %v3313 = vpack.c.b16 %v3261, %v3257
    %v3314 = vpack.c.b16 %v3262, %v3258
    %v3315 = vpack.c.b16 %v3263, %v3259
    %v3316 = vpack.c.b16 %v3264, %v3260
    %v3317 = vpack.c.b16 %v3269, %v3265
    %v3318 = vpack.c.b16 %v3270, %v3266
    %v3319 = vpack.c.b16 %v3271, %v3267
    %v3320 = vpack.c.b16 %v3272, %v3268
    %v3321 = vpack.c.b16 %v3277, %v3273
    %v3322 = vpack.c.b16 %v3278, %v3274
    %v3323 = vpack.c.b16 %v3279, %v3275
    %v3324 = vpack.c.b16 %v3280, %v3276
    %v3325 = vpack.c.b16 %v3285, %v3281
    %v3326 = vpack.c.b16 %v3286, %v3282
    %v3327 = vpack.c.b16 %v3287, %v3283
    %v3328 = vpack.c.b16 %v3288, %v3284
    %v3329 = vpack.c.b16 %v3293, %v3289
    %v3330 = vpack.c.b16 %v3294, %v3290
    %v3331 = vpack.c.b16 %v3295, %v3291
    %v3332 = vpack.c.b16 %v3296, %v3292
    %v3333 = vpack.c.b16 %v3301, %v3297
    %v3334 = vpack.c.b16 %v3302, %v3298
    %v3335 = vpack.c.b16 %v3303, %v3299
    %v3336 = vpack.c.b16 %v3304, %v3300
    %3369 = vmatpush.bf16.msra.mxu0 %v3333
    %3370 = vmatpush.bf16.msra.mxu0 %v3329
    %3371 = vmatpush.bf16.msra.mxu0 %v3325
    %3372 = vmatpush.bf16.msra.mxu0 %v3321
    %3373 = vmatpush.bf16.msra.mxu0 %v3317
    %3374 = vmatpush.bf16.msra.mxu0 %v3313
    %3375 = vmatpush.bf16.msra.mxu0 %v3309
    %3376 = vmatpush.bf16.msra.mxu0 %v3305
    %3377 = vmatmul.bf16.gmra.mxu0 %v3161
    %v3378 = vpop.f32.mrf.mxu0
    %v3379 = vadd.f32 %v3201, %v3378
    %v3380 = vpop.f32.mrf.mxu0
    %v3381 = vadd.f32 %v3201, %v3380
    %3382 = vmatmul.bf16.gmra.mxu0 %v3162
    %v3383 = vpop.f32.mrf.mxu0
    %v3384 = vadd.f32 %v3201, %v3383
    %v3385 = vpop.f32.mrf.mxu0
    %v3386 = vadd.f32 %v3201, %v3385
    %3387 = vmatmul.bf16.gmra.mxu0 %v3163
    %v3388 = vpop.f32.mrf.mxu0
    %v3389 = vadd.f32 %v3201, %v3388
    %v3390 = vpop.f32.mrf.mxu0
    %v3391 = vadd.f32 %v3201, %v3390
    %3392 = vmatmul.bf16.gmra.mxu0 %v3164
    %v3393 = vpop.f32.mrf.mxu0
    %v3394 = vadd.f32 %v3201, %v3393
    %v3395 = vpop.f32.mrf.mxu0
    %v3396 = vadd.f32 %v3201, %v3395
    %3397 = vdwg.mxu0
    %3398 = vmatpush.bf16.msra.mxu0 %v3334
    %3399 = vmatpush.bf16.msra.mxu0 %v3330
    %3400 = vmatpush.bf16.msra.mxu0 %v3326
    %3401 = vmatpush.bf16.msra.mxu0 %v3322
    %3402 = vmatpush.bf16.msra.mxu0 %v3318
    %3403 = vmatpush.bf16.msra.mxu0 %v3314
    %3404 = vmatpush.bf16.msra.mxu0 %v3310
    %3405 = vmatpush.bf16.msra.mxu0 %v3306
    %3406 = vmatmul.bf16.gmra.mxu0 %v3161
    %v3407 = vpop.f32.mrf.mxu0
    %v3408 = vadd.f32 %v3202, %v3407
    %v3409 = vpop.f32.mrf.mxu0
    %v3410 = vadd.f32 %v3202, %v3409
    %3411 = vmatmul.bf16.gmra.mxu0 %v3162
    %v3412 = vpop.f32.mrf.mxu0
    %v3413 = vadd.f32 %v3202, %v3412
    %v3414 = vpop.f32.mrf.mxu0
    %v3415 = vadd.f32 %v3202, %v3414
    %3416 = vmatmul.bf16.gmra.mxu0 %v3163
    %v3417 = vpop.f32.mrf.mxu0
    %v3418 = vadd.f32 %v3202, %v3417
    %v3419 = vpop.f32.mrf.mxu0
    %v3420 = vadd.f32 %v3202, %v3419
    %3421 = vmatmul.bf16.gmra.mxu0 %v3164
    %v3422 = vpop.f32.mrf.mxu0
    %v3423 = vadd.f32 %v3202, %v3422
    %v3424 = vpop.f32.mrf.mxu0
    %v3425 = vadd.f32 %v3202, %v3424
    %3426 = vdwg.mxu0
    %3427 = vmatpush.bf16.msra.mxu0 %v3335
    %3428 = vmatpush.bf16.msra.mxu0 %v3331
    %3429 = vmatpush.bf16.msra.mxu0 %v3327
    %3430 = vmatpush.bf16.msra.mxu0 %v3323
    %3431 = vmatpush.bf16.msra.mxu0 %v3319
    %3432 = vmatpush.bf16.msra.mxu0 %v3315
    %3433 = vmatpush.bf16.msra.mxu0 %v3311
    %3434 = vmatpush.bf16.msra.mxu0 %v3307
    %3435 = vmatmul.bf16.gmra.mxu0 %v3161
    %v3436 = vpop.f32.mrf.mxu0
    %v3437 = vadd.f32 %v3203, %v3436
    %v3438 = vpop.f32.mrf.mxu0
    %v3439 = vadd.f32 %v3203, %v3438
    %3440 = vmatmul.bf16.gmra.mxu0 %v3162
    %v3441 = vpop.f32.mrf.mxu0
    %v3442 = vadd.f32 %v3203, %v3441
    %v3443 = vpop.f32.mrf.mxu0
    %v3444 = vadd.f32 %v3203, %v3443
    %3445 = vmatmul.bf16.gmra.mxu0 %v3163
    %v3446 = vpop.f32.mrf.mxu0
    %v3447 = vadd.f32 %v3203, %v3446
    %v3448 = vpop.f32.mrf.mxu0
    %v3449 = vadd.f32 %v3203, %v3448
    %3450 = vmatmul.bf16.gmra.mxu0 %v3164
    %v3451 = vpop.f32.mrf.mxu0
    %v3452 = vadd.f32 %v3203, %v3451
    %v3453 = vpop.f32.mrf.mxu0
    %v3454 = vadd.f32 %v3203, %v3453
    %3455 = vdwg.mxu0
    %3456 = vmatpush.bf16.msra.mxu0 %v3336
    %3457 = vmatpush.bf16.msra.mxu0 %v3332
    %3458 = vmatpush.bf16.msra.mxu0 %v3328
    %3459 = vmatpush.bf16.msra.mxu0 %v3324
    %3460 = vmatpush.bf16.msra.mxu0 %v3320
    %3461 = vmatpush.bf16.msra.mxu0 %v3316
    %3462 = vmatpush.bf16.msra.mxu0 %v3312
    %3463 = vmatpush.bf16.msra.mxu0 %v3308
    %3464 = vmatmul.bf16.gmra.mxu0 %v3161
    %v3465 = vpop.f32.mrf.mxu0
    %v3466 = vadd.f32 %v3204, %v3465
    %v3467 = vpop.f32.mrf.mxu0
    %v3468 = vadd.f32 %v3204, %v3467
    %3469 = vmatmul.bf16.gmra.mxu0 %v3162
    %v3470 = vpop.f32.mrf.mxu0
    %v3471 = vadd.f32 %v3204, %v3470
    %v3472 = vpop.f32.mrf.mxu0
    %v3473 = vadd.f32 %v3204, %v3472
    %3474 = vmatmul.bf16.gmra.mxu0 %v3163
    %v3475 = vpop.f32.mrf.mxu0
    %v3476 = vadd.f32 %v3204, %v3475
    %v3477 = vpop.f32.mrf.mxu0
    %v3478 = vadd.f32 %v3204, %v3477
    %3479 = vmatmul.bf16.gmra.mxu0 %v3164
    %v3480 = vpop.f32.mrf.mxu0
    %v3481 = vadd.f32 %v3204, %v3480
    %v3482 = vpop.f32.mrf.mxu0
    %v3483 = vadd.f32 %v3204, %v3482
    %3484 = vdwg.mxu0
    %3485 = vst [vmem:[#allocation3] sm:$0xff] %v3379
    %3486 = vst [vmem:[#allocation3 + $0x8] sm:$0xff] %v3408
    %3487 = vst [vmem:[#allocation3 + $0x10] sm:$0xff] %v3437
    %3488 = vst [vmem:[#allocation3 + $0x18] sm:$0xff] %v3466
    %3489 = vst [vmem:[#allocation3 + $0x20] sm:$0xff] %v3381
    %3490 = vst [vmem:[#allocation3 + $0x28] sm:$0xff] %v3410
    %3491 = vst [vmem:[#allocation3 + $0x30] sm:$0xff] %v3439
    %3492 = vst [vmem:[#allocation3 + $0x38] sm:$0xff] %v3468
    %3493 = vst [vmem:[#allocation3 + $0x40] sm:$0xff] %v3384
    %3494 = vst [vmem:[#allocation3 + $0x48] sm:$0xff] %v3413
    %3495 = vst [vmem:[#allocation3 + $0x50] sm:$0xff] %v3442
    %3496 = vst [vmem:[#allocation3 + $0x58] sm:$0xff] %v3471
    %3497 = vst [vmem:[#allocation3 + $0x60] sm:$0xff] %v3386
    %3498 = vst [vmem:[#allocation3 + $0x68] sm:$0xff] %v3415
    %3499 = vst [vmem:[#allocation3 + $0x70] sm:$0xff] %v3444
    %3500 = vst [vmem:[#allocation3 + $0x78] sm:$0xff] %v3473
    %3501 = vst [vmem:[#allocation3 + $0x80] sm:$0xff] %v3389
    %3502 = vst [vmem:[#allocation3 + $0x88] sm:$0xff] %v3418
    %3503 = vst [vmem:[#allocation3 + $0x90] sm:$0xff] %v3447
    %3504 = vst [vmem:[#allocation3 + $0x98] sm:$0xff] %v3476
    %3505 = vst [vmem:[#allocation3 + $0xa0] sm:$0xff] %v3391
    %3506 = vst [vmem:[#allocation3 + $0xa8] sm:$0xff] %v3420
    %3507 = vst [vmem:[#allocation3 + $0xb0] sm:$0xff] %v3449
    %3508 = vst [vmem:[#allocation3 + $0xb8] sm:$0xff] %v3478
    %3509 = vst [vmem:[#allocation3 + $0xc0] sm:$0xff] %v3394
    %3510 = vst [vmem:[#allocation3 + $0xc8] sm:$0xff] %v3423
    %3511 = vst [vmem:[#allocation3 + $0xd0] sm:$0xff] %v3452
    %3512 = vst [vmem:[#allocation3 + $0xd8] sm:$0xff] %v3481
    %3513 = vst [vmem:[#allocation3 + $0xe0] sm:$0xff] %v3396
    %3514 = vst [vmem:[#allocation3 + $0xe8] sm:$0xff] %v3425
    %3515 = vst [vmem:[#allocation3 + $0xf0] sm:$0xff] %v3454
    %3516 = vst [vmem:[#allocation3 + $0xf8] sm:$0xff] %v3483
    %s3517 = scalar_lea.vmem %s6, 8
    %v3518 = vld [vmem:[%s3517] sm:$0xff]
    %s3519 = scalar_lea.vmem [#allocation11], 8
    %v3520 = vld [vmem:[%s3519] sm:$0xff]
    %v3521 = vld [vmem:[%s588] sm:$0xff]
    %v3522 = vld [vmem:[%s588 + $0x8] sm:$0xff]
    %v3523 = vld [vmem:[%s588 + $0x10] sm:$0xff]
    %v3524 = vld [vmem:[%s588 + $0x18] sm:$0xff]
    %v3525 = vpack.c.bf16 %v3518, %v3518
    %s3526 = scalar_lea.vmem [#allocation8], 256
    %v3527 = vld [vmem:[%s3526] sm:$0xff]
    %v3528 = vld [vmem:[%s3526 + $0x8] sm:$0xff]
    %v3529 = vld [vmem:[%s3526 + $0x10] sm:$0xff]
    %v3530 = vld [vmem:[%s3526 + $0x18] sm:$0xff]
    %v3531 = vld [vmem:[%s3526 + $0x20] sm:$0xff]
    %v3532 = vld [vmem:[%s3526 + $0x28] sm:$0xff]
    %v3533 = vld [vmem:[%s3526 + $0x30] sm:$0xff]
    %v3534 = vld [vmem:[%s3526 + $0x38] sm:$0xff]
    %v3535 = vld [vmem:[%s3526 + $0x40] sm:$0xff]
    %v3536 = vld [vmem:[%s3526 + $0x48] sm:$0xff]
    %v3537 = vld [vmem:[%s3526 + $0x50] sm:$0xff]
    %v3538 = vld [vmem:[%s3526 + $0x58] sm:$0xff]
    %v3539 = vld [vmem:[%s3526 + $0x60] sm:$0xff]
    %v3540 = vld [vmem:[%s3526 + $0x68] sm:$0xff]
    %v3541 = vld [vmem:[%s3526 + $0x70] sm:$0xff]
    %v3542 = vld [vmem:[%s3526 + $0x78] sm:$0xff]
    %v3543 = vld [vmem:[%s3526 + $0x80] sm:$0xff]
    %v3544 = vld [vmem:[%s3526 + $0x88] sm:$0xff]
    %v3545 = vld [vmem:[%s3526 + $0x90] sm:$0xff]
    %v3546 = vld [vmem:[%s3526 + $0x98] sm:$0xff]
    %v3547 = vld [vmem:[%s3526 + $0xa0] sm:$0xff]
    %v3548 = vld [vmem:[%s3526 + $0xa8] sm:$0xff]
    %v3549 = vld [vmem:[%s3526 + $0xb0] sm:$0xff]
    %v3550 = vld [vmem:[%s3526 + $0xb8] sm:$0xff]
    %v3551 = vld [vmem:[%s3526 + $0xc0] sm:$0xff]
    %v3552 = vld [vmem:[%s3526 + $0xc8] sm:$0xff]
    %v3553 = vld [vmem:[%s3526 + $0xd0] sm:$0xff]
    %v3554 = vld [vmem:[%s3526 + $0xd8] sm:$0xff]
    %v3555 = vld [vmem:[%s3526 + $0xe0] sm:$0xff]
    %v3556 = vld [vmem:[%s3526 + $0xe8] sm:$0xff]
    %v3557 = vld [vmem:[%s3526 + $0xf0] sm:$0xff]
    %v3558 = vld [vmem:[%s3526 + $0xf8] sm:$0xff]
    %v3591 = vunpack.c.l.b16 %v3527
    %v3592 = vunpack.c.h.b16 %v3527
    %v3593 = vunpack.c.l.b16 %v3528
    %v3594 = vunpack.c.h.b16 %v3528
    %v3595 = vunpack.c.l.b16 %v3529
    %v3596 = vunpack.c.h.b16 %v3529
    %v3597 = vunpack.c.l.b16 %v3530
    %v3598 = vunpack.c.h.b16 %v3530
    %v3599 = vunpack.c.l.b16 %v3531
    %v3600 = vunpack.c.h.b16 %v3531
    %v3601 = vunpack.c.l.b16 %v3532
    %v3602 = vunpack.c.h.b16 %v3532
    %v3603 = vunpack.c.l.b16 %v3533
    %v3604 = vunpack.c.h.b16 %v3533
    %v3605 = vunpack.c.l.b16 %v3534
    %v3606 = vunpack.c.h.b16 %v3534
    %v3607 = vunpack.c.l.b16 %v3535
    %v3608 = vunpack.c.h.b16 %v3535
    %v3609 = vunpack.c.l.b16 %v3536
    %v3610 = vunpack.c.h.b16 %v3536
    %v3611 = vunpack.c.l.b16 %v3537
    %v3612 = vunpack.c.h.b16 %v3537
    %v3613 = vunpack.c.l.b16 %v3538
    %v3614 = vunpack.c.h.b16 %v3538
    %v3615 = vunpack.c.l.b16 %v3539
    %v3616 = vunpack.c.h.b16 %v3539
    %v3617 = vunpack.c.l.b16 %v3540
    %v3618 = vunpack.c.h.b16 %v3540
    %v3619 = vunpack.c.l.b16 %v3541
    %v3620 = vunpack.c.h.b16 %v3541
    %v3621 = vunpack.c.l.b16 %v3542
    %v3622 = vunpack.c.h.b16 %v3542
    %v3623 = vunpack.c.l.b16 %v3543
    %v3624 = vunpack.c.h.b16 %v3543
    %v3625 = vunpack.c.l.b16 %v3544
    %v3626 = vunpack.c.h.b16 %v3544
    %v3627 = vunpack.c.l.b16 %v3545
    %v3628 = vunpack.c.h.b16 %v3545
    %v3629 = vunpack.c.l.b16 %v3546
    %v3630 = vunpack.c.h.b16 %v3546
    %v3631 = vunpack.c.l.b16 %v3547
    %v3632 = vunpack.c.h.b16 %v3547
    %v3633 = vunpack.c.l.b16 %v3548
    %v3634 = vunpack.c.h.b16 %v3548
    %v3635 = vunpack.c.l.b16 %v3549
    %v3636 = vunpack.c.h.b16 %v3549
    %v3637 = vunpack.c.l.b16 %v3550
    %v3638 = vunpack.c.h.b16 %v3550
    %v3639 = vunpack.c.l.b16 %v3551
    %v3640 = vunpack.c.h.b16 %v3551
    %v3641 = vunpack.c.l.b16 %v3552
    %v3642 = vunpack.c.h.b16 %v3552
    %v3643 = vunpack.c.l.b16 %v3553
    %v3644 = vunpack.c.h.b16 %v3553
    %v3645 = vunpack.c.l.b16 %v3554
    %v3646 = vunpack.c.h.b16 %v3554
    %v3647 = vunpack.c.l.b16 %v3555
    %v3648 = vunpack.c.h.b16 %v3555
    %v3649 = vunpack.c.l.b16 %v3556
    %v3650 = vunpack.c.h.b16 %v3556
    %v3651 = vunpack.c.l.b16 %v3557
    %v3652 = vunpack.c.h.b16 %v3557
    %v3653 = vunpack.c.l.b16 %v3558
    %v3654 = vunpack.c.h.b16 %v3558
    %v3655 = vpack.c.b16 %v3595, %v3591
    %v3656 = vpack.c.b16 %v3596, %v3592
    %v3657 = vpack.c.b16 %v3597, %v3593
    %v3658 = vpack.c.b16 %v3598, %v3594
    %v3659 = vpack.c.b16 %v3603, %v3599
    %v3660 = vpack.c.b16 %v3604, %v3600
    %v3661 = vpack.c.b16 %v3605, %v3601
    %v3662 = vpack.c.b16 %v3606, %v3602
    %v3663 = vpack.c.b16 %v3611, %v3607
    %v3664 = vpack.c.b16 %v3612, %v3608
    %v3665 = vpack.c.b16 %v3613, %v3609
    %v3666 = vpack.c.b16 %v3614, %v3610
    %v3667 = vpack.c.b16 %v3619, %v3615
    %v3668 = vpack.c.b16 %v3620, %v3616
    %v3669 = vpack.c.b16 %v3621, %v3617
    %v3670 = vpack.c.b16 %v3622, %v3618
    %v3671 = vpack.c.b16 %v3627, %v3623
    %v3672 = vpack.c.b16 %v3628, %v3624
    %v3673 = vpack.c.b16 %v3629, %v3625
    %v3674 = vpack.c.b16 %v3630, %v3626
    %v3675 = vpack.c.b16 %v3635, %v3631
    %v3676 = vpack.c.b16 %v3636, %v3632
    %v3677 = vpack.c.b16 %v3637, %v3633
    %v3678 = vpack.c.b16 %v3638, %v3634
    %v3679 = vpack.c.b16 %v3643, %v3639
    %v3680 = vpack.c.b16 %v3644, %v3640
    %v3681 = vpack.c.b16 %v3645, %v3641
    %v3682 = vpack.c.b16 %v3646, %v3642
    %v3683 = vpack.c.b16 %v3651, %v3647
    %v3684 = vpack.c.b16 %v3652, %v3648
    %v3685 = vpack.c.b16 %v3653, %v3649
    %v3686 = vpack.c.b16 %v3654, %v3650
    %3719 = vmatpush.bf16.msra.mxu0 %v3683
    %3720 = vmatpush.bf16.msra.mxu0 %v3679
    %3721 = vmatpush.bf16.msra.mxu0 %v3675
    %3722 = vmatpush.bf16.msra.mxu0 %v3671
    %3723 = vmatpush.bf16.msra.mxu0 %v3667
    %3724 = vmatpush.bf16.msra.mxu0 %v3663
    %3725 = vmatpush.bf16.msra.mxu0 %v3659
    %3726 = vmatpush.bf16.msra.mxu0 %v3655
    %3727 = vmatmul.bf16.gmra.mxu0 %v3525
    %v3728 = vpop.f32.mrf.mxu0
    %v3729 = vadd.f32 0.0, %v3728
    %v3730 = vpop.f32.mrf.mxu0
    %3731 = vdwg.mxu0
    %3732 = vmatpush.bf16.msra.mxu0 %v3684
    %3733 = vmatpush.bf16.msra.mxu0 %v3680
    %3734 = vmatpush.bf16.msra.mxu0 %v3676
    %3735 = vmatpush.bf16.msra.mxu0 %v3672
    %3736 = vmatpush.bf16.msra.mxu0 %v3668
    %3737 = vmatpush.bf16.msra.mxu0 %v3664
    %3738 = vmatpush.bf16.msra.mxu0 %v3660
    %3739 = vmatpush.bf16.msra.mxu0 %v3656
    %3740 = vmatmul.bf16.gmra.mxu0 %v3525
    %v3741 = vpop.f32.mrf.mxu0
    %v3742 = vadd.f32 0.0, %v3741
    %v3743 = vpop.f32.mrf.mxu0
    %3744 = vdwg.mxu0
    %3745 = vmatpush.bf16.msra.mxu0 %v3685
    %3746 = vmatpush.bf16.msra.mxu0 %v3681
    %3747 = vmatpush.bf16.msra.mxu0 %v3677
    %3748 = vmatpush.bf16.msra.mxu0 %v3673
    %3749 = vmatpush.bf16.msra.mxu0 %v3669
    %3750 = vmatpush.bf16.msra.mxu0 %v3665
    %3751 = vmatpush.bf16.msra.mxu0 %v3661
    %3752 = vmatpush.bf16.msra.mxu0 %v3657
    %3753 = vmatmul.bf16.gmra.mxu0 %v3525
    %v3754 = vpop.f32.mrf.mxu0
    %v3755 = vadd.f32 0.0, %v3754
    %v3756 = vpop.f32.mrf.mxu0
    %3757 = vdwg.mxu0
    %3758 = vmatpush.bf16.msra.mxu0 %v3686
    %3759 = vmatpush.bf16.msra.mxu0 %v3682
    %3760 = vmatpush.bf16.msra.mxu0 %v3678
    %3761 = vmatpush.bf16.msra.mxu0 %v3674
    %3762 = vmatpush.bf16.msra.mxu0 %v3670
    %3763 = vmatpush.bf16.msra.mxu0 %v3666
    %3764 = vmatpush.bf16.msra.mxu0 %v3662
    %3765 = vmatpush.bf16.msra.mxu0 %v3658
    %3766 = vmatmul.bf16.gmra.mxu0 %v3525
    %v3767 = vpop.f32.mrf.mxu0
    %v3768 = vadd.f32 0.0, %v3767
    %v3769 = vpop.f32.mrf.mxu0
    %3770 = vdwg.mxu0
    %v3771 = vadd.f32 %v3521, %v3729
    %v3772 = vadd.f32 %v3522, %v3742
    %v3773 = vadd.f32 %v3523, %v3755
    %v3774 = vadd.f32 %v3524, %v3768
    %v3775 = vxor.u32 %v3771, 2147483648
    %v3776 = vmul.f32 %v3775, 1.442695
    %v3777 = vpow.pop %v3776
    %v3778 = vadd.f32 %v3777, 1.0
    %v3779 = vrcp.pop %v3778
    %v3780 = vmul.f32 %v3778, %v3779
    %v3781 = vsub.f32 1.0, %v3780
    %v3782 = vmul.f32 %v3779, %v3781
    %v3783 = vadd.f32 %v3779, %v3782
    %vm3784 = vweird.f32 %v3778
    %vm3785 = vweird.f32 %v3779
    %vm3786 = vmor %vm3784, %vm3785
    %v3787 = vsel %vm3786, %v3779, %v3783
    %v3788 = vand.u32 2147483647, %v3778
    %vm3789 = vcmp.eq.f32.partialorder %v3788, 8.507059e+37
    %v3790 = vand.u32 %v3778, 2147483648
    %v3791 = vor.u32 1.1754944e-38, %v3790
    %v3792 = vsel %vm3789, %v3791, %v3787
    %v3793 = vmul.f32 1.0, %v3792
    %v3794 = vxor.u32 %v3772, 2147483648
    %v3795 = vmul.f32 %v3794, 1.442695
    %v3796 = vpow.pop %v3795
    %v3797 = vadd.f32 %v3796, 1.0
    %v3798 = vrcp.pop %v3797
    %v3799 = vmul.f32 %v3797, %v3798
    %v3800 = vsub.f32 1.0, %v3799
    %v3801 = vmul.f32 %v3798, %v3800
    %v3802 = vadd.f32 %v3798, %v3801
    %vm3803 = vweird.f32 %v3797
    %vm3804 = vweird.f32 %v3798
    %vm3805 = vmor %vm3803, %vm3804
    %v3806 = vsel %vm3805, %v3798, %v3802
    %v3807 = vand.u32 2147483647, %v3797
    %vm3808 = vcmp.eq.f32.partialorder %v3807, 8.507059e+37
    %v3809 = vand.u32 %v3797, 2147483648
    %v3810 = vor.u32 1.1754944e-38, %v3809
    %v3811 = vsel %vm3808, %v3810, %v3806
    %v3812 = vmul.f32 1.0, %v3811
    %v3813 = vtanh.pop %v3773
    %v3814 = vxor.u32 %v3774, 2147483648
    %v3815 = vmul.f32 %v3814, 1.442695
    %v3816 = vpow.pop %v3815
    %v3817 = vadd.f32 %v3816, 1.0
    %v3818 = vrcp.pop %v3817
    %v3819 = vmul.f32 %v3817, %v3818
    %v3820 = vsub.f32 1.0, %v3819
    %v3821 = vmul.f32 %v3818, %v3820
    %v3822 = vadd.f32 %v3818, %v3821
    %vm3823 = vweird.f32 %v3817
    %vm3824 = vweird.f32 %v3818
    %vm3825 = vmor %vm3823, %vm3824
    %v3826 = vsel %vm3825, %v3818, %v3822
    %v3827 = vand.u32 2147483647, %v3817
    %vm3828 = vcmp.eq.f32.partialorder %v3827, 8.507059e+37
    %v3829 = vand.u32 %v3817, 2147483648
    %v3830 = vor.u32 1.1754944e-38, %v3829
    %v3831 = vsel %vm3828, %v3830, %v3826
    %v3832 = vmul.f32 1.0, %v3831
    %v3833 = vmul.f32 %v3812, %v3520
    %v3834 = vmul.f32 %v3793, %v3813
    %v3835 = vadd.f32 %v3833, %v3834
    %v3836 = vtanh.pop %v3835
    %v3837 = vmul.f32 %v3832, %v3836
    %3838 = vst [vmem:[#allocation2] sm:$0xff] %v3837
    %v3839 = vld [vmem:[%s908] sm:$0xff]
    %v3840 = vld [vmem:[%s908 + $0x8] sm:$0xff]
    %v3841 = vld [vmem:[%s908 + $0x10] sm:$0xff]
    %v3842 = vld [vmem:[%s908 + $0x18] sm:$0xff]
    %v3843 = vpack.c.bf16 %v3837, %v3837
    %v3844 = vld [vmem:[%s3526] sm:$0xff]
    %v3845 = vld [vmem:[%s3526 + $0x8] sm:$0xff]
    %v3846 = vld [vmem:[%s3526 + $0x10] sm:$0xff]
    %v3847 = vld [vmem:[%s3526 + $0x18] sm:$0xff]
    %v3848 = vld [vmem:[%s3526 + $0x20] sm:$0xff]
    %v3849 = vld [vmem:[%s3526 + $0x28] sm:$0xff]
    %v3850 = vld [vmem:[%s3526 + $0x30] sm:$0xff]
    %v3851 = vld [vmem:[%s3526 + $0x38] sm:$0xff]
    %v3852 = vld [vmem:[%s3526 + $0x40] sm:$0xff]
    %v3853 = vld [vmem:[%s3526 + $0x48] sm:$0xff]
    %v3854 = vld [vmem:[%s3526 + $0x50] sm:$0xff]
    %v3855 = vld [vmem:[%s3526 + $0x58] sm:$0xff]
    %v3856 = vld [vmem:[%s3526 + $0x60] sm:$0xff]
    %v3857 = vld [vmem:[%s3526 + $0x68] sm:$0xff]
    %v3858 = vld [vmem:[%s3526 + $0x70] sm:$0xff]
    %v3859 = vld [vmem:[%s3526 + $0x78] sm:$0xff]
    %v3860 = vld [vmem:[%s3526 + $0x80] sm:$0xff]
    %v3861 = vld [vmem:[%s3526 + $0x88] sm:$0xff]
    %v3862 = vld [vmem:[%s3526 + $0x90] sm:$0xff]
    %v3863 = vld [vmem:[%s3526 + $0x98] sm:$0xff]
    %v3864 = vld [vmem:[%s3526 + $0xa0] sm:$0xff]
    %v3865 = vld [vmem:[%s3526 + $0xa8] sm:$0xff]
    %v3866 = vld [vmem:[%s3526 + $0xb0] sm:$0xff]
    %v3867 = vld [vmem:[%s3526 + $0xb8] sm:$0xff]
    %v3868 = vld [vmem:[%s3526 + $0xc0] sm:$0xff]
    %v3869 = vld [vmem:[%s3526 + $0xc8] sm:$0xff]
    %v3870 = vld [vmem:[%s3526 + $0xd0] sm:$0xff]
    %v3871 = vld [vmem:[%s3526 + $0xd8] sm:$0xff]
    %v3872 = vld [vmem:[%s3526 + $0xe0] sm:$0xff]
    %v3873 = vld [vmem:[%s3526 + $0xe8] sm:$0xff]
    %v3874 = vld [vmem:[%s3526 + $0xf0] sm:$0xff]
    %v3875 = vld [vmem:[%s3526 + $0xf8] sm:$0xff]
    %v3908 = vunpack.c.l.b16 %v3844
    %v3909 = vunpack.c.h.b16 %v3844
    %v3910 = vunpack.c.l.b16 %v3845
    %v3911 = vunpack.c.h.b16 %v3845
    %v3912 = vunpack.c.l.b16 %v3846
    %v3913 = vunpack.c.h.b16 %v3846
    %v3914 = vunpack.c.l.b16 %v3847
    %v3915 = vunpack.c.h.b16 %v3847
    %v3916 = vunpack.c.l.b16 %v3848
    %v3917 = vunpack.c.h.b16 %v3848
    %v3918 = vunpack.c.l.b16 %v3849
    %v3919 = vunpack.c.h.b16 %v3849
    %v3920 = vunpack.c.l.b16 %v3850
    %v3921 = vunpack.c.h.b16 %v3850
    %v3922 = vunpack.c.l.b16 %v3851
    %v3923 = vunpack.c.h.b16 %v3851
    %v3924 = vunpack.c.l.b16 %v3852
    %v3925 = vunpack.c.h.b16 %v3852
    %v3926 = vunpack.c.l.b16 %v3853
    %v3927 = vunpack.c.h.b16 %v3853
    %v3928 = vunpack.c.l.b16 %v3854
    %v3929 = vunpack.c.h.b16 %v3854
    %v3930 = vunpack.c.l.b16 %v3855
    %v3931 = vunpack.c.h.b16 %v3855
    %v3932 = vunpack.c.l.b16 %v3856
    %v3933 = vunpack.c.h.b16 %v3856
    %v3934 = vunpack.c.l.b16 %v3857
    %v3935 = vunpack.c.h.b16 %v3857
    %v3936 = vunpack.c.l.b16 %v3858
    %v3937 = vunpack.c.h.b16 %v3858
    %v3938 = vunpack.c.l.b16 %v3859
    %v3939 = vunpack.c.h.b16 %v3859
    %v3940 = vunpack.c.l.b16 %v3860
    %v3941 = vunpack.c.h.b16 %v3860
    %v3942 = vunpack.c.l.b16 %v3861
    %v3943 = vunpack.c.h.b16 %v3861
    %v3944 = vunpack.c.l.b16 %v3862
    %v3945 = vunpack.c.h.b16 %v3862
    %v3946 = vunpack.c.l.b16 %v3863
    %v3947 = vunpack.c.h.b16 %v3863
    %v3948 = vunpack.c.l.b16 %v3864
    %v3949 = vunpack.c.h.b16 %v3864
    %v3950 = vunpack.c.l.b16 %v3865
    %v3951 = vunpack.c.h.b16 %v3865
    %v3952 = vunpack.c.l.b16 %v3866
    %v3953 = vunpack.c.h.b16 %v3866
    %v3954 = vunpack.c.l.b16 %v3867
    %v3955 = vunpack.c.h.b16 %v3867
    %v3956 = vunpack.c.l.b16 %v3868
    %v3957 = vunpack.c.h.b16 %v3868
    %v3958 = vunpack.c.l.b16 %v3869
    %v3959 = vunpack.c.h.b16 %v3869
    %v3960 = vunpack.c.l.b16 %v3870
    %v3961 = vunpack.c.h.b16 %v3870
    %v3962 = vunpack.c.l.b16 %v3871
    %v3963 = vunpack.c.h.b16 %v3871
    %v3964 = vunpack.c.l.b16 %v3872
    %v3965 = vunpack.c.h.b16 %v3872
    %v3966 = vunpack.c.l.b16 %v3873
    %v3967 = vunpack.c.h.b16 %v3873
    %v3968 = vunpack.c.l.b16 %v3874
    %v3969 = vunpack.c.h.b16 %v3874
    %v3970 = vunpack.c.l.b16 %v3875
    %v3971 = vunpack.c.h.b16 %v3875
    %v3972 = vpack.c.b16 %v3912, %v3908
    %v3973 = vpack.c.b16 %v3913, %v3909
    %v3974 = vpack.c.b16 %v3914, %v3910
    %v3975 = vpack.c.b16 %v3915, %v3911
    %v3976 = vpack.c.b16 %v3920, %v3916
    %v3977 = vpack.c.b16 %v3921, %v3917
    %v3978 = vpack.c.b16 %v3922, %v3918
    %v3979 = vpack.c.b16 %v3923, %v3919
    %v3980 = vpack.c.b16 %v3928, %v3924
    %v3981 = vpack.c.b16 %v3929, %v3925
    %v3982 = vpack.c.b16 %v3930, %v3926
    %v3983 = vpack.c.b16 %v3931, %v3927
    %v3984 = vpack.c.b16 %v3936, %v3932
    %v3985 = vpack.c.b16 %v3937, %v3933
    %v3986 = vpack.c.b16 %v3938, %v3934
    %v3987 = vpack.c.b16 %v3939, %v3935
    %v3988 = vpack.c.b16 %v3944, %v3940
    %v3989 = vpack.c.b16 %v3945, %v3941
    %v3990 = vpack.c.b16 %v3946, %v3942
    %v3991 = vpack.c.b16 %v3947, %v3943
    %v3992 = vpack.c.b16 %v3952, %v3948
    %v3993 = vpack.c.b16 %v3953, %v3949
    %v3994 = vpack.c.b16 %v3954, %v3950
    %v3995 = vpack.c.b16 %v3955, %v3951
    %v3996 = vpack.c.b16 %v3960, %v3956
    %v3997 = vpack.c.b16 %v3961, %v3957
    %v3998 = vpack.c.b16 %v3962, %v3958
    %v3999 = vpack.c.b16 %v3963, %v3959
    %v4000 = vpack.c.b16 %v3968, %v3964
    %v4001 = vpack.c.b16 %v3969, %v3965
    %v4002 = vpack.c.b16 %v3970, %v3966
    %v4003 = vpack.c.b16 %v3971, %v3967
    %4036 = vmatpush.bf16.msra.mxu0 %v4000
    %4037 = vmatpush.bf16.msra.mxu0 %v3996
    %4038 = vmatpush.bf16.msra.mxu0 %v3992
    %4039 = vmatpush.bf16.msra.mxu0 %v3988
    %4040 = vmatpush.bf16.msra.mxu0 %v3984
    %4041 = vmatpush.bf16.msra.mxu0 %v3980
    %4042 = vmatpush.bf16.msra.mxu0 %v3976
    %4043 = vmatpush.bf16.msra.mxu0 %v3972
    %4044 = vmatmul.bf16.gmra.mxu0 %v3843
    %v4045 = vpop.f32.mrf.mxu0
    %v4046 = vadd.f32 0.0, %v4045
    %v4047 = vpop.f32.mrf.mxu0
    %4048 = vdwg.mxu0
    %4049 = vmatpush.bf16.msra.mxu0 %v4001
    %4050 = vmatpush.bf16.msra.mxu0 %v3997
    %4051 = vmatpush.bf16.msra.mxu0 %v3993
    %4052 = vmatpush.bf16.msra.mxu0 %v3989
    %4053 = vmatpush.bf16.msra.mxu0 %v3985
    %4054 = vmatpush.bf16.msra.mxu0 %v3981
    %4055 = vmatpush.bf16.msra.mxu0 %v3977
    %4056 = vmatpush.bf16.msra.mxu0 %v3973
    %4057 = vmatmul.bf16.gmra.mxu0 %v3843
    %v4058 = vpop.f32.mrf.mxu0
    %v4059 = vadd.f32 0.0, %v4058
    %v4060 = vpop.f32.mrf.mxu0
    %4061 = vdwg.mxu0
    %4062 = vmatpush.bf16.msra.mxu0 %v4002
    %4063 = vmatpush.bf16.msra.mxu0 %v3998
    %4064 = vmatpush.bf16.msra.mxu0 %v3994
    %4065 = vmatpush.bf16.msra.mxu0 %v3990
    %4066 = vmatpush.bf16.msra.mxu0 %v3986
    %4067 = vmatpush.bf16.msra.mxu0 %v3982
    %4068 = vmatpush.bf16.msra.mxu0 %v3978
    %4069 = vmatpush.bf16.msra.mxu0 %v3974
    %4070 = vmatmul.bf16.gmra.mxu0 %v3843
    %v4071 = vpop.f32.mrf.mxu0
    %v4072 = vadd.f32 0.0, %v4071
    %v4073 = vpop.f32.mrf.mxu0
    %4074 = vdwg.mxu0
    %4075 = vmatpush.bf16.msra.mxu0 %v4003
    %4076 = vmatpush.bf16.msra.mxu0 %v3999
    %4077 = vmatpush.bf16.msra.mxu0 %v3995
    %4078 = vmatpush.bf16.msra.mxu0 %v3991
    %4079 = vmatpush.bf16.msra.mxu0 %v3987
    %4080 = vmatpush.bf16.msra.mxu0 %v3983
    %4081 = vmatpush.bf16.msra.mxu0 %v3979
    %4082 = vmatpush.bf16.msra.mxu0 %v3975
    %4083 = vmatmul.bf16.gmra.mxu0 %v3843
    %v4084 = vpop.f32.mrf.mxu0
    %v4085 = vadd.f32 0.0, %v4084
    %v4086 = vpop.f32.mrf.mxu0
    %4087 = vdwg.mxu0
    %v4088 = vadd.f32 %v3839, %v4046
    %v4089 = vadd.f32 %v3840, %v4059
    %v4090 = vadd.f32 %v3841, %v4072
    %v4091 = vadd.f32 %v3842, %v4085
    %v4092 = vxor.u32 %v4088, 2147483648
    %v4093 = vmul.f32 %v4092, 1.442695
    %v4094 = vpow.pop %v4093
    %v4095 = vadd.f32 %v4094, 1.0
    %v4096 = vrcp.pop %v4095
    %v4097 = vmul.f32 %v4095, %v4096
    %v4098 = vsub.f32 1.0, %v4097
    %v4099 = vmul.f32 %v4096, %v4098
    %v4100 = vadd.f32 %v4096, %v4099
    %vm4101 = vweird.f32 %v4095
    %vm4102 = vweird.f32 %v4096
    %vm4103 = vmor %vm4101, %vm4102
    %v4104 = vsel %vm4103, %v4096, %v4100
    %v4105 = vand.u32 2147483647, %v4095
    %vm4106 = vcmp.eq.f32.partialorder %v4105, 8.507059e+37
    %v4107 = vand.u32 %v4095, 2147483648
    %v4108 = vor.u32 1.1754944e-38, %v4107
    %v4109 = vsel %vm4106, %v4108, %v4104
    %v4110 = vmul.f32 1.0, %v4109
    %v4111 = vxor.u32 %v4089, 2147483648
    %v4112 = vmul.f32 %v4111, 1.442695
    %v4113 = vpow.pop %v4112
    %v4114 = vadd.f32 %v4113, 1.0
    %v4115 = vrcp.pop %v4114
    %v4116 = vmul.f32 %v4114, %v4115
    %v4117 = vsub.f32 1.0, %v4116
    %v4118 = vmul.f32 %v4115, %v4117
    %v4119 = vadd.f32 %v4115, %v4118
    %vm4120 = vweird.f32 %v4114
    %vm4121 = vweird.f32 %v4115
    %vm4122 = vmor %vm4120, %vm4121
    %v4123 = vsel %vm4122, %v4115, %v4119
    %v4124 = vand.u32 2147483647, %v4114
    %vm4125 = vcmp.eq.f32.partialorder %v4124, 8.507059e+37
    %v4126 = vand.u32 %v4114, 2147483648
    %v4127 = vor.u32 1.1754944e-38, %v4126
    %v4128 = vsel %vm4125, %v4127, %v4123
    %v4129 = vmul.f32 1.0, %v4128
    %v4130 = vtanh.pop %v4090
    %v4131 = vxor.u32 %v4091, 2147483648
    %v4132 = vmul.f32 %v4131, 1.442695
    %v4133 = vpow.pop %v4132
    %v4134 = vadd.f32 %v4133, 1.0
    %v4135 = vrcp.pop %v4134
    %v4136 = vmul.f32 %v4134, %v4135
    %v4137 = vsub.f32 1.0, %v4136
    %v4138 = vmul.f32 %v4135, %v4137
    %v4139 = vadd.f32 %v4135, %v4138
    %vm4140 = vweird.f32 %v4134
    %vm4141 = vweird.f32 %v4135
    %vm4142 = vmor %vm4140, %vm4141
    %v4143 = vsel %vm4142, %v4135, %v4139
    %v4144 = vand.u32 2147483647, %v4134
    %vm4145 = vcmp.eq.f32.partialorder %v4144, 8.507059e+37
    %v4146 = vand.u32 %v4134, 2147483648
    %v4147 = vor.u32 1.1754944e-38, %v4146
    %v4148 = vsel %vm4145, %v4147, %v4143
    %v4149 = vmul.f32 1.0, %v4148
    %v4150 = vmul.f32 %v4129, %v3835
    %v4151 = vmul.f32 %v4110, %v4130
    %v4152 = vadd.f32 %v4150, %v4151
    %v4153 = vtanh.pop %v4152
    %v4154 = vmul.f32 %v4149, %v4153
    %4155 = vst [vmem:[%s1225] sm:$0xff] %v4154
    %v4156 = vld [vmem:[%s1229] sm:$0xff]
    %v4157 = vld [vmem:[%s1229 + $0x8] sm:$0xff]
    %v4158 = vld [vmem:[%s1229 + $0x10] sm:$0xff]
    %v4159 = vld [vmem:[%s1229 + $0x18] sm:$0xff]
    %v4160 = vpack.c.bf16 %v4154, %v4154
    %v4161 = vld [vmem:[%s3526] sm:$0xff]
    %v4162 = vld [vmem:[%s3526 + $0x8] sm:$0xff]
    %v4163 = vld [vmem:[%s3526 + $0x10] sm:$0xff]
    %v4164 = vld [vmem:[%s3526 + $0x18] sm:$0xff]
    %v4165 = vld [vmem:[%s3526 + $0x20] sm:$0xff]
    %v4166 = vld [vmem:[%s3526 + $0x28] sm:$0xff]
    %v4167 = vld [vmem:[%s3526 + $0x30] sm:$0xff]
    %v4168 = vld [vmem:[%s3526 + $0x38] sm:$0xff]
    %v4169 = vld [vmem:[%s3526 + $0x40] sm:$0xff]
    %v4170 = vld [vmem:[%s3526 + $0x48] sm:$0xff]
    %v4171 = vld [vmem:[%s3526 + $0x50] sm:$0xff]
    %v4172 = vld [vmem:[%s3526 + $0x58] sm:$0xff]
    %v4173 = vld [vmem:[%s3526 + $0x60] sm:$0xff]
    %v4174 = vld [vmem:[%s3526 + $0x68] sm:$0xff]
    %v4175 = vld [vmem:[%s3526 + $0x70] sm:$0xff]
    %v4176 = vld [vmem:[%s3526 + $0x78] sm:$0xff]
    %v4177 = vld [vmem:[%s3526 + $0x80] sm:$0xff]
    %v4178 = vld [vmem:[%s3526 + $0x88] sm:$0xff]
    %v4179 = vld [vmem:[%s3526 + $0x90] sm:$0xff]
    %v4180 = vld [vmem:[%s3526 + $0x98] sm:$0xff]
    %v4181 = vld [vmem:[%s3526 + $0xa0] sm:$0xff]
    %v4182 = vld [vmem:[%s3526 + $0xa8] sm:$0xff]
    %v4183 = vld [vmem:[%s3526 + $0xb0] sm:$0xff]
    %v4184 = vld [vmem:[%s3526 + $0xb8] sm:$0xff]
    %v4185 = vld [vmem:[%s3526 + $0xc0] sm:$0xff]
    %v4186 = vld [vmem:[%s3526 + $0xc8] sm:$0xff]
    %v4187 = vld [vmem:[%s3526 + $0xd0] sm:$0xff]
    %v4188 = vld [vmem:[%s3526 + $0xd8] sm:$0xff]
    %v4189 = vld [vmem:[%s3526 + $0xe0] sm:$0xff]
    %v4190 = vld [vmem:[%s3526 + $0xe8] sm:$0xff]
    %v4191 = vld [vmem:[%s3526 + $0xf0] sm:$0xff]
    %v4192 = vld [vmem:[%s3526 + $0xf8] sm:$0xff]
    %v4225 = vunpack.c.l.b16 %v4161
    %v4226 = vunpack.c.h.b16 %v4161
    %v4227 = vunpack.c.l.b16 %v4162
    %v4228 = vunpack.c.h.b16 %v4162
    %v4229 = vunpack.c.l.b16 %v4163
    %v4230 = vunpack.c.h.b16 %v4163
    %v4231 = vunpack.c.l.b16 %v4164
    %v4232 = vunpack.c.h.b16 %v4164
    %v4233 = vunpack.c.l.b16 %v4165
    %v4234 = vunpack.c.h.b16 %v4165
    %v4235 = vunpack.c.l.b16 %v4166
    %v4236 = vunpack.c.h.b16 %v4166
    %v4237 = vunpack.c.l.b16 %v4167
    %v4238 = vunpack.c.h.b16 %v4167
    %v4239 = vunpack.c.l.b16 %v4168
    %v4240 = vunpack.c.h.b16 %v4168
    %v4241 = vunpack.c.l.b16 %v4169
    %v4242 = vunpack.c.h.b16 %v4169
    %v4243 = vunpack.c.l.b16 %v4170
    %v4244 = vunpack.c.h.b16 %v4170
    %v4245 = vunpack.c.l.b16 %v4171
    %v4246 = vunpack.c.h.b16 %v4171
    %v4247 = vunpack.c.l.b16 %v4172
    %v4248 = vunpack.c.h.b16 %v4172
    %v4249 = vunpack.c.l.b16 %v4173
    %v4250 = vunpack.c.h.b16 %v4173
    %v4251 = vunpack.c.l.b16 %v4174
    %v4252 = vunpack.c.h.b16 %v4174
    %v4253 = vunpack.c.l.b16 %v4175
    %v4254 = vunpack.c.h.b16 %v4175
    %v4255 = vunpack.c.l.b16 %v4176
    %v4256 = vunpack.c.h.b16 %v4176
    %v4257 = vunpack.c.l.b16 %v4177
    %v4258 = vunpack.c.h.b16 %v4177
    %v4259 = vunpack.c.l.b16 %v4178
    %v4260 = vunpack.c.h.b16 %v4178
    %v4261 = vunpack.c.l.b16 %v4179
    %v4262 = vunpack.c.h.b16 %v4179
    %v4263 = vunpack.c.l.b16 %v4180
    %v4264 = vunpack.c.h.b16 %v4180
    %v4265 = vunpack.c.l.b16 %v4181
    %v4266 = vunpack.c.h.b16 %v4181
    %v4267 = vunpack.c.l.b16 %v4182
    %v4268 = vunpack.c.h.b16 %v4182
    %v4269 = vunpack.c.l.b16 %v4183
    %v4270 = vunpack.c.h.b16 %v4183
    %v4271 = vunpack.c.l.b16 %v4184
    %v4272 = vunpack.c.h.b16 %v4184
    %v4273 = vunpack.c.l.b16 %v4185
    %v4274 = vunpack.c.h.b16 %v4185
    %v4275 = vunpack.c.l.b16 %v4186
    %v4276 = vunpack.c.h.b16 %v4186
    %v4277 = vunpack.c.l.b16 %v4187
    %v4278 = vunpack.c.h.b16 %v4187
    %v4279 = vunpack.c.l.b16 %v4188
    %v4280 = vunpack.c.h.b16 %v4188
    %v4281 = vunpack.c.l.b16 %v4189
    %v4282 = vunpack.c.h.b16 %v4189
    %v4283 = vunpack.c.l.b16 %v4190
    %v4284 = vunpack.c.h.b16 %v4190
    %v4285 = vunpack.c.l.b16 %v4191
    %v4286 = vunpack.c.h.b16 %v4191
    %v4287 = vunpack.c.l.b16 %v4192
    %v4288 = vunpack.c.h.b16 %v4192
    %v4289 = vpack.c.b16 %v4229, %v4225
    %v4290 = vpack.c.b16 %v4230, %v4226
    %v4291 = vpack.c.b16 %v4231, %v4227
    %v4292 = vpack.c.b16 %v4232, %v4228
    %v4293 = vpack.c.b16 %v4237, %v4233
    %v4294 = vpack.c.b16 %v4238, %v4234
    %v4295 = vpack.c.b16 %v4239, %v4235
    %v4296 = vpack.c.b16 %v4240, %v4236
    %v4297 = vpack.c.b16 %v4245, %v4241
    %v4298 = vpack.c.b16 %v4246, %v4242
    %v4299 = vpack.c.b16 %v4247, %v4243
    %v4300 = vpack.c.b16 %v4248, %v4244
    %v4301 = vpack.c.b16 %v4253, %v4249
    %v4302 = vpack.c.b16 %v4254, %v4250
    %v4303 = vpack.c.b16 %v4255, %v4251
    %v4304 = vpack.c.b16 %v4256, %v4252
    %v4305 = vpack.c.b16 %v4261, %v4257
    %v4306 = vpack.c.b16 %v4262, %v4258
    %v4307 = vpack.c.b16 %v4263, %v4259
    %v4308 = vpack.c.b16 %v4264, %v4260
    %v4309 = vpack.c.b16 %v4269, %v4265
    %v4310 = vpack.c.b16 %v4270, %v4266
    %v4311 = vpack.c.b16 %v4271, %v4267
    %v4312 = vpack.c.b16 %v4272, %v4268
    %v4313 = vpack.c.b16 %v4277, %v4273
    %v4314 = vpack.c.b16 %v4278, %v4274
    %v4315 = vpack.c.b16 %v4279, %v4275
    %v4316 = vpack.c.b16 %v4280, %v4276
    %v4317 = vpack.c.b16 %v4285, %v4281
    %v4318 = vpack.c.b16 %v4286, %v4282
    %v4319 = vpack.c.b16 %v4287, %v4283
    %v4320 = vpack.c.b16 %v4288, %v4284
    %4353 = vmatpush.bf16.msra.mxu0 %v4317
    %4354 = vmatpush.bf16.msra.mxu0 %v4313
    %4355 = vmatpush.bf16.msra.mxu0 %v4309
    %4356 = vmatpush.bf16.msra.mxu0 %v4305
    %4357 = vmatpush.bf16.msra.mxu0 %v4301
    %4358 = vmatpush.bf16.msra.mxu0 %v4297
    %4359 = vmatpush.bf16.msra.mxu0 %v4293
    %4360 = vmatpush.bf16.msra.mxu0 %v4289
    %4361 = vmatmul.bf16.gmra.mxu0 %v4160
    %v4362 = vpop.f32.mrf.mxu0
    %v4363 = vadd.f32 0.0, %v4362
    %v4364 = vpop.f32.mrf.mxu0
    %4365 = vdwg.mxu0
    %4366 = vmatpush.bf16.msra.mxu0 %v4318
    %4367 = vmatpush.bf16.msra.mxu0 %v4314
    %4368 = vmatpush.bf16.msra.mxu0 %v4310
    %4369 = vmatpush.bf16.msra.mxu0 %v4306
    %4370 = vmatpush.bf16.msra.mxu0 %v4302
    %4371 = vmatpush.bf16.msra.mxu0 %v4298
    %4372 = vmatpush.bf16.msra.mxu0 %v4294
    %4373 = vmatpush.bf16.msra.mxu0 %v4290
    %4374 = vmatmul.bf16.gmra.mxu0 %v4160
    %v4375 = vpop.f32.mrf.mxu0
    %v4376 = vadd.f32 0.0, %v4375
    %v4377 = vpop.f32.mrf.mxu0
    %4378 = vdwg.mxu0
    %4379 = vmatpush.bf16.msra.mxu0 %v4319
    %4380 = vmatpush.bf16.msra.mxu0 %v4315
    %4381 = vmatpush.bf16.msra.mxu0 %v4311
    %4382 = vmatpush.bf16.msra.mxu0 %v4307
    %4383 = vmatpush.bf16.msra.mxu0 %v4303
    %4384 = vmatpush.bf16.msra.mxu0 %v4299
    %4385 = vmatpush.bf16.msra.mxu0 %v4295
    %4386 = vmatpush.bf16.msra.mxu0 %v4291
    %4387 = vmatmul.bf16.gmra.mxu0 %v4160
    %v4388 = vpop.f32.mrf.mxu0
    %v4389 = vadd.f32 0.0, %v4388
    %v4390 = vpop.f32.mrf.mxu0
    %4391 = vdwg.mxu0
    %4392 = vmatpush.bf16.msra.mxu0 %v4320
    %4393 = vmatpush.bf16.msra.mxu0 %v4316
    %4394 = vmatpush.bf16.msra.mxu0 %v4312
    %4395 = vmatpush.bf16.msra.mxu0 %v4308
    %4396 = vmatpush.bf16.msra.mxu0 %v4304
    %4397 = vmatpush.bf16.msra.mxu0 %v4300
    %4398 = vmatpush.bf16.msra.mxu0 %v4296
    %4399 = vmatpush.bf16.msra.mxu0 %v4292
    %4400 = vmatmul.bf16.gmra.mxu0 %v4160
    %v4401 = vpop.f32.mrf.mxu0
    %v4402 = vadd.f32 0.0, %v4401
    %v4403 = vpop.f32.mrf.mxu0
    %4404 = vdwg.mxu0
    %v4405 = vadd.f32 %v4156, %v4363
    %v4406 = vadd.f32 %v4157, %v4376
    %v4407 = vadd.f32 %v4158, %v4389
    %v4408 = vadd.f32 %v4159, %v4402
    %v4409 = vxor.u32 %v4405, 2147483648
    %v4410 = vmul.f32 %v4409, 1.442695
    %v4411 = vpow.pop %v4410
    %v4412 = vadd.f32 %v4411, 1.0
    %v4413 = vrcp.pop %v4412
    %v4414 = vmul.f32 %v4412, %v4413
    %v4415 = vsub.f32 1.0, %v4414
    %v4416 = vmul.f32 %v4413, %v4415
    %v4417 = vadd.f32 %v4413, %v4416
    %vm4418 = vweird.f32 %v4412
    %vm4419 = vweird.f32 %v4413
    %vm4420 = vmor %vm4418, %vm4419
    %v4421 = vsel %vm4420, %v4413, %v4417
    %v4422 = vand.u32 2147483647, %v4412
    %vm4423 = vcmp.eq.f32.partialorder %v4422, 8.507059e+37
    %v4424 = vand.u32 %v4412, 2147483648
    %v4425 = vor.u32 1.1754944e-38, %v4424
    %v4426 = vsel %vm4423, %v4425, %v4421
    %v4427 = vmul.f32 1.0, %v4426
    %v4428 = vxor.u32 %v4406, 2147483648
    %v4429 = vmul.f32 %v4428, 1.442695
    %v4430 = vpow.pop %v4429
    %v4431 = vadd.f32 %v4430, 1.0
    %v4432 = vrcp.pop %v4431
    %v4433 = vmul.f32 %v4431, %v4432
    %v4434 = vsub.f32 1.0, %v4433
    %v4435 = vmul.f32 %v4432, %v4434
    %v4436 = vadd.f32 %v4432, %v4435
    %vm4437 = vweird.f32 %v4431
    %vm4438 = vweird.f32 %v4432
    %vm4439 = vmor %vm4437, %vm4438
    %v4440 = vsel %vm4439, %v4432, %v4436
    %v4441 = vand.u32 2147483647, %v4431
    %vm4442 = vcmp.eq.f32.partialorder %v4441, 8.507059e+37
    %v4443 = vand.u32 %v4431, 2147483648
    %v4444 = vor.u32 1.1754944e-38, %v4443
    %v4445 = vsel %vm4442, %v4444, %v4440
    %v4446 = vmul.f32 1.0, %v4445
    %v4447 = vtanh.pop %v4407
    %v4448 = vxor.u32 %v4408, 2147483648
    %v4449 = vmul.f32 %v4448, 1.442695
    %v4450 = vpow.pop %v4449
    %v4451 = vadd.f32 %v4450, 1.0
    %v4452 = vrcp.pop %v4451
    %v4453 = vmul.f32 %v4451, %v4452
    %v4454 = vsub.f32 1.0, %v4453
    %v4455 = vmul.f32 %v4452, %v4454
    %v4456 = vadd.f32 %v4452, %v4455
    %vm4457 = vweird.f32 %v4451
    %vm4458 = vweird.f32 %v4452
    %vm4459 = vmor %vm4457, %vm4458
    %v4460 = vsel %vm4459, %v4452, %v4456
    %v4461 = vand.u32 2147483647, %v4451
    %vm4462 = vcmp.eq.f32.partialorder %v4461, 8.507059e+37
    %v4463 = vand.u32 %v4451, 2147483648
    %v4464 = vor.u32 1.1754944e-38, %v4463
    %v4465 = vsel %vm4462, %v4464, %v4460
    %v4466 = vmul.f32 1.0, %v4465
    %v4467 = vmul.f32 %v4446, %v4152
    %v4468 = vmul.f32 %v4427, %v4447
    %v4469 = vadd.f32 %v4467, %v4468
    %v4470 = vtanh.pop %v4469
    %v4471 = vmul.f32 %v4466, %v4470
    %4472 = vst [vmem:[%s1546] sm:$0xff] %v4471
    %v4473 = vld [vmem:[%s1550] sm:$0xff]
    %v4474 = vld [vmem:[%s1550 + $0x8] sm:$0xff]
    %v4475 = vld [vmem:[%s1550 + $0x10] sm:$0xff]
    %v4476 = vld [vmem:[%s1550 + $0x18] sm:$0xff]
    %v4477 = vpack.c.bf16 %v4471, %v4471
    %v4478 = vld [vmem:[%s3526] sm:$0xff]
    %v4479 = vld [vmem:[%s3526 + $0x8] sm:$0xff]
    %v4480 = vld [vmem:[%s3526 + $0x10] sm:$0xff]
    %v4481 = vld [vmem:[%s3526 + $0x18] sm:$0xff]
    %v4482 = vld [vmem:[%s3526 + $0x20] sm:$0xff]
    %v4483 = vld [vmem:[%s3526 + $0x28] sm:$0xff]
    %v4484 = vld [vmem:[%s3526 + $0x30] sm:$0xff]
    %v4485 = vld [vmem:[%s3526 + $0x38] sm:$0xff]
    %v4486 = vld [vmem:[%s3526 + $0x40] sm:$0xff]
    %v4487 = vld [vmem:[%s3526 + $0x48] sm:$0xff]
    %v4488 = vld [vmem:[%s3526 + $0x50] sm:$0xff]
    %v4489 = vld [vmem:[%s3526 + $0x58] sm:$0xff]
    %v4490 = vld [vmem:[%s3526 + $0x60] sm:$0xff]
    %v4491 = vld [vmem:[%s3526 + $0x68] sm:$0xff]
    %v4492 = vld [vmem:[%s3526 + $0x70] sm:$0xff]
    %v4493 = vld [vmem:[%s3526 + $0x78] sm:$0xff]
    %v4494 = vld [vmem:[%s3526 + $0x80] sm:$0xff]
    %v4495 = vld [vmem:[%s3526 + $0x88] sm:$0xff]
    %v4496 = vld [vmem:[%s3526 + $0x90] sm:$0xff]
    %v4497 = vld [vmem:[%s3526 + $0x98] sm:$0xff]
    %v4498 = vld [vmem:[%s3526 + $0xa0] sm:$0xff]
    %v4499 = vld [vmem:[%s3526 + $0xa8] sm:$0xff]
    %v4500 = vld [vmem:[%s3526 + $0xb0] sm:$0xff]
    %v4501 = vld [vmem:[%s3526 + $0xb8] sm:$0xff]
    %v4502 = vld [vmem:[%s3526 + $0xc0] sm:$0xff]
    %v4503 = vld [vmem:[%s3526 + $0xc8] sm:$0xff]
    %v4504 = vld [vmem:[%s3526 + $0xd0] sm:$0xff]
    %v4505 = vld [vmem:[%s3526 + $0xd8] sm:$0xff]
    %v4506 = vld [vmem:[%s3526 + $0xe0] sm:$0xff]
    %v4507 = vld [vmem:[%s3526 + $0xe8] sm:$0xff]
    %v4508 = vld [vmem:[%s3526 + $0xf0] sm:$0xff]
    %v4509 = vld [vmem:[%s3526 + $0xf8] sm:$0xff]
    %v4542 = vunpack.c.l.b16 %v4478
    %v4543 = vunpack.c.h.b16 %v4478
    %v4544 = vunpack.c.l.b16 %v4479
    %v4545 = vunpack.c.h.b16 %v4479
    %v4546 = vunpack.c.l.b16 %v4480
    %v4547 = vunpack.c.h.b16 %v4480
    %v4548 = vunpack.c.l.b16 %v4481
    %v4549 = vunpack.c.h.b16 %v4481
    %v4550 = vunpack.c.l.b16 %v4482
    %v4551 = vunpack.c.h.b16 %v4482
    %v4552 = vunpack.c.l.b16 %v4483
    %v4553 = vunpack.c.h.b16 %v4483
    %v4554 = vunpack.c.l.b16 %v4484
    %v4555 = vunpack.c.h.b16 %v4484
    %v4556 = vunpack.c.l.b16 %v4485
    %v4557 = vunpack.c.h.b16 %v4485
    %v4558 = vunpack.c.l.b16 %v4486
    %v4559 = vunpack.c.h.b16 %v4486
    %v4560 = vunpack.c.l.b16 %v4487
    %v4561 = vunpack.c.h.b16 %v4487
    %v4562 = vunpack.c.l.b16 %v4488
    %v4563 = vunpack.c.h.b16 %v4488
    %v4564 = vunpack.c.l.b16 %v4489
    %v4565 = vunpack.c.h.b16 %v4489
    %v4566 = vunpack.c.l.b16 %v4490
    %v4567 = vunpack.c.h.b16 %v4490
    %v4568 = vunpack.c.l.b16 %v4491
    %v4569 = vunpack.c.h.b16 %v4491
    %v4570 = vunpack.c.l.b16 %v4492
    %v4571 = vunpack.c.h.b16 %v4492
    %v4572 = vunpack.c.l.b16 %v4493
    %v4573 = vunpack.c.h.b16 %v4493
    %v4574 = vunpack.c.l.b16 %v4494
    %v4575 = vunpack.c.h.b16 %v4494
    %v4576 = vunpack.c.l.b16 %v4495
    %v4577 = vunpack.c.h.b16 %v4495
    %v4578 = vunpack.c.l.b16 %v4496
    %v4579 = vunpack.c.h.b16 %v4496
    %v4580 = vunpack.c.l.b16 %v4497
    %v4581 = vunpack.c.h.b16 %v4497
    %v4582 = vunpack.c.l.b16 %v4498
    %v4583 = vunpack.c.h.b16 %v4498
    %v4584 = vunpack.c.l.b16 %v4499
    %v4585 = vunpack.c.h.b16 %v4499
    %v4586 = vunpack.c.l.b16 %v4500
    %v4587 = vunpack.c.h.b16 %v4500
    %v4588 = vunpack.c.l.b16 %v4501
    %v4589 = vunpack.c.h.b16 %v4501
    %v4590 = vunpack.c.l.b16 %v4502
    %v4591 = vunpack.c.h.b16 %v4502
    %v4592 = vunpack.c.l.b16 %v4503
    %v4593 = vunpack.c.h.b16 %v4503
    %v4594 = vunpack.c.l.b16 %v4504
    %v4595 = vunpack.c.h.b16 %v4504
    %v4596 = vunpack.c.l.b16 %v4505
    %v4597 = vunpack.c.h.b16 %v4505
    %v4598 = vunpack.c.l.b16 %v4506
    %v4599 = vunpack.c.h.b16 %v4506
    %v4600 = vunpack.c.l.b16 %v4507
    %v4601 = vunpack.c.h.b16 %v4507
    %v4602 = vunpack.c.l.b16 %v4508
    %v4603 = vunpack.c.h.b16 %v4508
    %v4604 = vunpack.c.l.b16 %v4509
    %v4605 = vunpack.c.h.b16 %v4509
    %v4606 = vpack.c.b16 %v4546, %v4542
    %v4607 = vpack.c.b16 %v4547, %v4543
    %v4608 = vpack.c.b16 %v4548, %v4544
    %v4609 = vpack.c.b16 %v4549, %v4545
    %v4610 = vpack.c.b16 %v4554, %v4550
    %v4611 = vpack.c.b16 %v4555, %v4551
    %v4612 = vpack.c.b16 %v4556, %v4552
    %v4613 = vpack.c.b16 %v4557, %v4553
    %v4614 = vpack.c.b16 %v4562, %v4558
    %v4615 = vpack.c.b16 %v4563, %v4559
    %v4616 = vpack.c.b16 %v4564, %v4560
    %v4617 = vpack.c.b16 %v4565, %v4561
    %v4618 = vpack.c.b16 %v4570, %v4566
    %v4619 = vpack.c.b16 %v4571, %v4567
    %v4620 = vpack.c.b16 %v4572, %v4568
    %v4621 = vpack.c.b16 %v4573, %v4569
    %v4622 = vpack.c.b16 %v4578, %v4574
    %v4623 = vpack.c.b16 %v4579, %v4575
    %v4624 = vpack.c.b16 %v4580, %v4576
    %v4625 = vpack.c.b16 %v4581, %v4577
    %v4626 = vpack.c.b16 %v4586, %v4582
    %v4627 = vpack.c.b16 %v4587, %v4583
    %v4628 = vpack.c.b16 %v4588, %v4584
    %v4629 = vpack.c.b16 %v4589, %v4585
    %v4630 = vpack.c.b16 %v4594, %v4590
    %v4631 = vpack.c.b16 %v4595, %v4591
    %v4632 = vpack.c.b16 %v4596, %v4592
    %v4633 = vpack.c.b16 %v4597, %v4593
    %v4634 = vpack.c.b16 %v4602, %v4598
    %v4635 = vpack.c.b16 %v4603, %v4599
    %v4636 = vpack.c.b16 %v4604, %v4600
    %v4637 = vpack.c.b16 %v4605, %v4601
    %4670 = vmatpush.bf16.msra.mxu0 %v4634
    %4671 = vmatpush.bf16.msra.mxu0 %v4630
    %4672 = vmatpush.bf16.msra.mxu0 %v4626
    %4673 = vmatpush.bf16.msra.mxu0 %v4622
    %4674 = vmatpush.bf16.msra.mxu0 %v4618
    %4675 = vmatpush.bf16.msra.mxu0 %v4614
    %4676 = vmatpush.bf16.msra.mxu0 %v4610
    %4677 = vmatpush.bf16.msra.mxu0 %v4606
    %4678 = vmatmul.bf16.gmra.mxu0 %v4477
    %v4679 = vpop.f32.mrf.mxu0
    %v4680 = vadd.f32 0.0, %v4679
    %v4681 = vpop.f32.mrf.mxu0
    %4682 = vdwg.mxu0
    %4683 = vmatpush.bf16.msra.mxu0 %v4635
    %4684 = vmatpush.bf16.msra.mxu0 %v4631
    %4685 = vmatpush.bf16.msra.mxu0 %v4627
    %4686 = vmatpush.bf16.msra.mxu0 %v4623
    %4687 = vmatpush.bf16.msra.mxu0 %v4619
    %4688 = vmatpush.bf16.msra.mxu0 %v4615
    %4689 = vmatpush.bf16.msra.mxu0 %v4611
    %4690 = vmatpush.bf16.msra.mxu0 %v4607
    %4691 = vmatmul.bf16.gmra.mxu0 %v4477
    %v4692 = vpop.f32.mrf.mxu0
    %v4693 = vadd.f32 0.0, %v4692
    %v4694 = vpop.f32.mrf.mxu0
    %4695 = vdwg.mxu0
    %4696 = vmatpush.bf16.msra.mxu0 %v4636
    %4697 = vmatpush.bf16.msra.mxu0 %v4632
    %4698 = vmatpush.bf16.msra.mxu0 %v4628
    %4699 = vmatpush.bf16.msra.mxu0 %v4624
    %4700 = vmatpush.bf16.msra.mxu0 %v4620
    %4701 = vmatpush.bf16.msra.mxu0 %v4616
    %4702 = vmatpush.bf16.msra.mxu0 %v4612
    %4703 = vmatpush.bf16.msra.mxu0 %v4608
    %4704 = vmatmul.bf16.gmra.mxu0 %v4477
    %v4705 = vpop.f32.mrf.mxu0
    %v4706 = vadd.f32 0.0, %v4705
    %v4707 = vpop.f32.mrf.mxu0
    %4708 = vdwg.mxu0
    %4709 = vmatpush.bf16.msra.mxu0 %v4637
    %4710 = vmatpush.bf16.msra.mxu0 %v4633
    %4711 = vmatpush.bf16.msra.mxu0 %v4629
    %4712 = vmatpush.bf16.msra.mxu0 %v4625
    %4713 = vmatpush.bf16.msra.mxu0 %v4621
    %4714 = vmatpush.bf16.msra.mxu0 %v4617
    %4715 = vmatpush.bf16.msra.mxu0 %v4613
    %4716 = vmatpush.bf16.msra.mxu0 %v4609
    %4717 = vmatmul.bf16.gmra.mxu0 %v4477
    %v4718 = vpop.f32.mrf.mxu0
    %v4719 = vadd.f32 0.0, %v4718
    %v4720 = vpop.f32.mrf.mxu0
    %4721 = vdwg.mxu0
    %v4722 = vadd.f32 %v4473, %v4680
    %v4723 = vadd.f32 %v4474, %v4693
    %v4724 = vadd.f32 %v4475, %v4706
    %v4725 = vadd.f32 %v4476, %v4719
    %v4726 = vxor.u32 %v4722, 2147483648
    %v4727 = vmul.f32 %v4726, 1.442695
    %v4728 = vpow.pop %v4727
    %v4729 = vadd.f32 %v4728, 1.0
    %v4730 = vrcp.pop %v4729
    %v4731 = vmul.f32 %v4729, %v4730
    %v4732 = vsub.f32 1.0, %v4731
    %v4733 = vmul.f32 %v4730, %v4732
    %v4734 = vadd.f32 %v4730, %v4733
    %vm4735 = vweird.f32 %v4729
    %vm4736 = vweird.f32 %v4730
    %vm4737 = vmor %vm4735, %vm4736
    %v4738 = vsel %vm4737, %v4730, %v4734
    %v4739 = vand.u32 2147483647, %v4729
    %vm4740 = vcmp.eq.f32.partialorder %v4739, 8.507059e+37
    %v4741 = vand.u32 %v4729, 2147483648
    %v4742 = vor.u32 1.1754944e-38, %v4741
    %v4743 = vsel %vm4740, %v4742, %v4738
    %v4744 = vmul.f32 1.0, %v4743
    %v4745 = vxor.u32 %v4723, 2147483648
    %v4746 = vmul.f32 %v4745, 1.442695
    %v4747 = vpow.pop %v4746
    %v4748 = vadd.f32 %v4747, 1.0
    %v4749 = vrcp.pop %v4748
    %v4750 = vmul.f32 %v4748, %v4749
    %v4751 = vsub.f32 1.0, %v4750
    %v4752 = vmul.f32 %v4749, %v4751
    %v4753 = vadd.f32 %v4749, %v4752
    %vm4754 = vweird.f32 %v4748
    %vm4755 = vweird.f32 %v4749
    %vm4756 = vmor %vm4754, %vm4755
    %v4757 = vsel %vm4756, %v4749, %v4753
    %v4758 = vand.u32 2147483647, %v4748
    %vm4759 = vcmp.eq.f32.partialorder %v4758, 8.507059e+37
    %v4760 = vand.u32 %v4748, 2147483648
    %v4761 = vor.u32 1.1754944e-38, %v4760
    %v4762 = vsel %vm4759, %v4761, %v4757
    %v4763 = vmul.f32 1.0, %v4762
    %v4764 = vtanh.pop %v4724
    %v4765 = vxor.u32 %v4725, 2147483648
    %v4766 = vmul.f32 %v4765, 1.442695
    %v4767 = vpow.pop %v4766
    %v4768 = vadd.f32 %v4767, 1.0
    %v4769 = vrcp.pop %v4768
    %v4770 = vmul.f32 %v4768, %v4769
    %v4771 = vsub.f32 1.0, %v4770
    %v4772 = vmul.f32 %v4769, %v4771
    %v4773 = vadd.f32 %v4769, %v4772
    %vm4774 = vweird.f32 %v4768
    %vm4775 = vweird.f32 %v4769
    %vm4776 = vmor %vm4774, %vm4775
    %v4777 = vsel %vm4776, %v4769, %v4773
    %v4778 = vand.u32 2147483647, %v4768
    %vm4779 = vcmp.eq.f32.partialorder %v4778, 8.507059e+37
    %v4780 = vand.u32 %v4768, 2147483648
    %v4781 = vor.u32 1.1754944e-38, %v4780
    %v4782 = vsel %vm4779, %v4781, %v4777
    %v4783 = vmul.f32 1.0, %v4782
    %v4784 = vmul.f32 %v4763, %v4469
    %v4785 = vmul.f32 %v4744, %v4764
    %v4786 = vadd.f32 %v4784, %v4785
    %v4787 = vtanh.pop %v4786
    %v4788 = vmul.f32 %v4783, %v4787
    %4789 = vst [vmem:[%s1867] sm:$0xff] %v4788
    %v4790 = vld [vmem:[%s1871] sm:$0xff]
    %v4791 = vld [vmem:[%s1871 + $0x8] sm:$0xff]
    %v4792 = vld [vmem:[%s1871 + $0x10] sm:$0xff]
    %v4793 = vld [vmem:[%s1871 + $0x18] sm:$0xff]
    %v4794 = vpack.c.bf16 %v4788, %v4788
    %v4795 = vld [vmem:[%s3526] sm:$0xff]
    %v4796 = vld [vmem:[%s3526 + $0x8] sm:$0xff]
    %v4797 = vld [vmem:[%s3526 + $0x10] sm:$0xff]
    %v4798 = vld [vmem:[%s3526 + $0x18] sm:$0xff]
    %v4799 = vld [vmem:[%s3526 + $0x20] sm:$0xff]
    %v4800 = vld [vmem:[%s3526 + $0x28] sm:$0xff]
    %v4801 = vld [vmem:[%s3526 + $0x30] sm:$0xff]
    %v4802 = vld [vmem:[%s3526 + $0x38] sm:$0xff]
    %v4803 = vld [vmem:[%s3526 + $0x40] sm:$0xff]
    %v4804 = vld [vmem:[%s3526 + $0x48] sm:$0xff]
    %v4805 = vld [vmem:[%s3526 + $0x50] sm:$0xff]
    %v4806 = vld [vmem:[%s3526 + $0x58] sm:$0xff]
    %v4807 = vld [vmem:[%s3526 + $0x60] sm:$0xff]
    %v4808 = vld [vmem:[%s3526 + $0x68] sm:$0xff]
    %v4809 = vld [vmem:[%s3526 + $0x70] sm:$0xff]
    %v4810 = vld [vmem:[%s3526 + $0x78] sm:$0xff]
    %v4811 = vld [vmem:[%s3526 + $0x80] sm:$0xff]
    %v4812 = vld [vmem:[%s3526 + $0x88] sm:$0xff]
    %v4813 = vld [vmem:[%s3526 + $0x90] sm:$0xff]
    %v4814 = vld [vmem:[%s3526 + $0x98] sm:$0xff]
    %v4815 = vld [vmem:[%s3526 + $0xa0] sm:$0xff]
    %v4816 = vld [vmem:[%s3526 + $0xa8] sm:$0xff]
    %v4817 = vld [vmem:[%s3526 + $0xb0] sm:$0xff]
    %v4818 = vld [vmem:[%s3526 + $0xb8] sm:$0xff]
    %v4819 = vld [vmem:[%s3526 + $0xc0] sm:$0xff]
    %v4820 = vld [vmem:[%s3526 + $0xc8] sm:$0xff]
    %v4821 = vld [vmem:[%s3526 + $0xd0] sm:$0xff]
    %v4822 = vld [vmem:[%s3526 + $0xd8] sm:$0xff]
    %v4823 = vld [vmem:[%s3526 + $0xe0] sm:$0xff]
    %v4824 = vld [vmem:[%s3526 + $0xe8] sm:$0xff]
    %v4825 = vld [vmem:[%s3526 + $0xf0] sm:$0xff]
    %v4826 = vld [vmem:[%s3526 + $0xf8] sm:$0xff]
    %v4859 = vunpack.c.l.b16 %v4795
    %v4860 = vunpack.c.h.b16 %v4795
    %v4861 = vunpack.c.l.b16 %v4796
    %v4862 = vunpack.c.h.b16 %v4796
    %v4863 = vunpack.c.l.b16 %v4797
    %v4864 = vunpack.c.h.b16 %v4797
    %v4865 = vunpack.c.l.b16 %v4798
    %v4866 = vunpack.c.h.b16 %v4798
    %v4867 = vunpack.c.l.b16 %v4799
    %v4868 = vunpack.c.h.b16 %v4799
    %v4869 = vunpack.c.l.b16 %v4800
    %v4870 = vunpack.c.h.b16 %v4800
    %v4871 = vunpack.c.l.b16 %v4801
    %v4872 = vunpack.c.h.b16 %v4801
    %v4873 = vunpack.c.l.b16 %v4802
    %v4874 = vunpack.c.h.b16 %v4802
    %v4875 = vunpack.c.l.b16 %v4803
    %v4876 = vunpack.c.h.b16 %v4803
    %v4877 = vunpack.c.l.b16 %v4804
    %v4878 = vunpack.c.h.b16 %v4804
    %v4879 = vunpack.c.l.b16 %v4805
    %v4880 = vunpack.c.h.b16 %v4805
    %v4881 = vunpack.c.l.b16 %v4806
    %v4882 = vunpack.c.h.b16 %v4806
    %v4883 = vunpack.c.l.b16 %v4807
    %v4884 = vunpack.c.h.b16 %v4807
    %v4885 = vunpack.c.l.b16 %v4808
    %v4886 = vunpack.c.h.b16 %v4808
    %v4887 = vunpack.c.l.b16 %v4809
    %v4888 = vunpack.c.h.b16 %v4809
    %v4889 = vunpack.c.l.b16 %v4810
    %v4890 = vunpack.c.h.b16 %v4810
    %v4891 = vunpack.c.l.b16 %v4811
    %v4892 = vunpack.c.h.b16 %v4811
    %v4893 = vunpack.c.l.b16 %v4812
    %v4894 = vunpack.c.h.b16 %v4812
    %v4895 = vunpack.c.l.b16 %v4813
    %v4896 = vunpack.c.h.b16 %v4813
    %v4897 = vunpack.c.l.b16 %v4814
    %v4898 = vunpack.c.h.b16 %v4814
    %v4899 = vunpack.c.l.b16 %v4815
    %v4900 = vunpack.c.h.b16 %v4815
    %v4901 = vunpack.c.l.b16 %v4816
    %v4902 = vunpack.c.h.b16 %v4816
    %v4903 = vunpack.c.l.b16 %v4817
    %v4904 = vunpack.c.h.b16 %v4817
    %v4905 = vunpack.c.l.b16 %v4818
    %v4906 = vunpack.c.h.b16 %v4818
    %v4907 = vunpack.c.l.b16 %v4819
    %v4908 = vunpack.c.h.b16 %v4819
    %v4909 = vunpack.c.l.b16 %v4820
    %v4910 = vunpack.c.h.b16 %v4820
    %v4911 = vunpack.c.l.b16 %v4821
    %v4912 = vunpack.c.h.b16 %v4821
    %v4913 = vunpack.c.l.b16 %v4822
    %v4914 = vunpack.c.h.b16 %v4822
    %v4915 = vunpack.c.l.b16 %v4823
    %v4916 = vunpack.c.h.b16 %v4823
    %v4917 = vunpack.c.l.b16 %v4824
    %v4918 = vunpack.c.h.b16 %v4824
    %v4919 = vunpack.c.l.b16 %v4825
    %v4920 = vunpack.c.h.b16 %v4825
    %v4921 = vunpack.c.l.b16 %v4826
    %v4922 = vunpack.c.h.b16 %v4826
    %v4923 = vpack.c.b16 %v4863, %v4859
    %v4924 = vpack.c.b16 %v4864, %v4860
    %v4925 = vpack.c.b16 %v4865, %v4861
    %v4926 = vpack.c.b16 %v4866, %v4862
    %v4927 = vpack.c.b16 %v4871, %v4867
    %v4928 = vpack.c.b16 %v4872, %v4868
    %v4929 = vpack.c.b16 %v4873, %v4869
    %v4930 = vpack.c.b16 %v4874, %v4870
    %v4931 = vpack.c.b16 %v4879, %v4875
    %v4932 = vpack.c.b16 %v4880, %v4876
    %v4933 = vpack.c.b16 %v4881, %v4877
    %v4934 = vpack.c.b16 %v4882, %v4878
    %v4935 = vpack.c.b16 %v4887, %v4883
    %v4936 = vpack.c.b16 %v4888, %v4884
    %v4937 = vpack.c.b16 %v4889, %v4885
    %v4938 = vpack.c.b16 %v4890, %v4886
    %v4939 = vpack.c.b16 %v4895, %v4891
    %v4940 = vpack.c.b16 %v4896, %v4892
    %v4941 = vpack.c.b16 %v4897, %v4893
    %v4942 = vpack.c.b16 %v4898, %v4894
    %v4943 = vpack.c.b16 %v4903, %v4899
    %v4944 = vpack.c.b16 %v4904, %v4900
    %v4945 = vpack.c.b16 %v4905, %v4901
    %v4946 = vpack.c.b16 %v4906, %v4902
    %v4947 = vpack.c.b16 %v4911, %v4907
    %v4948 = vpack.c.b16 %v4912, %v4908
    %v4949 = vpack.c.b16 %v4913, %v4909
    %v4950 = vpack.c.b16 %v4914, %v4910
    %v4951 = vpack.c.b16 %v4919, %v4915
    %v4952 = vpack.c.b16 %v4920, %v4916
    %v4953 = vpack.c.b16 %v4921, %v4917
    %v4954 = vpack.c.b16 %v4922, %v4918
    %4987 = vmatpush.bf16.msra.mxu0 %v4951
    %4988 = vmatpush.bf16.msra.mxu0 %v4947
    %4989 = vmatpush.bf16.msra.mxu0 %v4943
    %4990 = vmatpush.bf16.msra.mxu0 %v4939
    %4991 = vmatpush.bf16.msra.mxu0 %v4935
    %4992 = vmatpush.bf16.msra.mxu0 %v4931
    %4993 = vmatpush.bf16.msra.mxu0 %v4927
    %4994 = vmatpush.bf16.msra.mxu0 %v4923
    %4995 = vmatmul.bf16.gmra.mxu0 %v4794
    %v4996 = vpop.f32.mrf.mxu0
    %v4997 = vadd.f32 0.0, %v4996
    %v4998 = vpop.f32.mrf.mxu0
    %4999 = vdwg.mxu0
    %5000 = vmatpush.bf16.msra.mxu0 %v4952
    %5001 = vmatpush.bf16.msra.mxu0 %v4948
    %5002 = vmatpush.bf16.msra.mxu0 %v4944
    %5003 = vmatpush.bf16.msra.mxu0 %v4940
    %5004 = vmatpush.bf16.msra.mxu0 %v4936
    %5005 = vmatpush.bf16.msra.mxu0 %v4932
    %5006 = vmatpush.bf16.msra.mxu0 %v4928
    %5007 = vmatpush.bf16.msra.mxu0 %v4924
    %5008 = vmatmul.bf16.gmra.mxu0 %v4794
    %v5009 = vpop.f32.mrf.mxu0
    %v5010 = vadd.f32 0.0, %v5009
    %v5011 = vpop.f32.mrf.mxu0
    %5012 = vdwg.mxu0
    %5013 = vmatpush.bf16.msra.mxu0 %v4953
    %5014 = vmatpush.bf16.msra.mxu0 %v4949
    %5015 = vmatpush.bf16.msra.mxu0 %v4945
    %5016 = vmatpush.bf16.msra.mxu0 %v4941
    %5017 = vmatpush.bf16.msra.mxu0 %v4937
    %5018 = vmatpush.bf16.msra.mxu0 %v4933
    %5019 = vmatpush.bf16.msra.mxu0 %v4929
    %5020 = vmatpush.bf16.msra.mxu0 %v4925
    %5021 = vmatmul.bf16.gmra.mxu0 %v4794
    %v5022 = vpop.f32.mrf.mxu0
    %v5023 = vadd.f32 0.0, %v5022
    %v5024 = vpop.f32.mrf.mxu0
    %5025 = vdwg.mxu0
    %5026 = vmatpush.bf16.msra.mxu0 %v4954
    %5027 = vmatpush.bf16.msra.mxu0 %v4950
    %5028 = vmatpush.bf16.msra.mxu0 %v4946
    %5029 = vmatpush.bf16.msra.mxu0 %v4942
    %5030 = vmatpush.bf16.msra.mxu0 %v4938
    %5031 = vmatpush.bf16.msra.mxu0 %v4934
    %5032 = vmatpush.bf16.msra.mxu0 %v4930
    %5033 = vmatpush.bf16.msra.mxu0 %v4926
    %5034 = vmatmul.bf16.gmra.mxu0 %v4794
    %v5035 = vpop.f32.mrf.mxu0
    %v5036 = vadd.f32 0.0, %v5035
    %v5037 = vpop.f32.mrf.mxu0
    %5038 = vdwg.mxu0
    %v5039 = vadd.f32 %v4790, %v4997
    %v5040 = vadd.f32 %v4791, %v5010
    %v5041 = vadd.f32 %v4792, %v5023
    %v5042 = vadd.f32 %v4793, %v5036
    %v5043 = vxor.u32 %v5039, 2147483648
    %v5044 = vmul.f32 %v5043, 1.442695
    %v5045 = vpow.pop %v5044
    %v5046 = vadd.f32 %v5045, 1.0
    %v5047 = vrcp.pop %v5046
    %v5048 = vmul.f32 %v5046, %v5047
    %v5049 = vsub.f32 1.0, %v5048
    %v5050 = vmul.f32 %v5047, %v5049
    %v5051 = vadd.f32 %v5047, %v5050
    %vm5052 = vweird.f32 %v5046
    %vm5053 = vweird.f32 %v5047
    %vm5054 = vmor %vm5052, %vm5053
    %v5055 = vsel %vm5054, %v5047, %v5051
    %v5056 = vand.u32 2147483647, %v5046
    %vm5057 = vcmp.eq.f32.partialorder %v5056, 8.507059e+37
    %v5058 = vand.u32 %v5046, 2147483648
    %v5059 = vor.u32 1.1754944e-38, %v5058
    %v5060 = vsel %vm5057, %v5059, %v5055
    %v5061 = vmul.f32 1.0, %v5060
    %v5062 = vxor.u32 %v5040, 2147483648
    %v5063 = vmul.f32 %v5062, 1.442695
    %v5064 = vpow.pop %v5063
    %v5065 = vadd.f32 %v5064, 1.0
    %v5066 = vrcp.pop %v5065
    %v5067 = vmul.f32 %v5065, %v5066
    %v5068 = vsub.f32 1.0, %v5067
    %v5069 = vmul.f32 %v5066, %v5068
    %v5070 = vadd.f32 %v5066, %v5069
    %vm5071 = vweird.f32 %v5065
    %vm5072 = vweird.f32 %v5066
    %vm5073 = vmor %vm5071, %vm5072
    %v5074 = vsel %vm5073, %v5066, %v5070
    %v5075 = vand.u32 2147483647, %v5065
    %vm5076 = vcmp.eq.f32.partialorder %v5075, 8.507059e+37
    %v5077 = vand.u32 %v5065, 2147483648
    %v5078 = vor.u32 1.1754944e-38, %v5077
    %v5079 = vsel %vm5076, %v5078, %v5074
    %v5080 = vmul.f32 1.0, %v5079
    %v5081 = vtanh.pop %v5041
    %v5082 = vxor.u32 %v5042, 2147483648
    %v5083 = vmul.f32 %v5082, 1.442695
    %v5084 = vpow.pop %v5083
    %v5085 = vadd.f32 %v5084, 1.0
    %v5086 = vrcp.pop %v5085
    %v5087 = vmul.f32 %v5085, %v5086
    %v5088 = vsub.f32 1.0, %v5087
    %v5089 = vmul.f32 %v5086, %v5088
    %v5090 = vadd.f32 %v5086, %v5089
    %vm5091 = vweird.f32 %v5085
    %vm5092 = vweird.f32 %v5086
    %vm5093 = vmor %vm5091, %vm5092
    %v5094 = vsel %vm5093, %v5086, %v5090
    %v5095 = vand.u32 2147483647, %v5085
    %vm5096 = vcmp.eq.f32.partialorder %v5095, 8.507059e+37
    %v5097 = vand.u32 %v5085, 2147483648
    %v5098 = vor.u32 1.1754944e-38, %v5097
    %v5099 = vsel %vm5096, %v5098, %v5094
    %v5100 = vmul.f32 1.0, %v5099
    %v5101 = vmul.f32 %v5080, %v4786
    %v5102 = vmul.f32 %v5061, %v5081
    %v5103 = vadd.f32 %v5101, %v5102
    %v5104 = vtanh.pop %v5103
    %v5105 = vmul.f32 %v5100, %v5104
    %5106 = vst [vmem:[%s2188] sm:$0xff] %v5105
    %v5107 = vld [vmem:[%s2192] sm:$0xff]
    %v5108 = vld [vmem:[%s2192 + $0x8] sm:$0xff]
    %v5109 = vld [vmem:[%s2192 + $0x10] sm:$0xff]
    %v5110 = vld [vmem:[%s2192 + $0x18] sm:$0xff]
    %v5111 = vpack.c.bf16 %v5105, %v5105
    %v5112 = vld [vmem:[%s3526] sm:$0xff]
    %v5113 = vld [vmem:[%s3526 + $0x8] sm:$0xff]
    %v5114 = vld [vmem:[%s3526 + $0x10] sm:$0xff]
    %v5115 = vld [vmem:[%s3526 + $0x18] sm:$0xff]
    %v5116 = vld [vmem:[%s3526 + $0x20] sm:$0xff]
    %v5117 = vld [vmem:[%s3526 + $0x28] sm:$0xff]
    %v5118 = vld [vmem:[%s3526 + $0x30] sm:$0xff]
    %v5119 = vld [vmem:[%s3526 + $0x38] sm:$0xff]
    %v5120 = vld [vmem:[%s3526 + $0x40] sm:$0xff]
    %v5121 = vld [vmem:[%s3526 + $0x48] sm:$0xff]
    %v5122 = vld [vmem:[%s3526 + $0x50] sm:$0xff]
    %v5123 = vld [vmem:[%s3526 + $0x58] sm:$0xff]
    %v5124 = vld [vmem:[%s3526 + $0x60] sm:$0xff]
    %v5125 = vld [vmem:[%s3526 + $0x68] sm:$0xff]
    %v5126 = vld [vmem:[%s3526 + $0x70] sm:$0xff]
    %v5127 = vld [vmem:[%s3526 + $0x78] sm:$0xff]
    %v5128 = vld [vmem:[%s3526 + $0x80] sm:$0xff]
    %v5129 = vld [vmem:[%s3526 + $0x88] sm:$0xff]
    %v5130 = vld [vmem:[%s3526 + $0x90] sm:$0xff]
    %v5131 = vld [vmem:[%s3526 + $0x98] sm:$0xff]
    %v5132 = vld [vmem:[%s3526 + $0xa0] sm:$0xff]
    %v5133 = vld [vmem:[%s3526 + $0xa8] sm:$0xff]
    %v5134 = vld [vmem:[%s3526 + $0xb0] sm:$0xff]
    %v5135 = vld [vmem:[%s3526 + $0xb8] sm:$0xff]
    %v5136 = vld [vmem:[%s3526 + $0xc0] sm:$0xff]
    %v5137 = vld [vmem:[%s3526 + $0xc8] sm:$0xff]
    %v5138 = vld [vmem:[%s3526 + $0xd0] sm:$0xff]
    %v5139 = vld [vmem:[%s3526 + $0xd8] sm:$0xff]
    %v5140 = vld [vmem:[%s3526 + $0xe0] sm:$0xff]
    %v5141 = vld [vmem:[%s3526 + $0xe8] sm:$0xff]
    %v5142 = vld [vmem:[%s3526 + $0xf0] sm:$0xff]
    %v5143 = vld [vmem:[%s3526 + $0xf8] sm:$0xff]
    %v5176 = vunpack.c.l.b16 %v5112
    %v5177 = vunpack.c.h.b16 %v5112
    %v5178 = vunpack.c.l.b16 %v5113
    %v5179 = vunpack.c.h.b16 %v5113
    %v5180 = vunpack.c.l.b16 %v5114
    %v5181 = vunpack.c.h.b16 %v5114
    %v5182 = vunpack.c.l.b16 %v5115
    %v5183 = vunpack.c.h.b16 %v5115
    %v5184 = vunpack.c.l.b16 %v5116
    %v5185 = vunpack.c.h.b16 %v5116
    %v5186 = vunpack.c.l.b16 %v5117
    %v5187 = vunpack.c.h.b16 %v5117
    %v5188 = vunpack.c.l.b16 %v5118
    %v5189 = vunpack.c.h.b16 %v5118
    %v5190 = vunpack.c.l.b16 %v5119
    %v5191 = vunpack.c.h.b16 %v5119
    %v5192 = vunpack.c.l.b16 %v5120
    %v5193 = vunpack.c.h.b16 %v5120
    %v5194 = vunpack.c.l.b16 %v5121
    %v5195 = vunpack.c.h.b16 %v5121
    %v5196 = vunpack.c.l.b16 %v5122
    %v5197 = vunpack.c.h.b16 %v5122
    %v5198 = vunpack.c.l.b16 %v5123
    %v5199 = vunpack.c.h.b16 %v5123
    %v5200 = vunpack.c.l.b16 %v5124
    %v5201 = vunpack.c.h.b16 %v5124
    %v5202 = vunpack.c.l.b16 %v5125
    %v5203 = vunpack.c.h.b16 %v5125
    %v5204 = vunpack.c.l.b16 %v5126
    %v5205 = vunpack.c.h.b16 %v5126
    %v5206 = vunpack.c.l.b16 %v5127
    %v5207 = vunpack.c.h.b16 %v5127
    %v5208 = vunpack.c.l.b16 %v5128
    %v5209 = vunpack.c.h.b16 %v5128
    %v5210 = vunpack.c.l.b16 %v5129
    %v5211 = vunpack.c.h.b16 %v5129
    %v5212 = vunpack.c.l.b16 %v5130
    %v5213 = vunpack.c.h.b16 %v5130
    %v5214 = vunpack.c.l.b16 %v5131
    %v5215 = vunpack.c.h.b16 %v5131
    %v5216 = vunpack.c.l.b16 %v5132
    %v5217 = vunpack.c.h.b16 %v5132
    %v5218 = vunpack.c.l.b16 %v5133
    %v5219 = vunpack.c.h.b16 %v5133
    %v5220 = vunpack.c.l.b16 %v5134
    %v5221 = vunpack.c.h.b16 %v5134
    %v5222 = vunpack.c.l.b16 %v5135
    %v5223 = vunpack.c.h.b16 %v5135
    %v5224 = vunpack.c.l.b16 %v5136
    %v5225 = vunpack.c.h.b16 %v5136
    %v5226 = vunpack.c.l.b16 %v5137
    %v5227 = vunpack.c.h.b16 %v5137
    %v5228 = vunpack.c.l.b16 %v5138
    %v5229 = vunpack.c.h.b16 %v5138
    %v5230 = vunpack.c.l.b16 %v5139
    %v5231 = vunpack.c.h.b16 %v5139
    %v5232 = vunpack.c.l.b16 %v5140
    %v5233 = vunpack.c.h.b16 %v5140
    %v5234 = vunpack.c.l.b16 %v5141
    %v5235 = vunpack.c.h.b16 %v5141
    %v5236 = vunpack.c.l.b16 %v5142
    %v5237 = vunpack.c.h.b16 %v5142
    %v5238 = vunpack.c.l.b16 %v5143
    %v5239 = vunpack.c.h.b16 %v5143
    %v5240 = vpack.c.b16 %v5180, %v5176
    %v5241 = vpack.c.b16 %v5181, %v5177
    %v5242 = vpack.c.b16 %v5182, %v5178
    %v5243 = vpack.c.b16 %v5183, %v5179
    %v5244 = vpack.c.b16 %v5188, %v5184
    %v5245 = vpack.c.b16 %v5189, %v5185
    %v5246 = vpack.c.b16 %v5190, %v5186
    %v5247 = vpack.c.b16 %v5191, %v5187
    %v5248 = vpack.c.b16 %v5196, %v5192
    %v5249 = vpack.c.b16 %v5197, %v5193
    %v5250 = vpack.c.b16 %v5198, %v5194
    %v5251 = vpack.c.b16 %v5199, %v5195
    %v5252 = vpack.c.b16 %v5204, %v5200
    %v5253 = vpack.c.b16 %v5205, %v5201
    %v5254 = vpack.c.b16 %v5206, %v5202
    %v5255 = vpack.c.b16 %v5207, %v5203
    %v5256 = vpack.c.b16 %v5212, %v5208
    %v5257 = vpack.c.b16 %v5213, %v5209
    %v5258 = vpack.c.b16 %v5214, %v5210
    %v5259 = vpack.c.b16 %v5215, %v5211
    %v5260 = vpack.c.b16 %v5220, %v5216
    %v5261 = vpack.c.b16 %v5221, %v5217
    %v5262 = vpack.c.b16 %v5222, %v5218
    %v5263 = vpack.c.b16 %v5223, %v5219
    %v5264 = vpack.c.b16 %v5228, %v5224
    %v5265 = vpack.c.b16 %v5229, %v5225
    %v5266 = vpack.c.b16 %v5230, %v5226
    %v5267 = vpack.c.b16 %v5231, %v5227
    %v5268 = vpack.c.b16 %v5236, %v5232
    %v5269 = vpack.c.b16 %v5237, %v5233
    %v5270 = vpack.c.b16 %v5238, %v5234
    %v5271 = vpack.c.b16 %v5239, %v5235
    %5304 = vmatpush.bf16.msra.mxu0 %v5268
    %5305 = vmatpush.bf16.msra.mxu0 %v5264
    %5306 = vmatpush.bf16.msra.mxu0 %v5260
    %5307 = vmatpush.bf16.msra.mxu0 %v5256
    %5308 = vmatpush.bf16.msra.mxu0 %v5252
    %5309 = vmatpush.bf16.msra.mxu0 %v5248
    %5310 = vmatpush.bf16.msra.mxu0 %v5244
    %5311 = vmatpush.bf16.msra.mxu0 %v5240
    %5312 = vmatmul.bf16.gmra.mxu0 %v5111
    %v5313 = vpop.f32.mrf.mxu0
    %v5314 = vadd.f32 0.0, %v5313
    %v5315 = vpop.f32.mrf.mxu0
    %5316 = vdwg.mxu0
    %5317 = vmatpush.bf16.msra.mxu0 %v5269
    %5318 = vmatpush.bf16.msra.mxu0 %v5265
    %5319 = vmatpush.bf16.msra.mxu0 %v5261
    %5320 = vmatpush.bf16.msra.mxu0 %v5257
    %5321 = vmatpush.bf16.msra.mxu0 %v5253
    %5322 = vmatpush.bf16.msra.mxu0 %v5249
    %5323 = vmatpush.bf16.msra.mxu0 %v5245
    %5324 = vmatpush.bf16.msra.mxu0 %v5241
    %5325 = vmatmul.bf16.gmra.mxu0 %v5111
    %v5326 = vpop.f32.mrf.mxu0
    %v5327 = vadd.f32 0.0, %v5326
    %v5328 = vpop.f32.mrf.mxu0
    %5329 = vdwg.mxu0
    %5330 = vmatpush.bf16.msra.mxu0 %v5270
    %5331 = vmatpush.bf16.msra.mxu0 %v5266
    %5332 = vmatpush.bf16.msra.mxu0 %v5262
    %5333 = vmatpush.bf16.msra.mxu0 %v5258
    %5334 = vmatpush.bf16.msra.mxu0 %v5254
    %5335 = vmatpush.bf16.msra.mxu0 %v5250
    %5336 = vmatpush.bf16.msra.mxu0 %v5246
    %5337 = vmatpush.bf16.msra.mxu0 %v5242
    %5338 = vmatmul.bf16.gmra.mxu0 %v5111
    %v5339 = vpop.f32.mrf.mxu0
    %v5340 = vadd.f32 0.0, %v5339
    %v5341 = vpop.f32.mrf.mxu0
    %5342 = vdwg.mxu0
    %5343 = vmatpush.bf16.msra.mxu0 %v5271
    %5344 = vmatpush.bf16.msra.mxu0 %v5267
    %5345 = vmatpush.bf16.msra.mxu0 %v5263
    %5346 = vmatpush.bf16.msra.mxu0 %v5259
    %5347 = vmatpush.bf16.msra.mxu0 %v5255
    %5348 = vmatpush.bf16.msra.mxu0 %v5251
    %5349 = vmatpush.bf16.msra.mxu0 %v5247
    %5350 = vmatpush.bf16.msra.mxu0 %v5243
    %5351 = vmatmul.bf16.gmra.mxu0 %v5111
    %v5352 = vpop.f32.mrf.mxu0
    %v5353 = vadd.f32 0.0, %v5352
    %v5354 = vpop.f32.mrf.mxu0
    %5355 = vdwg.mxu0
    %v5356 = vadd.f32 %v5107, %v5314
    %v5357 = vadd.f32 %v5108, %v5327
    %v5358 = vadd.f32 %v5109, %v5340
    %v5359 = vadd.f32 %v5110, %v5353
    %v5360 = vxor.u32 %v5356, 2147483648
    %v5361 = vmul.f32 %v5360, 1.442695
    %v5362 = vpow.pop %v5361
    %v5363 = vadd.f32 %v5362, 1.0
    %v5364 = vrcp.pop %v5363
    %v5365 = vmul.f32 %v5363, %v5364
    %v5366 = vsub.f32 1.0, %v5365
    %v5367 = vmul.f32 %v5364, %v5366
    %v5368 = vadd.f32 %v5364, %v5367
    %vm5369 = vweird.f32 %v5363
    %vm5370 = vweird.f32 %v5364
    %vm5371 = vmor %vm5369, %vm5370
    %v5372 = vsel %vm5371, %v5364, %v5368
    %v5373 = vand.u32 2147483647, %v5363
    %vm5374 = vcmp.eq.f32.partialorder %v5373, 8.507059e+37
    %v5375 = vand.u32 %v5363, 2147483648
    %v5376 = vor.u32 1.1754944e-38, %v5375
    %v5377 = vsel %vm5374, %v5376, %v5372
    %v5378 = vmul.f32 1.0, %v5377
    %v5379 = vxor.u32 %v5357, 2147483648
    %v5380 = vmul.f32 %v5379, 1.442695
    %v5381 = vpow.pop %v5380
    %v5382 = vadd.f32 %v5381, 1.0
    %v5383 = vrcp.pop %v5382
    %v5384 = vmul.f32 %v5382, %v5383
    %v5385 = vsub.f32 1.0, %v5384
    %v5386 = vmul.f32 %v5383, %v5385
    %v5387 = vadd.f32 %v5383, %v5386
    %vm5388 = vweird.f32 %v5382
    %vm5389 = vweird.f32 %v5383
    %vm5390 = vmor %vm5388, %vm5389
    %v5391 = vsel %vm5390, %v5383, %v5387
    %v5392 = vand.u32 2147483647, %v5382
    %vm5393 = vcmp.eq.f32.partialorder %v5392, 8.507059e+37
    %v5394 = vand.u32 %v5382, 2147483648
    %v5395 = vor.u32 1.1754944e-38, %v5394
    %v5396 = vsel %vm5393, %v5395, %v5391
    %v5397 = vmul.f32 1.0, %v5396
    %v5398 = vtanh.pop %v5358
    %v5399 = vxor.u32 %v5359, 2147483648
    %v5400 = vmul.f32 %v5399, 1.442695
    %v5401 = vpow.pop %v5400
    %v5402 = vadd.f32 %v5401, 1.0
    %v5403 = vrcp.pop %v5402
    %v5404 = vmul.f32 %v5402, %v5403
    %v5405 = vsub.f32 1.0, %v5404
    %v5406 = vmul.f32 %v5403, %v5405
    %v5407 = vadd.f32 %v5403, %v5406
    %vm5408 = vweird.f32 %v5402
    %vm5409 = vweird.f32 %v5403
    %vm5410 = vmor %vm5408, %vm5409
    %v5411 = vsel %vm5410, %v5403, %v5407
    %v5412 = vand.u32 2147483647, %v5402
    %vm5413 = vcmp.eq.f32.partialorder %v5412, 8.507059e+37
    %v5414 = vand.u32 %v5402, 2147483648
    %v5415 = vor.u32 1.1754944e-38, %v5414
    %v5416 = vsel %vm5413, %v5415, %v5411
    %v5417 = vmul.f32 1.0, %v5416
    %v5418 = vmul.f32 %v5397, %v5103
    %v5419 = vmul.f32 %v5378, %v5398
    %v5420 = vadd.f32 %v5418, %v5419
    %v5421 = vtanh.pop %v5420
    %v5422 = vmul.f32 %v5417, %v5421
    %5423 = vst [vmem:[%s2509] sm:$0xff] %v5422
    %v5424 = vld [vmem:[%s2513] sm:$0xff]
    %v5425 = vld [vmem:[%s2513 + $0x8] sm:$0xff]
    %v5426 = vld [vmem:[%s2513 + $0x10] sm:$0xff]
    %v5427 = vld [vmem:[%s2513 + $0x18] sm:$0xff]
    %v5428 = vpack.c.bf16 %v5422, %v5422
    %v5429 = vld [vmem:[%s3526] sm:$0xff]
    %v5430 = vld [vmem:[%s3526 + $0x8] sm:$0xff]
    %v5431 = vld [vmem:[%s3526 + $0x10] sm:$0xff]
    %v5432 = vld [vmem:[%s3526 + $0x18] sm:$0xff]
    %v5433 = vld [vmem:[%s3526 + $0x20] sm:$0xff]
    %v5434 = vld [vmem:[%s3526 + $0x28] sm:$0xff]
    %v5435 = vld [vmem:[%s3526 + $0x30] sm:$0xff]
    %v5436 = vld [vmem:[%s3526 + $0x38] sm:$0xff]
    %v5437 = vld [vmem:[%s3526 + $0x40] sm:$0xff]
    %v5438 = vld [vmem:[%s3526 + $0x48] sm:$0xff]
    %v5439 = vld [vmem:[%s3526 + $0x50] sm:$0xff]
    %v5440 = vld [vmem:[%s3526 + $0x58] sm:$0xff]
    %v5441 = vld [vmem:[%s3526 + $0x60] sm:$0xff]
    %v5442 = vld [vmem:[%s3526 + $0x68] sm:$0xff]
    %v5443 = vld [vmem:[%s3526 + $0x70] sm:$0xff]
    %v5444 = vld [vmem:[%s3526 + $0x78] sm:$0xff]
    %v5445 = vld [vmem:[%s3526 + $0x80] sm:$0xff]
    %v5446 = vld [vmem:[%s3526 + $0x88] sm:$0xff]
    %v5447 = vld [vmem:[%s3526 + $0x90] sm:$0xff]
    %v5448 = vld [vmem:[%s3526 + $0x98] sm:$0xff]
    %v5449 = vld [vmem:[%s3526 + $0xa0] sm:$0xff]
    %v5450 = vld [vmem:[%s3526 + $0xa8] sm:$0xff]
    %v5451 = vld [vmem:[%s3526 + $0xb0] sm:$0xff]
    %v5452 = vld [vmem:[%s3526 + $0xb8] sm:$0xff]
    %v5453 = vld [vmem:[%s3526 + $0xc0] sm:$0xff]
    %v5454 = vld [vmem:[%s3526 + $0xc8] sm:$0xff]
    %v5455 = vld [vmem:[%s3526 + $0xd0] sm:$0xff]
    %v5456 = vld [vmem:[%s3526 + $0xd8] sm:$0xff]
    %v5457 = vld [vmem:[%s3526 + $0xe0] sm:$0xff]
    %v5458 = vld [vmem:[%s3526 + $0xe8] sm:$0xff]
    %v5459 = vld [vmem:[%s3526 + $0xf0] sm:$0xff]
    %v5460 = vld [vmem:[%s3526 + $0xf8] sm:$0xff]
    %v5493 = vunpack.c.l.b16 %v5429
    %v5494 = vunpack.c.h.b16 %v5429
    %v5495 = vunpack.c.l.b16 %v5430
    %v5496 = vunpack.c.h.b16 %v5430
    %v5497 = vunpack.c.l.b16 %v5431
    %v5498 = vunpack.c.h.b16 %v5431
    %v5499 = vunpack.c.l.b16 %v5432
    %v5500 = vunpack.c.h.b16 %v5432
    %v5501 = vunpack.c.l.b16 %v5433
    %v5502 = vunpack.c.h.b16 %v5433
    %v5503 = vunpack.c.l.b16 %v5434
    %v5504 = vunpack.c.h.b16 %v5434
    %v5505 = vunpack.c.l.b16 %v5435
    %v5506 = vunpack.c.h.b16 %v5435
    %v5507 = vunpack.c.l.b16 %v5436
    %v5508 = vunpack.c.h.b16 %v5436
    %v5509 = vunpack.c.l.b16 %v5437
    %v5510 = vunpack.c.h.b16 %v5437
    %v5511 = vunpack.c.l.b16 %v5438
    %v5512 = vunpack.c.h.b16 %v5438
    %v5513 = vunpack.c.l.b16 %v5439
    %v5514 = vunpack.c.h.b16 %v5439
    %v5515 = vunpack.c.l.b16 %v5440
    %v5516 = vunpack.c.h.b16 %v5440
    %v5517 = vunpack.c.l.b16 %v5441
    %v5518 = vunpack.c.h.b16 %v5441
    %v5519 = vunpack.c.l.b16 %v5442
    %v5520 = vunpack.c.h.b16 %v5442
    %v5521 = vunpack.c.l.b16 %v5443
    %v5522 = vunpack.c.h.b16 %v5443
    %v5523 = vunpack.c.l.b16 %v5444
    %v5524 = vunpack.c.h.b16 %v5444
    %v5525 = vunpack.c.l.b16 %v5445
    %v5526 = vunpack.c.h.b16 %v5445
    %v5527 = vunpack.c.l.b16 %v5446
    %v5528 = vunpack.c.h.b16 %v5446
    %v5529 = vunpack.c.l.b16 %v5447
    %v5530 = vunpack.c.h.b16 %v5447
    %v5531 = vunpack.c.l.b16 %v5448
    %v5532 = vunpack.c.h.b16 %v5448
    %v5533 = vunpack.c.l.b16 %v5449
    %v5534 = vunpack.c.h.b16 %v5449
    %v5535 = vunpack.c.l.b16 %v5450
    %v5536 = vunpack.c.h.b16 %v5450
    %v5537 = vunpack.c.l.b16 %v5451
    %v5538 = vunpack.c.h.b16 %v5451
    %v5539 = vunpack.c.l.b16 %v5452
    %v5540 = vunpack.c.h.b16 %v5452
    %v5541 = vunpack.c.l.b16 %v5453
    %v5542 = vunpack.c.h.b16 %v5453
    %v5543 = vunpack.c.l.b16 %v5454
    %v5544 = vunpack.c.h.b16 %v5454
    %v5545 = vunpack.c.l.b16 %v5455
    %v5546 = vunpack.c.h.b16 %v5455
    %v5547 = vunpack.c.l.b16 %v5456
    %v5548 = vunpack.c.h.b16 %v5456
    %v5549 = vunpack.c.l.b16 %v5457
    %v5550 = vunpack.c.h.b16 %v5457
    %v5551 = vunpack.c.l.b16 %v5458
    %v5552 = vunpack.c.h.b16 %v5458
    %v5553 = vunpack.c.l.b16 %v5459
    %v5554 = vunpack.c.h.b16 %v5459
    %v5555 = vunpack.c.l.b16 %v5460
    %v5556 = vunpack.c.h.b16 %v5460
    %v5557 = vpack.c.b16 %v5497, %v5493
    %v5558 = vpack.c.b16 %v5498, %v5494
    %v5559 = vpack.c.b16 %v5499, %v5495
    %v5560 = vpack.c.b16 %v5500, %v5496
    %v5561 = vpack.c.b16 %v5505, %v5501
    %v5562 = vpack.c.b16 %v5506, %v5502
    %v5563 = vpack.c.b16 %v5507, %v5503
    %v5564 = vpack.c.b16 %v5508, %v5504
    %v5565 = vpack.c.b16 %v5513, %v5509
    %v5566 = vpack.c.b16 %v5514, %v5510
    %v5567 = vpack.c.b16 %v5515, %v5511
    %v5568 = vpack.c.b16 %v5516, %v5512
    %v5569 = vpack.c.b16 %v5521, %v5517
    %v5570 = vpack.c.b16 %v5522, %v5518
    %v5571 = vpack.c.b16 %v5523, %v5519
    %v5572 = vpack.c.b16 %v5524, %v5520
    %v5573 = vpack.c.b16 %v5529, %v5525
    %v5574 = vpack.c.b16 %v5530, %v5526
    %v5575 = vpack.c.b16 %v5531, %v5527
    %v5576 = vpack.c.b16 %v5532, %v5528
    %v5577 = vpack.c.b16 %v5537, %v5533
    %v5578 = vpack.c.b16 %v5538, %v5534
    %v5579 = vpack.c.b16 %v5539, %v5535
    %v5580 = vpack.c.b16 %v5540, %v5536
    %v5581 = vpack.c.b16 %v5545, %v5541
    %v5582 = vpack.c.b16 %v5546, %v5542
    %v5583 = vpack.c.b16 %v5547, %v5543
    %v5584 = vpack.c.b16 %v5548, %v5544
    %v5585 = vpack.c.b16 %v5553, %v5549
    %v5586 = vpack.c.b16 %v5554, %v5550
    %v5587 = vpack.c.b16 %v5555, %v5551
    %v5588 = vpack.c.b16 %v5556, %v5552
    %5621 = vmatpush.bf16.msra.mxu0 %v5585
    %5622 = vmatpush.bf16.msra.mxu0 %v5581
    %5623 = vmatpush.bf16.msra.mxu0 %v5577
    %5624 = vmatpush.bf16.msra.mxu0 %v5573
    %5625 = vmatpush.bf16.msra.mxu0 %v5569
    %5626 = vmatpush.bf16.msra.mxu0 %v5565
    %5627 = vmatpush.bf16.msra.mxu0 %v5561
    %5628 = vmatpush.bf16.msra.mxu0 %v5557
    %5629 = vmatmul.bf16.gmra.mxu0 %v5428
    %v5630 = vpop.f32.mrf.mxu0
    %v5631 = vadd.f32 0.0, %v5630
    %v5632 = vpop.f32.mrf.mxu0
    %5633 = vdwg.mxu0
    %5634 = vmatpush.bf16.msra.mxu0 %v5586
    %5635 = vmatpush.bf16.msra.mxu0 %v5582
    %5636 = vmatpush.bf16.msra.mxu0 %v5578
    %5637 = vmatpush.bf16.msra.mxu0 %v5574
    %5638 = vmatpush.bf16.msra.mxu0 %v5570
    %5639 = vmatpush.bf16.msra.mxu0 %v5566
    %5640 = vmatpush.bf16.msra.mxu0 %v5562
    %5641 = vmatpush.bf16.msra.mxu0 %v5558
    %5642 = vmatmul.bf16.gmra.mxu0 %v5428
    %v5643 = vpop.f32.mrf.mxu0
    %v5644 = vadd.f32 0.0, %v5643
    %v5645 = vpop.f32.mrf.mxu0
    %5646 = vdwg.mxu0
    %5647 = vmatpush.bf16.msra.mxu0 %v5587
    %5648 = vmatpush.bf16.msra.mxu0 %v5583
    %5649 = vmatpush.bf16.msra.mxu0 %v5579
    %5650 = vmatpush.bf16.msra.mxu0 %v5575
    %5651 = vmatpush.bf16.msra.mxu0 %v5571
    %5652 = vmatpush.bf16.msra.mxu0 %v5567
    %5653 = vmatpush.bf16.msra.mxu0 %v5563
    %5654 = vmatpush.bf16.msra.mxu0 %v5559
    %5655 = vmatmul.bf16.gmra.mxu0 %v5428
    %v5656 = vpop.f32.mrf.mxu0
    %v5657 = vadd.f32 0.0, %v5656
    %v5658 = vpop.f32.mrf.mxu0
    %5659 = vdwg.mxu0
    %5660 = vmatpush.bf16.msra.mxu0 %v5588
    %5661 = vmatpush.bf16.msra.mxu0 %v5584
    %5662 = vmatpush.bf16.msra.mxu0 %v5580
    %5663 = vmatpush.bf16.msra.mxu0 %v5576
    %5664 = vmatpush.bf16.msra.mxu0 %v5572
    %5665 = vmatpush.bf16.msra.mxu0 %v5568
    %5666 = vmatpush.bf16.msra.mxu0 %v5564
    %5667 = vmatpush.bf16.msra.mxu0 %v5560
    %5668 = vmatmul.bf16.gmra.mxu0 %v5428
    %v5669 = vpop.f32.mrf.mxu0
    %v5670 = vadd.f32 0.0, %v5669
    %v5671 = vpop.f32.mrf.mxu0
    %5672 = vdwg.mxu0
    %v5673 = vadd.f32 %v5424, %v5631
    %v5674 = vadd.f32 %v5425, %v5644
    %v5675 = vadd.f32 %v5426, %v5657
    %v5676 = vadd.f32 %v5427, %v5670
    %v5677 = vxor.u32 %v5673, 2147483648
    %v5678 = vmul.f32 %v5677, 1.442695
    %v5679 = vpow.pop %v5678
    %v5680 = vadd.f32 %v5679, 1.0
    %v5681 = vrcp.pop %v5680
    %v5682 = vmul.f32 %v5680, %v5681
    %v5683 = vsub.f32 1.0, %v5682
    %v5684 = vmul.f32 %v5681, %v5683
    %v5685 = vadd.f32 %v5681, %v5684
    %vm5686 = vweird.f32 %v5680
    %vm5687 = vweird.f32 %v5681
    %vm5688 = vmor %vm5686, %vm5687
    %v5689 = vsel %vm5688, %v5681, %v5685
    %v5690 = vand.u32 2147483647, %v5680
    %vm5691 = vcmp.eq.f32.partialorder %v5690, 8.507059e+37
    %v5692 = vand.u32 %v5680, 2147483648
    %v5693 = vor.u32 1.1754944e-38, %v5692
    %v5694 = vsel %vm5691, %v5693, %v5689
    %v5695 = vmul.f32 1.0, %v5694
    %v5696 = vxor.u32 %v5674, 2147483648
    %v5697 = vmul.f32 %v5696, 1.442695
    %v5698 = vpow.pop %v5697
    %v5699 = vadd.f32 %v5698, 1.0
    %v5700 = vrcp.pop %v5699
    %v5701 = vmul.f32 %v5699, %v5700
    %v5702 = vsub.f32 1.0, %v5701
    %v5703 = vmul.f32 %v5700, %v5702
    %v5704 = vadd.f32 %v5700, %v5703
    %vm5705 = vweird.f32 %v5699
    %vm5706 = vweird.f32 %v5700
    %vm5707 = vmor %vm5705, %vm5706
    %v5708 = vsel %vm5707, %v5700, %v5704
    %v5709 = vand.u32 2147483647, %v5699
    %vm5710 = vcmp.eq.f32.partialorder %v5709, 8.507059e+37
    %v5711 = vand.u32 %v5699, 2147483648
    %v5712 = vor.u32 1.1754944e-38, %v5711
    %v5713 = vsel %vm5710, %v5712, %v5708
    %v5714 = vmul.f32 1.0, %v5713
    %v5715 = vtanh.pop %v5675
    %v5716 = vxor.u32 %v5676, 2147483648
    %v5717 = vmul.f32 %v5716, 1.442695
    %v5718 = vpow.pop %v5717
    %v5719 = vadd.f32 %v5718, 1.0
    %v5720 = vrcp.pop %v5719
    %v5721 = vmul.f32 %v5719, %v5720
    %v5722 = vsub.f32 1.0, %v5721
    %v5723 = vmul.f32 %v5720, %v5722
    %v5724 = vadd.f32 %v5720, %v5723
    %vm5725 = vweird.f32 %v5719
    %vm5726 = vweird.f32 %v5720
    %vm5727 = vmor %vm5725, %vm5726
    %v5728 = vsel %vm5727, %v5720, %v5724
    %v5729 = vand.u32 2147483647, %v5719
    %vm5730 = vcmp.eq.f32.partialorder %v5729, 8.507059e+37
    %v5731 = vand.u32 %v5719, 2147483648
    %v5732 = vor.u32 1.1754944e-38, %v5731
    %v5733 = vsel %vm5730, %v5732, %v5728
    %v5734 = vmul.f32 1.0, %v5733
    %v5735 = vmul.f32 %v5714, %v5420
    %v5736 = vmul.f32 %v5695, %v5715
    %v5737 = vadd.f32 %v5735, %v5736
    %v5738 = vtanh.pop %v5737
    %v5739 = vmul.f32 %v5734, %v5738
    %5740 = vst [vmem:[%s2830] sm:$0xff] %v5739
    %v5741 = vld [vmem:[%s2834] sm:$0xff]
    %v5742 = vld [vmem:[%s2834 + $0x8] sm:$0xff]
    %v5743 = vld [vmem:[%s2834 + $0x10] sm:$0xff]
    %v5744 = vld [vmem:[%s2834 + $0x18] sm:$0xff]
    %v5745 = vpack.c.bf16 %v5739, %v5739
    %v5746 = vld [vmem:[%s3526] sm:$0xff]
    %v5747 = vld [vmem:[%s3526 + $0x8] sm:$0xff]
    %v5748 = vld [vmem:[%s3526 + $0x10] sm:$0xff]
    %v5749 = vld [vmem:[%s3526 + $0x18] sm:$0xff]
    %v5750 = vld [vmem:[%s3526 + $0x20] sm:$0xff]
    %v5751 = vld [vmem:[%s3526 + $0x28] sm:$0xff]
    %v5752 = vld [vmem:[%s3526 + $0x30] sm:$0xff]
    %v5753 = vld [vmem:[%s3526 + $0x38] sm:$0xff]
    %v5754 = vld [vmem:[%s3526 + $0x40] sm:$0xff]
    %v5755 = vld [vmem:[%s3526 + $0x48] sm:$0xff]
    %v5756 = vld [vmem:[%s3526 + $0x50] sm:$0xff]
    %v5757 = vld [vmem:[%s3526 + $0x58] sm:$0xff]
    %v5758 = vld [vmem:[%s3526 + $0x60] sm:$0xff]
    %v5759 = vld [vmem:[%s3526 + $0x68] sm:$0xff]
    %v5760 = vld [vmem:[%s3526 + $0x70] sm:$0xff]
    %v5761 = vld [vmem:[%s3526 + $0x78] sm:$0xff]
    %v5762 = vld [vmem:[%s3526 + $0x80] sm:$0xff]
    %v5763 = vld [vmem:[%s3526 + $0x88] sm:$0xff]
    %v5764 = vld [vmem:[%s3526 + $0x90] sm:$0xff]
    %v5765 = vld [vmem:[%s3526 + $0x98] sm:$0xff]
    %v5766 = vld [vmem:[%s3526 + $0xa0] sm:$0xff]
    %v5767 = vld [vmem:[%s3526 + $0xa8] sm:$0xff]
    %v5768 = vld [vmem:[%s3526 + $0xb0] sm:$0xff]
    %v5769 = vld [vmem:[%s3526 + $0xb8] sm:$0xff]
    %v5770 = vld [vmem:[%s3526 + $0xc0] sm:$0xff]
    %v5771 = vld [vmem:[%s3526 + $0xc8] sm:$0xff]
    %v5772 = vld [vmem:[%s3526 + $0xd0] sm:$0xff]
    %v5773 = vld [vmem:[%s3526 + $0xd8] sm:$0xff]
    %v5774 = vld [vmem:[%s3526 + $0xe0] sm:$0xff]
    %v5775 = vld [vmem:[%s3526 + $0xe8] sm:$0xff]
    %v5776 = vld [vmem:[%s3526 + $0xf0] sm:$0xff]
    %v5777 = vld [vmem:[%s3526 + $0xf8] sm:$0xff]
    %v5810 = vunpack.c.l.b16 %v5746
    %v5811 = vunpack.c.h.b16 %v5746
    %v5812 = vunpack.c.l.b16 %v5747
    %v5813 = vunpack.c.h.b16 %v5747
    %v5814 = vunpack.c.l.b16 %v5748
    %v5815 = vunpack.c.h.b16 %v5748
    %v5816 = vunpack.c.l.b16 %v5749
    %v5817 = vunpack.c.h.b16 %v5749
    %v5818 = vunpack.c.l.b16 %v5750
    %v5819 = vunpack.c.h.b16 %v5750
    %v5820 = vunpack.c.l.b16 %v5751
    %v5821 = vunpack.c.h.b16 %v5751
    %v5822 = vunpack.c.l.b16 %v5752
    %v5823 = vunpack.c.h.b16 %v5752
    %v5824 = vunpack.c.l.b16 %v5753
    %v5825 = vunpack.c.h.b16 %v5753
    %v5826 = vunpack.c.l.b16 %v5754
    %v5827 = vunpack.c.h.b16 %v5754
    %v5828 = vunpack.c.l.b16 %v5755
    %v5829 = vunpack.c.h.b16 %v5755
    %v5830 = vunpack.c.l.b16 %v5756
    %v5831 = vunpack.c.h.b16 %v5756
    %v5832 = vunpack.c.l.b16 %v5757
    %v5833 = vunpack.c.h.b16 %v5757
    %v5834 = vunpack.c.l.b16 %v5758
    %v5835 = vunpack.c.h.b16 %v5758
    %v5836 = vunpack.c.l.b16 %v5759
    %v5837 = vunpack.c.h.b16 %v5759
    %v5838 = vunpack.c.l.b16 %v5760
    %v5839 = vunpack.c.h.b16 %v5760
    %v5840 = vunpack.c.l.b16 %v5761
    %v5841 = vunpack.c.h.b16 %v5761
    %v5842 = vunpack.c.l.b16 %v5762
    %v5843 = vunpack.c.h.b16 %v5762
    %v5844 = vunpack.c.l.b16 %v5763
    %v5845 = vunpack.c.h.b16 %v5763
    %v5846 = vunpack.c.l.b16 %v5764
    %v5847 = vunpack.c.h.b16 %v5764
    %v5848 = vunpack.c.l.b16 %v5765
    %v5849 = vunpack.c.h.b16 %v5765
    %v5850 = vunpack.c.l.b16 %v5766
    %v5851 = vunpack.c.h.b16 %v5766
    %v5852 = vunpack.c.l.b16 %v5767
    %v5853 = vunpack.c.h.b16 %v5767
    %v5854 = vunpack.c.l.b16 %v5768
    %v5855 = vunpack.c.h.b16 %v5768
    %v5856 = vunpack.c.l.b16 %v5769
    %v5857 = vunpack.c.h.b16 %v5769
    %v5858 = vunpack.c.l.b16 %v5770
    %v5859 = vunpack.c.h.b16 %v5770
    %v5860 = vunpack.c.l.b16 %v5771
    %v5861 = vunpack.c.h.b16 %v5771
    %v5862 = vunpack.c.l.b16 %v5772
    %v5863 = vunpack.c.h.b16 %v5772
    %v5864 = vunpack.c.l.b16 %v5773
    %v5865 = vunpack.c.h.b16 %v5773
    %v5866 = vunpack.c.l.b16 %v5774
    %v5867 = vunpack.c.h.b16 %v5774
    %v5868 = vunpack.c.l.b16 %v5775
    %v5869 = vunpack.c.h.b16 %v5775
    %v5870 = vunpack.c.l.b16 %v5776
    %v5871 = vunpack.c.h.b16 %v5776
    %v5872 = vunpack.c.l.b16 %v5777
    %v5873 = vunpack.c.h.b16 %v5777
    %v5874 = vpack.c.b16 %v5814, %v5810
    %v5875 = vpack.c.b16 %v5815, %v5811
    %v5876 = vpack.c.b16 %v5816, %v5812
    %v5877 = vpack.c.b16 %v5817, %v5813
    %v5878 = vpack.c.b16 %v5822, %v5818
    %v5879 = vpack.c.b16 %v5823, %v5819
    %v5880 = vpack.c.b16 %v5824, %v5820
    %v5881 = vpack.c.b16 %v5825, %v5821
    %v5882 = vpack.c.b16 %v5830, %v5826
    %v5883 = vpack.c.b16 %v5831, %v5827
    %v5884 = vpack.c.b16 %v5832, %v5828
    %v5885 = vpack.c.b16 %v5833, %v5829
    %v5886 = vpack.c.b16 %v5838, %v5834
    %v5887 = vpack.c.b16 %v5839, %v5835
    %v5888 = vpack.c.b16 %v5840, %v5836
    %v5889 = vpack.c.b16 %v5841, %v5837
    %v5890 = vpack.c.b16 %v5846, %v5842
    %v5891 = vpack.c.b16 %v5847, %v5843
    %v5892 = vpack.c.b16 %v5848, %v5844
    %v5893 = vpack.c.b16 %v5849, %v5845
    %v5894 = vpack.c.b16 %v5854, %v5850
    %v5895 = vpack.c.b16 %v5855, %v5851
    %v5896 = vpack.c.b16 %v5856, %v5852
    %v5897 = vpack.c.b16 %v5857, %v5853
    %v5898 = vpack.c.b16 %v5862, %v5858
    %v5899 = vpack.c.b16 %v5863, %v5859
    %v5900 = vpack.c.b16 %v5864, %v5860
    %v5901 = vpack.c.b16 %v5865, %v5861
    %v5902 = vpack.c.b16 %v5870, %v5866
    %v5903 = vpack.c.b16 %v5871, %v5867
    %v5904 = vpack.c.b16 %v5872, %v5868
    %v5905 = vpack.c.b16 %v5873, %v5869
    %5938 = vmatpush.bf16.msra.mxu0 %v5902
    %5939 = vmatpush.bf16.msra.mxu0 %v5898
    %5940 = vmatpush.bf16.msra.mxu0 %v5894
    %5941 = vmatpush.bf16.msra.mxu0 %v5890
    %5942 = vmatpush.bf16.msra.mxu0 %v5886
    %5943 = vmatpush.bf16.msra.mxu0 %v5882
    %5944 = vmatpush.bf16.msra.mxu0 %v5878
    %5945 = vmatpush.bf16.msra.mxu0 %v5874
    %5946 = vmatmul.bf16.gmra.mxu0 %v5745
    %v5947 = vpop.f32.mrf.mxu0
    %v5948 = vadd.f32 0.0, %v5947
    %v5949 = vpop.f32.mrf.mxu0
    %5950 = vdwg.mxu0
    %5951 = vmatpush.bf16.msra.mxu0 %v5903
    %5952 = vmatpush.bf16.msra.mxu0 %v5899
    %5953 = vmatpush.bf16.msra.mxu0 %v5895
    %5954 = vmatpush.bf16.msra.mxu0 %v5891
    %5955 = vmatpush.bf16.msra.mxu0 %v5887
    %5956 = vmatpush.bf16.msra.mxu0 %v5883
    %5957 = vmatpush.bf16.msra.mxu0 %v5879
    %5958 = vmatpush.bf16.msra.mxu0 %v5875
    %5959 = vmatmul.bf16.gmra.mxu0 %v5745
    %v5960 = vpop.f32.mrf.mxu0
    %v5961 = vadd.f32 0.0, %v5960
    %v5962 = vpop.f32.mrf.mxu0
    %5963 = vdwg.mxu0
    %5964 = vmatpush.bf16.msra.mxu0 %v5904
    %5965 = vmatpush.bf16.msra.mxu0 %v5900
    %5966 = vmatpush.bf16.msra.mxu0 %v5896
    %5967 = vmatpush.bf16.msra.mxu0 %v5892
    %5968 = vmatpush.bf16.msra.mxu0 %v5888
    %5969 = vmatpush.bf16.msra.mxu0 %v5884
    %5970 = vmatpush.bf16.msra.mxu0 %v5880
    %5971 = vmatpush.bf16.msra.mxu0 %v5876
    %5972 = vmatmul.bf16.gmra.mxu0 %v5745
    %v5973 = vpop.f32.mrf.mxu0
    %v5974 = vadd.f32 0.0, %v5973
    %v5975 = vpop.f32.mrf.mxu0
    %5976 = vdwg.mxu0
    %5977 = vmatpush.bf16.msra.mxu0 %v5905
    %5978 = vmatpush.bf16.msra.mxu0 %v5901
    %5979 = vmatpush.bf16.msra.mxu0 %v5897
    %5980 = vmatpush.bf16.msra.mxu0 %v5893
    %5981 = vmatpush.bf16.msra.mxu0 %v5889
    %5982 = vmatpush.bf16.msra.mxu0 %v5885
    %5983 = vmatpush.bf16.msra.mxu0 %v5881
    %5984 = vmatpush.bf16.msra.mxu0 %v5877
    %5985 = vmatmul.bf16.gmra.mxu0 %v5745
    %v5986 = vpop.f32.mrf.mxu0
    %v5987 = vadd.f32 0.0, %v5986
    %v5988 = vpop.f32.mrf.mxu0
    %5989 = vdwg.mxu0
    %v5990 = vadd.f32 %v5741, %v5948
    %v5991 = vadd.f32 %v5742, %v5961
    %v5992 = vadd.f32 %v5743, %v5974
    %v5993 = vadd.f32 %v5744, %v5987
    %v5994 = vxor.u32 %v5990, 2147483648
    %v5995 = vmul.f32 %v5994, 1.442695
    %v5996 = vpow.pop %v5995
    %v5997 = vadd.f32 %v5996, 1.0
    %v5998 = vrcp.pop %v5997
    %v5999 = vmul.f32 %v5997, %v5998
    %v6000 = vsub.f32 1.0, %v5999
    %v6001 = vmul.f32 %v5998, %v6000
    %v6002 = vadd.f32 %v5998, %v6001
    %vm6003 = vweird.f32 %v5997
    %vm6004 = vweird.f32 %v5998
    %vm6005 = vmor %vm6003, %vm6004
    %v6006 = vsel %vm6005, %v5998, %v6002
    %v6007 = vand.u32 2147483647, %v5997
    %vm6008 = vcmp.eq.f32.partialorder %v6007, 8.507059e+37
    %v6009 = vand.u32 %v5997, 2147483648
    %v6010 = vor.u32 1.1754944e-38, %v6009
    %v6011 = vsel %vm6008, %v6010, %v6006
    %v6012 = vmul.f32 1.0, %v6011
    %v6013 = vxor.u32 %v5991, 2147483648
    %v6014 = vmul.f32 %v6013, 1.442695
    %v6015 = vpow.pop %v6014
    %v6016 = vadd.f32 %v6015, 1.0
    %v6017 = vrcp.pop %v6016
    %v6018 = vmul.f32 %v6016, %v6017
    %v6019 = vsub.f32 1.0, %v6018
    %v6020 = vmul.f32 %v6017, %v6019
    %v6021 = vadd.f32 %v6017, %v6020
    %vm6022 = vweird.f32 %v6016
    %vm6023 = vweird.f32 %v6017
    %vm6024 = vmor %vm6022, %vm6023
    %v6025 = vsel %vm6024, %v6017, %v6021
    %v6026 = vand.u32 2147483647, %v6016
    %vm6027 = vcmp.eq.f32.partialorder %v6026, 8.507059e+37
    %v6028 = vand.u32 %v6016, 2147483648
    %v6029 = vor.u32 1.1754944e-38, %v6028
    %v6030 = vsel %vm6027, %v6029, %v6025
    %v6031 = vmul.f32 1.0, %v6030
    %v6032 = vtanh.pop %v5992
    %v6033 = vxor.u32 %v5993, 2147483648
    %v6034 = vmul.f32 %v6033, 1.442695
    %v6035 = vpow.pop %v6034
    %v6036 = vadd.f32 %v6035, 1.0
    %v6037 = vrcp.pop %v6036
    %v6038 = vmul.f32 %v6036, %v6037
    %v6039 = vsub.f32 1.0, %v6038
    %v6040 = vmul.f32 %v6037, %v6039
    %v6041 = vadd.f32 %v6037, %v6040
    %vm6042 = vweird.f32 %v6036
    %vm6043 = vweird.f32 %v6037
    %vm6044 = vmor %vm6042, %vm6043
    %v6045 = vsel %vm6044, %v6037, %v6041
    %v6046 = vand.u32 2147483647, %v6036
    %vm6047 = vcmp.eq.f32.partialorder %v6046, 8.507059e+37
    %v6048 = vand.u32 %v6036, 2147483648
    %v6049 = vor.u32 1.1754944e-38, %v6048
    %v6050 = vsel %vm6047, %v6049, %v6045
    %v6051 = vmul.f32 1.0, %v6050
    %v6052 = vmul.f32 %v6031, %v5737
    %v6053 = vmul.f32 %v6012, %v6032
    %v6054 = vadd.f32 %v6052, %v6053
    %v6055 = vtanh.pop %v6054
    %v6056 = vmul.f32 %v6051, %v6055
    %6057 = vst [vmem:[%s3151] sm:$0xff] %v6056
    %v6058 = vld [vmem:[#allocation2] sm:$0xff]
    %v6059 = vld [vmem:[#allocation2 + $0x8] sm:$0xff]
    %v6060 = vld [vmem:[#allocation2 + $0x10] sm:$0xff]
    %v6061 = vld [vmem:[#allocation2 + $0x18] sm:$0xff]
    %v6062 = vld [vmem:[#allocation2 + $0x20] sm:$0xff]
    %v6063 = vld [vmem:[#allocation2 + $0x28] sm:$0xff]
    %v6064 = vld [vmem:[#allocation2 + $0x30] sm:$0xff]
    %v6065 = vld [vmem:[#allocation2 + $0x38] sm:$0xff]
    %v6066 = vpack.c.bf16 %v6059, %v6058
    %v6067 = vpack.c.bf16 %v6061, %v6060
    %v6068 = vpack.c.bf16 %v6063, %v6062
    %v6069 = vpack.c.bf16 %v6065, %v6064
    %v6070 = vld [vmem:[%s8] sm:$0xf]
    %v6071 = vld [vmem:[%s8 + $0x4] sm:$0xf]
    %v6072 = vld [vmem:[%s8 + $0x8] sm:$0xf]
    %v6073 = vld [vmem:[%s8 + $0xc] sm:$0xf]
    %v6074 = vld [vmem:[%s8 + $0x10] sm:$0xf]
    %v6075 = vld [vmem:[%s8 + $0x14] sm:$0xf]
    %v6076 = vld [vmem:[%s8 + $0x18] sm:$0xf]
    %v6077 = vld [vmem:[%s8 + $0x1c] sm:$0xf]
    %v6078 = vld [vmem:[%s8 + $0x20] sm:$0xf]
    %v6079 = vld [vmem:[%s8 + $0x24] sm:$0xf]
    %v6080 = vld [vmem:[%s8 + $0x28] sm:$0xf]
    %v6081 = vld [vmem:[%s8 + $0x2c] sm:$0xf]
    %v6082 = vld [vmem:[%s8 + $0x30] sm:$0xf]
    %v6083 = vld [vmem:[%s8 + $0x34] sm:$0xf]
    %v6084 = vld [vmem:[%s8 + $0x38] sm:$0xf]
    %v6085 = vld [vmem:[%s8 + $0x3c] sm:$0xf]
    %v6086 = vld [vmem:[%s9] sm:$0x1]
    %v6088 = vperm.slane %v6086, 0
    %v6106 = vunpack.c.l.b16 %v6070
    %v6107 = vunpack.c.l.b16 %v6071
    %v6108 = vunpack.c.l.b16 %v6072
    %v6109 = vunpack.c.l.b16 %v6073
    %v6110 = vunpack.c.l.b16 %v6074
    %v6111 = vunpack.c.l.b16 %v6075
    %v6112 = vunpack.c.l.b16 %v6076
    %v6113 = vunpack.c.l.b16 %v6077
    %v6114 = vunpack.c.l.b16 %v6078
    %v6115 = vunpack.c.l.b16 %v6079
    %v6116 = vunpack.c.l.b16 %v6080
    %v6117 = vunpack.c.l.b16 %v6081
    %v6118 = vunpack.c.l.b16 %v6082
    %v6119 = vunpack.c.l.b16 %v6083
    %v6120 = vunpack.c.l.b16 %v6084
    %v6121 = vunpack.c.l.b16 %v6085
    %v6122 = vpack.c.b16 %v6107, %v6106
    %v6123 = vpack.c.b16 %v6109, %v6108
    %v6124 = vpack.c.b16 %v6111, %v6110
    %v6125 = vpack.c.b16 %v6113, %v6112
    %v6126 = vpack.c.b16 %v6115, %v6114
    %v6127 = vpack.c.b16 %v6117, %v6116
    %v6128 = vpack.c.b16 %v6119, %v6118
    %v6129 = vpack.c.b16 %v6121, %v6120
    %6138 = vmatpush.bf16.msra.mxu0 %v6129
    %6139 = vmatpush.bf16.msra.mxu0 %v6128
    %6140 = vmatpush.bf16.msra.mxu0 %v6127
    %6141 = vmatpush.bf16.msra.mxu0 %v6126
    %6142 = vmatpush.bf16.msra.mxu0 %v6125
    %6143 = vmatpush.bf16.msra.mxu0 %v6124
    %6144 = vmatpush.bf16.msra.mxu0 %v6123
    %6145 = vmatpush.bf16.msra.mxu0 %v6122
    %6146 = vmatmul.bf16.gmra.mxu0 %v6066
    %v6147 = vpop.f32.mrf.mxu0
    %v6148 = vadd.f32 %v6088, %v6147
    %v6149 = vpop.f32.mrf.mxu0
    %v6150 = vadd.f32 %v6088, %v6149
    %6151 = vmatmul.bf16.gmra.mxu0 %v6067
    %v6152 = vpop.f32.mrf.mxu0
    %v6153 = vadd.f32 %v6088, %v6152
    %v6154 = vpop.f32.mrf.mxu0
    %v6155 = vadd.f32 %v6088, %v6154
    %6156 = vmatmul.bf16.gmra.mxu0 %v6068
    %v6157 = vpop.f32.mrf.mxu0
    %v6158 = vadd.f32 %v6088, %v6157
    %v6159 = vpop.f32.mrf.mxu0
    %v6160 = vadd.f32 %v6088, %v6159
    %6161 = vmatmul.bf16.gmra.mxu0 %v6069
    %v6162 = vpop.f32.mrf.mxu0
    %v6163 = vadd.f32 %v6088, %v6162
    %v6164 = vpop.f32.mrf.mxu0
    %v6165 = vadd.f32 %v6088, %v6164
    %6166 = vdwg.mxu0
    %v6167 = vtanh.pop %v6148
    %v6168 = vtanh.pop %v6150
    %v6169 = vtanh.pop %v6153
    %v6170 = vtanh.pop %v6155
    %v6171 = vtanh.pop %v6158
    %v6172 = vtanh.pop %v6160
    %v6173 = vtanh.pop %v6163
    %v6174 = vtanh.pop %v6165
    %6175 = vst [vmem:[#allocation16] sm:$0xff] %v6167
    %6176 = vst [vmem:[#allocation16 + $0x8] sm:$0xff] %v6168
    %6177 = vst [vmem:[#allocation16 + $0x10] sm:$0xff] %v6169
    %6178 = vst [vmem:[#allocation16 + $0x18] sm:$0xff] %v6170
    %6179 = vst [vmem:[#allocation16 + $0x20] sm:$0xff] %v6171
    %6180 = vst [vmem:[#allocation16 + $0x28] sm:$0xff] %v6172
    %6181 = vst [vmem:[#allocation16 + $0x30] sm:$0xff] %v6173
    %6182 = vst [vmem:[#allocation16 + $0x38] sm:$0xff] %v6174
    %v6183 = vld [vmem:[#allocation13] sm:$0xff]
    %v6184 = vld [vmem:[#allocation13 + $0x8] sm:$0xff]
    %v6185 = vld [vmem:[#allocation13 + $0x10] sm:$0xff]
    %v6186 = vld [vmem:[#allocation13 + $0x18] sm:$0xff]
    %v6187 = vld [vmem:[#allocation13 + $0x20] sm:$0xff]
    %v6188 = vld [vmem:[#allocation13 + $0x28] sm:$0xff]
    %v6189 = vld [vmem:[#allocation13 + $0x30] sm:$0xff]
    %v6190 = vld [vmem:[#allocation13 + $0x38] sm:$0xff]
    %vm6191 = vcmp.gt.s32.totalorder %v6183, 0
    %vm6192 = vcmp.gt.s32.totalorder %v6184, 0
    %vm6193 = vcmp.gt.s32.totalorder %v6185, 0
    %vm6194 = vcmp.gt.s32.totalorder %v6186, 0
    %vm6195 = vcmp.gt.s32.totalorder %v6187, 0
    %vm6196 = vcmp.gt.s32.totalorder %v6188, 0
    %vm6197 = vcmp.gt.s32.totalorder %v6189, 0
    %vm6198 = vcmp.gt.s32.totalorder %v6190, 0
    %v6199 = vsel %vm6191, 1, 0
    %v6200 = vsel %vm6192, 1, 0
    %v6201 = vsel %vm6193, 1, 0
    %v6202 = vsel %vm6194, 1, 0
    %v6203 = vsel %vm6195, 1, 0
    %v6204 = vsel %vm6196, 1, 0
    %v6205 = vsel %vm6197, 1, 0
    %v6206 = vsel %vm6198, 1, 0
    %v6207 = vcvt.s32.f32 %v6199
    %v6208 = vcvt.s32.f32 %v6200
    %v6209 = vcvt.s32.f32 %v6201
    %v6210 = vcvt.s32.f32 %v6202
    %v6211 = vcvt.s32.f32 %v6203
    %v6212 = vcvt.s32.f32 %v6204
    %v6213 = vcvt.s32.f32 %v6205
    %v6214 = vcvt.s32.f32 %v6206
    %v6215 = vld [vmem:[#allocation14] sm:$0xff]
    %v6216 = vld [vmem:[#allocation14 + $0x8] sm:$0xff]
    %v6217 = vld [vmem:[#allocation14 + $0x10] sm:$0xff]
    %v6218 = vld [vmem:[#allocation14 + $0x18] sm:$0xff]
    %v6219 = vld [vmem:[#allocation14 + $0x20] sm:$0xff]
    %v6220 = vld [vmem:[#allocation14 + $0x28] sm:$0xff]
    %v6221 = vld [vmem:[#allocation14 + $0x30] sm:$0xff]
    %v6222 = vld [vmem:[#allocation14 + $0x38] sm:$0xff]
    %v6223 = vsub.f32 %v6167, %v6215
    %v6224 = vsub.f32 %v6168, %v6216
    %v6225 = vsub.f32 %v6169, %v6217
    %v6226 = vsub.f32 %v6170, %v6218
    %v6227 = vsub.f32 %v6171, %v6219
    %v6228 = vsub.f32 %v6172, %v6220
    %v6229 = vsub.f32 %v6173, %v6221
    %v6230 = vsub.f32 %v6174, %v6222
    %v6231 = vmul.f32 %v6223, %v6207
    %v6232 = vmul.f32 %v6224, %v6208
    %v6233 = vmul.f32 %v6225, %v6209
    %v6234 = vmul.f32 %v6226, %v6210
    %v6235 = vmul.f32 %v6227, %v6211
    %v6236 = vmul.f32 %v6228, %v6212
    %v6237 = vmul.f32 %v6229, %v6213
    %v6238 = vmul.f32 %v6230, %v6214
    %v6239 = vmul.f32 %v6231, %v6231
    %v6240 = vmul.f32 %v6232, %v6232
    %v6241 = vmul.f32 %v6233, %v6233
    %v6242 = vmul.f32 %v6234, %v6234
    %v6243 = vmul.f32 %v6235, %v6235
    %v6244 = vmul.f32 %v6236, %v6236
    %v6245 = vmul.f32 %v6237, %v6237
    %v6246 = vmul.f32 %v6238, %v6238
    %v6247 = vadd.f32 %v6239, %v6240
    %v6248 = vadd.f32 %v6247, %v6241
    %v6249 = vadd.f32 %v6248, %v6242
    %v6250 = vadd.f32 %v6249, %v6243
    %v6251 = vadd.f32 %v6250, %v6244
    %v6252 = vadd.f32 %v6251, %v6245
    %v6253 = vadd.f32 %v6252, %v6246
    %6254 = vadd.xlane.f32.xlu0 %v6253
    %v6255 = vpop.xlane.xlu0 %6254
    %v6256 = vrot.slane %v6255, 4
    %v6257 = vadd.f32 %v6255, %v6256
    %v6258 = vrot.slane %v6257, 2
    %v6259 = vadd.f32 %v6257, %v6258
    %v6260 = vrot.slane %v6259, 1
    %v6261 = vadd.f32 %v6259, %v6260
    %s6262 = vtos %v6261
    %v6263 = vadd.f32 %v6207, %v6208
    %v6264 = vadd.f32 %v6263, %v6209
    %v6265 = vadd.f32 %v6264, %v6210
    %v6266 = vadd.f32 %v6265, %v6211
    %v6267 = vadd.f32 %v6266, %v6212
    %v6268 = vadd.f32 %v6267, %v6213
    %v6269 = vadd.f32 %v6268, %v6214
    %6270 = vadd.xlane.f32.xlu0 %v6269
    %v6271 = vpop.xlane.xlu0 %6270
    %v6272 = vrot.slane %v6271, 4
    %v6273 = vadd.f32 %v6271, %v6272
    %v6274 = vrot.slane %v6273, 2
    %v6275 = vadd.f32 %v6273, %v6274
    %v6276 = vrot.slane %v6275, 1
    %v6277 = vadd.f32 %v6275, %v6276
    %s6278 = vtos %v6277
    %s6279 = smax.f32 %s6278, 1.0
    %v6280 = vstv %s6279
    %v6281 = vrcp.pop %v6280
    %v6282 = vmul.f32 %v6280, %v6281
    %v6283 = vsub.f32 1.0, %v6282
    %v6284 = vmul.f32 %v6281, %v6283
    %v6285 = vadd.f32 %v6281, %v6284
    %vm6286 = vweird.f32 %v6280
    %vm6287 = vweird.f32 %v6281
    %vm6288 = vmor %vm6286, %vm6287
    %v6289 = vsel %vm6288, %v6281, %v6285
    %v6290 = vand.u32 2147483647, %v6280
    %vm6291 = vcmp.eq.f32.partialorder %v6290, 8.507059e+37
    %v6292 = vand.u32 %v6280, 2147483648
    %v6293 = vor.u32 1.1754944e-38, %v6292
    %v6294 = vsel %vm6291, %v6293, %v6289
    %s6295 = vtos %v6294
    %s6296 = smul.f32 %s6262, %s6295
    %s6297 = scalar_lea.smem [#allocation17], 0
    %6298 = sst [smem:[%s6297]] %s6296
    // Predicated region
    $region74: #{tpu_custom_call.1} parent=1 // pred_check
      _
    $region75: #{tpu_custom_call.1} parent=1 // pred_check_branch
      %6300 = sbr.rel (0) target = $region77
    $region76: #{tpu_custom_call.1} parent=1 // pred_region
      %6302 = vsyncadd [#allocation6], 0
      %s6303 = sshll.u32 [#allocation16], 4
      %s6304 = int_to_ptr.vmem [resolvable:$true] %s6303
      %s6305 = sshll.u32 %s12, 4
      %s6306 = int_to_ptr.hbm [resolvable:$true] %s6305
      %6311 = dma.vmem_to_hbm [thread:$0]  %s6304, 1024, %s6306, [#allocation6], 128, 128, 8
    $region77: #{tpu_custom_call.1} parent=1 // pred_fallthru
      _
    // Predicated region
    $region78: #{tpu_custom_call.1} parent=1 // pred_check
      _
    $region79: #{tpu_custom_call.1} parent=1 // pred_check_branch
      %6313 = sbr.rel (0) target = $region81
    $region80: #{tpu_custom_call.1} parent=1 // pred_region
      %6315 = vsyncadd [#allocation7], 0
      %s6317 = sshll.u32 %s13, 4
      %s6318 = int_to_ptr.hbm [resolvable:$true] %s6317
      %6320 = dma.smem_to_hbm [#allocation17], 16, %s6318, [#allocation7]
    $region81: #{tpu_custom_call.1} parent=1 // pred_fallthru
      _
    // Predicated region
    $region82: #{tpu_custom_call.1} parent=1 // pred_check
      _
    $region83: #{tpu_custom_call.1} parent=1 // pred_check_branch
      %6322 = sbr.rel (0) target = $region85
    $region84: #{tpu_custom_call.1} parent=1 // pred_region
      %6324 = dma.done [#allocation6], 1024
    $region85: #{tpu_custom_call.1} parent=1 // pred_fallthru
      _
    // Predicated region
    $region86: #{tpu_custom_call.1} parent=1 // pred_check
      _
    $region87: #{tpu_custom_call.1} parent=1 // pred_check_branch
      %6326 = sbr.rel (0) target = $region89
    $region88: #{tpu_custom_call.1} parent=1 // pred_region
      %6328 = dma.done [#allocation7], 16
    $region89: #{tpu_custom_call.1} parent=1 // pred_fallthru
      _
    %6329 = sfence
    %6330 = vsyncpa [#allocation5], 1
    %6331 = vsyncpa [#allocation9], 1
    %6332 = vsyncpa [#allocation12], 1
    %6333 = vsyncpa [#allocation15], 1
    %6334 = vsyncpa [#allocation6], 1
    %6335 = vsyncpa [#allocation7], 1

</llo_original>
